<compile_context>
chip_gen: v7x
topology: tpu7x:2x2x1
jax: 0.10.0
libtpu: 0.0.40
codegen_flags: <defaults>
</compile_context>

<pallas_src>
import functools

import numpy as np
import jax
import jax.numpy as jnp
from jax.experimental import pallas as pl
from jax.experimental.pallas import tpu as pltpu

# grade of each of the 16 Cl(1,3) basis blades (scalar, 4 vectors, 6 bivectors, ...)
GRADES = np.array([0, 1, 1, 1, 1, 2, 2, 2, 2, 2, 2, 3, 3, 3, 3, 4])
# signature of each blade under the (+,-,-,-) metric
METRIC = np.array(
    [1.0,
     1.0, -1.0, -1.0, -1.0,
     -1.0, -1.0, -1.0, 1.0, 1.0, 1.0,
     1.0, 1.0, 1.0, -1.0,
     -1.0], dtype=np.float32)

LANE = 128


def _ru(x, m):
    return (x + m - 1) // m * m


# ===================================================================== weight building
def _equilinear_dense(key, cin, sin, cout, sout, w_scale=1.0):
    """Dense (Fin, Fout) equivariant-linear weight in the channel-major flat layout
    (feature index = channel*16 + component, scalars after all mv lanes) + bias.
    # TODO(synk): gatr's EquiLinear uses the full Pin(1,3)-equivariant map basis;
    # per-grade channel mixing (+ scalar coupling) is the dominant subset implemented here.
    """
    Fin, Fout = 16 * cin + sin, 16 * cout + sout
    ks = jax.random.split(key, 9)
    W = np.zeros((Fin, Fout), np.float32)
    wg = [w_scale * np.asarray(jax.random.normal(ks[g], (cin, cout), jnp.float32))
          / np.sqrt(cin) for g in range(5)]
    for comp in range(16):
        W[comp:16 * cin:16, comp:16 * cout:16] = wg[int(GRADES[comp])]
    W[16 * cin:, 0:16 * cout:16] = (w_scale *
        np.asarray(jax.random.normal(ks[5], (sin, cout), jnp.float32)) / np.sqrt(max(sin, 1)))
    W[0:16 * cin:16, 16 * cout:] = (w_scale *
        np.asarray(jax.random.normal(ks[6], (cin, sout), jnp.float32)) / np.sqrt(cin))
    W[16 * cin:, 16 * cout:] = (w_scale *
        np.asarray(jax.random.normal(ks[7], (sin, sout), jnp.float32)) / np.sqrt(max(sin, 1)))
    b_raw = 0.01 * np.asarray(jax.random.normal(ks[8], (cout + sout,), jnp.float32))
    b = np.zeros((Fout,), np.float32)
    b[0:16 * cout:16] = b_raw[:cout]      # bias only on the mv scalar component
    b[16 * cout:] = b_raw[cout:]
    return W, b


def _padw(W, rp, cp):
    P = np.zeros((rp, cp), np.float32)
    P[:W.shape[0], :W.shape[1]] = W
    return P


def _padb(b, cp):
    P = np.zeros((1, cp), np.float32)
    P[0, :b.shape[0]] = b
    return P


def _pad_wb(W, b, kin_p, kout_p):
    """Zero-pad once, weight -> bf16, bias stays f32."""
    return jnp.asarray(_padw(W, kin_p, kout_p), jnp.bfloat16), jnp.asarray(_padb(b, kout_p))


def _init_block(key, h_mv, h_s):
    F = 16 * h_mv + h_s
    Fp = _ru(F, LANE)
    c_mid, s_mid = 2 * h_mv, 2 * h_s
    Fmid = 16 * c_mid + s_mid
    Fmid_p = _ru(Fmid, LANE)
    bk = jax.random.split(key, 6)

    Wq, bq = _equilinear_dense(bk[0], h_mv, h_s, h_mv, h_s)
    Wk, bkk = _equilinear_dense(bk[1], h_mv, h_s, h_mv, h_s)
    Wv, bv = _equilinear_dense(bk[2], h_mv, h_s, h_mv, h_s)
    # bake the 1/sqrt(d) attention scale into Q and the Lorentz metric into K
    scale = 1.0 / np.sqrt(F)
    Wq, bq = Wq * scale, bq * scale
    metric_cols = np.ones((F,), np.float32)
    metric_cols[:16 * h_mv] = np.tile(METRIC, h_mv)
    Wk, bkk = Wk * metric_cols[None, :], bkk * metric_cols

    # fused QKV weight: (Fp, 3*Fp); attention picks Q/K/V slabs via BlockSpec column idx.
    Wqkv = np.concatenate([_padw(Wq, Fp, Fp), _padw(Wk, Fp, Fp), _padw(Wv, Fp, Fp)], axis=1)
    bqkv = np.concatenate([_padb(bq, Fp), _padb(bkk, Fp), _padb(bv, Fp)], axis=1)

    Wo, bo = _equilinear_dense(bk[3], h_mv, h_s, h_mv, h_s, w_scale=0.5)
    W1, b1 = _equilinear_dense(bk[4], h_mv, h_s, c_mid, s_mid)
    W2, b2 = _equilinear_dense(bk[5], c_mid, s_mid, h_mv, h_s, w_scale=0.5)

    W1p, b1p = _padw(W1, Fp, Fmid_p), _padb(b1, Fmid_p)
    # gate-broadcast matrix (scalar component of each mv channel broadcast over its 16
    # lanes, identity on scalar lanes) FOLDED into the MLP up-projection at init time.
    B = np.zeros((Fmid_p, Fmid_p), np.float32)
    for c in range(c_mid):
        B[c * 16, c * 16:(c + 1) * 16] = 1.0
    for si in range(s_mid):
        B[16 * c_mid + si, 16 * c_mid + si] = 1.0
    Wg, bg = W1p @ B, b1p @ B

    bf = lambda a: jnp.asarray(a, jnp.bfloat16)
    f32 = lambda a: jnp.asarray(a, jnp.float32)
    return dict(qkv_W=bf(Wqkv), qkv_b=f32(bqkv),
                o_W=bf(_padw(Wo, Fp, Fp)), o_b=f32(_padb(bo, Fp)),
                m1_W=bf(W1p), m1_b=f32(b1p),
                mg_W=bf(Wg), mg_b=f32(bg),
                m2_W=bf(_padw(W2, Fmid_p, Fp)), m2_b=f32(_padb(b2, Fp)))


def init_params(key, n_scalars, h_mv, h_s, blocks, n_scalars_out):
    F = 16 * h_mv + h_s
    Fp = _ru(F, LANE)
    Fin0 = 16 * 3 + n_scalars          # 3 input mv channels (vector + 2 spurions)
    Fin0_p = _ru(Fin0, LANE)
    Fout = 16 + n_scalars_out          # out_mv_channels = 1
    c_mid, s_mid = 2 * h_mv, 2 * h_s
    Fmid_p = _ru(16 * c_mid + s_mid, LANE)
    keys = jax.random.split(key, 3 + blocks)

    params = {"cfg": dict(n_scalars=n_scalars, h_mv=h_mv, h_s=h_s,
                          n_scalars_out=n_scalars_out)}

    W_in, b_in = _equilinear_dense(keys[0], 3, n_scalars, h_mv, h_s)
    params["in_W"], params["in_b"] = _pad_wb(W_in, b_in, Fin0_p, Fp)

    params["blocks"] = [_init_block(keys[3 + b], h_mv, h_s) for b in range(blocks)]

    # output equi-linear with the final `beta` Linear folded in as one extra column.
    W_out, b_out = _equilinear_dense(keys[1], h_mv, h_s, 1, n_scalars_out)
    bkey = jax.random.split(keys[2], 2)
    beta_w = (np.asarray(jax.random.normal(bkey[0], (n_scalars_out + 1, 1), jnp.float32))
              / np.sqrt(n_scalars_out + 1))
    sel = np.zeros((Fout, 1), np.float32)
    sel[0, 0] = beta_w[0, 0]            # mv scalar component
    sel[16:, 0] = beta_w[1:, 0]         # output scalar channels
    W_ext = np.concatenate([W_out, W_out @ sel], axis=1)      # (F, Fout + 1)
    b_ext = np.concatenate([b_out, b_out @ sel])              # beta bias = 0
    params["out_W"], params["out_b"] = _pad_wb(W_ext, b_ext, Fp, _ru(Fout + 1, LANE))

    # lane masks for the in-kernel equivariant layer norm (width Fp) + MLP gate mask
    mv_mask = np.zeros((1, Fp), np.float32); mv_mask[0, :16 * h_mv] = 1.0
    s_mask = np.zeros((1, Fp), np.float32); s_mask[0, 16 * h_mv:F] = 1.0
    gate_mv = np.zeros((1, Fmid_p), np.float32); gate_mv[0, :16 * c_mid] = 1.0
    params["mv_mask"] = jnp.asarray(mv_mask)
    params["s_mask"] = jnp.asarray(s_mask)
    params["gate_mv_mask"] = jnp.asarray(gate_mv)
    return params


# ===================================================================== Pallas kernels
def _equi_ln(x, mv_mask, s_mask, n_mv, n_s, eps):
    """Equivariant layer norm on the flat layout (mv lanes + scalar lanes), f32 math.
    # TODO(synk): gatr's EquiLayerNorm uses the algebra's invariant norm; a
    # channel-mean Euclidean norm is used here."""
    msq = jnp.sum(x * x * mv_mask, axis=-1, keepdims=True)
    inv_mv = jax.lax.rsqrt(msq / n_mv + eps)
    mu = jnp.sum(x * s_mask, axis=-1, keepdims=True) / n_s
    d = x - mu
    var = jnp.sum(d * d * s_mask, axis=-1, keepdims=True) / n_s
    inv_s = jax.lax.rsqrt(var + eps)
    return mv_mask * x * inv_mv + s_mask * d * inv_s


# --------------------------------------------------------------------- generic linear
def _linear_kernel(x_ref, w_ref, b_ref, o_ref):
    y = jnp.dot(x_ref[...].astype(jnp.bfloat16), w_ref[...],
                preferred_element_type=jnp.float32) + b_ref[...]
    o_ref[...] = y.astype(o_ref.dtype)


def pallas_linear(x, w, b, tm, out_dtype=jnp.float32):
    Mp, Kp = x.shape
    Np_ = w.shape[1]
    return pl.pallas_call(
        _linear_kernel,
        grid=(Mp // tm,),
        in_specs=[pl.BlockSpec((tm, Kp), lambda i: (i, 0)),
                  pl.BlockSpec((Kp, Np_), lambda i: (0, 0)),
                  pl.BlockSpec((1, Np_), lambda i: (0, 0))],
        out_specs=pl.BlockSpec((tm, Np_), lambda i: (i, 0)),
        out_shape=jax.ShapeDtypeStruct((Mp, Np_), out_dtype),
        compiler_params=pltpu.CompilerParams(dimension_semantics=("parallel",)),
    )(x, w, b)


# --------------------------------------------- input embedding + LN + QKV (fused)
def _embed_qkv_kernel(x0_ref, win_ref, bin_ref, mvm_ref, sm_ref, wqkv_ref, bqkv_ref,
                      x_ref, qkv_ref, *, n_mv, n_s, eps):
    x = jnp.dot(x0_ref[...], win_ref[...],
                preferred_element_type=jnp.float32) + bin_ref[...]
    x_ref[...] = x.astype(x_ref.dtype)
    xn = _equi_ln(x, mvm_ref[...], sm_ref[...], n_mv, n_s, eps).astype(jnp.bfloat16)
    qkv = jnp.dot(xn, wqkv_ref[...], preferred_element_type=jnp.float32) + bqkv_ref[...]
    qkv_ref[...] = qkv.astype(qkv_ref.dtype)


def pallas_embed_qkv(x0, win, bin_, mv_mask, s_mask, wqkv, bqkv, n_mv, n_s, tm, eps=1e-6):
    Mp, K0 = x0.shape
    Fp = win.shape[1]
    N3 = wqkv.shape[1]
    kern = functools.partial(_embed_qkv_kernel, n_mv=float(n_mv), n_s=float(n_s), eps=eps)
    return pl.pallas_call(
        kern,
        grid=(Mp // tm,),
        in_specs=[pl.BlockSpec((tm, K0), lambda i: (i, 0)),
                  pl.BlockSpec((K0, Fp), lambda i: (0, 0)),
                  pl.BlockSpec((1, Fp), lambda i: (0, 0)),
                  pl.BlockSpec((1, Fp), lambda i: (0, 0)),
                  pl.BlockSpec((1, Fp), lambda i: (0, 0)),
                  pl.BlockSpec((Fp, N3), lambda i: (0, 0)),
                  pl.BlockSpec((1, N3), lambda i: (0, 0))],
        out_specs=[pl.BlockSpec((tm, Fp), lambda i: (i, 0)),
                   pl.BlockSpec((tm, N3), lambda i: (i, 0))],
        out_shape=(jax.ShapeDtypeStruct((Mp, Fp), jnp.bfloat16),
                   jax.ShapeDtypeStruct((Mp, N3), jnp.bfloat16)),
        compiler_params=pltpu.CompilerParams(dimension_semantics=("parallel",)),
    )(x0, win, bin_, mv_mask, s_mask, wqkv, bqkv)


# --------------------------------------------------------- flash attention (masked)
def _flash_attn_kernel(qmin_ref, qmax_ref, kmin_ref, kmax_ref,
                       segq_ref, segk_ref, q_ref, k_ref, v_ref, o_ref,
                       m_sc, l_sc, acc_sc):
    """Flash-style block-diagonal attention.  Segment-range overlap is checked from
    SMEM scalars; fully-masked KV tiles skip all QK^T / softmax / PV work."""
    i = pl.program_id(0)
    j = pl.program_id(1)

    @pl.when(j == 0)
    def _():
        m_sc[...] = jnp.full_like(m_sc, -jnp.inf)
        l_sc[...] = jnp.zeros_like(l_sc)
        acc_sc[...] = jnp.zeros_like(acc_sc)

    overlap = jnp.logical_and(qmax_ref[i] >= kmin_ref[j], kmax_ref[j] >= qmin_ref[i])

    @pl.when(overlap)
    def _():
        s = jax.lax.dot_general(q_ref[...], k_ref[...], (((1,), (1,)), ((), ())),
                                preferred_element_type=jnp.float32)
        mask = segq_ref[...] == segk_ref[...]          # (TQ,1)==(1,TK) -> (TQ,TK)
        s = jnp.where(mask, s, -1e30)                  # mask / softmax stay in f32
        m_new = jnp.maximum(m_sc[...], jnp.max(s, axis=-1, keepdims=True))
        alpha = jnp.exp(m_sc[...] - m_new)
        p = jnp.exp(s - m_new)
        l_sc[...] = alpha * l_sc[...] + jnp.sum(p, axis=-1, keepdims=True)
        acc_sc[...] = alpha * acc_sc[...] + jnp.dot(p.astype(jnp.bfloat16), v_ref[...],
                                                    preferred_element_type=jnp.float32)
        m_sc[...] = m_new

    @pl.when(j == pl.num_programs(1) - 1)
    def _():
        l = jnp.maximum(l_sc[...], 1e-30)
        o_ref[...] = (acc_sc[...] * pl.reciprocal(l, approx=True)).astype(o_ref.dtype)


def pallas_block_attention(qkv, seg_rows, seg_cols, q_min, q_max, k_min, k_max, tq, tk):
    """qkv: (Mp, 3*Fp) bf16 fused projection output; single-head attention.
    # TODO(synk): gatr's SelfAttentionConfig is multi-head; one head is used here."""
    Mp = qkv.shape[0]
    Fp = qkv.shape[1] // 3
    grid_spec = pltpu.PrefetchScalarGridSpec(
        num_scalar_prefetch=4,
        grid=(Mp // tq, Mp // tk),
        in_specs=[pl.BlockSpec((tq, 1), lambda i, j, *_: (i, 0)),   # seg of q rows
                  pl.BlockSpec((1, tk), lambda i, j, *_: (0, j)),   # seg of kv cols
                  pl.BlockSpec((tq, Fp), lambda i, j, *_: (i, 0)),  # Q slab
                  pl.BlockSpec((tk, Fp), lambda i, j, *_: (j, 1)),  # K slab
                  pl.BlockSpec((tk, Fp), lambda i, j, *_: (j, 2))], # V slab
        out_specs=pl.BlockSpec((tq, Fp), lambda i, j, *_: (i, 0)),
        scratch_shapes=[pltpu.VMEM((tq, 1), jnp.float32),
                        pltpu.VMEM((tq, 1), jnp.float32),
                        pltpu.VMEM((tq, Fp), jnp.float32)])
    return pl.pallas_call(
        _flash_attn_kernel,
        grid_spec=grid_spec,
        out_shape=jax.ShapeDtypeStruct((Mp, Fp), jnp.bfloat16),
        compiler_params=pltpu.CompilerParams(
            dimension_semantics=("parallel", "arbitrary")),
    )(q_min, q_max, k_min, k_max, seg_rows, seg_cols, qkv, qkv, qkv)


# ------------------------ O-proj + residual + LN + gated-GELU MLP + residual (+ next QKV)
def _block_tail_core(x_ref, a_ref, mvm, sm, gm, wo, bo, w1, b1, wg, bg, w2, b2,
                     n_mv, n_s, eps):
    """# TODO(synk): gatr's geometric-product bilinear MLP is replaced by a scalar-gated GELU."""
    x = x_ref[...].astype(jnp.float32)
    x1 = x + jnp.dot(a_ref[...], wo[...], preferred_element_type=jnp.float32) + bo[...]
    xn = _equi_ln(x1, mvm[...], sm[...], n_mv, n_s, eps).astype(jnp.bfloat16)
    # two independent matmuls from xn (gate-broadcast matrix folded into wg at init)
    h = jnp.dot(xn, w1[...], preferred_element_type=jnp.float32) + b1[...]
    g = jax.nn.gelu(jnp.dot(xn, wg[...], preferred_element_type=jnp.float32) + bg[...])
    gmv = gm[...]
    gated = g * (gmv * h + (1.0 - gmv))
    y = jnp.dot(gated.astype(jnp.bfloat16), w2[...],
                preferred_element_type=jnp.float32) + b2[...]
    return x1 + y


def _block_tail_kernel(x_ref, a_ref, mvm, sm, gm, wo, bo, w1, b1, wg, bg, w2, b2,
                       o_ref, *, n_mv, n_s, eps):
    x2 = _block_tail_core(x_ref, a_ref, mvm, sm, gm, wo, bo, w1, b1, wg, bg, w2, b2,
                          n_mv, n_s, eps)
    o_ref[...] = x2.astype(o_ref.dtype)


def _block_tail_qkv_kernel(x_ref, a_ref, mvm, sm, gm, wo, bo, w1, b1, wg, bg, w2, b2,
                           wq, bq, o_ref, qkv_ref, *, n_mv, n_s, eps):
    x2 = _block_tail_core(x_ref, a_ref, mvm, sm, gm, wo, bo, w1, b1, wg, bg, w2, b2,
                          n_mv, n_s, eps)
    o_ref[...] = x2.astype(o_ref.dtype)
    # fused: next block's equi-LN + QKV projection (saves a pallas_call + HBM round-trip)
    xn2 = _equi_ln(x2, mvm[...], sm[...], n_mv, n_s, eps).astype(jnp.bfloat16)
    qkv = jnp.dot(xn2, wq[...], preferred_element_type=jnp.float32) + bq[...]
    qkv_ref[...] = qkv.astype(qkv_ref.dtype)


def pallas_block_tail(x, attn, mv_mask, s_mask, gm, p, p_next, n_mv, n_s, tm, eps=1e-6):
    Mp, Fp = x.shape
    Fmid_p = p["m1_W"].shape[1]
    row = lambda i: (i, 0)
    const = lambda i: (0, 0)
    in_specs = [pl.BlockSpec((tm, Fp), row),          # residual stream (bf16)
                pl.BlockSpec((tm, Fp), row),          # attention output (bf16)
                pl.BlockSpec((1, Fp), const),         # mv lane mask
                pl.BlockSpec((1, Fp), const),         # scalar lane mask
                pl.BlockSpec((1, Fmid_p), const),     # gate mv-lane mask
                pl.BlockSpec((Fp, Fp), const),        # W_o
                pl.BlockSpec((1, Fp), const),         # b_o
                pl.BlockSpec((Fp, Fmid_p), const),    # W_mlp1
                pl.BlockSpec((1, Fmid_p), const),     # b_mlp1
                pl.BlockSpec((Fp, Fmid_p), const),    # W_gate  (= W1 @ gate_B)
                pl.BlockSpec((1, Fmid_p), const),     # b_gate
                pl.BlockSpec((Fmid_p, Fp), const),    # W_mlp2
                pl.BlockSpec((1, Fp), const)]         # b_mlp2
    args = [x, attn, mv_mask, s_mask, gm,
            p["o_W"], p["o_b"], p["m1_W"], p["m1_b"], p["mg_W"], p["mg_b"],
            p["m2_W"], p["m2_b"]]
    cp = pltpu.CompilerParams(dimension_semantics=("parallel",))

    if p_next is None:
        kern = functools.partial(_block_tail_kernel, n_mv=float(n_mv), n_s=float(n_s), eps=eps)
        return pl.pallas_call(
            kern, grid=(Mp // tm,), in_specs=in_specs,
            out_specs=pl.BlockSpec((tm, Fp), row),
            out_shape=jax.ShapeDtypeStruct((Mp, Fp), jnp.bfloat16),
            compiler_params=cp)(*args)

    N3 = p_next["qkv_W"].shape[1]
    in_specs = in_specs + [pl.BlockSpec((Fp, N3), const), pl.BlockSpec((1, N3), const)]
    args = args + [p_next["qkv_W"], p_next["qkv_b"]]
    kern = functools.partial(_block_tail_qkv_kernel, n_mv=float(n_mv), n_s=float(n_s), eps=eps)
    return pl.pallas_call(
        kern, grid=(Mp // tm,), in_specs=in_specs,
        out_specs=[pl.BlockSpec((tm, Fp), row), pl.BlockSpec((tm, N3), row)],
        out_shape=(jax.ShapeDtypeStruct((Mp, Fp), jnp.bfloat16),
                   jax.ShapeDtypeStruct((Mp, N3), jnp.bfloat16)),
        compiler_params=cp)(*args)


# ===================================================================== model forward
def _pick_tiles(N):
    """Row tiles up to 512, keeping >= 2 tiles on the parallel axis when possible (v7x)."""
    Mp0 = _ru(N, 128)
    if Mp0 >= 1024:
        tm = 512
    elif Mp0 >= 512:
        tm = 256
    else:
        tm = 128
    Mp = _ru(N, tm)
    tq = min(tm, 256)
    if Mp % 512 == 0 and Mp >= 512:
        tk = 512
    elif Mp % 256 == 0 and Mp >= 256:
        tk = 256
    else:
        tk = 128
    return Mp, tm, tq, tk


def lgatr_forward(params, input_vectors, input_scalars, batch_idx):
    """LGATrModel.forward with obj_score=False, return_scalar_coords=False,
    global_features_copy=False.  Returns (N, 5): extracted vector part ++ sigmoid(beta)."""
    cfg = params["cfg"]
    h_mv, h_s = cfg["h_mv"], cfg["h_s"]
    n_scalars, n_scalars_out = cfg["n_scalars"], cfg["n_scalars_out"]
    N = input_vectors.shape[0]
    Mp, tm, tq, tk = _pick_tiles(N)
    Fin0_p = _ru(16 * 3 + n_scalars, LANE)

    # one-time embedding into the padded channel-major flat layout (bf16 residual stream)
    x0 = jnp.zeros((Mp, Fin0_p), jnp.float32)
    x0 = x0.at[:N, 1:5].set(input_vectors.astype(jnp.float32))   # grade-1 part, mv ch 0
    x0 = x0.at[:N, 16 + 8].set(1.0)   # spurion: beam reference 'xyplane' (e1^e2), mv ch 1
    x0 = x0.at[:N, 32 + 1].set(1.0)   # spurion: time reference (e0), mv ch 2
    x0 = x0.at[:N, 48:48 + n_scalars].set(input_scalars.astype(jnp.float32))
    x0 = x0.astype(jnp.bfloat16)

    # segment ids for the block-diagonal mask (padding rows = -1, matching each other)
    seg = jnp.full((Mp,), -1, jnp.int32).at[:N].set(batch_idx.astype(jnp.int32))
    seg_rows = seg[:, None]
    seg_cols = seg[None, :]
    # per-tile segment ranges for the scalar-prefetch tile-skipping test
    q_min = seg.reshape(Mp // tq, tq).min(axis=1)
    q_max = seg.reshape(Mp // tq, tq).max(axis=1)
    k_min = seg.reshape(Mp // tk, tk).min(axis=1)
    k_max = seg.reshape(Mp // tk, tk).max(axis=1)

    mv_mask, s_mask, gm = params["mv_mask"], params["s_mask"], params["gate_mv_mask"]
    blocks = params["blocks"]

    # input equi-linear fused with block 0's LN + QKV
    x, qkv = pallas_embed_qkv(x0, params["in_W"], params["in_b"], mv_mask, s_mask,
                              blocks[0]["qkv_W"], blocks[0]["qkv_b"], h_mv, h_s, tm)

    for b, p in enumerate(blocks):
        attn = pallas_block_attention(qkv, seg_rows, seg_cols,
                                      q_min, q_max, k_min, k_max, tq, tk)
        p_next = blocks[b + 1] if b + 1 < len(blocks) else None
        res = pallas_block_tail(x, attn, mv_mask, s_mask, gm, p, p_next, h_mv, h_s, tm)
        if p_next is None:
            x = res
        else:
            x, qkv = res

    out = pallas_linear(x, params["out_W"], params["out_b"], tm)     # (Mp, 128) f32

    x_clusters = out[:N, 1:5]                               # extract_vector(...)[0,:,0,:]
    beta = out[:N, 16 + n_scalars_out:16 + n_scalars_out + 1]   # fused beta Linear
    return jnp.concatenate([x_clusters, jax.nn.sigmoid(beta)], axis=1)   # (N, 5)


if __name__ == "__main__":
    key = jax.random.PRNGKey(0)
    k_param, k_v, k_s = jax.random.split(key, 3)

    n_scalars, h_mv, h_s, blocks, n_scalars_out = 4, 4, 8, 2, 4
    N = 16  # number of points (two events of 8 points)

    params = init_params(k_param, n_scalars, h_mv, h_s, blocks, n_scalars_out)
    input_vectors = jax.random.normal(k_v, (N, 4), jnp.float32)
    input_scalars = jax.random.normal(k_s, (N, n_scalars), jnp.float32)
    batch_idx = jnp.array([0] * (N // 2) + [1] * (N // 2), jnp.int32)

    fwd = jax.jit(functools.partial(lgatr_forward, params))
    x = fwd(input_vectors, input_scalars, batch_idx)
    jax.block_until_ready(x)

    assert x.shape == (N, 5), x.shape
    assert bool(jnp.all(jnp.isfinite(x)))
    print("KERNEL_OK")
</pallas_src>

<mosaic_0001>
module attributes {stable_mosaic.version = 11 : i64} {
  func.func @_embed_qkv_kernel(%arg0: i32, %arg1: memref<128x128xbf16, #tpu.memory_space<vmem>>, %arg2: memref<128x128xbf16, #tpu.memory_space<vmem>>, %arg3: memref<1x128xf32, #tpu.memory_space<vmem>>, %arg4: memref<1x128xf32, #tpu.memory_space<vmem>>, %arg5: memref<1x128xf32, #tpu.memory_space<vmem>>, %arg6: memref<128x384xbf16, #tpu.memory_space<vmem>>, %arg7: memref<1x384xf32, #tpu.memory_space<vmem>>, %arg8: memref<128x128xbf16, #tpu.memory_space<vmem>>, %arg9: memref<128x384xbf16, #tpu.memory_space<vmem>>) attributes {dimension_semantics = [#tpu.dimension_semantics<parallel>], iteration_bounds = array<i64: 1>, scalar_prefetch = 0 : i64, scratch_operands = 0 : i64, tpu.core_type = #tpu.core_type<tc>, window_params = [{transform_indices = @transform_0, window_bounds = array<i64: 128, 128>}, {pipeline_mode = #tpu.pipeline_mode<synchronous>, transform_indices = @transform_1, window_bounds = array<i64: 128, 128>}, {pipeline_mode = #tpu.pipeline_mode<synchronous>, transform_indices = @transform_2, window_bounds = array<i64: 1, 128>}, {pipeline_mode = #tpu.pipeline_mode<synchronous>, transform_indices = @transform_3, window_bounds = array<i64: 1, 128>}, {pipeline_mode = #tpu.pipeline_mode<synchronous>, transform_indices = @transform_4, window_bounds = array<i64: 1, 128>}, {pipeline_mode = #tpu.pipeline_mode<synchronous>, transform_indices = @transform_5, window_bounds = array<i64: 128, 384>}, {pipeline_mode = #tpu.pipeline_mode<synchronous>, transform_indices = @transform_6, window_bounds = array<i64: 1, 384>}, {transform_indices = @transform_7, window_bounds = array<i64: 128, 128>}, {transform_indices = @transform_8, window_bounds = array<i64: 128, 384>}]} {
    %c0 = arith.constant 0 : index
    %c0_0 = arith.constant 0 : index
    %0 = vector.load %arg1[%c0, %c0_0] : memref<128x128xbf16, #tpu.memory_space<vmem>>, vector<128x128xbf16>
    %c0_1 = arith.constant 0 : index
    %c0_2 = arith.constant 0 : index
    %1 = vector.load %arg2[%c0_1, %c0_2] : memref<128x128xbf16, #tpu.memory_space<vmem>>, vector<128x128xbf16>
    %cst = arith.constant dense<0.000000e+00> : vector<128x128xf32>
    %2 = tpu.matmul %0, %1, %cst {dimension_numbers = #tpu.dot_dimension_numbers<[1], [0], [0], [1], [0, 0, 1, 1], [], []>} : vector<128x128xbf16>, vector<128x128xbf16>, vector<128x128xf32> -> vector<128x128xf32>
    %c0_3 = arith.constant 0 : index
    %c0_4 = arith.constant 0 : index
    %3 = vector.load %arg3[%c0_3, %c0_4] : memref<1x128xf32, #tpu.memory_space<vmem>>, vector<1x128xf32>
    %4 = vector.broadcast %3 : vector<1x128xf32> to vector<128x128xf32>
    %5 = arith.addf %2, %4 : vector<128x128xf32>
    %6 = arith.truncf %5 : vector<128x128xf32> to vector<128x128xbf16>
    %c0_5 = arith.constant 0 : index
    %c0_6 = arith.constant 0 : index
    %7 = vector.load %arg8[%c0_5, %c0_6] : memref<128x128xbf16, #tpu.memory_space<vmem>>, vector<128x128xbf16>
    tpu.vector_store %arg8[%c0_5, %c0_6], %6 {strides = array<i32>} : memref<128x128xbf16, #tpu.memory_space<vmem>>, vector<128x128xbf16>,
    %c0_7 = arith.constant 0 : index
    %c0_8 = arith.constant 0 : index
    %8 = vector.load %arg4[%c0_7, %c0_8] : memref<1x128xf32, #tpu.memory_space<vmem>>, vector<1x128xf32>
    %c0_9 = arith.constant 0 : index
    %c0_10 = arith.constant 0 : index
    %9 = vector.load %arg5[%c0_9, %c0_10] : memref<1x128xf32, #tpu.memory_space<vmem>>, vector<1x128xf32>
    %10 = arith.mulf %5, %5 : vector<128x128xf32>
    %11 = vector.broadcast %8 : vector<1x128xf32> to vector<128x128xf32>
    %12 = arith.mulf %10, %11 : vector<128x128xf32>
    %cst_11 = arith.constant dense<0.000000e+00> : vector<128xf32>
    %13 = vector.multi_reduction <add>, %12, %cst_11 [1] : vector<128x128xf32> to vector<128xf32>
    %14 = vector.shape_cast %13 : vector<128xf32> to vector<128x1xf32>
    %cst_12 = arith.constant 4.000000e+00 : f32
    %15 = vector.broadcast %cst_12 : f32 to vector<128x1xf32>
    %16 = arith.divf %14, %15 : vector<128x1xf32>
    %cst_13 = arith.constant 9.99999997E-7 : f32
    %17 = vector.broadcast %cst_13 : f32 to vector<128x1xf32>
    %18 = arith.addf %16, %17 : vector<128x1xf32>
    %19 = math.rsqrt %18 : vector<128x1xf32>
    %20 = vector.broadcast %9 : vector<1x128xf32> to vector<128x128xf32>
    %21 = arith.mulf %5, %20 : vector<128x128xf32>
    %cst_14 = arith.constant dense<0.000000e+00> : vector<128xf32>
    %22 = vector.multi_reduction <add>, %21, %cst_14 [1] : vector<128x128xf32> to vector<128xf32>
    %23 = vector.shape_cast %22 : vector<128xf32> to vector<128x1xf32>
    %cst_15 = arith.constant 8.000000e+00 : f32
    %24 = vector.broadcast %cst_15 : f32 to vector<128x1xf32>
    %25 = arith.divf %23, %24 : vector<128x1xf32>
    %26 = vector.broadcast %25 : vector<128x1xf32> to vector<128x128xf32>
    %27 = arith.subf %5, %26 : vector<128x128xf32>
    %28 = arith.mulf %27, %27 : vector<128x128xf32>
    %29 = vector.broadcast %9 : vector<1x128xf32> to vector<128x128xf32>
    %30 = arith.mulf %28, %29 : vector<128x128xf32>
    %cst_16 = arith.constant dense<0.000000e+00> : vector<128xf32>
    %31 = vector.multi_reduction <add>, %30, %cst_16 [1] : vector<128x128xf32> to vector<128xf32>
    %32 = vector.shape_cast %31 : vector<128xf32> to vector<128x1xf32>
    %cst_17 = arith.constant 8.000000e+00 : f32
    %33 = vector.broadcast %cst_17 : f32 to vector<128x1xf32>
    %34 = arith.divf %32, %33 : vector<128x1xf32>
    %cst_18 = arith.constant 9.99999997E-7 : f32
    %35 = vector.broadcast %cst_18 : f32 to vector<128x1xf32>
    %36 = arith.addf %34, %35 : vector<128x1xf32>
    %37 = math.rsqrt %36 : vector<128x1xf32>
    %38 = vector.broadcast %8 : vector<1x128xf32> to vector<128x128xf32>
    %39 = arith.mulf %38, %5 : vector<128x128xf32>
    %40 = vector.broadcast %19 : vector<128x1xf32> to vector<128x128xf32>
    %41 = arith.mulf %39, %40 : vector<128x128xf32>
    %42 = vector.broadcast %9 : vector<1x128xf32> to vector<128x128xf32>
    %43 = arith.mulf %42, %27 : vector<128x128xf32>
    %44 = vector.broadcast %37 : vector<128x1xf32> to vector<128x128xf32>
    %45 = arith.mulf %43, %44 : vector<128x128xf32>
    %46 = arith.addf %41, %45 : vector<128x128xf32>
    %47 = arith.truncf %46 : vector<128x128xf32> to vector<128x128xbf16>
    %c0_19 = arith.constant 0 : index
    %c0_20 = arith.constant 0 : index
    %48 = vector.load %arg6[%c0_19, %c0_20] : memref<128x384xbf16, #tpu.memory_space<vmem>>, vector<128x384xbf16>
    %cst_21 = arith.constant dense<0.000000e+00> : vector<128x384xf32>
    %49 = tpu.matmul %47, %48, %cst_21 {dimension_numbers = #tpu.dot_dimension_numbers<[1], [0], [0], [1], [0, 0, 1, 1], [], []>} : vector<128x128xbf16>, vector<128x384xbf16>, vector<128x384xf32> -> vector<128x384xf32>
    %c0_22 = arith.constant 0 : index
    %c0_23 = arith.constant 0 : index
    %50 = vector.load %arg7[%c0_22, %c0_23] : memref<1x384xf32, #tpu.memory_space<vmem>>, vector<1x384xf32>
    %51 = vector.broadcast %50 : vector<1x384xf32> to vector<128x384xf32>
    %52 = arith.addf %49, %51 : vector<128x384xf32>
    %53 = arith.truncf %52 : vector<128x384xf32> to vector<128x384xbf16>
    %c0_24 = arith.constant 0 : index
    %c0_25 = arith.constant 0 : index
    %54 = vector.load %arg9[%c0_24, %c0_25] : memref<128x384xbf16, #tpu.memory_space<vmem>>, vector<128x384xbf16>
    tpu.vector_store %arg9[%c0_24, %c0_25], %53 {strides = array<i32>} : memref<128x384xbf16, #tpu.memory_space<vmem>>, vector<128x384xbf16>,
    return
  }
  func.func @transform_0(%arg0: i32) -> (i32, i32) {
    %c0_i32 = arith.constant 0 : i32
    %c0_i32_0 = arith.constant 0 : i32
    return %arg0, %c0_i32 : i32, i32
  }
  func.func @transform_1(%arg0: i32) -> (i32, i32) {
    %c0_i32 = arith.constant 0 : i32
    %c0_i32_0 = arith.constant 0 : i32
    %c0_i32_1 = arith.constant 0 : i32
    return %c0_i32, %c0_i32_0 : i32, i32
  }
  func.func @transform_2(%arg0: i32) -> (i32, i32) {
    %c0_i32 = arith.constant 0 : i32
    %c0_i32_0 = arith.constant 0 : i32
    %c0_i32_1 = arith.constant 0 : i32
    return %c0_i32, %c0_i32_0 : i32, i32
  }
  func.func @transform_3(%arg0: i32) -> (i32, i32) {
    %c0_i32 = arith.constant 0 : i32
    %c0_i32_0 = arith.constant 0 : i32
    %c0_i32_1 = arith.constant 0 : i32
    return %c0_i32, %c0_i32_0 : i32, i32
  }
  func.func @transform_4(%arg0: i32) -> (i32, i32) {
    %c0_i32 = arith.constant 0 : i32
    %c0_i32_0 = arith.constant 0 : i32
    %c0_i32_1 = arith.constant 0 : i32
    return %c0_i32, %c0_i32_0 : i32, i32
  }
  func.func @transform_5(%arg0: i32) -> (i32, i32) {
    %c0_i32 = arith.constant 0 : i32
    %c0_i32_0 = arith.constant 0 : i32
    %c0_i32_1 = arith.constant 0 : i32
    return %c0_i32, %c0_i32_0 : i32, i32
  }
  func.func @transform_6(%arg0: i32) -> (i32, i32) {
    %c0_i32 = arith.constant 0 : i32
    %c0_i32_0 = arith.constant 0 : i32
    %c0_i32_1 = arith.constant 0 : i32
    return %c0_i32, %c0_i32_0 : i32, i32
  }
  func.func @transform_7(%arg0: i32) -> (i32, i32) {
    %c0_i32 = arith.constant 0 : i32
    %c0_i32_0 = arith.constant 0 : i32
    return %arg0, %c0_i32 : i32, i32
  }
  func.func @transform_8(%arg0: i32) -> (i32, i32) {
    %c0_i32 = arith.constant 0 : i32
    %c0_i32_0 = arith.constant 0 : i32
    return %arg0, %c0_i32 : i32, i32
  }
}

module attributes {stable_mosaic.version = 11 : i64} {
  func.func @_flash_attn_kernel(%arg0: i32, %arg1: i32, %arg2: memref<1xi32, #tpu.memory_space<smem>>, %arg3: memref<1xi32, #tpu.memory_space<smem>>, %arg4: memref<1xi32, #tpu.memory_space<smem>>, %arg5: memref<1xi32, #tpu.memory_space<smem>>, %arg6: memref<128x1xi32, #tpu.memory_space<vmem>>, %arg7: memref<1x128xi32, #tpu.memory_space<vmem>>, %arg8: memref<128x128xbf16, #tpu.memory_space<vmem>>, %arg9: memref<128x128xbf16, #tpu.memory_space<vmem>>, %arg10: memref<128x128xbf16, #tpu.memory_space<vmem>>, %arg11: memref<128x128xbf16, #tpu.memory_space<vmem>>, %arg12: memref<128x1xf32, #tpu.memory_space<vmem>>, %arg13: memref<128x1xf32, #tpu.memory_space<vmem>>, %arg14: memref<128x128xf32, #tpu.memory_space<vmem>>) attributes {dimension_semantics = [#tpu.dimension_semantics<parallel>, #tpu.dimension_semantics<arbitrary>], iteration_bounds = array<i64: 1, 1>, scalar_prefetch = 4 : i64, scratch_operands = 3 : i64, tpu.core_type = #tpu.core_type<tc>, window_params = [{transform_indices = @transform_0, window_bounds = array<i64: 128, 1>}, {transform_indices = @transform_1, window_bounds = array<i64: 1, 128>}, {transform_indices = @transform_2, window_bounds = array<i64: 128, 128>}, {transform_indices = @transform_3, window_bounds = array<i64: 128, 128>}, {transform_indices = @transform_4, window_bounds = array<i64: 128, 128>}, {transform_indices = @transform_5, window_bounds = array<i64: 128, 128>}]} {
    %c0_i32 = arith.constant 0 : i32
    %0 = arith.cmpi eq, %arg1, %c0_i32 : i32
    %1 = arith.extui %0 : i1 to i32
    %c0_i32_0 = arith.constant 0 : i32
    %2 = arith.cmpi ne, %1, %c0_i32_0 : i32
    scf.if %2 {
      %cst = arith.constant 0xFF800000 : f32
      %19 = vector.broadcast %cst : f32 to vector<128x1xf32>
      %c0 = arith.constant 0 : index
      %c0_4 = arith.constant 0 : index
      %20 = vector.load %arg12[%c0, %c0_4] : memref<128x1xf32, #tpu.memory_space<vmem>>, vector<128x1xf32>
      tpu.vector_store %arg12[%c0, %c0_4], %19 {strides = array<i32>} : memref<128x1xf32, #tpu.memory_space<vmem>>, vector<128x1xf32>,
      %cst_5 = arith.constant 0.000000e+00 : f32
      %21 = vector.broadcast %cst_5 : f32 to vector<128x1xf32>
      %c0_6 = arith.constant 0 : index
      %c0_7 = arith.constant 0 : index
      %22 = vector.load %arg13[%c0_6, %c0_7] : memref<128x1xf32, #tpu.memory_space<vmem>>, vector<128x1xf32>
      tpu.vector_store %arg13[%c0_6, %c0_7], %21 {strides = array<i32>} : memref<128x1xf32, #tpu.memory_space<vmem>>, vector<128x1xf32>,
      %cst_8 = arith.constant 0.000000e+00 : f32
      %23 = vector.broadcast %cst_8 : f32 to vector<128x128xf32>
      %c0_9 = arith.constant 0 : index
      %c0_10 = arith.constant 0 : index
      %24 = vector.load %arg14[%c0_9, %c0_10] : memref<128x128xf32, #tpu.memory_space<vmem>>, vector<128x128xf32>
      tpu.vector_store %arg14[%c0_9, %c0_10], %23 {strides = array<i32>} : memref<128x128xf32, #tpu.memory_space<vmem>>, vector<128x128xf32>,
    } else {
    }
    %3 = arith.index_cast %arg0 : i32 to index
    %4 = memref.load %arg3[%3] : memref<1xi32, #tpu.memory_space<smem>>
    %5 = arith.index_cast %arg1 : i32 to index
    %6 = memref.load %arg4[%5] : memref<1xi32, #tpu.memory_space<smem>>
    %7 = arith.cmpi sge, %4, %6 : i32
    %8 = arith.index_cast %arg1 : i32 to index
    %9 = memref.load %arg5[%8] : memref<1xi32, #tpu.memory_space<smem>>
    %10 = arith.index_cast %arg0 : i32 to index
    %11 = memref.load %arg2[%10] : memref<1xi32, #tpu.memory_space<smem>>
    %12 = arith.cmpi sge, %9, %11 : i32
    %13 = arith.andi %7, %12 : i1
    %14 = arith.extui %13 : i1 to i32
    %c0_i32_1 = arith.constant 0 : i32
    %15 = arith.cmpi ne, %14, %c0_i32_1 : i32
    scf.if %15 {
      %c0 = arith.constant 0 : index
      %c0_4 = arith.constant 0 : index
      %19 = vector.load %arg8[%c0, %c0_4] : memref<128x128xbf16, #tpu.memory_space<vmem>>, vector<128x128xbf16>
      %c0_5 = arith.constant 0 : index
      %c0_6 = arith.constant 0 : index
      %20 = vector.load %arg9[%c0_5, %c0_6] : memref<128x128xbf16, #tpu.memory_space<vmem>>, vector<128x128xbf16>
      %cst = arith.constant dense<0.000000e+00> : vector<128x128xf32>
      %21 = tpu.matmul %19, %20, %cst {dimension_numbers = #tpu.dot_dimension_numbers<[1], [1], [0], [0], [0, 0, 1, 0], [], []>} : vector<128x128xbf16>, vector<128x128xbf16>, vector<128x128xf32> -> vector<128x128xf32>
      %c0_7 = arith.constant 0 : index
      %c0_8 = arith.constant 0 : index
      %22 = vector.load %arg6[%c0_7, %c0_8] : memref<128x1xi32, #tpu.memory_space<vmem>>, vector<128x1xi32>
      %c0_9 = arith.constant 0 : index
      %c0_10 = arith.constant 0 : index
      %23 = vector.load %arg7[%c0_9, %c0_10] : memref<1x128xi32, #tpu.memory_space<vmem>>, vector<1x128xi32>
      %24 = vector.broadcast %22 : vector<128x1xi32> to vector<128x128xi32>
      %25 = vector.broadcast %23 : vector<1x128xi32> to vector<128x128xi32>
      %26 = arith.cmpi eq, %24, %25 : vector<128x128xi32>
      %cst_11 = arith.constant -1.000000e+30 : f32
      %27 = vector.broadcast %cst_11 : f32 to vector<128x128xf32>
      %28 = arith.select %26, %21, %27 : vector<128x128xi1>, vector<128x128xf32>
      %c0_12 = arith.constant 0 : index
      %c0_13 = arith.constant 0 : index
      %29 = vector.load %arg12[%c0_12, %c0_13] : memref<128x1xf32, #tpu.memory_space<vmem>>, vector<128x1xf32>
      %cst_14 = arith.constant dense<0xFF800000> : vector<128xf32>
      %30 = vector.multi_reduction <maximumf>, %28, %cst_14 [1] : vector<128x128xf32> to vector<128xf32>
      %31 = vector.shape_cast %30 : vector<128xf32> to vector<128x1xf32>
      %32 = arith.maximumf %29, %31 : vector<128x1xf32>
      %c0_15 = arith.constant 0 : index
      %c0_16 = arith.constant 0 : index
      %33 = vector.load %arg12[%c0_15, %c0_16] : memref<128x1xf32, #tpu.memory_space<vmem>>, vector<128x1xf32>
      %34 = arith.subf %33, %32 : vector<128x1xf32>
      %35 = math.exp %34 : vector<128x1xf32>
      %36 = vector.broadcast %32 : vector<128x1xf32> to vector<128x128xf32>
      %37 = arith.subf %28, %36 : vector<128x128xf32>
      %38 = math.exp %37 : vector<128x128xf32>
      %c0_17 = arith.constant 0 : index
      %c0_18 = arith.constant 0 : index
      %39 = vector.load %arg13[%c0_17, %c0_18] : memref<128x1xf32, #tpu.memory_space<vmem>>, vector<128x1xf32>
      %40 = arith.mulf %35, %39 : vector<128x1xf32>
      %cst_19 = arith.constant dense<0.000000e+00> : vector<128xf32>
      %41 = vector.multi_reduction <add>, %38, %cst_19 [1] : vector<128x128xf32> to vector<128xf32>
      %42 = vector.shape_cast %41 : vector<128xf32> to vector<128x1xf32>
      %43 = arith.addf %40, %42 : vector<128x1xf32>
      %c0_20 = arith.constant 0 : index
      %c0_21 = arith.constant 0 : index
      %44 = vector.load %arg13[%c0_20, %c0_21] : memref<128x1xf32, #tpu.memory_space<vmem>>, vector<128x1xf32>
      tpu.vector_store %arg13[%c0_20, %c0_21], %43 {strides = array<i32>} : memref<128x1xf32, #tpu.memory_space<vmem>>, vector<128x1xf32>,
      %c0_22 = arith.constant 0 : index
      %c0_23 = arith.constant 0 : index
      %45 = vector.load %arg14[%c0_22, %c0_23] : memref<128x128xf32, #tpu.memory_space<vmem>>, vector<128x128xf32>
      %46 = vector.broadcast %35 : vector<128x1xf32> to vector<128x128xf32>
      %47 = arith.mulf %46, %45 : vector<128x128xf32>
      %48 = arith.truncf %38 : vector<128x128xf32> to vector<128x128xbf16>
      %c0_24 = arith.constant 0 : index
      %c0_25 = arith.constant 0 : index
      %49 = vector.load %arg10[%c0_24, %c0_25] : memref<128x128xbf16, #tpu.memory_space<vmem>>, vector<128x128xbf16>
      %cst_26 = arith.constant dense<0.000000e+00> : vector<128x128xf32>
      %50 = tpu.matmul %48, %49, %cst_26 {dimension_numbers = #tpu.dot_dimension_numbers<[1], [0], [0], [1], [0, 0, 1, 1], [], []>} : vector<128x128xbf16>, vector<128x128xbf16>, vector<128x128xf32> -> vector<128x128xf32>
      %51 = arith.addf %47, %50 : vector<128x128xf32>
      %c0_27 = arith.constant 0 : index
      %c0_28 = arith.constant 0 : index
      %52 = vector.load %arg14[%c0_27, %c0_28] : memref<128x128xf32, #tpu.memory_space<vmem>>, vector<128x128xf32>
      tpu.vector_store %arg14[%c0_27, %c0_28], %51 {strides = array<i32>} : memref<128x128xf32, #tpu.memory_space<vmem>>, vector<128x128xf32>,
      %c0_29 = arith.constant 0 : index
      %c0_30 = arith.constant 0 : index
      %53 = vector.load %arg12[%c0_29, %c0_30] : memref<128x1xf32, #tpu.memory_space<vmem>>, vector<128x1xf32>
      tpu.vector_store %arg12[%c0_29, %c0_30], %32 {strides = array<i32>} : memref<128x1xf32, #tpu.memory_space<vmem>>, vector<128x1xf32>,
    } else {
    }
    %c0_i32_2 = arith.constant 0 : i32
    %16 = arith.cmpi eq, %arg1, %c0_i32_2 : i32
    %17 = arith.extui %16 : i1 to i32
    %c0_i32_3 = arith.constant 0 : i32
    %18 = arith.cmpi ne, %17, %c0_i32_3 : i32
    scf.if %18 {
      %c0 = arith.constant 0 : index
      %c0_4 = arith.constant 0 : index
      %19 = vector.load %arg13[%c0, %c0_4] : memref<128x1xf32, #tpu.memory_space<vmem>>, vector<128x1xf32>
      %cst = arith.constant 1.000000e-30 : f32
      %20 = vector.broadcast %cst : f32 to vector<128x1xf32>
      %21 = arith.maximumf %19, %20 : vector<128x1xf32>
      %c0_5 = arith.constant 0 : index
      %c0_6 = arith.constant 0 : index
      %22 = vector.load %arg14[%c0_5, %c0_6] : memref<128x128xf32, #tpu.memory_space<vmem>>, vector<128x128xf32>
      %23 = tpu.reciprocal %21 {approx = true} : vector<128x1xf32> -> vector<128x1xf32>
      %24 = vector.broadcast %23 : vector<128x1xf32> to vector<128x128xf32>
      %25 = arith.mulf %22, %24 : vector<128x128xf32>
      %26 = arith.truncf %25 : vector<128x128xf32> to vector<128x128xbf16>
      %c0_7 = arith.constant 0 : index
      %c0_8 = arith.constant 0 : index
      %27 = vector.load %arg11[%c0_7, %c0_8] : memref<128x128xbf16, #tpu.memory_space<vmem>>, vector<128x128xbf16>
      tpu.vector_store %arg11[%c0_7, %c0_8], %26 {strides = array<i32>} : memref<128x128xbf16, #tpu.memory_space<vmem>>, vector<128x128xbf16>,
    } else {
    }
    return
  }
  func.func @transform_0(%arg0: i32, %arg1: i32, %arg2: memref<1xi32, #tpu.memory_space<smem>>, %arg3: memref<1xi32, #tpu.memory_space<smem>>, %arg4: memref<1xi32, #tpu.memory_space<smem>>, %arg5: memref<1xi32, #tpu.memory_space<smem>>) -> (i32, i32) {
    %c0_i32 = arith.constant 0 : i32
    %c0_i32_0 = arith.constant 0 : i32
    return %arg0, %c0_i32 : i32, i32
  }
  func.func @transform_1(%arg0: i32, %arg1: i32, %arg2: memref<1xi32, #tpu.memory_space<smem>>, %arg3: memref<1xi32, #tpu.memory_space<smem>>, %arg4: memref<1xi32, #tpu.memory_space<smem>>, %arg5: memref<1xi32, #tpu.memory_space<smem>>) -> (i32, i32) {
    %c0_i32 = arith.constant 0 : i32
    %c0_i32_0 = arith.constant 0 : i32
    return %c0_i32, %arg1 : i32, i32
  }
  func.func @transform_2(%arg0: i32, %arg1: i32, %arg2: memref<1xi32, #tpu.memory_space<smem>>, %arg3: memref<1xi32, #tpu.memory_space<smem>>, %arg4: memref<1xi32, #tpu.memory_space<smem>>, %arg5: memref<1xi32, #tpu.memory_space<smem>>) -> (i32, i32) {
    %c0_i32 = arith.constant 0 : i32
    %c0_i32_0 = arith.constant 0 : i32
    return %arg0, %c0_i32 : i32, i32
  }
  func.func @transform_3(%arg0: i32, %arg1: i32, %arg2: memref<1xi32, #tpu.memory_space<smem>>, %arg3: memref<1xi32, #tpu.memory_space<smem>>, %arg4: memref<1xi32, #tpu.memory_space<smem>>, %arg5: memref<1xi32, #tpu.memory_space<smem>>) -> (i32, i32) {
    %c1_i32 = arith.constant 1 : i32
    %c0_i32 = arith.constant 0 : i32
    return %arg1, %c1_i32 : i32, i32
  }
  func.func @transform_4(%arg0: i32, %arg1: i32, %arg2: memref<1xi32, #tpu.memory_space<smem>>, %arg3: memref<1xi32, #tpu.memory_space<smem>>, %arg4: memref<1xi32, #tpu.memory_space<smem>>, %arg5: memref<1xi32, #tpu.memory_space<smem>>) -> (i32, i32) {
    %c2_i32 = arith.constant 2 : i32
    %c0_i32 = arith.constant 0 : i32
    return %arg1, %c2_i32 : i32, i32
  }
  func.func @transform_5(%arg0: i32, %arg1: i32, %arg2: memref<1xi32, #tpu.memory_space<smem>>, %arg3: memref<1xi32, #tpu.memory_space<smem>>, %arg4: memref<1xi32, #tpu.memory_space<smem>>, %arg5: memref<1xi32, #tpu.memory_space<smem>>) -> (i32, i32) {
    %c0_i32 = arith.constant 0 : i32
    %c0_i32_0 = arith.constant 0 : i32
    return %arg0, %c0_i32 : i32, i32
  }
}

module attributes {stable_mosaic.version = 11 : i64} {
  func.func @_block_tail_qkv_kernel(%arg0: i32, %arg1: memref<128x128xbf16, #tpu.memory_space<vmem>>, %arg2: memref<128x128xbf16, #tpu.memory_space<vmem>>, %arg3: memref<1x128xf32, #tpu.memory_space<vmem>>, %arg4: memref<1x128xf32, #tpu.memory_space<vmem>>, %arg5: memref<1x256xf32, #tpu.memory_space<vmem>>, %arg6: memref<128x128xbf16, #tpu.memory_space<vmem>>, %arg7: memref<1x128xf32, #tpu.memory_space<vmem>>, %arg8: memref<128x256xbf16, #tpu.memory_space<vmem>>, %arg9: memref<1x256xf32, #tpu.memory_space<vmem>>, %arg10: memref<128x256xbf16, #tpu.memory_space<vmem>>, %arg11: memref<1x256xf32, #tpu.memory_space<vmem>>, %arg12: memref<256x128xbf16, #tpu.memory_space<vmem>>, %arg13: memref<1x128xf32, #tpu.memory_space<vmem>>, %arg14: memref<128x384xbf16, #tpu.memory_space<vmem>>, %arg15: memref<1x384xf32, #tpu.memory_space<vmem>>, %arg16: memref<128x128xbf16, #tpu.memory_space<vmem>>, %arg17: memref<128x384xbf16, #tpu.memory_space<vmem>>) attributes {dimension_semantics = [#tpu.dimension_semantics<parallel>], iteration_bounds = array<i64: 1>, scalar_prefetch = 0 : i64, scratch_operands = 0 : i64, tpu.core_type = #tpu.core_type<tc>, window_params = [{transform_indices = @transform_0, window_bounds = array<i64: 128, 128>}, {transform_indices = @transform_1, window_bounds = array<i64: 128, 128>}, {pipeline_mode = #tpu.pipeline_mode<synchronous>, transform_indices = @transform_2, window_bounds = array<i64: 1, 128>}, {pipeline_mode = #tpu.pipeline_mode<synchronous>, transform_indices = @transform_3, window_bounds = array<i64: 1, 128>}, {pipeline_mode = #tpu.pipeline_mode<synchronous>, transform_indices = @transform_4, window_bounds = array<i64: 1, 256>}, {pipeline_mode = #tpu.pipeline_mode<synchronous>, transform_indices = @transform_5, window_bounds = array<i64: 128, 128>}, {pipeline_mode = #tpu.pipeline_mode<synchronous>, transform_indices = @transform_6, window_bounds = array<i64: 1, 128>}, {pipeline_mode = #tpu.pipeline_mode<synchronous>, transform_indices = @transform_7, window_bounds = array<i64: 128, 256>}, {pipeline_mode = #tpu.pipeline_mode<synchronous>, transform_indices = @transform_8, window_bounds = array<i64: 1, 256>}, {pipeline_mode = #tpu.pipeline_mode<synchronous>, transform_indices = @transform_9, window_bounds = array<i64: 128, 256>}, {pipeline_mode = #tpu.pipeline_mode<synchronous>, transform_indices = @transform_10, window_bounds = array<i64: 1, 256>}, {pipeline_mode = #tpu.pipeline_mode<synchronous>, transform_indices = @transform_11, window_bounds = array<i64: 256, 128>}, {pipeline_mode = #tpu.pipeline_mode<synchronous>, transform_indices = @transform_12, window_bounds = array<i64: 1, 128>}, {pipeline_mode = #tpu.pipeline_mode<synchronous>, transform_indices = @transform_13, window_bounds = array<i64: 128, 384>}, {pipeline_mode = #tpu.pipeline_mode<synchronous>, transform_indices = @transform_14, window_bounds = array<i64: 1, 384>}, {transform_indices = @transform_15, window_bounds = array<i64: 128, 128>}, {transform_indices = @transform_16, window_bounds = array<i64: 128, 384>}]} {
    %c0 = arith.constant 0 : index
    %c0_0 = arith.constant 0 : index
    %0 = vector.load %arg1[%c0, %c0_0] : memref<128x128xbf16, #tpu.memory_space<vmem>>, vector<128x128xbf16>
    %1 = arith.extf %0 : vector<128x128xbf16> to vector<128x128xf32>
    %c0_1 = arith.constant 0 : index
    %c0_2 = arith.constant 0 : index
    %2 = vector.load %arg2[%c0_1, %c0_2] : memref<128x128xbf16, #tpu.memory_space<vmem>>, vector<128x128xbf16>
    %c0_3 = arith.constant 0 : index
    %c0_4 = arith.constant 0 : index
    %3 = vector.load %arg6[%c0_3, %c0_4] : memref<128x128xbf16, #tpu.memory_space<vmem>>, vector<128x128xbf16>
    %cst = arith.constant dense<0.000000e+00> : vector<128x128xf32>
    %4 = tpu.matmul %2, %3, %cst {dimension_numbers = #tpu.dot_dimension_numbers<[1], [0], [0], [1], [0, 0, 1, 1], [], []>} : vector<128x128xbf16>, vector<128x128xbf16>, vector<128x128xf32> -> vector<128x128xf32>
    %5 = arith.addf %1, %4 : vector<128x128xf32>
    %c0_5 = arith.constant 0 : index
    %c0_6 = arith.constant 0 : index
    %6 = vector.load %arg7[%c0_5, %c0_6] : memref<1x128xf32, #tpu.memory_space<vmem>>, vector<1x128xf32>
    %7 = vector.broadcast %6 : vector<1x128xf32> to vector<128x128xf32>
    %8 = arith.addf %5, %7 : vector<128x128xf32>
    %c0_7 = arith.constant 0 : index
    %c0_8 = arith.constant 0 : index
    %9 = vector.load %arg3[%c0_7, %c0_8] : memref<1x128xf32, #tpu.memory_space<vmem>>, vector<1x128xf32>
    %c0_9 = arith.constant 0 : index
    %c0_10 = arith.constant 0 : index
    %10 = vector.load %arg4[%c0_9, %c0_10] : memref<1x128xf32, #tpu.memory_space<vmem>>, vector<1x128xf32>
    %11 = arith.mulf %8, %8 : vector<128x128xf32>
    %12 = vector.broadcast %9 : vector<1x128xf32> to vector<128x128xf32>
    %13 = arith.mulf %11, %12 : vector<128x128xf32>
    %cst_11 = arith.constant dense<0.000000e+00> : vector<128xf32>
    %14 = vector.multi_reduction <add>, %13, %cst_11 [1] : vector<128x128xf32> to vector<128xf32>
    %15 = vector.shape_cast %14 : vector<128xf32> to vector<128x1xf32>
    %cst_12 = arith.constant 4.000000e+00 : f32
    %16 = vector.broadcast %cst_12 : f32 to vector<128x1xf32>
    %17 = arith.divf %15, %16 : vector<128x1xf32>
    %cst_13 = arith.constant 9.99999997E-7 : f32
    %18 = vector.broadcast %cst_13 : f32 to vector<128x1xf32>
    %19 = arith.addf %17, %18 : vector<128x1xf32>
    %20 = math.rsqrt %19 : vector<128x1xf32>
    %21 = vector.broadcast %10 : vector<1x128xf32> to vector<128x128xf32>
    %22 = arith.mulf %8, %21 : vector<128x128xf32>
    %cst_14 = arith.constant dense<0.000000e+00> : vector<128xf32>
    %23 = vector.multi_reduction <add>, %22, %cst_14 [1] : vector<128x128xf32> to vector<128xf32>
    %24 = vector.shape_cast %23 : vector<128xf32> to vector<128x1xf32>
    %cst_15 = arith.constant 8.000000e+00 : f32
    %25 = vector.broadcast %cst_15 : f32 to vector<128x1xf32>
    %26 = arith.divf %24, %25 : vector<128x1xf32>
    %27 = vector.broadcast %26 : vector<128x1xf32> to vector<128x128xf32>
    %28 = arith.subf %8, %27 : vector<128x128xf32>
    %29 = arith.mulf %28, %28 : vector<128x128xf32>
    %30 = vector.broadcast %10 : vector<1x128xf32> to vector<128x128xf32>
    %31 = arith.mulf %29, %30 : vector<128x128xf32>
    %cst_16 = arith.constant dense<0.000000e+00> : vector<128xf32>
    %32 = vector.multi_reduction <add>, %31, %cst_16 [1] : vector<128x128xf32> to vector<128xf32>
    %33 = vector.shape_cast %32 : vector<128xf32> to vector<128x1xf32>
    %cst_17 = arith.constant 8.000000e+00 : f32
    %34 = vector.broadcast %cst_17 : f32 to vector<128x1xf32>
    %35 = arith.divf %33, %34 : vector<128x1xf32>
    %cst_18 = arith.constant 9.99999997E-7 : f32
    %36 = vector.broadcast %cst_18 : f32 to vector<128x1xf32>
    %37 = arith.addf %35, %36 : vector<128x1xf32>
    %38 = math.rsqrt %37 : vector<128x1xf32>
    %39 = vector.broadcast %9 : vector<1x128xf32> to vector<128x128xf32>
    %40 = arith.mulf %39, %8 : vector<128x128xf32>
    %41 = vector.broadcast %20 : vector<128x1xf32> to vector<128x128xf32>
    %42 = arith.mulf %40, %41 : vector<128x128xf32>
    %43 = vector.broadcast %10 : vector<1x128xf32> to vector<128x128xf32>
    %44 = arith.mulf %43, %28 : vector<128x128xf32>
    %45 = vector.broadcast %38 : vector<128x1xf32> to vector<128x128xf32>
    %46 = arith.mulf %44, %45 : vector<128x128xf32>
    %47 = arith.addf %42, %46 : vector<128x128xf32>
    %48 = arith.truncf %47 : vector<128x128xf32> to vector<128x128xbf16>
    %c0_19 = arith.constant 0 : index
    %c0_20 = arith.constant 0 : index
    %49 = vector.load %arg8[%c0_19, %c0_20] : memref<128x256xbf16, #tpu.memory_space<vmem>>, vector<128x256xbf16>
    %cst_21 = arith.constant dense<0.000000e+00> : vector<128x256xf32>
    %50 = tpu.matmul %48, %49, %cst_21 {dimension_numbers = #tpu.dot_dimension_numbers<[1], [0], [0], [1], [0, 0, 1, 1], [], []>} : vector<128x128xbf16>, vector<128x256xbf16>, vector<128x256xf32> -> vector<128x256xf32>
    %c0_22 = arith.constant 0 : index
    %c0_23 = arith.constant 0 : index
    %51 = vector.load %arg9[%c0_22, %c0_23] : memref<1x256xf32, #tpu.memory_space<vmem>>, vector<1x256xf32>
    %52 = vector.broadcast %51 : vector<1x256xf32> to vector<128x256xf32>
    %53 = arith.addf %50, %52 : vector<128x256xf32>
    %c0_24 = arith.constant 0 : index
    %c0_25 = arith.constant 0 : index
    %54 = vector.load %arg10[%c0_24, %c0_25] : memref<128x256xbf16, #tpu.memory_space<vmem>>, vector<128x256xbf16>
    %cst_26 = arith.constant dense<0.000000e+00> : vector<128x256xf32>
    %55 = tpu.matmul %48, %54, %cst_26 {dimension_numbers = #tpu.dot_dimension_numbers<[1], [0], [0], [1], [0, 0, 1, 1], [], []>} : vector<128x128xbf16>, vector<128x256xbf16>, vector<128x256xf32> -> vector<128x256xf32>
    %c0_27 = arith.constant 0 : index
    %c0_28 = arith.constant 0 : index
    %56 = vector.load %arg11[%c0_27, %c0_28] : memref<1x256xf32, #tpu.memory_space<vmem>>, vector<1x256xf32>
    %57 = vector.broadcast %56 : vector<1x256xf32> to vector<128x256xf32>
    %58 = arith.addf %55, %57 : vector<128x256xf32>
    %59 = arith.mulf %58, %58 : vector<128x256xf32>
    %60 = arith.mulf %58, %59 : vector<128x256xf32>
    %cst_29 = arith.constant 4.471500e-02 : f32
    %61 = vector.broadcast %cst_29 : f32 to vector<128x256xf32>
    %62 = arith.mulf %61, %60 : vector<128x256xf32>
    %63 = arith.addf %58, %62 : vector<128x256xf32>
    %cst_30 = arith.constant 0.797884583 : f32
    %64 = vector.broadcast %cst_30 : f32 to vector<128x256xf32>
    %65 = arith.mulf %64, %63 : vector<128x256xf32>
    %66 = math.tanh %65 : vector<128x256xf32>
    %cst_31 = arith.constant 1.000000e+00 : f32
    %67 = vector.broadcast %cst_31 : f32 to vector<128x256xf32>
    %68 = arith.addf %67, %66 : vector<128x256xf32>
    %cst_32 = arith.constant 5.000000e-01 : f32
    %69 = vector.broadcast %cst_32 : f32 to vector<128x256xf32>
    %70 = arith.mulf %69, %68 : vector<128x256xf32>
    %71 = arith.mulf %58, %70 : vector<128x256xf32>
    %c0_33 = arith.constant 0 : index
    %c0_34 = arith.constant 0 : index
    %72 = vector.load %arg5[%c0_33, %c0_34] : memref<1x256xf32, #tpu.memory_space<vmem>>, vector<1x256xf32>
    %73 = vector.broadcast %72 : vector<1x256xf32> to vector<128x256xf32>
    %74 = arith.mulf %73, %53 : vector<128x256xf32>
    %cst_35 = arith.constant 1.000000e+00 : f32
    %75 = vector.broadcast %cst_35 : f32 to vector<1x256xf32>
    %76 = arith.subf %75, %72 : vector<1x256xf32>
    %77 = vector.broadcast %76 : vector<1x256xf32> to vector<128x256xf32>
    %78 = arith.addf %74, %77 : vector<128x256xf32>
    %79 = arith.mulf %71, %78 : vector<128x256xf32>
    %80 = arith.truncf %79 : vector<128x256xf32> to vector<128x256xbf16>
    %c0_36 = arith.constant 0 : index
    %c0_37 = arith.constant 0 : index
    %81 = vector.load %arg12[%c0_36, %c0_37] : memref<256x128xbf16, #tpu.memory_space<vmem>>, vector<256x128xbf16>
    %cst_38 = arith.constant dense<0.000000e+00> : vector<128x128xf32>
    %82 = tpu.matmul %80, %81, %cst_38 {dimension_numbers = #tpu.dot_dimension_numbers<[1], [0], [0], [1], [0, 0, 1, 1], [], []>} : vector<128x256xbf16>, vector<256x128xbf16>, vector<128x128xf32> -> vector<128x128xf32>
    %c0_39 = arith.constant 0 : index
    %c0_40 = arith.constant 0 : index
    %83 = vector.load %arg13[%c0_39, %c0_40] : memref<1x128xf32, #tpu.memory_space<vmem>>, vector<1x128xf32>
    %84 = vector.broadcast %83 : vector<1x128xf32> to vector<128x128xf32>
    %85 = arith.addf %82, %84 : vector<128x128xf32>
    %86 = arith.addf %8, %85 : vector<128x128xf32>
    %87 = arith.truncf %86 : vector<128x128xf32> to vector<128x128xbf16>
    %c0_41 = arith.constant 0 : index
    %c0_42 = arith.constant 0 : index
    %88 = vector.load %arg16[%c0_41, %c0_42] : memref<128x128xbf16, #tpu.memory_space<vmem>>, vector<128x128xbf16>
    tpu.vector_store %arg16[%c0_41, %c0_42], %87 {strides = array<i32>} : memref<128x128xbf16, #tpu.memory_space<vmem>>, vector<128x128xbf16>,
    %c0_43 = arith.constant 0 : index
    %c0_44 = arith.constant 0 : index
    %89 = vector.load %arg3[%c0_43, %c0_44] : memref<1x128xf32, #tpu.memory_space<vmem>>, vector<1x128xf32>
    %c0_45 = arith.constant 0 : index
    %c0_46 = arith.constant 0 : index
    %90 = vector.load %arg4[%c0_45, %c0_46] : memref<1x128xf32, #tpu.memory_space<vmem>>, vector<1x128xf32>
    %91 = arith.mulf %86, %86 : vector<128x128xf32>
    %92 = vector.broadcast %89 : vector<1x128xf32> to vector<128x128xf32>
    %93 = arith.mulf %91, %92 : vector<128x128xf32>
    %cst_47 = arith.constant dense<0.000000e+00> : vector<128xf32>
    %94 = vector.multi_reduction <add>, %93, %cst_47 [1] : vector<128x128xf32> to vector<128xf32>
    %95 = vector.shape_cast %94 : vector<128xf32> to vector<128x1xf32>
    %cst_48 = arith.constant 4.000000e+00 : f32
    %96 = vector.broadcast %cst_48 : f32 to vector<128x1xf32>
    %97 = arith.divf %95, %96 : vector<128x1xf32>
    %cst_49 = arith.constant 9.99999997E-7 : f32
    %98 = vector.broadcast %cst_49 : f32 to vector<128x1xf32>
    %99 = arith.addf %97, %98 : vector<128x1xf32>
    %100 = math.rsqrt %99 : vector<128x1xf32>
    %101 = vector.broadcast %90 : vector<1x128xf32> to vector<128x128xf32>
    %102 = arith.mulf %86, %101 : vector<128x128xf32>
    %cst_50 = arith.constant dense<0.000000e+00> : vector<128xf32>
    %103 = vector.multi_reduction <add>, %102, %cst_50 [1] : vector<128x128xf32> to vector<128xf32>
    %104 = vector.shape_cast %103 : vector<128xf32> to vector<128x1xf32>
    %cst_51 = arith.constant 8.000000e+00 : f32
    %105 = vector.broadcast %cst_51 : f32 to vector<128x1xf32>
    %106 = arith.divf %104, %105 : vector<128x1xf32>
    %107 = vector.broadcast %106 : vector<128x1xf32> to vector<128x128xf32>
    %108 = arith.subf %86, %107 : vector<128x128xf32>
    %109 = arith.mulf %108, %108 : vector<128x128xf32>
    %110 = vector.broadcast %90 : vector<1x128xf32> to vector<128x128xf32>
    %111 = arith.mulf %109, %110 : vector<128x128xf32>
    %cst_52 = arith.constant dense<0.000000e+00> : vector<128xf32>
    %112 = vector.multi_reduction <add>, %111, %cst_52 [1] : vector<128x128xf32> to vector<128xf32>
    %113 = vector.shape_cast %112 : vector<128xf32> to vector<128x1xf32>
    %cst_53 = arith.constant 8.000000e+00 : f32
    %114 = vector.broadcast %cst_53 : f32 to vector<128x1xf32>
    %115 = arith.divf %113, %114 : vector<128x1xf32>
    %cst_54 = arith.constant 9.99999997E-7 : f32
    %116 = vector.broadcast %cst_54 : f32 to vector<128x1xf32>
    %117 = arith.addf %115, %116 : vector<128x1xf32>
    %118 = math.rsqrt %117 : vector<128x1xf32>
    %119 = vector.broadcast %89 : vector<1x128xf32> to vector<128x128xf32>
    %120 = arith.mulf %119, %86 : vector<128x128xf32>
    %121 = vector.broadcast %100 : vector<128x1xf32> to vector<128x128xf32>
    %122 = arith.mulf %120, %121 : vector<128x128xf32>
    %123 = vector.broadcast %90 : vector<1x128xf32> to vector<128x128xf32>
    %124 = arith.mulf %123, %108 : vector<128x128xf32>
    %125 = vector.broadcast %118 : vector<128x1xf32> to vector<128x128xf32>
    %126 = arith.mulf %124, %125 : vector<128x128xf32>
    %127 = arith.addf %122, %126 : vector<128x128xf32>
    %128 = arith.truncf %127 : vector<128x128xf32> to vector<128x128xbf16>
    %c0_55 = arith.constant 0 : index
    %c0_56 = arith.constant 0 : index
    %129 = vector.load %arg14[%c0_55, %c0_56] : memref<128x384xbf16, #tpu.memory_space<vmem>>, vector<128x384xbf16>
    %cst_57 = arith.constant dense<0.000000e+00> : vector<128x384xf32>
    %130 = tpu.matmul %128, %129, %cst_57 {dimension_numbers = #tpu.dot_dimension_numbers<[1], [0], [0], [1], [0, 0, 1, 1], [], []>} : vector<128x128xbf16>, vector<128x384xbf16>, vector<128x384xf32> -> vector<128x384xf32>
    %c0_58 = arith.constant 0 : index
    %c0_59 = arith.constant 0 : index
    %131 = vector.load %arg15[%c0_58, %c0_59] : memref<1x384xf32, #tpu.memory_space<vmem>>, vector<1x384xf32>
    %132 = vector.broadcast %131 : vector<1x384xf32> to vector<128x384xf32>
    %133 = arith.addf %130, %132 : vector<128x384xf32>
    %134 = arith.truncf %133 : vector<128x384xf32> to vector<128x384xbf16>
    %c0_60 = arith.constant 0 : index
    %c0_61 = arith.constant 0 : index
    %135 = vector.load %arg17[%c0_60, %c0_61] : memref<128x384xbf16, #tpu.memory_space<vmem>>, vector<128x384xbf16>
    tpu.vector_store %arg17[%c0_60, %c0_61], %134 {strides = array<i32>} : memref<128x384xbf16, #tpu.memory_space<vmem>>, vector<128x384xbf16>,
    return
  }
  func.func @transform_0(%arg0: i32) -> (i32, i32) {
    %c0_i32 = arith.constant 0 : i32
    %c0_i32_0 = arith.constant 0 : i32
    return %arg0, %c0_i32 : i32, i32
  }
  func.func @transform_1(%arg0: i32) -> (i32, i32) {
    %c0_i32 = arith.constant 0 : i32
    %c0_i32_0 = arith.constant 0 : i32
    return %arg0, %c0_i32 : i32, i32
  }
  func.func @transform_2(%arg0: i32) -> (i32, i32) {
    %c0_i32 = arith.constant 0 : i32
    %c0_i32_0 = arith.constant 0 : i32
    %c0_i32_1 = arith.constant 0 : i32
    return %c0_i32, %c0_i32_0 : i32, i32
  }
  func.func @transform_3(%arg0: i32) -> (i32, i32) {
    %c0_i32 = arith.constant 0 : i32
    %c0_i32_0 = arith.constant 0 : i32
    %c0_i32_1 = arith.constant 0 : i32
    return %c0_i32, %c0_i32_0 : i32, i32
  }
  func.func @transform_4(%arg0: i32) -> (i32, i32) {
    %c0_i32 = arith.constant 0 : i32
    %c0_i32_0 = arith.constant 0 : i32
    %c0_i32_1 = arith.constant 0 : i32
    return %c0_i32, %c0_i32_0 : i32, i32
  }
  func.func @transform_5(%arg0: i32) -> (i32, i32) {
    %c0_i32 = arith.constant 0 : i32
    %c0_i32_0 = arith.constant 0 : i32
    %c0_i32_1 = arith.constant 0 : i32
    return %c0_i32, %c0_i32_0 : i32, i32
  }
  func.func @transform_6(%arg0: i32) -> (i32, i32) {
    %c0_i32 = arith.constant 0 : i32
    %c0_i32_0 = arith.constant 0 : i32
    %c0_i32_1 = arith.constant 0 : i32
    return %c0_i32, %c0_i32_0 : i32, i32
  }
  func.func @transform_7(%arg0: i32) -> (i32, i32) {
    %c0_i32 = arith.constant 0 : i32
    %c0_i32_0 = arith.constant 0 : i32
    %c0_i32_1 = arith.constant 0 : i32
    return %c0_i32, %c0_i32_0 : i32, i32
  }
  func.func @transform_8(%arg0: i32) -> (i32, i32) {
    %c0_i32 = arith.constant 0 : i32
    %c0_i32_0 = arith.constant 0 : i32
    %c0_i32_1 = arith.constant 0 : i32
    return %c0_i32, %c0_i32_0 : i32, i32
  }
  func.func @transform_9(%arg0: i32) -> (i32, i32) {
    %c0_i32 = arith.constant 0 : i32
    %c0_i32_0 = arith.constant 0 : i32
    %c0_i32_1 = arith.constant 0 : i32
    return %c0_i32, %c0_i32_0 : i32, i32
  }
  func.func @transform_10(%arg0: i32) -> (i32, i32) {
    %c0_i32 = arith.constant 0 : i32
    %c0_i32_0 = arith.constant 0 : i32
    %c0_i32_1 = arith.constant 0 : i32
    return %c0_i32, %c0_i32_0 : i32, i32
  }
  func.func @transform_11(%arg0: i32) -> (i32, i32) {
    %c0_i32 = arith.constant 0 : i32
    %c0_i32_0 = arith.constant 0 : i32
    %c0_i32_1 = arith.constant 0 : i32
    return %c0_i32, %c0_i32_0 : i32, i32
  }
  func.func @transform_12(%arg0: i32) -> (i32, i32) {
    %c0_i32 = arith.constant 0 : i32
    %c0_i32_0 = arith.constant 0 : i32
    %c0_i32_1 = arith.constant 0 : i32
    return %c0_i32, %c0_i32_0 : i32, i32
  }
  func.func @transform_13(%arg0: i32) -> (i32, i32) {
    %c0_i32 = arith.constant 0 : i32
    %c0_i32_0 = arith.constant 0 : i32
    %c0_i32_1 = arith.constant 0 : i32
    return %c0_i32, %c0_i32_0 : i32, i32
  }
  func.func @transform_14(%arg0: i32) -> (i32, i32) {
    %c0_i32 = arith.constant 0 : i32
    %c0_i32_0 = arith.constant 0 : i32
    %c0_i32_1 = arith.constant 0 : i32
    return %c0_i32, %c0_i32_0 : i32, i32
  }
  func.func @transform_15(%arg0: i32) -> (i32, i32) {
    %c0_i32 = arith.constant 0 : i32
    %c0_i32_0 = arith.constant 0 : i32
    return %arg0, %c0_i32 : i32, i32
  }
  func.func @transform_16(%arg0: i32) -> (i32, i32) {
    %c0_i32 = arith.constant 0 : i32
    %c0_i32_0 = arith.constant 0 : i32
    return %arg0, %c0_i32 : i32, i32
  }
}

module attributes {stable_mosaic.version = 11 : i64} {
  func.func @_block_tail_kernel(%arg0: i32, %arg1: memref<128x128xbf16, #tpu.memory_space<vmem>>, %arg2: memref<128x128xbf16, #tpu.memory_space<vmem>>, %arg3: memref<1x128xf32, #tpu.memory_space<vmem>>, %arg4: memref<1x128xf32, #tpu.memory_space<vmem>>, %arg5: memref<1x256xf32, #tpu.memory_space<vmem>>, %arg6: memref<128x128xbf16, #tpu.memory_space<vmem>>, %arg7: memref<1x128xf32, #tpu.memory_space<vmem>>, %arg8: memref<128x256xbf16, #tpu.memory_space<vmem>>, %arg9: memref<1x256xf32, #tpu.memory_space<vmem>>, %arg10: memref<128x256xbf16, #tpu.memory_space<vmem>>, %arg11: memref<1x256xf32, #tpu.memory_space<vmem>>, %arg12: memref<256x128xbf16, #tpu.memory_space<vmem>>, %arg13: memref<1x128xf32, #tpu.memory_space<vmem>>, %arg14: memref<128x128xbf16, #tpu.memory_space<vmem>>) attributes {dimension_semantics = [#tpu.dimension_semantics<parallel>], iteration_bounds = array<i64: 1>, scalar_prefetch = 0 : i64, scratch_operands = 0 : i64, tpu.core_type = #tpu.core_type<tc>, window_params = [{transform_indices = @transform_0, window_bounds = array<i64: 128, 128>}, {transform_indices = @transform_1, window_bounds = array<i64: 128, 128>}, {pipeline_mode = #tpu.pipeline_mode<synchronous>, transform_indices = @transform_2, window_bounds = array<i64: 1, 128>}, {pipeline_mode = #tpu.pipeline_mode<synchronous>, transform_indices = @transform_3, window_bounds = array<i64: 1, 128>}, {pipeline_mode = #tpu.pipeline_mode<synchronous>, transform_indices = @transform_4, window_bounds = array<i64: 1, 256>}, {pipeline_mode = #tpu.pipeline_mode<synchronous>, transform_indices = @transform_5, window_bounds = array<i64: 128, 128>}, {pipeline_mode = #tpu.pipeline_mode<synchronous>, transform_indices = @transform_6, window_bounds = array<i64: 1, 128>}, {pipeline_mode = #tpu.pipeline_mode<synchronous>, transform_indices = @transform_7, window_bounds = array<i64: 128, 256>}, {pipeline_mode = #tpu.pipeline_mode<synchronous>, transform_indices = @transform_8, window_bounds = array<i64: 1, 256>}, {pipeline_mode = #tpu.pipeline_mode<synchronous>, transform_indices = @transform_9, window_bounds = array<i64: 128, 256>}, {pipeline_mode = #tpu.pipeline_mode<synchronous>, transform_indices = @transform_10, window_bounds = array<i64: 1, 256>}, {pipeline_mode = #tpu.pipeline_mode<synchronous>, transform_indices = @transform_11, window_bounds = array<i64: 256, 128>}, {pipeline_mode = #tpu.pipeline_mode<synchronous>, transform_indices = @transform_12, window_bounds = array<i64: 1, 128>}, {transform_indices = @transform_13, window_bounds = array<i64: 128, 128>}]} {
    %c0 = arith.constant 0 : index
    %c0_0 = arith.constant 0 : index
    %0 = vector.load %arg1[%c0, %c0_0] : memref<128x128xbf16, #tpu.memory_space<vmem>>, vector<128x128xbf16>
    %1 = arith.extf %0 : vector<128x128xbf16> to vector<128x128xf32>
    %c0_1 = arith.constant 0 : index
    %c0_2 = arith.constant 0 : index
    %2 = vector.load %arg2[%c0_1, %c0_2] : memref<128x128xbf16, #tpu.memory_space<vmem>>, vector<128x128xbf16>
    %c0_3 = arith.constant 0 : index
    %c0_4 = arith.constant 0 : index
    %3 = vector.load %arg6[%c0_3, %c0_4] : memref<128x128xbf16, #tpu.memory_space<vmem>>, vector<128x128xbf16>
    %cst = arith.constant dense<0.000000e+00> : vector<128x128xf32>
    %4 = tpu.matmul %2, %3, %cst {dimension_numbers = #tpu.dot_dimension_numbers<[1], [0], [0], [1], [0, 0, 1, 1], [], []>} : vector<128x128xbf16>, vector<128x128xbf16>, vector<128x128xf32> -> vector<128x128xf32>
    %5 = arith.addf %1, %4 : vector<128x128xf32>
    %c0_5 = arith.constant 0 : index
    %c0_6 = arith.constant 0 : index
    %6 = vector.load %arg7[%c0_5, %c0_6] : memref<1x128xf32, #tpu.memory_space<vmem>>, vector<1x128xf32>
    %7 = vector.broadcast %6 : vector<1x128xf32> to vector<128x128xf32>
    %8 = arith.addf %5, %7 : vector<128x128xf32>
    %c0_7 = arith.constant 0 : index
    %c0_8 = arith.constant 0 : index
    %9 = vector.load %arg3[%c0_7, %c0_8] : memref<1x128xf32, #tpu.memory_space<vmem>>, vector<1x128xf32>
    %c0_9 = arith.constant 0 : index
    %c0_10 = arith.constant 0 : index
    %10 = vector.load %arg4[%c0_9, %c0_10] : memref<1x128xf32, #tpu.memory_space<vmem>>, vector<1x128xf32>
    %11 = arith.mulf %8, %8 : vector<128x128xf32>
    %12 = vector.broadcast %9 : vector<1x128xf32> to vector<128x128xf32>
    %13 = arith.mulf %11, %12 : vector<128x128xf32>
    %cst_11 = arith.constant dense<0.000000e+00> : vector<128xf32>
    %14 = vector.multi_reduction <add>, %13, %cst_11 [1] : vector<128x128xf32> to vector<128xf32>
    %15 = vector.shape_cast %14 : vector<128xf32> to vector<128x1xf32>
    %cst_12 = arith.constant 4.000000e+00 : f32
    %16 = vector.broadcast %cst_12 : f32 to vector<128x1xf32>
    %17 = arith.divf %15, %16 : vector<128x1xf32>
    %cst_13 = arith.constant 9.99999997E-7 : f32
    %18 = vector.broadcast %cst_13 : f32 to vector<128x1xf32>
    %19 = arith.addf %17, %18 : vector<128x1xf32>
    %20 = math.rsqrt %19 : vector<128x1xf32>
    %21 = vector.broadcast %10 : vector<1x128xf32> to vector<128x128xf32>
    %22 = arith.mulf %8, %21 : vector<128x128xf32>
    %cst_14 = arith.constant dense<0.000000e+00> : vector<128xf32>
    %23 = vector.multi_reduction <add>, %22, %cst_14 [1] : vector<128x128xf32> to vector<128xf32>
    %24 = vector.shape_cast %23 : vector<128xf32> to vector<128x1xf32>
    %cst_15 = arith.constant 8.000000e+00 : f32
    %25 = vector.broadcast %cst_15 : f32 to vector<128x1xf32>
    %26 = arith.divf %24, %25 : vector<128x1xf32>
    %27 = vector.broadcast %26 : vector<128x1xf32> to vector<128x128xf32>
    %28 = arith.subf %8, %27 : vector<128x128xf32>
    %29 = arith.mulf %28, %28 : vector<128x128xf32>
    %30 = vector.broadcast %10 : vector<1x128xf32> to vector<128x128xf32>
    %31 = arith.mulf %29, %30 : vector<128x128xf32>
    %cst_16 = arith.constant dense<0.000000e+00> : vector<128xf32>
    %32 = vector.multi_reduction <add>, %31, %cst_16 [1] : vector<128x128xf32> to vector<128xf32>
    %33 = vector.shape_cast %32 : vector<128xf32> to vector<128x1xf32>
    %cst_17 = arith.constant 8.000000e+00 : f32
    %34 = vector.broadcast %cst_17 : f32 to vector<128x1xf32>
    %35 = arith.divf %33, %34 : vector<128x1xf32>
    %cst_18 = arith.constant 9.99999997E-7 : f32
    %36 = vector.broadcast %cst_18 : f32 to vector<128x1xf32>
    %37 = arith.addf %35, %36 : vector<128x1xf32>
    %38 = math.rsqrt %37 : vector<128x1xf32>
    %39 = vector.broadcast %9 : vector<1x128xf32> to vector<128x128xf32>
    %40 = arith.mulf %39, %8 : vector<128x128xf32>
    %41 = vector.broadcast %20 : vector<128x1xf32> to vector<128x128xf32>
    %42 = arith.mulf %40, %41 : vector<128x128xf32>
    %43 = vector.broadcast %10 : vector<1x128xf32> to vector<128x128xf32>
    %44 = arith.mulf %43, %28 : vector<128x128xf32>
    %45 = vector.broadcast %38 : vector<128x1xf32> to vector<128x128xf32>
    %46 = arith.mulf %44, %45 : vector<128x128xf32>
    %47 = arith.addf %42, %46 : vector<128x128xf32>
    %48 = arith.truncf %47 : vector<128x128xf32> to vector<128x128xbf16>
    %c0_19 = arith.constant 0 : index
    %c0_20 = arith.constant 0 : index
    %49 = vector.load %arg8[%c0_19, %c0_20] : memref<128x256xbf16, #tpu.memory_space<vmem>>, vector<128x256xbf16>
    %cst_21 = arith.constant dense<0.000000e+00> : vector<128x256xf32>
    %50 = tpu.matmul %48, %49, %cst_21 {dimension_numbers = #tpu.dot_dimension_numbers<[1], [0], [0], [1], [0, 0, 1, 1], [], []>} : vector<128x128xbf16>, vector<128x256xbf16>, vector<128x256xf32> -> vector<128x256xf32>
    %c0_22 = arith.constant 0 : index
    %c0_23 = arith.constant 0 : index
    %51 = vector.load %arg9[%c0_22, %c0_23] : memref<1x256xf32, #tpu.memory_space<vmem>>, vector<1x256xf32>
    %52 = vector.broadcast %51 : vector<1x256xf32> to vector<128x256xf32>
    %53 = arith.addf %50, %52 : vector<128x256xf32>
    %c0_24 = arith.constant 0 : index
    %c0_25 = arith.constant 0 : index
    %54 = vector.load %arg10[%c0_24, %c0_25] : memref<128x256xbf16, #tpu.memory_space<vmem>>, vector<128x256xbf16>
    %cst_26 = arith.constant dense<0.000000e+00> : vector<128x256xf32>
    %55 = tpu.matmul %48, %54, %cst_26 {dimension_numbers = #tpu.dot_dimension_numbers<[1], [0], [0], [1], [0, 0, 1, 1], [], []>} : vector<128x128xbf16>, vector<128x256xbf16>, vector<128x256xf32> -> vector<128x256xf32>
    %c0_27 = arith.constant 0 : index
    %c0_28 = arith.constant 0 : index
    %56 = vector.load %arg11[%c0_27, %c0_28] : memref<1x256xf32, #tpu.memory_space<vmem>>, vector<1x256xf32>
    %57 = vector.broadcast %56 : vector<1x256xf32> to vector<128x256xf32>
    %58 = arith.addf %55, %57 : vector<128x256xf32>
    %59 = arith.mulf %58, %58 : vector<128x256xf32>
    %60 = arith.mulf %58, %59 : vector<128x256xf32>
    %cst_29 = arith.constant 4.471500e-02 : f32
    %61 = vector.broadcast %cst_29 : f32 to vector<128x256xf32>
    %62 = arith.mulf %61, %60 : vector<128x256xf32>
    %63 = arith.addf %58, %62 : vector<128x256xf32>
    %cst_30 = arith.constant 0.797884583 : f32
    %64 = vector.broadcast %cst_30 : f32 to vector<128x256xf32>
    %65 = arith.mulf %64, %63 : vector<128x256xf32>
    %66 = math.tanh %65 : vector<128x256xf32>
    %cst_31 = arith.constant 1.000000e+00 : f32
    %67 = vector.broadcast %cst_31 : f32 to vector<128x256xf32>
    %68 = arith.addf %67, %66 : vector<128x256xf32>
    %cst_32 = arith.constant 5.000000e-01 : f32
    %69 = vector.broadcast %cst_32 : f32 to vector<128x256xf32>
    %70 = arith.mulf %69, %68 : vector<128x256xf32>
    %71 = arith.mulf %58, %70 : vector<128x256xf32>
    %c0_33 = arith.constant 0 : index
    %c0_34 = arith.constant 0 : index
    %72 = vector.load %arg5[%c0_33, %c0_34] : memref<1x256xf32, #tpu.memory_space<vmem>>, vector<1x256xf32>
    %73 = vector.broadcast %72 : vector<1x256xf32> to vector<128x256xf32>
    %74 = arith.mulf %73, %53 : vector<128x256xf32>
    %cst_35 = arith.constant 1.000000e+00 : f32
    %75 = vector.broadcast %cst_35 : f32 to vector<1x256xf32>
    %76 = arith.subf %75, %72 : vector<1x256xf32>
    %77 = vector.broadcast %76 : vector<1x256xf32> to vector<128x256xf32>
    %78 = arith.addf %74, %77 : vector<128x256xf32>
    %79 = arith.mulf %71, %78 : vector<128x256xf32>
    %80 = arith.truncf %79 : vector<128x256xf32> to vector<128x256xbf16>
    %c0_36 = arith.constant 0 : index
    %c0_37 = arith.constant 0 : index
    %81 = vector.load %arg12[%c0_36, %c0_37] : memref<256x128xbf16, #tpu.memory_space<vmem>>, vector<256x128xbf16>
    %cst_38 = arith.constant dense<0.000000e+00> : vector<128x128xf32>
    %82 = tpu.matmul %80, %81, %cst_38 {dimension_numbers = #tpu.dot_dimension_numbers<[1], [0], [0], [1], [0, 0, 1, 1], [], []>} : vector<128x256xbf16>, vector<256x128xbf16>, vector<128x128xf32> -> vector<128x128xf32>
    %c0_39 = arith.constant 0 : index
    %c0_40 = arith.constant 0 : index
    %83 = vector.load %arg13[%c0_39, %c0_40] : memref<1x128xf32, #tpu.memory_space<vmem>>, vector<1x128xf32>
    %84 = vector.broadcast %83 : vector<1x128xf32> to vector<128x128xf32>
    %85 = arith.addf %82, %84 : vector<128x128xf32>
    %86 = arith.addf %8, %85 : vector<128x128xf32>
    %87 = arith.truncf %86 : vector<128x128xf32> to vector<128x128xbf16>
    %c0_41 = arith.constant 0 : index
    %c0_42 = arith.constant 0 : index
    %88 = vector.load %arg14[%c0_41, %c0_42] : memref<128x128xbf16, #tpu.memory_space<vmem>>, vector<128x128xbf16>
    tpu.vector_store %arg14[%c0_41, %c0_42], %87 {strides = array<i32>} : memref<128x128xbf16, #tpu.memory_space<vmem>>, vector<128x128xbf16>,
    return
  }
  func.func @transform_0(%arg0: i32) -> (i32, i32) {
    %c0_i32 = arith.constant 0 : i32
    %c0_i32_0 = arith.constant 0 : i32
    return %arg0, %c0_i32 : i32, i32
  }
  func.func @transform_1(%arg0: i32) -> (i32, i32) {
    %c0_i32 = arith.constant 0 : i32
    %c0_i32_0 = arith.constant 0 : i32
    return %arg0, %c0_i32 : i32, i32
  }
  func.func @transform_2(%arg0: i32) -> (i32, i32) {
    %c0_i32 = arith.constant 0 : i32
    %c0_i32_0 = arith.constant 0 : i32
    %c0_i32_1 = arith.constant 0 : i32
    return %c0_i32, %c0_i32_0 : i32, i32
  }
  func.func @transform_3(%arg0: i32) -> (i32, i32) {
    %c0_i32 = arith.constant 0 : i32
    %c0_i32_0 = arith.constant 0 : i32
    %c0_i32_1 = arith.constant 0 : i32
    return %c0_i32, %c0_i32_0 : i32, i32
  }
  func.func @transform_4(%arg0: i32) -> (i32, i32) {
    %c0_i32 = arith.constant 0 : i32
    %c0_i32_0 = arith.constant 0 : i32
    %c0_i32_1 = arith.constant 0 : i32
    return %c0_i32, %c0_i32_0 : i32, i32
  }
  func.func @transform_5(%arg0: i32) -> (i32, i32) {
    %c0_i32 = arith.constant 0 : i32
    %c0_i32_0 = arith.constant 0 : i32
    %c0_i32_1 = arith.constant 0 : i32
    return %c0_i32, %c0_i32_0 : i32, i32
  }
  func.func @transform_6(%arg0: i32) -> (i32, i32) {
    %c0_i32 = arith.constant 0 : i32
    %c0_i32_0 = arith.constant 0 : i32
    %c0_i32_1 = arith.constant 0 : i32
    return %c0_i32, %c0_i32_0 : i32, i32
  }
  func.func @transform_7(%arg0: i32) -> (i32, i32) {
    %c0_i32 = arith.constant 0 : i32
    %c0_i32_0 = arith.constant 0 : i32
    %c0_i32_1 = arith.constant 0 : i32
    return %c0_i32, %c0_i32_0 : i32, i32
  }
  func.func @transform_8(%arg0: i32) -> (i32, i32) {
    %c0_i32 = arith.constant 0 : i32
    %c0_i32_0 = arith.constant 0 : i32
    %c0_i32_1 = arith.constant 0 : i32
    return %c0_i32, %c0_i32_0 : i32, i32
  }
  func.func @transform_9(%arg0: i32) -> (i32, i32) {
    %c0_i32 = arith.constant 0 : i32
    %c0_i32_0 = arith.constant 0 : i32
    %c0_i32_1 = arith.constant 0 : i32
    return %c0_i32, %c0_i32_0 : i32, i32
  }
  func.func @transform_10(%arg0: i32) -> (i32, i32) {
    %c0_i32 = arith.constant 0 : i32
    %c0_i32_0 = arith.constant 0 : i32
    %c0_i32_1 = arith.constant 0 : i32
    return %c0_i32, %c0_i32_0 : i32, i32
  }
  func.func @transform_11(%arg0: i32) -> (i32, i32) {
    %c0_i32 = arith.constant 0 : i32
    %c0_i32_0 = arith.constant 0 : i32
    %c0_i32_1 = arith.constant 0 : i32
    return %c0_i32, %c0_i32_0 : i32, i32
  }
  func.func @transform_12(%arg0: i32) -> (i32, i32) {
    %c0_i32 = arith.constant 0 : i32
    %c0_i32_0 = arith.constant 0 : i32
    %c0_i32_1 = arith.constant 0 : i32
    return %c0_i32, %c0_i32_0 : i32, i32
  }
  func.func @transform_13(%arg0: i32) -> (i32, i32) {
    %c0_i32 = arith.constant 0 : i32
    %c0_i32_0 = arith.constant 0 : i32
    return %arg0, %c0_i32 : i32, i32
  }
}

module attributes {stable_mosaic.version = 11 : i64} {
  func.func @_linear_kernel(%arg0: i32, %arg1: memref<128x128xbf16, #tpu.memory_space<vmem>>, %arg2: memref<128x128xbf16, #tpu.memory_space<vmem>>, %arg3: memref<1x128xf32, #tpu.memory_space<vmem>>, %arg4: memref<128x128xf32, #tpu.memory_space<vmem>>) attributes {dimension_semantics = [#tpu.dimension_semantics<parallel>], iteration_bounds = array<i64: 1>, scalar_prefetch = 0 : i64, scratch_operands = 0 : i64, tpu.core_type = #tpu.core_type<tc>, window_params = [{transform_indices = @transform_0, window_bounds = array<i64: 128, 128>}, {pipeline_mode = #tpu.pipeline_mode<synchronous>, transform_indices = @transform_1, window_bounds = array<i64: 128, 128>}, {pipeline_mode = #tpu.pipeline_mode<synchronous>, transform_indices = @transform_2, window_bounds = array<i64: 1, 128>}, {transform_indices = @transform_3, window_bounds = array<i64: 128, 128>}]} {
    %c0 = arith.constant 0 : index
    %c0_0 = arith.constant 0 : index
    %0 = vector.load %arg1[%c0, %c0_0] : memref<128x128xbf16, #tpu.memory_space<vmem>>, vector<128x128xbf16>
    %c0_1 = arith.constant 0 : index
    %c0_2 = arith.constant 0 : index
    %1 = vector.load %arg2[%c0_1, %c0_2] : memref<128x128xbf16, #tpu.memory_space<vmem>>, vector<128x128xbf16>
    %cst = arith.constant dense<0.000000e+00> : vector<128x128xf32>
    %2 = tpu.matmul %0, %1, %cst {dimension_numbers = #tpu.dot_dimension_numbers<[1], [0], [0], [1], [0, 0, 1, 1], [], []>} : vector<128x128xbf16>, vector<128x128xbf16>, vector<128x128xf32> -> vector<128x128xf32>
    %c0_3 = arith.constant 0 : index
    %c0_4 = arith.constant 0 : index
    %3 = vector.load %arg3[%c0_3, %c0_4] : memref<1x128xf32, #tpu.memory_space<vmem>>, vector<1x128xf32>
    %4 = vector.broadcast %3 : vector<1x128xf32> to vector<128x128xf32>
    %5 = arith.addf %2, %4 : vector<128x128xf32>
    %c0_5 = arith.constant 0 : index
    %c0_6 = arith.constant 0 : index
    %6 = vector.load %arg4[%c0_5, %c0_6] : memref<128x128xf32, #tpu.memory_space<vmem>>, vector<128x128xf32>
    tpu.vector_store %arg4[%c0_5, %c0_6], %5 {strides = array<i32>} : memref<128x128xf32, #tpu.memory_space<vmem>>, vector<128x128xf32>,
    return
  }
  func.func @transform_0(%arg0: i32) -> (i32, i32) {
    %c0_i32 = arith.constant 0 : i32
    %c0_i32_0 = arith.constant 0 : i32
    return %arg0, %c0_i32 : i32, i32
  }
  func.func @transform_1(%arg0: i32) -> (i32, i32) {
    %c0_i32 = arith.constant 0 : i32
    %c0_i32_0 = arith.constant 0 : i32
    %c0_i32_1 = arith.constant 0 : i32
    return %c0_i32, %c0_i32_0 : i32, i32
  }
  func.func @transform_2(%arg0: i32) -> (i32, i32) {
    %c0_i32 = arith.constant 0 : i32
    %c0_i32_0 = arith.constant 0 : i32
    %c0_i32_1 = arith.constant 0 : i32
    return %c0_i32, %c0_i32_0 : i32, i32
  }
  func.func @transform_3(%arg0: i32) -> (i32, i32) {
    %c0_i32 = arith.constant 0 : i32
    %c0_i32_0 = arith.constant 0 : i32
    return %arg0, %c0_i32 : i32, i32
  }
}

</mosaic_0001>

<llo_original>
// kernel: lgatr_forward.6
$region0: #{lgatr_forward.6}
  #allocation0 [shape = 'u32[]', space=smem, size = 0x4, offset = 0x4, fixed_abs, tag = 'smem constant byte address 0x4 - core index']
  #allocation1 [shape = 'u32[144,128]{1,0:T(1,128)}', space=vmem, size = 0x12000, scoped, tag = 'internal scratch']
  %s0 = inlined_call_operand.vmem [shape: bf16[128,128], index: 0, kind: input, shape index: {}]
  %s1 = inlined_call_operand.vmem [shape: bf16[128,128], index: 1, kind: input, shape index: {}]
  %s2 = inlined_call_operand.vmem [shape: f32[1,128], index: 2, kind: input, shape index: {}]
  %s3 = inlined_call_operand.vmem [shape: f32[1,128], index: 3, kind: input, shape index: {}]
  %s4 = inlined_call_operand.vmem [shape: f32[1,128], index: 4, kind: input, shape index: {}]
  %s5 = inlined_call_operand.vmem [shape: bf16[128,384], index: 5, kind: input, shape index: {}]
  %s6 = inlined_call_operand.vmem [shape: f32[1,384], index: 6, kind: input, shape index: {}]
  %s7 = inlined_call_operand.vmem [shape: bf16[128,128], index: 7, kind: output, shape index: {0}]
  %s8 = inlined_call_operand.vmem [shape: bf16[128,384], index: 8, kind: output, shape index: {1}]
  %9 = xla_tuple %s7, %s8
  %s10 = sld [smem:[#allocation0]]
  $region46: #{lgatr_forward.6} parent=0
    _
  %s12 = ssub.s32 1, %s10
  %s13 = scalar_select 0, %s12, %s10
  // Predicated region
  $region2: #{lgatr_forward.6} parent=0 // pred_check
    _
  $region3: #{lgatr_forward.6} parent=0 // pred_check_branch
    %15 = sbr.rel (0) target = $region5
  $region4: #{lgatr_forward.6} parent=0 // pred_region
    _
  $region5: #{lgatr_forward.6} parent=0 // pred_fallthru
    _
  // Predicated region
  $region6: #{lgatr_forward.6} parent=0 // pred_check
    _
  $region7: #{lgatr_forward.6} parent=0 // pred_check_branch
    %17 = sbr.rel (0) target = $region9
  $region8: #{lgatr_forward.6} parent=0 // pred_region
    _
  $region9: #{lgatr_forward.6} parent=0 // pred_fallthru
    _
  // Predicated region
  $region10: #{lgatr_forward.6} parent=0 // pred_check
    _
  $region11: #{lgatr_forward.6} parent=0 // pred_check_branch
    %19 = sbr.rel (0) target = $region13
  $region12: #{lgatr_forward.6} parent=0 // pred_region
    _
  $region13: #{lgatr_forward.6} parent=0 // pred_fallthru
    _
  // Predicated region
  $region14: #{lgatr_forward.6} parent=0 // pred_check
    _
  $region15: #{lgatr_forward.6} parent=0 // pred_check_branch
    %21 = sbr.rel (0) target = $region17
  $region16: #{lgatr_forward.6} parent=0 // pred_region
    _
  $region17: #{lgatr_forward.6} parent=0 // pred_fallthru
    _
  // Predicated region
  $region18: #{lgatr_forward.6} parent=0 // pred_check
    _
  $region19: #{lgatr_forward.6} parent=0 // pred_check_branch
    %23 = sbr.rel (0) target = $region21
  $region20: #{lgatr_forward.6} parent=0 // pred_region
    _
  $region21: #{lgatr_forward.6} parent=0 // pred_fallthru
    _
  // Predicated region
  $region22: #{lgatr_forward.6} parent=0 // pred_check
    _
  $region23: #{lgatr_forward.6} parent=0 // pred_check_branch
    %25 = sbr.rel (0) target = $region25
  $region24: #{lgatr_forward.6} parent=0 // pred_region
    _
  $region25: #{lgatr_forward.6} parent=0 // pred_fallthru
    _
  // Predicated region
  $region26: #{lgatr_forward.6} parent=0 // pred_check
    _
  $region27: #{lgatr_forward.6} parent=0 // pred_check_branch
    %27 = sbr.rel (0) target = $region29
  $region28: #{lgatr_forward.6} parent=0 // pred_region
    _
  $region29: #{lgatr_forward.6} parent=0 // pred_fallthru
    _
  %v29 = vld [vmem:[%s0] sm:$0xf]
  %v30 = vld [vmem:[%s0 + $0x4] sm:$0xf]
  %v31 = vld [vmem:[%s0 + $0x8] sm:$0xf]
  %v32 = vld [vmem:[%s0 + $0xc] sm:$0xf]
  %v33 = vld [vmem:[%s0 + $0x10] sm:$0xf]
  %v34 = vld [vmem:[%s0 + $0x14] sm:$0xf]
  %v35 = vld [vmem:[%s0 + $0x18] sm:$0xf]
  %v36 = vld [vmem:[%s0 + $0x1c] sm:$0xf]
  %v37 = vld [vmem:[%s0 + $0x20] sm:$0xf]
  %v38 = vld [vmem:[%s0 + $0x24] sm:$0xf]
  %v39 = vld [vmem:[%s0 + $0x28] sm:$0xf]
  %v40 = vld [vmem:[%s0 + $0x2c] sm:$0xf]
  %v41 = vld [vmem:[%s0 + $0x30] sm:$0xf]
  %v42 = vld [vmem:[%s0 + $0x34] sm:$0xf]
  %v43 = vld [vmem:[%s0 + $0x38] sm:$0xf]
  %v44 = vld [vmem:[%s0 + $0x3c] sm:$0xf]
  %v45 = vld [vmem:[%s1] sm:$0xf]
  %v46 = vld [vmem:[%s1 + $0x4] sm:$0xf]
  %v47 = vld [vmem:[%s1 + $0x8] sm:$0xf]
  %v48 = vld [vmem:[%s1 + $0xc] sm:$0xf]
  %v49 = vld [vmem:[%s1 + $0x10] sm:$0xf]
  %v50 = vld [vmem:[%s1 + $0x14] sm:$0xf]
  %v51 = vld [vmem:[%s1 + $0x18] sm:$0xf]
  %v52 = vld [vmem:[%s1 + $0x1c] sm:$0xf]
  %v53 = vld [vmem:[%s1 + $0x20] sm:$0xf]
  %v54 = vld [vmem:[%s1 + $0x24] sm:$0xf]
  %v55 = vld [vmem:[%s1 + $0x28] sm:$0xf]
  %v56 = vld [vmem:[%s1 + $0x2c] sm:$0xf]
  %v57 = vld [vmem:[%s1 + $0x30] sm:$0xf]
  %v58 = vld [vmem:[%s1 + $0x34] sm:$0xf]
  %v59 = vld [vmem:[%s1 + $0x38] sm:$0xf]
  %v60 = vld [vmem:[%s1 + $0x3c] sm:$0xf]
  %v61 = vld [vmem:[%s2] sm:$0x1]
  %v63 = vlaneseq
  %v64 = vshrl.u32 %v63, 7
  %v65 = vsub.s32 0, %v64
  %v66 = vrot.slane %v61, %v65
  %v84 = vunpack.c.l.b16 %v29
  %v85 = vunpack.c.l.b16 %v30
  %v86 = vunpack.c.l.b16 %v31
  %v87 = vunpack.c.l.b16 %v32
  %v88 = vunpack.c.l.b16 %v33
  %v89 = vunpack.c.l.b16 %v34
  %v90 = vunpack.c.l.b16 %v35
  %v91 = vunpack.c.l.b16 %v36
  %v92 = vunpack.c.l.b16 %v37
  %v93 = vunpack.c.l.b16 %v38
  %v94 = vunpack.c.l.b16 %v39
  %v95 = vunpack.c.l.b16 %v40
  %v96 = vunpack.c.l.b16 %v41
  %v97 = vunpack.c.l.b16 %v42
  %v98 = vunpack.c.l.b16 %v43
  %v99 = vunpack.c.l.b16 %v44
  %v100 = vpack.c.b16 %v85, %v84
  %v101 = vpack.c.b16 %v87, %v86
  %v102 = vpack.c.b16 %v89, %v88
  %v103 = vpack.c.b16 %v91, %v90
  %v104 = vpack.c.b16 %v93, %v92
  %v105 = vpack.c.b16 %v95, %v94
  %v106 = vpack.c.b16 %v97, %v96
  %v107 = vpack.c.b16 %v99, %v98
  %v132 = vunpack.c.l.b16 %v45
  %v133 = vunpack.c.l.b16 %v46
  %v134 = vunpack.c.l.b16 %v47
  %v135 = vunpack.c.l.b16 %v48
  %v136 = vunpack.c.l.b16 %v49
  %v137 = vunpack.c.l.b16 %v50
  %v138 = vunpack.c.l.b16 %v51
  %v139 = vunpack.c.l.b16 %v52
  %v140 = vunpack.c.l.b16 %v53
  %v141 = vunpack.c.l.b16 %v54
  %v142 = vunpack.c.l.b16 %v55
  %v143 = vunpack.c.l.b16 %v56
  %v144 = vunpack.c.l.b16 %v57
  %v145 = vunpack.c.l.b16 %v58
  %v146 = vunpack.c.l.b16 %v59
  %v147 = vunpack.c.l.b16 %v60
  %v148 = vpack.c.b16 %v133, %v132
  %v149 = vpack.c.b16 %v135, %v134
  %v150 = vpack.c.b16 %v137, %v136
  %v151 = vpack.c.b16 %v139, %v138
  %v152 = vpack.c.b16 %v141, %v140
  %v153 = vpack.c.b16 %v143, %v142
  %v154 = vpack.c.b16 %v145, %v144
  %v155 = vpack.c.b16 %v147, %v146
  %164 = vmatprep.subr.bf16.mxu0 0
  %165 = vmatpush1.bf16.msra.mxu0 %v148
  %166 = vmatprep.subr.bf16.mxu0 0
  %167 = vmatpush1.bf16.msra.mxu0 %v149
  %168 = vmatprep.subr.bf16.mxu0 0
  %169 = vmatpush1.bf16.msra.mxu0 %v150
  %170 = vmatprep.subr.bf16.mxu0 0
  %171 = vmatpush1.bf16.msra.mxu0 %v151
  %172 = vmatprep.subr.bf16.mxu0 0
  %173 = vmatpush1.bf16.msra.mxu0 %v152
  %174 = vmatprep.subr.bf16.mxu0 0
  %175 = vmatpush1.bf16.msra.mxu0 %v153
  %176 = vmatprep.subr.bf16.mxu0 0
  %177 = vmatpush1.bf16.msra.mxu0 %v154
  %178 = vmatprep.subr.bf16.mxu0 0
  %179 = vmatpush1.bf16.msra.mxu0 %v155
  %180 = vmatprep.subr.bf16.mxu0 0
  %181 = vmatpush1.bf16.msra.mxu0 0
  %182 = vmatprep.subr.bf16.mxu0 0
  %183 = vmatpush1.bf16.msra.mxu0 0
  %184 = vmatprep.subr.bf16.mxu0 0
  %185 = vmatpush1.bf16.msra.mxu0 0
  %186 = vmatprep.subr.bf16.mxu0 0
  %187 = vmatpush1.bf16.msra.mxu0 0
  %188 = vmatprep.subr.bf16.mxu0 0
  %189 = vmatpush1.bf16.msra.mxu0 0
  %190 = vmatprep.subr.bf16.mxu0 0
  %191 = vmatpush1.bf16.msra.mxu0 0
  %192 = vmatprep.subr.bf16.mxu0 0
  %193 = vmatpush1.bf16.msra.mxu0 0
  %194 = vmatprep.subr.bf16.mxu0 0
  %195 = vmatpush1.bf16.msra.mxu0 0
  %196 = vmatprep.mubr.bf16.mxu0 0
  %197 = vmatmul.mubr.bf16.gmra.mrb[0].mxu0 %v100
  %v198 = vpop.f32.mrb[0].mxu0
  %v199 = vadd.f32 %v66, %v198
  %v200 = vpop.f32.mrb[0].mxu0
  %v201 = vpop.f32.mrb[0].mxu0
  %v202 = vadd.f32 %v66, %v201
  %v203 = vpop.f32.mrb[0].mxu0
  %204 = vmatprep.mubr.bf16.mxu0 0
  %205 = vmatmul.mubr.bf16.gmra.mrb[0].mxu0 %v101
  %v206 = vpop.f32.mrb[0].mxu0
  %v207 = vadd.f32 %v66, %v206
  %v208 = vpop.f32.mrb[0].mxu0
  %v209 = vpop.f32.mrb[0].mxu0
  %v210 = vadd.f32 %v66, %v209
  %v211 = vpop.f32.mrb[0].mxu0
  %212 = vmatprep.mubr.bf16.mxu0 0
  %213 = vmatmul.mubr.bf16.gmra.mrb[0].mxu0 %v102
  %v214 = vpop.f32.mrb[0].mxu0
  %v215 = vadd.f32 %v66, %v214
  %v216 = vpop.f32.mrb[0].mxu0
  %v217 = vpop.f32.mrb[0].mxu0
  %v218 = vadd.f32 %v66, %v217
  %v219 = vpop.f32.mrb[0].mxu0
  %220 = vmatprep.mubr.bf16.mxu0 0
  %221 = vmatmul.mubr.bf16.gmra.mrb[0].mxu0 %v103
  %v222 = vpop.f32.mrb[0].mxu0
  %v223 = vadd.f32 %v66, %v222
  %v224 = vpop.f32.mrb[0].mxu0
  %v225 = vpop.f32.mrb[0].mxu0
  %v226 = vadd.f32 %v66, %v225
  %v227 = vpop.f32.mrb[0].mxu0
  %228 = vmatprep.mubr.bf16.mxu0 0
  %229 = vmatmul.mubr.bf16.gmra.mrb[0].mxu0 %v104
  %v230 = vpop.f32.mrb[0].mxu0
  %v231 = vadd.f32 %v66, %v230
  %v232 = vpop.f32.mrb[0].mxu0
  %v233 = vpop.f32.mrb[0].mxu0
  %v234 = vadd.f32 %v66, %v233
  %v235 = vpop.f32.mrb[0].mxu0
  %236 = vmatprep.mubr.bf16.mxu0 0
  %237 = vmatmul.mubr.bf16.gmra.mrb[0].mxu0 %v105
  %v238 = vpop.f32.mrb[0].mxu0
  %v239 = vadd.f32 %v66, %v238
  %v240 = vpop.f32.mrb[0].mxu0
  %v241 = vpop.f32.mrb[0].mxu0
  %v242 = vadd.f32 %v66, %v241
  %v243 = vpop.f32.mrb[0].mxu0
  %244 = vmatprep.mubr.bf16.mxu0 0
  %245 = vmatmul.mubr.bf16.gmra.mrb[0].mxu0 %v106
  %v246 = vpop.f32.mrb[0].mxu0
  %v247 = vadd.f32 %v66, %v246
  %v248 = vpop.f32.mrb[0].mxu0
  %v249 = vpop.f32.mrb[0].mxu0
  %v250 = vadd.f32 %v66, %v249
  %v251 = vpop.f32.mrb[0].mxu0
  %252 = vmatprep.mubr.bf16.mxu0 0
  %253 = vmatmul.mubr.bf16.gmra.mrb[0].mxu0 %v107
  %v254 = vpop.f32.mrb[0].mxu0
  %v255 = vadd.f32 %v66, %v254
  %v256 = vpop.f32.mrb[0].mxu0
  %v257 = vpop.f32.mrb[0].mxu0
  %v258 = vadd.f32 %v66, %v257
  %v259 = vpop.f32.mrb[0].mxu0
  %260 = vdwg.mxu0
  %v261 = vpack.c.bf16 %v202, %v199
  %v262 = vpack.c.bf16 %v210, %v207
  %v263 = vpack.c.bf16 %v218, %v215
  %v264 = vpack.c.bf16 %v226, %v223
  %v265 = vpack.c.bf16 %v234, %v231
  %v266 = vpack.c.bf16 %v242, %v239
  %v267 = vpack.c.bf16 %v250, %v247
  %v268 = vpack.c.bf16 %v258, %v255
  %v277 = vunpack.c.l.b16 %v261
  %v278 = vunpack.c.h.b16 %v261
  %v279 = vunpack.c.l.b16 %v262
  %v280 = vunpack.c.h.b16 %v262
  %v281 = vunpack.c.l.b16 %v263
  %v282 = vunpack.c.h.b16 %v263
  %v283 = vunpack.c.l.b16 %v264
  %v284 = vunpack.c.h.b16 %v264
  %v285 = vunpack.c.l.b16 %v265
  %v286 = vunpack.c.h.b16 %v265
  %v287 = vunpack.c.l.b16 %v266
  %v288 = vunpack.c.h.b16 %v266
  %v289 = vunpack.c.l.b16 %v267
  %v290 = vunpack.c.h.b16 %v267
  %v291 = vunpack.c.l.b16 %v268
  %v292 = vunpack.c.h.b16 %v268
  %v293 = vpack.c.b16 %v277, %v277
  %v294 = vpack.c.b16 %v278, %v278
  %v295 = vpack.c.b16 %v279, %v279
  %v296 = vpack.c.b16 %v280, %v280
  %v297 = vpack.c.b16 %v281, %v281
  %v298 = vpack.c.b16 %v282, %v282
  %v299 = vpack.c.b16 %v283, %v283
  %v300 = vpack.c.b16 %v284, %v284
  %v301 = vpack.c.b16 %v285, %v285
  %v302 = vpack.c.b16 %v286, %v286
  %v303 = vpack.c.b16 %v287, %v287
  %v304 = vpack.c.b16 %v288, %v288
  %v305 = vpack.c.b16 %v289, %v289
  %v306 = vpack.c.b16 %v290, %v290
  %v307 = vpack.c.b16 %v291, %v291
  %v308 = vpack.c.b16 %v292, %v292
  %325 = vst [vmem:[%s7] sm:$0xf] %v293
  %326 = vst [vmem:[%s7 + $0x4] sm:$0xf] %v294
  %327 = vst [vmem:[%s7 + $0x8] sm:$0xf] %v295
  %328 = vst [vmem:[%s7 + $0xc] sm:$0xf] %v296
  %329 = vst [vmem:[%s7 + $0x10] sm:$0xf] %v297
  %330 = vst [vmem:[%s7 + $0x14] sm:$0xf] %v298
  %331 = vst [vmem:[%s7 + $0x18] sm:$0xf] %v299
  %332 = vst [vmem:[%s7 + $0x1c] sm:$0xf] %v300
  %333 = vst [vmem:[%s7 + $0x20] sm:$0xf] %v301
  %334 = vst [vmem:[%s7 + $0x24] sm:$0xf] %v302
  %335 = vst [vmem:[%s7 + $0x28] sm:$0xf] %v303
  %336 = vst [vmem:[%s7 + $0x2c] sm:$0xf] %v304
  %337 = vst [vmem:[%s7 + $0x30] sm:$0xf] %v305
  %338 = vst [vmem:[%s7 + $0x34] sm:$0xf] %v306
  %339 = vst [vmem:[%s7 + $0x38] sm:$0xf] %v307
  %340 = vst [vmem:[%s7 + $0x3c] sm:$0xf] %v308
  %v341 = vld [vmem:[%s3] sm:$0x1]
  %v342 = vld [vmem:[%s4] sm:$0x1]
  %v343 = vmul.f32 %v199, %v199
  %v344 = vmul.f32 %v202, %v202
  %v345 = vmul.f32 %v207, %v207
  %v346 = vmul.f32 %v210, %v210
  %v347 = vmul.f32 %v215, %v215
  %v348 = vmul.f32 %v218, %v218
  %v349 = vmul.f32 %v223, %v223
  %v350 = vmul.f32 %v226, %v226
  %v351 = vmul.f32 %v231, %v231
  %v352 = vmul.f32 %v234, %v234
  %v353 = vmul.f32 %v239, %v239
  %v354 = vmul.f32 %v242, %v242
  %v355 = vmul.f32 %v247, %v247
  %v356 = vmul.f32 %v250, %v250
  %v357 = vmul.f32 %v255, %v255
  %v358 = vmul.f32 %v258, %v258
  %v360 = vlaneseq
  %v361 = vshrl.u32 %v360, 7
  %v362 = vsub.s32 0, %v361
  %v363 = vrot.slane %v341, %v362
  %v365 = vmul.f32 %v343, %v363
  %v366 = vmul.f32 %v344, %v363
  %v367 = vmul.f32 %v345, %v363
  %v368 = vmul.f32 %v346, %v363
  %v369 = vmul.f32 %v347, %v363
  %v370 = vmul.f32 %v348, %v363
  %v371 = vmul.f32 %v349, %v363
  %v372 = vmul.f32 %v350, %v363
  %v373 = vmul.f32 %v351, %v363
  %v374 = vmul.f32 %v352, %v363
  %v375 = vmul.f32 %v353, %v363
  %v376 = vmul.f32 %v354, %v363
  %v377 = vmul.f32 %v355, %v363
  %v378 = vmul.f32 %v356, %v363
  %v379 = vmul.f32 %v357, %v363
  %v380 = vmul.f32 %v358, %v363
  %381 = vadd.xlane.f32.xlu0 %v365
  %v382 = vpop.xlane.xlu0 %381
  %383 = vadd.xlane.f32.xlu0 %v366
  %v384 = vpop.xlane.xlu0 %383
  %385 = vadd.xlane.f32.xlu0 %v367
  %v386 = vpop.xlane.xlu0 %385
  %387 = vadd.xlane.f32.xlu0 %v368
  %v388 = vpop.xlane.xlu0 %387
  %389 = vadd.xlane.f32.xlu0 %v369
  %v390 = vpop.xlane.xlu0 %389
  %391 = vadd.xlane.f32.xlu0 %v370
  %v392 = vpop.xlane.xlu0 %391
  %393 = vadd.xlane.f32.xlu0 %v371
  %v394 = vpop.xlane.xlu0 %393
  %395 = vadd.xlane.f32.xlu0 %v372
  %v396 = vpop.xlane.xlu0 %395
  %397 = vadd.xlane.f32.xlu0 %v373
  %v398 = vpop.xlane.xlu0 %397
  %399 = vadd.xlane.f32.xlu0 %v374
  %v400 = vpop.xlane.xlu0 %399
  %401 = vadd.xlane.f32.xlu0 %v375
  %v402 = vpop.xlane.xlu0 %401
  %403 = vadd.xlane.f32.xlu0 %v376
  %v404 = vpop.xlane.xlu0 %403
  %405 = vadd.xlane.f32.xlu0 %v377
  %v406 = vpop.xlane.xlu0 %405
  %407 = vadd.xlane.f32.xlu0 %v378
  %v408 = vpop.xlane.xlu0 %407
  %409 = vadd.xlane.f32.xlu0 %v379
  %v410 = vpop.xlane.xlu0 %409
  %411 = vadd.xlane.f32.xlu0 %v380
  %v412 = vpop.xlane.xlu0 %411
  %v413 = vrcp.pop 4.0
  %v414 = vmul.f32 %v382, %v413
  %v415 = vmul.f32 %v384, %v413
  %v416 = vmul.f32 %v386, %v413
  %v417 = vmul.f32 %v388, %v413
  %v418 = vmul.f32 %v390, %v413
  %v419 = vmul.f32 %v392, %v413
  %v420 = vmul.f32 %v394, %v413
  %v421 = vmul.f32 %v396, %v413
  %v422 = vmul.f32 %v398, %v413
  %v423 = vmul.f32 %v400, %v413
  %v424 = vmul.f32 %v402, %v413
  %v425 = vmul.f32 %v404, %v413
  %v426 = vmul.f32 %v406, %v413
  %v427 = vmul.f32 %v408, %v413
  %v428 = vmul.f32 %v410, %v413
  %v429 = vmul.f32 %v412, %v413
  %v430 = vadd.f32 %v414, 1e-06
  %v431 = vadd.f32 %v415, 1e-06
  %v432 = vadd.f32 %v416, 1e-06
  %v433 = vadd.f32 %v417, 1e-06
  %v434 = vadd.f32 %v418, 1e-06
  %v435 = vadd.f32 %v419, 1e-06
  %v436 = vadd.f32 %v420, 1e-06
  %v437 = vadd.f32 %v421, 1e-06
  %v438 = vadd.f32 %v422, 1e-06
  %v439 = vadd.f32 %v423, 1e-06
  %v440 = vadd.f32 %v424, 1e-06
  %v441 = vadd.f32 %v425, 1e-06
  %v442 = vadd.f32 %v426, 1e-06
  %v443 = vadd.f32 %v427, 1e-06
  %v444 = vadd.f32 %v428, 1e-06
  %v445 = vadd.f32 %v429, 1e-06
  %v446 = vrsqrt.pop %v430
  %v447 = vrsqrt.pop %v431
  %v448 = vrsqrt.pop %v432
  %v449 = vrsqrt.pop %v433
  %v450 = vrsqrt.pop %v434
  %v451 = vrsqrt.pop %v435
  %v452 = vrsqrt.pop %v436
  %v453 = vrsqrt.pop %v437
  %v454 = vrsqrt.pop %v438
  %v455 = vrsqrt.pop %v439
  %v456 = vrsqrt.pop %v440
  %v457 = vrsqrt.pop %v441
  %v458 = vrsqrt.pop %v442
  %v459 = vrsqrt.pop %v443
  %v460 = vrsqrt.pop %v444
  %v461 = vrsqrt.pop %v445
  %v463 = vlaneseq
  %v464 = vshrl.u32 %v463, 7
  %v465 = vsub.s32 0, %v464
  %v466 = vrot.slane %v342, %v465
  %v468 = vmul.f32 %v199, %v466
  %v469 = vmul.f32 %v202, %v466
  %v470 = vmul.f32 %v207, %v466
  %v471 = vmul.f32 %v210, %v466
  %v472 = vmul.f32 %v215, %v466
  %v473 = vmul.f32 %v218, %v466
  %v474 = vmul.f32 %v223, %v466
  %v475 = vmul.f32 %v226, %v466
  %v476 = vmul.f32 %v231, %v466
  %v477 = vmul.f32 %v234, %v466
  %v478 = vmul.f32 %v239, %v466
  %v479 = vmul.f32 %v242, %v466
  %v480 = vmul.f32 %v247, %v466
  %v481 = vmul.f32 %v250, %v466
  %v482 = vmul.f32 %v255, %v466
  %v483 = vmul.f32 %v258, %v466
  %484 = vadd.xlane.f32.xlu0 %v468
  %v485 = vpop.xlane.xlu0 %484
  %486 = vadd.xlane.f32.xlu0 %v469
  %v487 = vpop.xlane.xlu0 %486
  %488 = vadd.xlane.f32.xlu0 %v470
  %v489 = vpop.xlane.xlu0 %488
  %490 = vadd.xlane.f32.xlu0 %v471
  %v491 = vpop.xlane.xlu0 %490
  %492 = vadd.xlane.f32.xlu0 %v472
  %v493 = vpop.xlane.xlu0 %492
  %494 = vadd.xlane.f32.xlu0 %v473
  %v495 = vpop.xlane.xlu0 %494
  %496 = vadd.xlane.f32.xlu0 %v474
  %v497 = vpop.xlane.xlu0 %496
  %498 = vadd.xlane.f32.xlu0 %v475
  %v499 = vpop.xlane.xlu0 %498
  %500 = vadd.xlane.f32.xlu0 %v476
  %v501 = vpop.xlane.xlu0 %500
  %502 = vadd.xlane.f32.xlu0 %v477
  %v503 = vpop.xlane.xlu0 %502
  %504 = vadd.xlane.f32.xlu0 %v478
  %v505 = vpop.xlane.xlu0 %504
  %506 = vadd.xlane.f32.xlu0 %v479
  %v507 = vpop.xlane.xlu0 %506
  %508 = vadd.xlane.f32.xlu0 %v480
  %v509 = vpop.xlane.xlu0 %508
  %510 = vadd.xlane.f32.xlu0 %v481
  %v511 = vpop.xlane.xlu0 %510
  %512 = vadd.xlane.f32.xlu0 %v482
  %v513 = vpop.xlane.xlu0 %512
  %514 = vadd.xlane.f32.xlu0 %v483
  %v515 = vpop.xlane.xlu0 %514
  %v516 = vrcp.pop 8.0
  %v517 = vmul.f32 %v485, %v516
  %v518 = vmul.f32 %v487, %v516
  %v519 = vmul.f32 %v489, %v516
  %v520 = vmul.f32 %v491, %v516
  %v521 = vmul.f32 %v493, %v516
  %v522 = vmul.f32 %v495, %v516
  %v523 = vmul.f32 %v497, %v516
  %v524 = vmul.f32 %v499, %v516
  %v525 = vmul.f32 %v501, %v516
  %v526 = vmul.f32 %v503, %v516
  %v527 = vmul.f32 %v505, %v516
  %v528 = vmul.f32 %v507, %v516
  %v529 = vmul.f32 %v509, %v516
  %v530 = vmul.f32 %v511, %v516
  %v531 = vmul.f32 %v513, %v516
  %v532 = vmul.f32 %v515, %v516
  %v533 = vsub.f32 %v199, %v517
  %v534 = vsub.f32 %v202, %v518
  %v535 = vsub.f32 %v207, %v519
  %v536 = vsub.f32 %v210, %v520
  %v537 = vsub.f32 %v215, %v521
  %v538 = vsub.f32 %v218, %v522
  %v539 = vsub.f32 %v223, %v523
  %v540 = vsub.f32 %v226, %v524
  %v541 = vsub.f32 %v231, %v525
  %v542 = vsub.f32 %v234, %v526
  %v543 = vsub.f32 %v239, %v527
  %v544 = vsub.f32 %v242, %v528
  %v545 = vsub.f32 %v247, %v529
  %v546 = vsub.f32 %v250, %v530
  %v547 = vsub.f32 %v255, %v531
  %v548 = vsub.f32 %v258, %v532
  %v549 = vmul.f32 %v533, %v533
  %v550 = vmul.f32 %v534, %v534
  %v551 = vmul.f32 %v535, %v535
  %v552 = vmul.f32 %v536, %v536
  %v553 = vmul.f32 %v537, %v537
  %v554 = vmul.f32 %v538, %v538
  %v555 = vmul.f32 %v539, %v539
  %v556 = vmul.f32 %v540, %v540
  %v557 = vmul.f32 %v541, %v541
  %v558 = vmul.f32 %v542, %v542
  %v559 = vmul.f32 %v543, %v543
  %v560 = vmul.f32 %v544, %v544
  %v561 = vmul.f32 %v545, %v545
  %v562 = vmul.f32 %v546, %v546
  %v563 = vmul.f32 %v547, %v547
  %v564 = vmul.f32 %v548, %v548
  %v565 = vmul.f32 %v549, %v466
  %v566 = vmul.f32 %v550, %v466
  %v567 = vmul.f32 %v551, %v466
  %v568 = vmul.f32 %v552, %v466
  %v569 = vmul.f32 %v553, %v466
  %v570 = vmul.f32 %v554, %v466
  %v571 = vmul.f32 %v555, %v466
  %v572 = vmul.f32 %v556, %v466
  %v573 = vmul.f32 %v557, %v466
  %v574 = vmul.f32 %v558, %v466
  %v575 = vmul.f32 %v559, %v466
  %v576 = vmul.f32 %v560, %v466
  %v577 = vmul.f32 %v561, %v466
  %v578 = vmul.f32 %v562, %v466
  %v579 = vmul.f32 %v563, %v466
  %v580 = vmul.f32 %v564, %v466
  %581 = vadd.xlane.f32.xlu0 %v565
  %v582 = vpop.xlane.xlu0 %581
  %583 = vadd.xlane.f32.xlu0 %v566
  %v584 = vpop.xlane.xlu0 %583
  %585 = vadd.xlane.f32.xlu0 %v567
  %v586 = vpop.xlane.xlu0 %585
  %587 = vadd.xlane.f32.xlu0 %v568
  %v588 = vpop.xlane.xlu0 %587
  %589 = vadd.xlane.f32.xlu0 %v569
  %v590 = vpop.xlane.xlu0 %589
  %591 = vadd.xlane.f32.xlu0 %v570
  %v592 = vpop.xlane.xlu0 %591
  %593 = vadd.xlane.f32.xlu0 %v571
  %v594 = vpop.xlane.xlu0 %593
  %595 = vadd.xlane.f32.xlu0 %v572
  %v596 = vpop.xlane.xlu0 %595
  %597 = vadd.xlane.f32.xlu0 %v573
  %v598 = vpop.xlane.xlu0 %597
  %599 = vadd.xlane.f32.xlu0 %v574
  %v600 = vpop.xlane.xlu0 %599
  %601 = vadd.xlane.f32.xlu0 %v575
  %v602 = vpop.xlane.xlu0 %601
  %603 = vadd.xlane.f32.xlu0 %v576
  %v604 = vpop.xlane.xlu0 %603
  %605 = vadd.xlane.f32.xlu0 %v577
  %v606 = vpop.xlane.xlu0 %605
  %607 = vadd.xlane.f32.xlu0 %v578
  %v608 = vpop.xlane.xlu0 %607
  %609 = vadd.xlane.f32.xlu0 %v579
  %v610 = vpop.xlane.xlu0 %609
  %611 = vadd.xlane.f32.xlu0 %v580
  %v612 = vpop.xlane.xlu0 %611
  %v613 = vmul.f32 %v582, %v516
  %v614 = vmul.f32 %v584, %v516
  %v615 = vmul.f32 %v586, %v516
  %v616 = vmul.f32 %v588, %v516
  %v617 = vmul.f32 %v590, %v516
  %v618 = vmul.f32 %v592, %v516
  %v619 = vmul.f32 %v594, %v516
  %v620 = vmul.f32 %v596, %v516
  %v621 = vmul.f32 %v598, %v516
  %v622 = vmul.f32 %v600, %v516
  %v623 = vmul.f32 %v602, %v516
  %v624 = vmul.f32 %v604, %v516
  %v625 = vmul.f32 %v606, %v516
  %v626 = vmul.f32 %v608, %v516
  %v627 = vmul.f32 %v610, %v516
  %v628 = vmul.f32 %v612, %v516
  %v629 = vadd.f32 %v613, 1e-06
  %v630 = vadd.f32 %v614, 1e-06
  %v631 = vadd.f32 %v615, 1e-06
  %v632 = vadd.f32 %v616, 1e-06
  %v633 = vadd.f32 %v617, 1e-06
  %v634 = vadd.f32 %v618, 1e-06
  %v635 = vadd.f32 %v619, 1e-06
  %v636 = vadd.f32 %v620, 1e-06
  %v637 = vadd.f32 %v621, 1e-06
  %v638 = vadd.f32 %v622, 1e-06
  %v639 = vadd.f32 %v623, 1e-06
  %v640 = vadd.f32 %v624, 1e-06
  %v641 = vadd.f32 %v625, 1e-06
  %v642 = vadd.f32 %v626, 1e-06
  %v643 = vadd.f32 %v627, 1e-06
  %v644 = vadd.f32 %v628, 1e-06
  %v645 = vrsqrt.pop %v629
  %v646 = vrsqrt.pop %v630
  %v647 = vrsqrt.pop %v631
  %v648 = vrsqrt.pop %v632
  %v649 = vrsqrt.pop %v633
  %v650 = vrsqrt.pop %v634
  %v651 = vrsqrt.pop %v635
  %v652 = vrsqrt.pop %v636
  %v653 = vrsqrt.pop %v637
  %v654 = vrsqrt.pop %v638
  %v655 = vrsqrt.pop %v639
  %v656 = vrsqrt.pop %v640
  %v657 = vrsqrt.pop %v641
  %v658 = vrsqrt.pop %v642
  %v659 = vrsqrt.pop %v643
  %v660 = vrsqrt.pop %v644
  %v661 = vmul.f32 %v363, %v199
  %v662 = vmul.f32 %v363, %v202
  %v663 = vmul.f32 %v363, %v207
  %v664 = vmul.f32 %v363, %v210
  %v665 = vmul.f32 %v363, %v215
  %v666 = vmul.f32 %v363, %v218
  %v667 = vmul.f32 %v363, %v223
  %v668 = vmul.f32 %v363, %v226
  %v669 = vmul.f32 %v363, %v231
  %v670 = vmul.f32 %v363, %v234
  %v671 = vmul.f32 %v363, %v239
  %v672 = vmul.f32 %v363, %v242
  %v673 = vmul.f32 %v363, %v247
  %v674 = vmul.f32 %v363, %v250
  %v675 = vmul.f32 %v363, %v255
  %v676 = vmul.f32 %v363, %v258
  %v677 = vmul.f32 %v661, %v446
  %v678 = vmul.f32 %v662, %v447
  %v679 = vmul.f32 %v663, %v448
  %v680 = vmul.f32 %v664, %v449
  %v681 = vmul.f32 %v665, %v450
  %v682 = vmul.f32 %v666, %v451
  %v683 = vmul.f32 %v667, %v452
  %v684 = vmul.f32 %v668, %v453
  %v685 = vmul.f32 %v669, %v454
  %v686 = vmul.f32 %v670, %v455
  %v687 = vmul.f32 %v671, %v456
  %v688 = vmul.f32 %v672, %v457
  %v689 = vmul.f32 %v673, %v458
  %v690 = vmul.f32 %v674, %v459
  %v691 = vmul.f32 %v675, %v460
  %v692 = vmul.f32 %v676, %v461
  %v693 = vmul.f32 %v466, %v533
  %v694 = vmul.f32 %v466, %v534
  %v695 = vmul.f32 %v466, %v535
  %v696 = vmul.f32 %v466, %v536
  %v697 = vmul.f32 %v466, %v537
  %v698 = vmul.f32 %v466, %v538
  %v699 = vmul.f32 %v466, %v539
  %v700 = vmul.f32 %v466, %v540
  %v701 = vmul.f32 %v466, %v541
  %v702 = vmul.f32 %v466, %v542
  %v703 = vmul.f32 %v466, %v543
  %v704 = vmul.f32 %v466, %v544
  %v705 = vmul.f32 %v466, %v545
  %v706 = vmul.f32 %v466, %v546
  %v707 = vmul.f32 %v466, %v547
  %v708 = vmul.f32 %v466, %v548
  %v709 = vmul.f32 %v693, %v645
  %v710 = vmul.f32 %v694, %v646
  %v711 = vmul.f32 %v695, %v647
  %v712 = vmul.f32 %v696, %v648
  %v713 = vmul.f32 %v697, %v649
  %v714 = vmul.f32 %v698, %v650
  %v715 = vmul.f32 %v699, %v651
  %v716 = vmul.f32 %v700, %v652
  %v717 = vmul.f32 %v701, %v653
  %v718 = vmul.f32 %v702, %v654
  %v719 = vmul.f32 %v703, %v655
  %v720 = vmul.f32 %v704, %v656
  %v721 = vmul.f32 %v705, %v657
  %v722 = vmul.f32 %v706, %v658
  %v723 = vmul.f32 %v707, %v659
  %v724 = vmul.f32 %v708, %v660
  %v725 = vadd.f32 %v677, %v709
  %v726 = vadd.f32 %v678, %v710
  %v727 = vadd.f32 %v679, %v711
  %v728 = vadd.f32 %v680, %v712
  %v729 = vadd.f32 %v681, %v713
  %v730 = vadd.f32 %v682, %v714
  %v731 = vadd.f32 %v683, %v715
  %v732 = vadd.f32 %v684, %v716
  %v733 = vadd.f32 %v685, %v717
  %v734 = vadd.f32 %v686, %v718
  %v735 = vadd.f32 %v687, %v719
  %v736 = vadd.f32 %v688, %v720
  %v737 = vadd.f32 %v689, %v721
  %v738 = vadd.f32 %v690, %v722
  %v739 = vadd.f32 %v691, %v723
  %v740 = vadd.f32 %v692, %v724
  %v741 = vpack.c.bf16 %v726, %v725
  %v742 = vpack.c.bf16 %v728, %v727
  %v743 = vpack.c.bf16 %v730, %v729
  %v744 = vpack.c.bf16 %v732, %v731
  %v745 = vpack.c.bf16 %v734, %v733
  %v746 = vpack.c.bf16 %v736, %v735
  %v747 = vpack.c.bf16 %v738, %v737
  %v748 = vpack.c.bf16 %v740, %v739
  %v749 = vld [vmem:[%s5] sm:$0xff]
  %v750 = vld [vmem:[%s5 + $0x8] sm:$0xf]
  %v751 = vld [vmem:[%s5 + $0xc] sm:$0xff]
  %v752 = vld [vmem:[%s5 + $0x14] sm:$0xf]
  %v753 = vld [vmem:[%s5 + $0x18] sm:$0xff]
  %v754 = vld [vmem:[%s5 + $0x20] sm:$0xf]
  %v755 = vld [vmem:[%s5 + $0x24] sm:$0xff]
  %v756 = vld [vmem:[%s5 + $0x2c] sm:$0xf]
  %v757 = vld [vmem:[%s5 + $0x30] sm:$0xff]
  %v758 = vld [vmem:[%s5 + $0x38] sm:$0xf]
  %v759 = vld [vmem:[%s5 + $0x3c] sm:$0xff]
  %v760 = vld [vmem:[%s5 + $0x44] sm:$0xf]
  %v761 = vld [vmem:[%s5 + $0x48] sm:$0xff]
  %v762 = vld [vmem:[%s5 + $0x50] sm:$0xf]
  %v763 = vld [vmem:[%s5 + $0x54] sm:$0xff]
  %v764 = vld [vmem:[%s5 + $0x5c] sm:$0xf]
  %v765 = vld [vmem:[%s5 + $0x60] sm:$0xff]
  %v766 = vld [vmem:[%s5 + $0x68] sm:$0xf]
  %v767 = vld [vmem:[%s5 + $0x6c] sm:$0xff]
  %v768 = vld [vmem:[%s5 + $0x74] sm:$0xf]
  %v769 = vld [vmem:[%s5 + $0x78] sm:$0xff]
  %v770 = vld [vmem:[%s5 + $0x80] sm:$0xf]
  %v771 = vld [vmem:[%s5 + $0x84] sm:$0xff]
  %v772 = vld [vmem:[%s5 + $0x8c] sm:$0xf]
  %v773 = vld [vmem:[%s5 + $0x90] sm:$0xff]
  %v774 = vld [vmem:[%s5 + $0x98] sm:$0xf]
  %v775 = vld [vmem:[%s5 + $0x9c] sm:$0xff]
  %v776 = vld [vmem:[%s5 + $0xa4] sm:$0xf]
  %v777 = vld [vmem:[%s5 + $0xa8] sm:$0xff]
  %v778 = vld [vmem:[%s5 + $0xb0] sm:$0xf]
  %v779 = vld [vmem:[%s5 + $0xb4] sm:$0xff]
  %v780 = vld [vmem:[%s5 + $0xbc] sm:$0xf]
  %v781 = vld [vmem:[%s6] sm:$0x7]
  %v783 = vlaneseq
  %v784 = vshrl.u32 %v783, 7
  %v785 = vsub.s32 0, %v784
  %v786 = vrot.slane %v781, %v785
  %v787 = vlaneseq
  %v788 = vshrl.u32 %v787, 7
  %v789 = vsub.s32 1, %v788
  %v790 = vrot.slane %v781, %v789
  %v791 = vlaneseq
  %v792 = vshrl.u32 %v791, 7
  %v793 = vsub.s32 2, %v792
  %v794 = vrot.slane %v781, %v793
  %v830 = vunpack.c.l.b16 %v749
  %v831 = vunpack.c.h.b16 %v749
  %v832 = vunpack.c.l.b16 %v750
  %v833 = vunpack.c.l.b16 %v751
  %v834 = vunpack.c.h.b16 %v751
  %v835 = vunpack.c.l.b16 %v752
  %v836 = vunpack.c.l.b16 %v753
  %v837 = vunpack.c.h.b16 %v753
  %v838 = vunpack.c.l.b16 %v754
  %v839 = vunpack.c.l.b16 %v755
  %v840 = vunpack.c.h.b16 %v755
  %v841 = vunpack.c.l.b16 %v756
  %v842 = vunpack.c.l.b16 %v757
  %v843 = vunpack.c.h.b16 %v757
  %v844 = vunpack.c.l.b16 %v758
  %v845 = vunpack.c.l.b16 %v759
  %v846 = vunpack.c.h.b16 %v759
  %v847 = vunpack.c.l.b16 %v760
  %v848 = vunpack.c.l.b16 %v761
  %v849 = vunpack.c.h.b16 %v761
  %v850 = vunpack.c.l.b16 %v762
  %v851 = vunpack.c.l.b16 %v763
  %v852 = vunpack.c.h.b16 %v763
  %v853 = vunpack.c.l.b16 %v764
  %v854 = vunpack.c.l.b16 %v765
  %v855 = vunpack.c.h.b16 %v765
  %v856 = vunpack.c.l.b16 %v766
  %v857 = vunpack.c.l.b16 %v767
  %v858 = vunpack.c.h.b16 %v767
  %v859 = vunpack.c.l.b16 %v768
  %v860 = vunpack.c.l.b16 %v769
  %v861 = vunpack.c.h.b16 %v769
  %v862 = vunpack.c.l.b16 %v770
  %v863 = vunpack.c.l.b16 %v771
  %v864 = vunpack.c.h.b16 %v771
  %v865 = vunpack.c.l.b16 %v772
  %v866 = vunpack.c.l.b16 %v773
  %v867 = vunpack.c.h.b16 %v773
  %v868 = vunpack.c.l.b16 %v774
  %v869 = vunpack.c.l.b16 %v775
  %v870 = vunpack.c.h.b16 %v775
  %v871 = vunpack.c.l.b16 %v776
  %v872 = vunpack.c.l.b16 %v777
  %v873 = vunpack.c.h.b16 %v777
  %v874 = vunpack.c.l.b16 %v778
  %v875 = vunpack.c.l.b16 %v779
  %v876 = vunpack.c.h.b16 %v779
  %v877 = vunpack.c.l.b16 %v780
  %v878 = vpack.c.b16 %v833, %v830
  %v879 = vpack.c.b16 %v834, %v831
  %v880 = vpack.c.b16 %v835, %v832
  %v881 = vpack.c.b16 %v839, %v836
  %v882 = vpack.c.b16 %v840, %v837
  %v883 = vpack.c.b16 %v841, %v838
  %v884 = vpack.c.b16 %v845, %v842
  %v885 = vpack.c.b16 %v846, %v843
  %v886 = vpack.c.b16 %v847, %v844
  %v887 = vpack.c.b16 %v851, %v848
  %v888 = vpack.c.b16 %v852, %v849
  %v889 = vpack.c.b16 %v853, %v850
  %v890 = vpack.c.b16 %v857, %v854
  %v891 = vpack.c.b16 %v858, %v855
  %v892 = vpack.c.b16 %v859, %v856
  %v893 = vpack.c.b16 %v863, %v860
  %v894 = vpack.c.b16 %v864, %v861
  %v895 = vpack.c.b16 %v865, %v862
  %v896 = vpack.c.b16 %v869, %v866
  %v897 = vpack.c.b16 %v870, %v867
  %v898 = vpack.c.b16 %v871, %v868
  %v899 = vpack.c.b16 %v875, %v872
  %v900 = vpack.c.b16 %v876, %v873
  %v901 = vpack.c.b16 %v877, %v874
  %926 = vmatprep.subr.bf16.mxu0 %v879
  %927 = vmatpush1.bf16.msra.mxu0 %v878
  %928 = vmatprep.subr.bf16.mxu0 %v882
  %929 = vmatpush1.bf16.msra.mxu0 %v881
  %930 = vmatprep.subr.bf16.mxu0 %v885
  %931 = vmatpush1.bf16.msra.mxu0 %v884
  %932 = vmatprep.subr.bf16.mxu0 %v888
  %933 = vmatpush1.bf16.msra.mxu0 %v887
  %934 = vmatprep.subr.bf16.mxu0 %v891
  %935 = vmatpush1.bf16.msra.mxu0 %v890
  %936 = vmatprep.subr.bf16.mxu0 %v894
  %937 = vmatpush1.bf16.msra.mxu0 %v893
  %938 = vmatprep.subr.bf16.mxu0 %v897
  %939 = vmatpush1.bf16.msra.mxu0 %v896
  %940 = vmatprep.subr.bf16.mxu0 %v900
  %941 = vmatpush1.bf16.msra.mxu0 %v899
  %942 = vmatprep.subr.bf16.mxu0 0
  %943 = vmatpush1.bf16.msra.mxu0 0
  %944 = vmatprep.subr.bf16.mxu0 0
  %945 = vmatpush1.bf16.msra.mxu0 0
  %946 = vmatprep.subr.bf16.mxu0 0
  %947 = vmatpush1.bf16.msra.mxu0 0
  %948 = vmatprep.subr.bf16.mxu0 0
  %949 = vmatpush1.bf16.msra.mxu0 0
  %950 = vmatprep.subr.bf16.mxu0 0
  %951 = vmatpush1.bf16.msra.mxu0 0
  %952 = vmatprep.subr.bf16.mxu0 0
  %953 = vmatpush1.bf16.msra.mxu0 0
  %954 = vmatprep.subr.bf16.mxu0 0
  %955 = vmatpush1.bf16.msra.mxu0 0
  %956 = vmatprep.subr.bf16.mxu0 0
  %957 = vmatpush1.bf16.msra.mxu0 0
  %958 = vmatprep.mubr.bf16.mxu0 0
  %959 = vmatmul.mubr.bf16.gmra.mrb[0].mxu0 %v741
  %v960 = vpop.f32.mrb[0].mxu0
  %v961 = vadd.f32 %v786, %v960
  %v962 = vpop.f32.mrb[0].mxu0
  %v963 = vadd.f32 %v790, %v962
  %v964 = vpop.f32.mrb[0].mxu0
  %v965 = vadd.f32 %v786, %v964
  %v966 = vpop.f32.mrb[0].mxu0
  %v967 = vadd.f32 %v790, %v966
  %968 = vmatprep.mubr.bf16.mxu0 0
  %969 = vmatmul.mubr.bf16.gmra.mrb[0].mxu0 %v742
  %v970 = vpop.f32.mrb[0].mxu0
  %v971 = vadd.f32 %v786, %v970
  %v972 = vpop.f32.mrb[0].mxu0
  %v973 = vadd.f32 %v790, %v972
  %v974 = vpop.f32.mrb[0].mxu0
  %v975 = vadd.f32 %v786, %v974
  %v976 = vpop.f32.mrb[0].mxu0
  %v977 = vadd.f32 %v790, %v976
  %978 = vmatprep.mubr.bf16.mxu0 0
  %979 = vmatmul.mubr.bf16.gmra.mrb[0].mxu0 %v743
  %v980 = vpop.f32.mrb[0].mxu0
  %v981 = vadd.f32 %v786, %v980
  %v982 = vpop.f32.mrb[0].mxu0
  %v983 = vadd.f32 %v790, %v982
  %v984 = vpop.f32.mrb[0].mxu0
  %v985 = vadd.f32 %v786, %v984
  %v986 = vpop.f32.mrb[0].mxu0
  %v987 = vadd.f32 %v790, %v986
  %988 = vmatprep.mubr.bf16.mxu0 0
  %989 = vmatmul.mubr.bf16.gmra.mrb[0].mxu0 %v744
  %v990 = vpop.f32.mrb[0].mxu0
  %v991 = vadd.f32 %v786, %v990
  %v992 = vpop.f32.mrb[0].mxu0
  %v993 = vadd.f32 %v790, %v992
  %v994 = vpop.f32.mrb[0].mxu0
  %v995 = vadd.f32 %v786, %v994
  %v996 = vpop.f32.mrb[0].mxu0
  %v997 = vadd.f32 %v790, %v996
  %998 = vmatprep.mubr.bf16.mxu0 0
  %999 = vmatmul.mubr.bf16.gmra.mrb[0].mxu0 %v745
  %v1000 = vpop.f32.mrb[0].mxu0
  %v1001 = vadd.f32 %v786, %v1000
  %v1002 = vpop.f32.mrb[0].mxu0
  %v1003 = vadd.f32 %v790, %v1002
  %v1004 = vpop.f32.mrb[0].mxu0
  %v1005 = vadd.f32 %v786, %v1004
  %v1006 = vpop.f32.mrb[0].mxu0
  %v1007 = vadd.f32 %v790, %v1006
  %1008 = vmatprep.mubr.bf16.mxu0 0
  %1009 = vmatmul.mubr.bf16.gmra.mrb[0].mxu0 %v746
  %v1010 = vpop.f32.mrb[0].mxu0
  %v1011 = vadd.f32 %v786, %v1010
  %v1012 = vpop.f32.mrb[0].mxu0
  %v1013 = vadd.f32 %v790, %v1012
  %v1014 = vpop.f32.mrb[0].mxu0
  %v1015 = vadd.f32 %v786, %v1014
  %v1016 = vpop.f32.mrb[0].mxu0
  %v1017 = vadd.f32 %v790, %v1016
  %1018 = vmatprep.mubr.bf16.mxu0 0
  %1019 = vmatmul.mubr.bf16.gmra.mrb[0].mxu0 %v747
  %v1020 = vpop.f32.mrb[0].mxu0
  %v1021 = vadd.f32 %v786, %v1020
  %v1022 = vpop.f32.mrb[0].mxu0
  %v1023 = vadd.f32 %v790, %v1022
  %v1024 = vpop.f32.mrb[0].mxu0
  %v1025 = vadd.f32 %v786, %v1024
  %v1026 = vpop.f32.mrb[0].mxu0
  %v1027 = vadd.f32 %v790, %v1026
  %1028 = vmatprep.mubr.bf16.mxu0 0
  %1029 = vmatmul.mubr.bf16.gmra.mrb[0].mxu0 %v748
  %v1030 = vpop.f32.mrb[0].mxu0
  %v1031 = vadd.f32 %v786, %v1030
  %v1032 = vpop.f32.mrb[0].mxu0
  %v1033 = vadd.f32 %v790, %v1032
  %v1034 = vpop.f32.mrb[0].mxu0
  %v1035 = vadd.f32 %v786, %v1034
  %v1036 = vpop.f32.mrb[0].mxu0
  %v1037 = vadd.f32 %v790, %v1036
  %1038 = vdwg.mxu0
  %1039 = vmatprep.subr.bf16.mxu0 0
  %1040 = vmatpush1.bf16.msra.mxu0 %v880
  %1041 = vmatprep.subr.bf16.mxu0 0
  %1042 = vmatpush1.bf16.msra.mxu0 %v883
  %1043 = vmatprep.subr.bf16.mxu0 0
  %1044 = vmatpush1.bf16.msra.mxu0 %v886
  %1045 = vmatprep.subr.bf16.mxu0 0
  %1046 = vmatpush1.bf16.msra.mxu0 %v889
  %1047 = vmatprep.subr.bf16.mxu0 0
  %1048 = vmatpush1.bf16.msra.mxu0 %v892
  %1049 = vmatprep.subr.bf16.mxu0 0
  %1050 = vmatpush1.bf16.msra.mxu0 %v895
  %1051 = vmatprep.subr.bf16.mxu0 0
  %1052 = vmatpush1.bf16.msra.mxu0 %v898
  %1053 = vmatprep.subr.bf16.mxu0 0
  %1054 = vmatpush1.bf16.msra.mxu0 %v901
  %1055 = vmatprep.subr.bf16.mxu0 0
  %1056 = vmatpush1.bf16.msra.mxu0 0
  %1057 = vmatprep.subr.bf16.mxu0 0
  %1058 = vmatpush1.bf16.msra.mxu0 0
  %1059 = vmatprep.subr.bf16.mxu0 0
  %1060 = vmatpush1.bf16.msra.mxu0 0
  %1061 = vmatprep.subr.bf16.mxu0 0
  %1062 = vmatpush1.bf16.msra.mxu0 0
  %1063 = vmatprep.subr.bf16.mxu0 0
  %1064 = vmatpush1.bf16.msra.mxu0 0
  %1065 = vmatprep.subr.bf16.mxu0 0
  %1066 = vmatpush1.bf16.msra.mxu0 0
  %1067 = vmatprep.subr.bf16.mxu0 0
  %1068 = vmatpush1.bf16.msra.mxu0 0
  %1069 = vmatprep.subr.bf16.mxu0 0
  %1070 = vmatpush1.bf16.msra.mxu0 0
  %1071 = vmatprep.mubr.bf16.mxu0 0
  %1072 = vmatmul.mubr.bf16.gmra.mrb[0].mxu0 %v741
  %v1073 = vpop.f32.mrb[0].mxu0
  %v1074 = vadd.f32 %v794, %v1073
  %v1075 = vpop.f32.mrb[0].mxu0
  %v1076 = vpop.f32.mrb[0].mxu0
  %v1077 = vadd.f32 %v794, %v1076
  %v1078 = vpop.f32.mrb[0].mxu0
  %1079 = vmatprep.mubr.bf16.mxu0 0
  %1080 = vmatmul.mubr.bf16.gmra.mrb[0].mxu0 %v742
  %v1081 = vpop.f32.mrb[0].mxu0
  %v1082 = vadd.f32 %v794, %v1081
  %v1083 = vpop.f32.mrb[0].mxu0
  %v1084 = vpop.f32.mrb[0].mxu0
  %v1085 = vadd.f32 %v794, %v1084
  %v1086 = vpop.f32.mrb[0].mxu0
  %1087 = vmatprep.mubr.bf16.mxu0 0
  %1088 = vmatmul.mubr.bf16.gmra.mrb[0].mxu0 %v743
  %v1089 = vpop.f32.mrb[0].mxu0
  %v1090 = vadd.f32 %v794, %v1089
  %v1091 = vpop.f32.mrb[0].mxu0
  %v1092 = vpop.f32.mrb[0].mxu0
  %v1093 = vadd.f32 %v794, %v1092
  %v1094 = vpop.f32.mrb[0].mxu0
  %1095 = vmatprep.mubr.bf16.mxu0 0
  %1096 = vmatmul.mubr.bf16.gmra.mrb[0].mxu0 %v744
  %v1097 = vpop.f32.mrb[0].mxu0
  %v1098 = vadd.f32 %v794, %v1097
  %v1099 = vpop.f32.mrb[0].mxu0
  %v1100 = vpop.f32.mrb[0].mxu0
  %v1101 = vadd.f32 %v794, %v1100
  %v1102 = vpop.f32.mrb[0].mxu0
  %1103 = vmatprep.mubr.bf16.mxu0 0
  %1104 = vmatmul.mubr.bf16.gmra.mrb[0].mxu0 %v745
  %v1105 = vpop.f32.mrb[0].mxu0
  %v1106 = vadd.f32 %v794, %v1105
  %v1107 = vpop.f32.mrb[0].mxu0
  %v1108 = vpop.f32.mrb[0].mxu0
  %v1109 = vadd.f32 %v794, %v1108
  %v1110 = vpop.f32.mrb[0].mxu0
  %1111 = vmatprep.mubr.bf16.mxu0 0
  %1112 = vmatmul.mubr.bf16.gmra.mrb[0].mxu0 %v746
  %v1113 = vpop.f32.mrb[0].mxu0
  %v1114 = vadd.f32 %v794, %v1113
  %v1115 = vpop.f32.mrb[0].mxu0
  %v1116 = vpop.f32.mrb[0].mxu0
  %v1117 = vadd.f32 %v794, %v1116
  %v1118 = vpop.f32.mrb[0].mxu0
  %1119 = vmatprep.mubr.bf16.mxu0 0
  %1120 = vmatmul.mubr.bf16.gmra.mrb[0].mxu0 %v747
  %v1121 = vpop.f32.mrb[0].mxu0
  %v1122 = vadd.f32 %v794, %v1121
  %v1123 = vpop.f32.mrb[0].mxu0
  %v1124 = vpop.f32.mrb[0].mxu0
  %v1125 = vadd.f32 %v794, %v1124
  %v1126 = vpop.f32.mrb[0].mxu0
  %1127 = vmatprep.mubr.bf16.mxu0 0
  %1128 = vmatmul.mubr.bf16.gmra.mrb[0].mxu0 %v748
  %v1129 = vpop.f32.mrb[0].mxu0
  %v1130 = vadd.f32 %v794, %v1129
  %v1131 = vpop.f32.mrb[0].mxu0
  %v1132 = vpop.f32.mrb[0].mxu0
  %v1133 = vadd.f32 %v794, %v1132
  %v1134 = vpop.f32.mrb[0].mxu0
  %1135 = vdwg.mxu0
  %v1136 = vpack.c.bf16 %v965, %v961
  %v1137 = vpack.c.bf16 %v967, %v963
  %v1138 = vpack.c.bf16 %v1077, %v1074
  %v1139 = vpack.c.bf16 %v975, %v971
  %v1140 = vpack.c.bf16 %v977, %v973
  %v1141 = vpack.c.bf16 %v1085, %v1082
  %v1142 = vpack.c.bf16 %v985, %v981
  %v1143 = vpack.c.bf16 %v987, %v983
  %v1144 = vpack.c.bf16 %v1093, %v1090
  %v1145 = vpack.c.bf16 %v995, %v991
  %v1146 = vpack.c.bf16 %v997, %v993
  %v1147 = vpack.c.bf16 %v1101, %v1098
  %v1148 = vpack.c.bf16 %v1005, %v1001
  %v1149 = vpack.c.bf16 %v1007, %v1003
  %v1150 = vpack.c.bf16 %v1109, %v1106
  %v1151 = vpack.c.bf16 %v1015, %v1011
  %v1152 = vpack.c.bf16 %v1017, %v1013
  %v1153 = vpack.c.bf16 %v1117, %v1114
  %v1154 = vpack.c.bf16 %v1025, %v1021
  %v1155 = vpack.c.bf16 %v1027, %v1023
  %v1156 = vpack.c.bf16 %v1125, %v1122
  %v1157 = vpack.c.bf16 %v1035, %v1031
  %v1158 = vpack.c.bf16 %v1037, %v1033
  %v1159 = vpack.c.bf16 %v1133, %v1130
  %v1184 = vunpack.c.l.b16 %v1136
  %v1185 = vunpack.c.l.b16 %v1137
  %v1186 = vunpack.c.l.b16 %v1138
  %v1187 = vunpack.c.h.b16 %v1136
  %v1188 = vunpack.c.h.b16 %v1137
  %v1189 = vunpack.c.h.b16 %v1138
  %v1190 = vunpack.c.l.b16 %v1139
  %v1191 = vunpack.c.l.b16 %v1140
  %v1192 = vunpack.c.l.b16 %v1141
  %v1193 = vunpack.c.h.b16 %v1139
  %v1194 = vunpack.c.h.b16 %v1140
  %v1195 = vunpack.c.h.b16 %v1141
  %v1196 = vunpack.c.l.b16 %v1142
  %v1197 = vunpack.c.l.b16 %v1143
  %v1198 = vunpack.c.l.b16 %v1144
  %v1199 = vunpack.c.h.b16 %v1142
  %v1200 = vunpack.c.h.b16 %v1143
  %v1201 = vunpack.c.h.b16 %v1144
  %v1202 = vunpack.c.l.b16 %v1145
  %v1203 = vunpack.c.l.b16 %v1146
  %v1204 = vunpack.c.l.b16 %v1147
  %v1205 = vunpack.c.h.b16 %v1145
  %v1206 = vunpack.c.h.b16 %v1146
  %v1207 = vunpack.c.h.b16 %v1147
  %v1208 = vunpack.c.l.b16 %v1148
  %v1209 = vunpack.c.l.b16 %v1149
  %v1210 = vunpack.c.l.b16 %v1150
  %v1211 = vunpack.c.h.b16 %v1148
  %v1212 = vunpack.c.h.b16 %v1149
  %v1213 = vunpack.c.h.b16 %v1150
  %v1214 = vunpack.c.l.b16 %v1151
  %v1215 = vunpack.c.l.b16 %v1152
  %v1216 = vunpack.c.l.b16 %v1153
  %v1217 = vunpack.c.h.b16 %v1151
  %v1218 = vunpack.c.h.b16 %v1152
  %v1219 = vunpack.c.h.b16 %v1153
  %v1220 = vunpack.c.l.b16 %v1154
  %v1221 = vunpack.c.l.b16 %v1155
  %v1222 = vunpack.c.l.b16 %v1156
  %v1223 = vunpack.c.h.b16 %v1154
  %v1224 = vunpack.c.h.b16 %v1155
  %v1225 = vunpack.c.h.b16 %v1156
  %v1226 = vunpack.c.l.b16 %v1157
  %v1227 = vunpack.c.l.b16 %v1158
  %v1228 = vunpack.c.l.b16 %v1159
  %v1229 = vunpack.c.h.b16 %v1157
  %v1230 = vunpack.c.h.b16 %v1158
  %v1231 = vunpack.c.h.b16 %v1159
  %v1232 = vpack.c.b16 %v1185, %v1184
  %v1233 = vpack.c.b16 %v1186, %v1186
  %v1234 = vpack.c.b16 %v1188, %v1187
  %v1235 = vpack.c.b16 %v1189, %v1189
  %v1236 = vpack.c.b16 %v1191, %v1190
  %v1237 = vpack.c.b16 %v1192, %v1192
  %v1238 = vpack.c.b16 %v1194, %v1193
  %v1239 = vpack.c.b16 %v1195, %v1195
  %v1240 = vpack.c.b16 %v1197, %v1196
  %v1241 = vpack.c.b16 %v1198, %v1198
  %v1242 = vpack.c.b16 %v1200, %v1199
  %v1243 = vpack.c.b16 %v1201, %v1201
  %v1244 = vpack.c.b16 %v1203, %v1202
  %v1245 = vpack.c.b16 %v1204, %v1204
  %v1246 = vpack.c.b16 %v1206, %v1205
  %v1247 = vpack.c.b16 %v1207, %v1207
  %v1248 = vpack.c.b16 %v1209, %v1208
  %v1249 = vpack.c.b16 %v1210, %v1210
  %v1250 = vpack.c.b16 %v1212, %v1211
  %v1251 = vpack.c.b16 %v1213, %v1213
  %v1252 = vpack.c.b16 %v1215, %v1214
  %v1253 = vpack.c.b16 %v1216, %v1216
  %v1254 = vpack.c.b16 %v1218, %v1217
  %v1255 = vpack.c.b16 %v1219, %v1219
  %v1256 = vpack.c.b16 %v1221, %v1220
  %v1257 = vpack.c.b16 %v1222, %v1222
  %v1258 = vpack.c.b16 %v1224, %v1223
  %v1259 = vpack.c.b16 %v1225, %v1225
  %v1260 = vpack.c.b16 %v1227, %v1226
  %v1261 = vpack.c.b16 %v1228, %v1228
  %v1262 = vpack.c.b16 %v1230, %v1229
  %v1263 = vpack.c.b16 %v1231, %v1231
  %1296 = vst [vmem:[%s8] sm:$0xff] %v1232
  %1297 = vst [vmem:[%s8 + $0x8] sm:$0xf] %v1233
  %1298 = vst [vmem:[%s8 + $0xc] sm:$0xff] %v1234
  %1299 = vst [vmem:[%s8 + $0x14] sm:$0xf] %v1235
  %1300 = vst [vmem:[%s8 + $0x18] sm:$0xff] %v1236
  %1301 = vst [vmem:[%s8 + $0x20] sm:$0xf] %v1237
  %1302 = vst [vmem:[%s8 + $0x24] sm:$0xff] %v1238
  %1303 = vst [vmem:[%s8 + $0x2c] sm:$0xf] %v1239
  %1304 = vst [vmem:[%s8 + $0x30] sm:$0xff] %v1240
  %1305 = vst [vmem:[%s8 + $0x38] sm:$0xf] %v1241
  %1306 = vst [vmem:[%s8 + $0x3c] sm:$0xff] %v1242
  %1307 = vst [vmem:[%s8 + $0x44] sm:$0xf] %v1243
  %1308 = vst [vmem:[%s8 + $0x48] sm:$0xff] %v1244
  %1309 = vst [vmem:[%s8 + $0x50] sm:$0xf] %v1245
  %1310 = vst [vmem:[%s8 + $0x54] sm:$0xff] %v1246
  %1311 = vst [vmem:[%s8 + $0x5c] sm:$0xf] %v1247
  %1312 = vst [vmem:[%s8 + $0x60] sm:$0xff] %v1248
  %1313 = vst [vmem:[%s8 + $0x68] sm:$0xf] %v1249
  %1314 = vst [vmem:[%s8 + $0x6c] sm:$0xff] %v1250
  %1315 = vst [vmem:[%s8 + $0x74] sm:$0xf] %v1251
  %1316 = vst [vmem:[%s8 + $0x78] sm:$0xff] %v1252
  %1317 = vst [vmem:[%s8 + $0x80] sm:$0xf] %v1253
  %1318 = vst [vmem:[%s8 + $0x84] sm:$0xff] %v1254
  %1319 = vst [vmem:[%s8 + $0x8c] sm:$0xf] %v1255
  %1320 = vst [vmem:[%s8 + $0x90] sm:$0xff] %v1256
  %1321 = vst [vmem:[%s8 + $0x98] sm:$0xf] %v1257
  %1322 = vst [vmem:[%s8 + $0x9c] sm:$0xff] %v1258
  %1323 = vst [vmem:[%s8 + $0xa4] sm:$0xf] %v1259
  %1324 = vst [vmem:[%s8 + $0xa8] sm:$0xff] %v1260
  %1325 = vst [vmem:[%s8 + $0xb0] sm:$0xf] %v1261
  %1326 = vst [vmem:[%s8 + $0xb4] sm:$0xff] %v1262
  %1327 = vst [vmem:[%s8 + $0xbc] sm:$0xf] %v1263
  // Predicated region
  $region30: #{lgatr_forward.6} parent=0 // pred_check
    _
  $region31: #{lgatr_forward.6} parent=0 // pred_check_branch
    %1329 = sbr.rel (0) target = $region33
  $region32: #{lgatr_forward.6} parent=0 // pred_region
    _
  $region33: #{lgatr_forward.6} parent=0 // pred_fallthru
    _
  // Predicated region
  $region34: #{lgatr_forward.6} parent=0 // pred_check
    _
  $region35: #{lgatr_forward.6} parent=0 // pred_check_branch
    %1331 = sbr.rel (0) target = $region37
  $region36: #{lgatr_forward.6} parent=0 // pred_region
    _
  $region37: #{lgatr_forward.6} parent=0 // pred_fallthru
    _
  // Predicated region
  $region38: #{lgatr_forward.6} parent=0 // pred_check
    _
  $region39: #{lgatr_forward.6} parent=0 // pred_check_branch
    %1333 = sbr.rel (0) target = $region41
  $region40: #{lgatr_forward.6} parent=0 // pred_region
    _
  $region41: #{lgatr_forward.6} parent=0 // pred_fallthru
    _
  // Predicated region
  $region42: #{lgatr_forward.6} parent=0 // pred_check
    _
  $region43: #{lgatr_forward.6} parent=0 // pred_check_branch
    %1335 = sbr.rel (0) target = $region45
  $region44: #{lgatr_forward.6} parent=0 // pred_region
    _
  $region45: #{lgatr_forward.6} parent=0 // pred_fallthru
    _

// kernel: lgatr_forward.7
$region0: #{lgatr_forward.7}
  #allocation0 [shape = 'u32[]', space=smem, size = 0x4, offset = 0x4, fixed_abs, tag = 'smem constant byte address 0x4 - core index']
  #allocation1 [shape = 'u32[144,128]{1,0:T(1,128)}', space=vmem, size = 0x12000, scoped, tag = 'internal scratch']
  #allocation2 [shape = 'f32[128,1]{1,0:T(8,128)}', space=vmem, size = 0x10000, scoped, tag = 'scratch operand']
  #allocation3 [shape = 'f32[128,1]{1,0:T(8,128)}', space=vmem, size = 0x10000, scoped, tag = 'scratch operand']
  #allocation4 [shape = 'f32[128,128]{1,0:T(8,128)}', space=vmem, size = 0x10000, scoped, tag = 'scratch operand']
  #allocation5 [shape = 's32[1]{0}', space=sflag, size = 0x4, scoped, tag = 'scoped memory for lgatr_forward.7']
  #allocation6 [shape = 's32[1]{0:T(128)S(6)}', space=smem, size = 0x200, scoped, tag = 'prefetched SMEM operand 0']
  #allocation7 [shape = 's32[1]{0:T(128)S(6)}', space=smem, size = 0x200, scoped, tag = 'prefetched SMEM operand 1']
  #allocation8 [shape = 's32[1]{0:T(128)S(6)}', space=smem, size = 0x200, scoped, tag = 'prefetched SMEM operand 2']
  #allocation9 [shape = 's32[1]{0:T(128)S(6)}', space=smem, size = 0x200, scoped, tag = 'prefetched SMEM operand 3']
  %s0 = inlined_call_operand.<no memory space> [shape: s32[1], index: 0, kind: input, shape index: {}, may-alias: {0,2}]
  %s1 = inlined_call_operand.<no memory space> [shape: s32[1], index: 1, kind: input, shape index: {}, may-alias: {1,3}]
  %s2 = inlined_call_operand.<no memory space> [shape: s32[1], index: 2, kind: input, shape index: {}, may-alias: {0,2}]
  %s3 = inlined_call_operand.<no memory space> [shape: s32[1], index: 3, kind: input, shape index: {}, may-alias: {1,3}]
  %s4 = inlined_call_operand.vmem [shape: s32[128,1], index: 4, kind: input, shape index: {}]
  %s5 = inlined_call_operand.vmem [shape: s32[1,128], index: 5, kind: input, shape index: {}]
  %s6 = inlined_call_operand.vmem [shape: bf16[128,384], index: 6, kind: input, shape index: {}, may-alias: {6,7,8}]
  %s7 = inlined_call_operand.vmem [shape: bf16[128,384], index: 7, kind: input, shape index: {}, may-alias: {6,7,8}]
  %s8 = inlined_call_operand.vmem [shape: bf16[128,384], index: 8, kind: input, shape index: {}, may-alias: {6,7,8}]
  %s9 = inlined_call_operand.vmem [shape: bf16[128,128], index: 9, kind: output, shape index: {}]
  %s10 = sld [smem:[#allocation0]]
  $region165: #{lgatr_forward.7} parent=0
    _
  %s12 = ssub.s32 1, %s10
  %s13 = scalar_select 0, %s12, %s10
  %14 = sst [smem:[#allocation6]] %s0
  %15 = sst [smem:[#allocation7]] %s1
  %16 = sst [smem:[#allocation8]] %s2
  %17 = sst [smem:[#allocation9]] %s3
  $region1: #{lgatr_forward.7} parent=0
    #allocation10 [shape = 'u8[32768]{0}', space=vmem, size = 0x8000, scoped, tag = 'input window, operand 6, single buffered']
    #allocation11 [shape = 'u8[32768]{0}', space=vmem, size = 0x8000, scoped, tag = 'input window, operand 7, single buffered']
    #allocation12 [shape = 'u8[32768]{0}', space=vmem, size = 0x8000, scoped, tag = 'input window, operand 8, single buffered']
    // Predicated region
    $region2: #{lgatr_forward.7} parent=1 // pred_check
      _
    $region3: #{lgatr_forward.7} parent=1 // pred_check_branch
      %19 = sbr.rel (0) target = $region5
    $region4: #{lgatr_forward.7} parent=1 // pred_region
      _
    $region5: #{lgatr_forward.7} parent=1 // pred_fallthru
      _
    // Predicated region
    $region6: #{lgatr_forward.7} parent=1 // pred_check
      _
    $region7: #{lgatr_forward.7} parent=1 // pred_check_branch
      %21 = sbr.rel (0) target = $region9
    $region8: #{lgatr_forward.7} parent=1 // pred_region
      _
    $region9: #{lgatr_forward.7} parent=1 // pred_fallthru
      _
    // Predicated region
    $region10: #{lgatr_forward.7} parent=1 // pred_check
      _
    $region11: #{lgatr_forward.7} parent=1 // pred_check_branch
      %23 = sbr.rel (0) target = $region13
    $region12: #{lgatr_forward.7} parent=1 // pred_region
      // Predicated region
      $region14: #{lgatr_forward.7} parent=12 // pred_check
        _
      $region15: #{lgatr_forward.7} parent=12 // pred_check_branch
        %25 = sbr.rel (0) target = $region17
      $region16: #{lgatr_forward.7} parent=12 // pred_region
        // Predicated region
        $region18: #{lgatr_forward.7} parent=16 // pred_check
          _
        $region19: #{lgatr_forward.7} parent=16 // pred_check_branch
          %27 = sbr.rel target = $region21
        $region20: #{lgatr_forward.7} parent=16 // pred_region
          // Predicated region
          $region33: #{lgatr_forward.7} parent=20 // pred_check
            _
          $region34: #{lgatr_forward.7} parent=20 // pred_check_branch
            %72 = sbr.rel (0) target = $region36
          $region35: #{lgatr_forward.7} parent=20 // pred_region
            loop: start=0, step=1, limit=1
            $region37: #{lgatr_forward.7} parent=35 // loop_pre_header
              _
            $region38: #{lgatr_forward.7} parent=35 // loop_header
              %s74 = sphi 0, %s78
              %p75 = scmp.ge.s32.totalorder %s74, 1
              %s79 = sphi %s6, %s6
              %s80 = sphi [#allocation10], [#allocation10]
            $region39: #{lgatr_forward.7} parent=35 // loop_header_branch
              %77 = sbr.rel (%p75) target = $region43
            $region40: #{lgatr_forward.7} parent=35 // loop_body
              _
            $region41: #{lgatr_forward.7} parent=35 // loop_footer
              %s78 = sadd.s32 1, %s74
            $region42: #{lgatr_forward.7} parent=35 // loop_footer_branch
              %73 = sbr.rel target = $region38
            $region43: #{lgatr_forward.7} parent=35 // loop_exit
              _
            loop: start=0, step=1, limit=1
            $region44: #{lgatr_forward.7} parent=35 // loop_pre_header
              _
            $region45: #{lgatr_forward.7} parent=35 // loop_header
              %s83 = sphi 0, %s87
              %p84 = scmp.ge.s32.totalorder %s83, 1
              %s88 = sphi %s6, %s6
              %s89 = sphi [#allocation10], [#allocation10]
            $region46: #{lgatr_forward.7} parent=35 // loop_header_branch
              %86 = sbr.rel (%p84) target = $region50
            $region47: #{lgatr_forward.7} parent=35 // loop_body
              %v90 = vld [vmem:[%s88] sm:$0xf]
              %91 = vst [vmem:[%s89] sm:$0xf] %v90
              %v92 = vld [vmem:[%s88 + $0xc] sm:$0xf]
              %93 = vst [vmem:[%s89 + $0x4] sm:$0xf] %v92
              %v94 = vld [vmem:[%s88 + $0x18] sm:$0xf]
              %95 = vst [vmem:[%s89 + $0x8] sm:$0xf] %v94
              %v96 = vld [vmem:[%s88 + $0x24] sm:$0xf]
              %97 = vst [vmem:[%s89 + $0xc] sm:$0xf] %v96
              %v98 = vld [vmem:[%s88 + $0x30] sm:$0xf]
              %99 = vst [vmem:[%s89 + $0x10] sm:$0xf] %v98
              %v100 = vld [vmem:[%s88 + $0x3c] sm:$0xf]
              %101 = vst [vmem:[%s89 + $0x14] sm:$0xf] %v100
              %v102 = vld [vmem:[%s88 + $0x48] sm:$0xf]
              %103 = vst [vmem:[%s89 + $0x18] sm:$0xf] %v102
              %v104 = vld [vmem:[%s88 + $0x54] sm:$0xf]
              %105 = vst [vmem:[%s89 + $0x1c] sm:$0xf] %v104
              %v106 = vld [vmem:[%s88 + $0x60] sm:$0xf]
              %107 = vst [vmem:[%s89 + $0x20] sm:$0xf] %v106
              %v108 = vld [vmem:[%s88 + $0x6c] sm:$0xf]
              %109 = vst [vmem:[%s89 + $0x24] sm:$0xf] %v108
              %v110 = vld [vmem:[%s88 + $0x78] sm:$0xf]
              %111 = vst [vmem:[%s89 + $0x28] sm:$0xf] %v110
              %v112 = vld [vmem:[%s88 + $0x84] sm:$0xf]
              %113 = vst [vmem:[%s89 + $0x2c] sm:$0xf] %v112
              %v114 = vld [vmem:[%s88 + $0x90] sm:$0xf]
              %115 = vst [vmem:[%s89 + $0x30] sm:$0xf] %v114
              %v116 = vld [vmem:[%s88 + $0x9c] sm:$0xf]
              %117 = vst [vmem:[%s89 + $0x34] sm:$0xf] %v116
              %v118 = vld [vmem:[%s88 + $0xa8] sm:$0xf]
              %119 = vst [vmem:[%s89 + $0x38] sm:$0xf] %v118
              %v120 = vld [vmem:[%s88 + $0xb4] sm:$0xf]
              %121 = vst [vmem:[%s89 + $0x3c] sm:$0xf] %v120
            $region48: #{lgatr_forward.7} parent=35 // loop_footer
              %s87 = sadd.s32 1, %s83
            $region49: #{lgatr_forward.7} parent=35 // loop_footer_branch
              %82 = sbr.rel target = $region45
            $region50: #{lgatr_forward.7} parent=35 // loop_exit
              _
          $region36: #{lgatr_forward.7} parent=20 // pred_fallthru
            _
        $region21: #{lgatr_forward.7} parent=16 // pred_fallthru
          _
        // Predicated region
        $region22: #{lgatr_forward.7} parent=16 // pred_check
          _
        $region23: #{lgatr_forward.7} parent=16 // pred_check_branch
          %29 = sbr.rel (0) target = $region25
        $region24: #{lgatr_forward.7} parent=16 // pred_region
          loop: start=0, step=1, limit=1
          $region26: #{lgatr_forward.7} parent=24 // loop_pre_header
            _
          $region27: #{lgatr_forward.7} parent=24 // loop_header
            %s32 = sphi 0, %s36
            %p33 = scmp.ge.s32.totalorder %s32, 1
            %s37 = sphi %s6, %s6
            %s38 = sphi [#allocation10], [#allocation10]
          $region28: #{lgatr_forward.7} parent=24 // loop_header_branch
            %35 = sbr.rel (%p33) target = $region32
          $region29: #{lgatr_forward.7} parent=24 // loop_body
            %v39 = vld [vmem:[%s37] sm:$0xf]
            %40 = vst [vmem:[%s38] sm:$0xf] %v39
            %v41 = vld [vmem:[%s37 + $0xc] sm:$0xf]
            %42 = vst [vmem:[%s38 + $0x4] sm:$0xf] %v41
            %v43 = vld [vmem:[%s37 + $0x18] sm:$0xf]
            %44 = vst [vmem:[%s38 + $0x8] sm:$0xf] %v43
            %v45 = vld [vmem:[%s37 + $0x24] sm:$0xf]
            %46 = vst [vmem:[%s38 + $0xc] sm:$0xf] %v45
            %v47 = vld [vmem:[%s37 + $0x30] sm:$0xf]
            %48 = vst [vmem:[%s38 + $0x10] sm:$0xf] %v47
            %v49 = vld [vmem:[%s37 + $0x3c] sm:$0xf]
            %50 = vst [vmem:[%s38 + $0x14] sm:$0xf] %v49
            %v51 = vld [vmem:[%s37 + $0x48] sm:$0xf]
            %52 = vst [vmem:[%s38 + $0x18] sm:$0xf] %v51
            %v53 = vld [vmem:[%s37 + $0x54] sm:$0xf]
            %54 = vst [vmem:[%s38 + $0x1c] sm:$0xf] %v53
            %v55 = vld [vmem:[%s37 + $0x60] sm:$0xf]
            %56 = vst [vmem:[%s38 + $0x20] sm:$0xf] %v55
            %v57 = vld [vmem:[%s37 + $0x6c] sm:$0xf]
            %58 = vst [vmem:[%s38 + $0x24] sm:$0xf] %v57
            %v59 = vld [vmem:[%s37 + $0x78] sm:$0xf]
            %60 = vst [vmem:[%s38 + $0x28] sm:$0xf] %v59
            %v61 = vld [vmem:[%s37 + $0x84] sm:$0xf]
            %62 = vst [vmem:[%s38 + $0x2c] sm:$0xf] %v61
            %v63 = vld [vmem:[%s37 + $0x90] sm:$0xf]
            %64 = vst [vmem:[%s38 + $0x30] sm:$0xf] %v63
            %v65 = vld [vmem:[%s37 + $0x9c] sm:$0xf]
            %66 = vst [vmem:[%s38 + $0x34] sm:$0xf] %v65
            %v67 = vld [vmem:[%s37 + $0xa8] sm:$0xf]
            %68 = vst [vmem:[%s38 + $0x38] sm:$0xf] %v67
            %v69 = vld [vmem:[%s37 + $0xb4] sm:$0xf]
            %70 = vst [vmem:[%s38 + $0x3c] sm:$0xf] %v69
          $region30: #{lgatr_forward.7} parent=24 // loop_footer
            %s36 = sadd.s32 1, %s32
          $region31: #{lgatr_forward.7} parent=24 // loop_footer_branch
            %31 = sbr.rel target = $region27
          $region32: #{lgatr_forward.7} parent=24 // loop_exit
            _
        $region25: #{lgatr_forward.7} parent=16 // pred_fallthru
          _
      $region17: #{lgatr_forward.7} parent=12 // pred_fallthru
        _
      %122 = vnop
    $region13: #{lgatr_forward.7} parent=1 // pred_fallthru
      _
    // Predicated region
    $region51: #{lgatr_forward.7} parent=1 // pred_check
      _
    $region52: #{lgatr_forward.7} parent=1 // pred_check_branch
      %124 = sbr.rel (0) target = $region54
    $region53: #{lgatr_forward.7} parent=1 // pred_region
      %s125 = scalar_lea.vmem %s7, 4
      // Predicated region
      $region55: #{lgatr_forward.7} parent=53 // pred_check
        _
      $region56: #{lgatr_forward.7} parent=53 // pred_check_branch
        %127 = sbr.rel (0) target = $region58
      $region57: #{lgatr_forward.7} parent=53 // pred_region
        // Predicated region
        $region59: #{lgatr_forward.7} parent=57 // pred_check
          _
        $region60: #{lgatr_forward.7} parent=57 // pred_check_branch
          %129 = sbr.rel target = $region62
        $region61: #{lgatr_forward.7} parent=57 // pred_region
          // Predicated region
          $region74: #{lgatr_forward.7} parent=61 // pred_check
            _
          $region75: #{lgatr_forward.7} parent=61 // pred_check_branch
            %174 = sbr.rel (0) target = $region77
          $region76: #{lgatr_forward.7} parent=61 // pred_region
            loop: start=0, step=1, limit=1
            $region78: #{lgatr_forward.7} parent=76 // loop_pre_header
              _
            $region79: #{lgatr_forward.7} parent=76 // loop_header
              %s176 = sphi 0, %s180
              %p177 = scmp.ge.s32.totalorder %s176, 1
              %s181 = sphi %s125, %s125
              %s182 = sphi [#allocation11], [#allocation11]
            $region80: #{lgatr_forward.7} parent=76 // loop_header_branch
              %179 = sbr.rel (%p177) target = $region84
            $region81: #{lgatr_forward.7} parent=76 // loop_body
              _
            $region82: #{lgatr_forward.7} parent=76 // loop_footer
              %s180 = sadd.s32 1, %s176
            $region83: #{lgatr_forward.7} parent=76 // loop_footer_branch
              %175 = sbr.rel target = $region79
            $region84: #{lgatr_forward.7} parent=76 // loop_exit
              _
            loop: start=0, step=1, limit=1
            $region85: #{lgatr_forward.7} parent=76 // loop_pre_header
              _
            $region86: #{lgatr_forward.7} parent=76 // loop_header
              %s185 = sphi 0, %s189
              %p186 = scmp.ge.s32.totalorder %s185, 1
              %s190 = sphi %s125, %s125
              %s191 = sphi [#allocation11], [#allocation11]
            $region87: #{lgatr_forward.7} parent=76 // loop_header_branch
              %188 = sbr.rel (%p186) target = $region91
            $region88: #{lgatr_forward.7} parent=76 // loop_body
              %v192 = vld [vmem:[%s190] sm:$0xf]
              %193 = vst [vmem:[%s191] sm:$0xf] %v192
              %v194 = vld [vmem:[%s190 + $0xc] sm:$0xf]
              %195 = vst [vmem:[%s191 + $0x4] sm:$0xf] %v194
              %v196 = vld [vmem:[%s190 + $0x18] sm:$0xf]
              %197 = vst [vmem:[%s191 + $0x8] sm:$0xf] %v196
              %v198 = vld [vmem:[%s190 + $0x24] sm:$0xf]
              %199 = vst [vmem:[%s191 + $0xc] sm:$0xf] %v198
              %v200 = vld [vmem:[%s190 + $0x30] sm:$0xf]
              %201 = vst [vmem:[%s191 + $0x10] sm:$0xf] %v200
              %v202 = vld [vmem:[%s190 + $0x3c] sm:$0xf]
              %203 = vst [vmem:[%s191 + $0x14] sm:$0xf] %v202
              %v204 = vld [vmem:[%s190 + $0x48] sm:$0xf]
              %205 = vst [vmem:[%s191 + $0x18] sm:$0xf] %v204
              %v206 = vld [vmem:[%s190 + $0x54] sm:$0xf]
              %207 = vst [vmem:[%s191 + $0x1c] sm:$0xf] %v206
              %v208 = vld [vmem:[%s190 + $0x60] sm:$0xf]
              %209 = vst [vmem:[%s191 + $0x20] sm:$0xf] %v208
              %v210 = vld [vmem:[%s190 + $0x6c] sm:$0xf]
              %211 = vst [vmem:[%s191 + $0x24] sm:$0xf] %v210
              %v212 = vld [vmem:[%s190 + $0x78] sm:$0xf]
              %213 = vst [vmem:[%s191 + $0x28] sm:$0xf] %v212
              %v214 = vld [vmem:[%s190 + $0x84] sm:$0xf]
              %215 = vst [vmem:[%s191 + $0x2c] sm:$0xf] %v214
              %v216 = vld [vmem:[%s190 + $0x90] sm:$0xf]
              %217 = vst [vmem:[%s191 + $0x30] sm:$0xf] %v216
              %v218 = vld [vmem:[%s190 + $0x9c] sm:$0xf]
              %219 = vst [vmem:[%s191 + $0x34] sm:$0xf] %v218
              %v220 = vld [vmem:[%s190 + $0xa8] sm:$0xf]
              %221 = vst [vmem:[%s191 + $0x38] sm:$0xf] %v220
              %v222 = vld [vmem:[%s190 + $0xb4] sm:$0xf]
              %223 = vst [vmem:[%s191 + $0x3c] sm:$0xf] %v222
            $region89: #{lgatr_forward.7} parent=76 // loop_footer
              %s189 = sadd.s32 1, %s185
            $region90: #{lgatr_forward.7} parent=76 // loop_footer_branch
              %184 = sbr.rel target = $region86
            $region91: #{lgatr_forward.7} parent=76 // loop_exit
              _
          $region77: #{lgatr_forward.7} parent=61 // pred_fallthru
            _
        $region62: #{lgatr_forward.7} parent=57 // pred_fallthru
          _
        // Predicated region
        $region63: #{lgatr_forward.7} parent=57 // pred_check
          _
        $region64: #{lgatr_forward.7} parent=57 // pred_check_branch
          %131 = sbr.rel (0) target = $region66
        $region65: #{lgatr_forward.7} parent=57 // pred_region
          loop: start=0, step=1, limit=1
          $region67: #{lgatr_forward.7} parent=65 // loop_pre_header
            _
          $region68: #{lgatr_forward.7} parent=65 // loop_header
            %s134 = sphi 0, %s138
            %p135 = scmp.ge.s32.totalorder %s134, 1
            %s139 = sphi %s125, %s125
            %s140 = sphi [#allocation11], [#allocation11]
          $region69: #{lgatr_forward.7} parent=65 // loop_header_branch
            %137 = sbr.rel (%p135) target = $region73
          $region70: #{lgatr_forward.7} parent=65 // loop_body
            %v141 = vld [vmem:[%s139] sm:$0xf]
            %142 = vst [vmem:[%s140] sm:$0xf] %v141
            %v143 = vld [vmem:[%s139 + $0xc] sm:$0xf]
            %144 = vst [vmem:[%s140 + $0x4] sm:$0xf] %v143
            %v145 = vld [vmem:[%s139 + $0x18] sm:$0xf]
            %146 = vst [vmem:[%s140 + $0x8] sm:$0xf] %v145
            %v147 = vld [vmem:[%s139 + $0x24] sm:$0xf]
            %148 = vst [vmem:[%s140 + $0xc] sm:$0xf] %v147
            %v149 = vld [vmem:[%s139 + $0x30] sm:$0xf]
            %150 = vst [vmem:[%s140 + $0x10] sm:$0xf] %v149
            %v151 = vld [vmem:[%s139 + $0x3c] sm:$0xf]
            %152 = vst [vmem:[%s140 + $0x14] sm:$0xf] %v151
            %v153 = vld [vmem:[%s139 + $0x48] sm:$0xf]
            %154 = vst [vmem:[%s140 + $0x18] sm:$0xf] %v153
            %v155 = vld [vmem:[%s139 + $0x54] sm:$0xf]
            %156 = vst [vmem:[%s140 + $0x1c] sm:$0xf] %v155
            %v157 = vld [vmem:[%s139 + $0x60] sm:$0xf]
            %158 = vst [vmem:[%s140 + $0x20] sm:$0xf] %v157
            %v159 = vld [vmem:[%s139 + $0x6c] sm:$0xf]
            %160 = vst [vmem:[%s140 + $0x24] sm:$0xf] %v159
            %v161 = vld [vmem:[%s139 + $0x78] sm:$0xf]
            %162 = vst [vmem:[%s140 + $0x28] sm:$0xf] %v161
            %v163 = vld [vmem:[%s139 + $0x84] sm:$0xf]
            %164 = vst [vmem:[%s140 + $0x2c] sm:$0xf] %v163
            %v165 = vld [vmem:[%s139 + $0x90] sm:$0xf]
            %166 = vst [vmem:[%s140 + $0x30] sm:$0xf] %v165
            %v167 = vld [vmem:[%s139 + $0x9c] sm:$0xf]
            %168 = vst [vmem:[%s140 + $0x34] sm:$0xf] %v167
            %v169 = vld [vmem:[%s139 + $0xa8] sm:$0xf]
            %170 = vst [vmem:[%s140 + $0x38] sm:$0xf] %v169
            %v171 = vld [vmem:[%s139 + $0xb4] sm:$0xf]
            %172 = vst [vmem:[%s140 + $0x3c] sm:$0xf] %v171
          $region71: #{lgatr_forward.7} parent=65 // loop_footer
            %s138 = sadd.s32 1, %s134
          $region72: #{lgatr_forward.7} parent=65 // loop_footer_branch
            %133 = sbr.rel target = $region68
          $region73: #{lgatr_forward.7} parent=65 // loop_exit
            _
        $region66: #{lgatr_forward.7} parent=57 // pred_fallthru
          _
      $region58: #{lgatr_forward.7} parent=53 // pred_fallthru
        _
      %224 = vnop
    $region54: #{lgatr_forward.7} parent=1 // pred_fallthru
      _
    // Predicated region
    $region92: #{lgatr_forward.7} parent=1 // pred_check
      _
    $region93: #{lgatr_forward.7} parent=1 // pred_check_branch
      %226 = sbr.rel (0) target = $region95
    $region94: #{lgatr_forward.7} parent=1 // pred_region
      %s227 = scalar_lea.vmem %s8, 8
      // Predicated region
      $region96: #{lgatr_forward.7} parent=94 // pred_check
        _
      $region97: #{lgatr_forward.7} parent=94 // pred_check_branch
        %229 = sbr.rel (0) target = $region99
      $region98: #{lgatr_forward.7} parent=94 // pred_region
        // Predicated region
        $region100: #{lgatr_forward.7} parent=98 // pred_check
          _
        $region101: #{lgatr_forward.7} parent=98 // pred_check_branch
          %231 = sbr.rel target = $region103
        $region102: #{lgatr_forward.7} parent=98 // pred_region
          // Predicated region
          $region115: #{lgatr_forward.7} parent=102 // pred_check
            _
          $region116: #{lgatr_forward.7} parent=102 // pred_check_branch
            %276 = sbr.rel (0) target = $region118
          $region117: #{lgatr_forward.7} parent=102 // pred_region
            loop: start=0, step=1, limit=1
            $region119: #{lgatr_forward.7} parent=117 // loop_pre_header
              _
            $region120: #{lgatr_forward.7} parent=117 // loop_header
              %s278 = sphi 0, %s282
              %p279 = scmp.ge.s32.totalorder %s278, 1
              %s283 = sphi %s227, %s227
              %s284 = sphi [#allocation12], [#allocation12]
            $region121: #{lgatr_forward.7} parent=117 // loop_header_branch
              %281 = sbr.rel (%p279) target = $region125
            $region122: #{lgatr_forward.7} parent=117 // loop_body
              _
            $region123: #{lgatr_forward.7} parent=117 // loop_footer
              %s282 = sadd.s32 1, %s278
            $region124: #{lgatr_forward.7} parent=117 // loop_footer_branch
              %277 = sbr.rel target = $region120
            $region125: #{lgatr_forward.7} parent=117 // loop_exit
              _
            loop: start=0, step=1, limit=1
            $region126: #{lgatr_forward.7} parent=117 // loop_pre_header
              _
            $region127: #{lgatr_forward.7} parent=117 // loop_header
              %s287 = sphi 0, %s291
              %p288 = scmp.ge.s32.totalorder %s287, 1
              %s292 = sphi %s227, %s227
              %s293 = sphi [#allocation12], [#allocation12]
            $region128: #{lgatr_forward.7} parent=117 // loop_header_branch
              %290 = sbr.rel (%p288) target = $region132
            $region129: #{lgatr_forward.7} parent=117 // loop_body
              %v294 = vld [vmem:[%s292] sm:$0xf]
              %295 = vst [vmem:[%s293] sm:$0xf] %v294
              %v296 = vld [vmem:[%s292 + $0xc] sm:$0xf]
              %297 = vst [vmem:[%s293 + $0x4] sm:$0xf] %v296
              %v298 = vld [vmem:[%s292 + $0x18] sm:$0xf]
              %299 = vst [vmem:[%s293 + $0x8] sm:$0xf] %v298
              %v300 = vld [vmem:[%s292 + $0x24] sm:$0xf]
              %301 = vst [vmem:[%s293 + $0xc] sm:$0xf] %v300
              %v302 = vld [vmem:[%s292 + $0x30] sm:$0xf]
              %303 = vst [vmem:[%s293 + $0x10] sm:$0xf] %v302
              %v304 = vld [vmem:[%s292 + $0x3c] sm:$0xf]
              %305 = vst [vmem:[%s293 + $0x14] sm:$0xf] %v304
              %v306 = vld [vmem:[%s292 + $0x48] sm:$0xf]
              %307 = vst [vmem:[%s293 + $0x18] sm:$0xf] %v306
              %v308 = vld [vmem:[%s292 + $0x54] sm:$0xf]
              %309 = vst [vmem:[%s293 + $0x1c] sm:$0xf] %v308
              %v310 = vld [vmem:[%s292 + $0x60] sm:$0xf]
              %311 = vst [vmem:[%s293 + $0x20] sm:$0xf] %v310
              %v312 = vld [vmem:[%s292 + $0x6c] sm:$0xf]
              %313 = vst [vmem:[%s293 + $0x24] sm:$0xf] %v312
              %v314 = vld [vmem:[%s292 + $0x78] sm:$0xf]
              %315 = vst [vmem:[%s293 + $0x28] sm:$0xf] %v314
              %v316 = vld [vmem:[%s292 + $0x84] sm:$0xf]
              %317 = vst [vmem:[%s293 + $0x2c] sm:$0xf] %v316
              %v318 = vld [vmem:[%s292 + $0x90] sm:$0xf]
              %319 = vst [vmem:[%s293 + $0x30] sm:$0xf] %v318
              %v320 = vld [vmem:[%s292 + $0x9c] sm:$0xf]
              %321 = vst [vmem:[%s293 + $0x34] sm:$0xf] %v320
              %v322 = vld [vmem:[%s292 + $0xa8] sm:$0xf]
              %323 = vst [vmem:[%s293 + $0x38] sm:$0xf] %v322
              %v324 = vld [vmem:[%s292 + $0xb4] sm:$0xf]
              %325 = vst [vmem:[%s293 + $0x3c] sm:$0xf] %v324
            $region130: #{lgatr_forward.7} parent=117 // loop_footer
              %s291 = sadd.s32 1, %s287
            $region131: #{lgatr_forward.7} parent=117 // loop_footer_branch
              %286 = sbr.rel target = $region127
            $region132: #{lgatr_forward.7} parent=117 // loop_exit
              _
          $region118: #{lgatr_forward.7} parent=102 // pred_fallthru
            _
        $region103: #{lgatr_forward.7} parent=98 // pred_fallthru
          _
        // Predicated region
        $region104: #{lgatr_forward.7} parent=98 // pred_check
          _
        $region105: #{lgatr_forward.7} parent=98 // pred_check_branch
          %233 = sbr.rel (0) target = $region107
        $region106: #{lgatr_forward.7} parent=98 // pred_region
          loop: start=0, step=1, limit=1
          $region108: #{lgatr_forward.7} parent=106 // loop_pre_header
            _
          $region109: #{lgatr_forward.7} parent=106 // loop_header
            %s236 = sphi 0, %s240
            %p237 = scmp.ge.s32.totalorder %s236, 1
            %s241 = sphi %s227, %s227
            %s242 = sphi [#allocation12], [#allocation12]
          $region110: #{lgatr_forward.7} parent=106 // loop_header_branch
            %239 = sbr.rel (%p237) target = $region114
          $region111: #{lgatr_forward.7} parent=106 // loop_body
            %v243 = vld [vmem:[%s241] sm:$0xf]
            %244 = vst [vmem:[%s242] sm:$0xf] %v243
            %v245 = vld [vmem:[%s241 + $0xc] sm:$0xf]
            %246 = vst [vmem:[%s242 + $0x4] sm:$0xf] %v245
            %v247 = vld [vmem:[%s241 + $0x18] sm:$0xf]
            %248 = vst [vmem:[%s242 + $0x8] sm:$0xf] %v247
            %v249 = vld [vmem:[%s241 + $0x24] sm:$0xf]
            %250 = vst [vmem:[%s242 + $0xc] sm:$0xf] %v249
            %v251 = vld [vmem:[%s241 + $0x30] sm:$0xf]
            %252 = vst [vmem:[%s242 + $0x10] sm:$0xf] %v251
            %v253 = vld [vmem:[%s241 + $0x3c] sm:$0xf]
            %254 = vst [vmem:[%s242 + $0x14] sm:$0xf] %v253
            %v255 = vld [vmem:[%s241 + $0x48] sm:$0xf]
            %256 = vst [vmem:[%s242 + $0x18] sm:$0xf] %v255
            %v257 = vld [vmem:[%s241 + $0x54] sm:$0xf]
            %258 = vst [vmem:[%s242 + $0x1c] sm:$0xf] %v257
            %v259 = vld [vmem:[%s241 + $0x60] sm:$0xf]
            %260 = vst [vmem:[%s242 + $0x20] sm:$0xf] %v259
            %v261 = vld [vmem:[%s241 + $0x6c] sm:$0xf]
            %262 = vst [vmem:[%s242 + $0x24] sm:$0xf] %v261
            %v263 = vld [vmem:[%s241 + $0x78] sm:$0xf]
            %264 = vst [vmem:[%s242 + $0x28] sm:$0xf] %v263
            %v265 = vld [vmem:[%s241 + $0x84] sm:$0xf]
            %266 = vst [vmem:[%s242 + $0x2c] sm:$0xf] %v265
            %v267 = vld [vmem:[%s241 + $0x90] sm:$0xf]
            %268 = vst [vmem:[%s242 + $0x30] sm:$0xf] %v267
            %v269 = vld [vmem:[%s241 + $0x9c] sm:$0xf]
            %270 = vst [vmem:[%s242 + $0x34] sm:$0xf] %v269
            %v271 = vld [vmem:[%s241 + $0xa8] sm:$0xf]
            %272 = vst [vmem:[%s242 + $0x38] sm:$0xf] %v271
            %v273 = vld [vmem:[%s241 + $0xb4] sm:$0xf]
            %274 = vst [vmem:[%s242 + $0x3c] sm:$0xf] %v273
          $region112: #{lgatr_forward.7} parent=106 // loop_footer
            %s240 = sadd.s32 1, %s236
          $region113: #{lgatr_forward.7} parent=106 // loop_footer_branch
            %235 = sbr.rel target = $region109
          $region114: #{lgatr_forward.7} parent=106 // loop_exit
            _
        $region107: #{lgatr_forward.7} parent=98 // pred_fallthru
          _
      $region99: #{lgatr_forward.7} parent=94 // pred_fallthru
        _
      %326 = vnop
    $region95: #{lgatr_forward.7} parent=1 // pred_fallthru
      _
    // Predicated region
    $region133: #{lgatr_forward.7} parent=1 // pred_check
      _
    $region134: #{lgatr_forward.7} parent=1 // pred_check_branch
      %328 = sbr.rel (0) target = $region136
    $region135: #{lgatr_forward.7} parent=1 // pred_region
      _
    $region136: #{lgatr_forward.7} parent=1 // pred_fallthru
      _
    // Predicated region
    $region137: #{lgatr_forward.7} parent=1 // pred_check
      _
    $region138: #{lgatr_forward.7} parent=1 // pred_check_branch
      %330 = sbr.rel (0) target = $region140
    $region139: #{lgatr_forward.7} parent=1 // pred_region
      _
    $region140: #{lgatr_forward.7} parent=1 // pred_fallthru
      _
    // Predicated region
    $region141: #{lgatr_forward.7} parent=1 // pred_check
      _
    $region142: #{lgatr_forward.7} parent=1 // pred_check_branch
      %332 = sbr.rel (0) target = $region144
    $region143: #{lgatr_forward.7} parent=1 // pred_region
      _
    $region144: #{lgatr_forward.7} parent=1 // pred_fallthru
      _
    %p334 = scmp.eq.s32.totalorder 0, 0
    // Predicated region
    $region145: #{lgatr_forward.7} parent=1 // pred_check
      %p335 = pneg %p334
    $region146: #{lgatr_forward.7} parent=1 // pred_check_branch
      %337 = sbr.rel (%p335) target = $region148
    $region147: #{lgatr_forward.7} parent=1 // pred_region
      %vm338 = vcmask 7168
      %339 = vst.msk [vmem:[#allocation2] sm:$0xff] %vm338, -inf
      %340 = vst.msk [vmem:[#allocation2 + $0x8] sm:$0xff] %vm338, -inf
      %341 = vst.msk [vmem:[#allocation2 + $0x10] sm:$0xff] %vm338, -inf
      %342 = vst.msk [vmem:[#allocation2 + $0x18] sm:$0xff] %vm338, -inf
      %343 = vst.msk [vmem:[#allocation2 + $0x20] sm:$0xff] %vm338, -inf
      %344 = vst.msk [vmem:[#allocation2 + $0x28] sm:$0xff] %vm338, -inf
      %345 = vst.msk [vmem:[#allocation2 + $0x30] sm:$0xff] %vm338, -inf
      %346 = vst.msk [vmem:[#allocation2 + $0x38] sm:$0xff] %vm338, -inf
      %347 = vst.msk [vmem:[#allocation2 + $0x40] sm:$0xff] %vm338, -inf
      %348 = vst.msk [vmem:[#allocation2 + $0x48] sm:$0xff] %vm338, -inf
      %349 = vst.msk [vmem:[#allocation2 + $0x50] sm:$0xff] %vm338, -inf
      %350 = vst.msk [vmem:[#allocation2 + $0x58] sm:$0xff] %vm338, -inf
      %351 = vst.msk [vmem:[#allocation2 + $0x60] sm:$0xff] %vm338, -inf
      %352 = vst.msk [vmem:[#allocation2 + $0x68] sm:$0xff] %vm338, -inf
      %353 = vst.msk [vmem:[#allocation2 + $0x70] sm:$0xff] %vm338, -inf
      %354 = vst.msk [vmem:[#allocation2 + $0x78] sm:$0xff] %vm338, -inf
      %355 = vst.msk [vmem:[#allocation3] sm:$0xff] %vm338, 0.0
      %356 = vst.msk [vmem:[#allocation3 + $0x8] sm:$0xff] %vm338, 0.0
      %357 = vst.msk [vmem:[#allocation3 + $0x10] sm:$0xff] %vm338, 0.0
      %358 = vst.msk [vmem:[#allocation3 + $0x18] sm:$0xff] %vm338, 0.0
      %359 = vst.msk [vmem:[#allocation3 + $0x20] sm:$0xff] %vm338, 0.0
      %360 = vst.msk [vmem:[#allocation3 + $0x28] sm:$0xff] %vm338, 0.0
      %361 = vst.msk [vmem:[#allocation3 + $0x30] sm:$0xff] %vm338, 0.0
      %362 = vst.msk [vmem:[#allocation3 + $0x38] sm:$0xff] %vm338, 0.0
      %363 = vst.msk [vmem:[#allocation3 + $0x40] sm:$0xff] %vm338, 0.0
      %364 = vst.msk [vmem:[#allocation3 + $0x48] sm:$0xff] %vm338, 0.0
      %365 = vst.msk [vmem:[#allocation3 + $0x50] sm:$0xff] %vm338, 0.0
      %366 = vst.msk [vmem:[#allocation3 + $0x58] sm:$0xff] %vm338, 0.0
      %367 = vst.msk [vmem:[#allocation3 + $0x60] sm:$0xff] %vm338, 0.0
      %368 = vst.msk [vmem:[#allocation3 + $0x68] sm:$0xff] %vm338, 0.0
      %369 = vst.msk [vmem:[#allocation3 + $0x70] sm:$0xff] %vm338, 0.0
      %370 = vst.msk [vmem:[#allocation3 + $0x78] sm:$0xff] %vm338, 0.0
      %371 = vst [vmem:[#allocation4] sm:$0xff] 0.0
      %372 = vst [vmem:[#allocation4 + $0x8] sm:$0xff] 0.0
      %373 = vst [vmem:[#allocation4 + $0x10] sm:$0xff] 0.0
      %374 = vst [vmem:[#allocation4 + $0x18] sm:$0xff] 0.0
      %375 = vst [vmem:[#allocation4 + $0x20] sm:$0xff] 0.0
      %376 = vst [vmem:[#allocation4 + $0x28] sm:$0xff] 0.0
      %377 = vst [vmem:[#allocation4 + $0x30] sm:$0xff] 0.0
      %378 = vst [vmem:[#allocation4 + $0x38] sm:$0xff] 0.0
      %379 = vst [vmem:[#allocation4 + $0x40] sm:$0xff] 0.0
      %380 = vst [vmem:[#allocation4 + $0x48] sm:$0xff] 0.0
      %381 = vst [vmem:[#allocation4 + $0x50] sm:$0xff] 0.0
      %382 = vst [vmem:[#allocation4 + $0x58] sm:$0xff] 0.0
      %383 = vst [vmem:[#allocation4 + $0x60] sm:$0xff] 0.0
      %384 = vst [vmem:[#allocation4 + $0x68] sm:$0xff] 0.0
      %385 = vst [vmem:[#allocation4 + $0x70] sm:$0xff] 0.0
      %386 = vst [vmem:[#allocation4 + $0x78] sm:$0xff] 0.0
    $region148: #{lgatr_forward.7} parent=1 // pred_fallthru
      _
    %s387 = sld [smem:[#allocation7]]
    %s388 = sld [smem:[#allocation8]]
    %p389 = scmp.ge.s32.totalorder %s387, %s388
    %s390 = sld [smem:[#allocation9]]
    %s391 = sld [smem:[#allocation6]]
    %p392 = scmp.ge.s32.totalorder %s390, %s391
    %p393 = pnand %p389, %p392
    %p394 = pneg %p393
    // Predicated region
    $region149: #{lgatr_forward.7} parent=1 // pred_check
      _
    $region150: #{lgatr_forward.7} parent=1 // pred_check_branch
      %396 = sbr.rel (%p393) target = $region152
    $region151: #{lgatr_forward.7} parent=1 // pred_region
      %v397 = vld [vmem:[#allocation10] sm:$0xf]
      %v398 = vld [vmem:[#allocation10 + $0x4] sm:$0xf]
      %v399 = vld [vmem:[#allocation10 + $0x8] sm:$0xf]
      %v400 = vld [vmem:[#allocation10 + $0xc] sm:$0xf]
      %v401 = vld [vmem:[#allocation10 + $0x10] sm:$0xf]
      %v402 = vld [vmem:[#allocation10 + $0x14] sm:$0xf]
      %v403 = vld [vmem:[#allocation10 + $0x18] sm:$0xf]
      %v404 = vld [vmem:[#allocation10 + $0x1c] sm:$0xf]
      %v405 = vld [vmem:[#allocation10 + $0x20] sm:$0xf]
      %v406 = vld [vmem:[#allocation10 + $0x24] sm:$0xf]
      %v407 = vld [vmem:[#allocation10 + $0x28] sm:$0xf]
      %v408 = vld [vmem:[#allocation10 + $0x2c] sm:$0xf]
      %v409 = vld [vmem:[#allocation10 + $0x30] sm:$0xf]
      %v410 = vld [vmem:[#allocation10 + $0x34] sm:$0xf]
      %v411 = vld [vmem:[#allocation10 + $0x38] sm:$0xf]
      %v412 = vld [vmem:[#allocation10 + $0x3c] sm:$0xf]
      %v413 = vld [vmem:[#allocation11] sm:$0xf]
      %v414 = vld [vmem:[#allocation11 + $0x4] sm:$0xf]
      %v415 = vld [vmem:[#allocation11 + $0x8] sm:$0xf]
      %v416 = vld [vmem:[#allocation11 + $0xc] sm:$0xf]
      %v417 = vld [vmem:[#allocation11 + $0x10] sm:$0xf]
      %v418 = vld [vmem:[#allocation11 + $0x14] sm:$0xf]
      %v419 = vld [vmem:[#allocation11 + $0x18] sm:$0xf]
      %v420 = vld [vmem:[#allocation11 + $0x1c] sm:$0xf]
      %v421 = vld [vmem:[#allocation11 + $0x20] sm:$0xf]
      %v422 = vld [vmem:[#allocation11 + $0x24] sm:$0xf]
      %v423 = vld [vmem:[#allocation11 + $0x28] sm:$0xf]
      %v424 = vld [vmem:[#allocation11 + $0x2c] sm:$0xf]
      %v425 = vld [vmem:[#allocation11 + $0x30] sm:$0xf]
      %v426 = vld [vmem:[#allocation11 + $0x34] sm:$0xf]
      %v427 = vld [vmem:[#allocation11 + $0x38] sm:$0xf]
      %v428 = vld [vmem:[#allocation11 + $0x3c] sm:$0xf]
      %v445 = vunpack.c.l.b16 %v397
      %v446 = vunpack.c.l.b16 %v398
      %v447 = vunpack.c.l.b16 %v399
      %v448 = vunpack.c.l.b16 %v400
      %v449 = vunpack.c.l.b16 %v401
      %v450 = vunpack.c.l.b16 %v402
      %v451 = vunpack.c.l.b16 %v403
      %v452 = vunpack.c.l.b16 %v404
      %v453 = vunpack.c.l.b16 %v405
      %v454 = vunpack.c.l.b16 %v406
      %v455 = vunpack.c.l.b16 %v407
      %v456 = vunpack.c.l.b16 %v408
      %v457 = vunpack.c.l.b16 %v409
      %v458 = vunpack.c.l.b16 %v410
      %v459 = vunpack.c.l.b16 %v411
      %v460 = vunpack.c.l.b16 %v412
      %v461 = vpack.c.b16 %v446, %v445
      %v462 = vpack.c.b16 %v448, %v447
      %v463 = vpack.c.b16 %v450, %v449
      %v464 = vpack.c.b16 %v452, %v451
      %v465 = vpack.c.b16 %v454, %v453
      %v466 = vpack.c.b16 %v456, %v455
      %v467 = vpack.c.b16 %v458, %v457
      %v468 = vpack.c.b16 %v460, %v459
      %v493 = vunpack.c.l.b16 %v413
      %v494 = vunpack.c.l.b16 %v414
      %v495 = vunpack.c.l.b16 %v415
      %v496 = vunpack.c.l.b16 %v416
      %v497 = vunpack.c.l.b16 %v417
      %v498 = vunpack.c.l.b16 %v418
      %v499 = vunpack.c.l.b16 %v419
      %v500 = vunpack.c.l.b16 %v420
      %v501 = vunpack.c.l.b16 %v421
      %v502 = vunpack.c.l.b16 %v422
      %v503 = vunpack.c.l.b16 %v423
      %v504 = vunpack.c.l.b16 %v424
      %v505 = vunpack.c.l.b16 %v425
      %v506 = vunpack.c.l.b16 %v426
      %v507 = vunpack.c.l.b16 %v427
      %v508 = vunpack.c.l.b16 %v428
      %v509 = vpack.c.b16 %v494, %v493
      %v510 = vpack.c.b16 %v496, %v495
      %v511 = vpack.c.b16 %v498, %v497
      %v512 = vpack.c.b16 %v500, %v499
      %v513 = vpack.c.b16 %v502, %v501
      %v514 = vpack.c.b16 %v504, %v503
      %v515 = vpack.c.b16 %v506, %v505
      %v516 = vpack.c.b16 %v508, %v507
      %525 = vmatprep.subr.bf16.mxu0 0
      %526 = vmatpush1.bf16.xpose.msra.mxu0 %v509
      %527 = vmatprep.subr.bf16.mxu0 0
      %528 = vmatpush1.bf16.xpose.msra.mxu0 %v510
      %529 = vmatprep.subr.bf16.mxu0 0
      %530 = vmatpush1.bf16.xpose.msra.mxu0 %v511
      %531 = vmatprep.subr.bf16.mxu0 0
      %532 = vmatpush1.bf16.xpose.msra.mxu0 %v512
      %533 = vmatprep.subr.bf16.mxu0 0
      %534 = vmatpush1.bf16.xpose.msra.mxu0 %v513
      %535 = vmatprep.subr.bf16.mxu0 0
      %536 = vmatpush1.bf16.xpose.msra.mxu0 %v514
      %537 = vmatprep.subr.bf16.mxu0 0
      %538 = vmatpush1.bf16.xpose.msra.mxu0 %v515
      %539 = vmatprep.subr.bf16.mxu0 0
      %540 = vmatpush1.bf16.xpose.msra.mxu0 %v516
      %541 = vmatprep.subr.bf16.mxu0 0
      %542 = vmatpush1.bf16.xpose.msra.mxu0 0
      %543 = vmatprep.subr.bf16.mxu0 0
      %544 = vmatpush1.bf16.xpose.msra.mxu0 0
      %545 = vmatprep.subr.bf16.mxu0 0
      %546 = vmatpush1.bf16.xpose.msra.mxu0 0
      %547 = vmatprep.subr.bf16.mxu0 0
      %548 = vmatpush1.bf16.xpose.msra.mxu0 0
      %549 = vmatprep.subr.bf16.mxu0 0
      %550 = vmatpush1.bf16.xpose.msra.mxu0 0
      %551 = vmatprep.subr.bf16.mxu0 0
      %552 = vmatpush1.bf16.xpose.msra.mxu0 0
      %553 = vmatprep.subr.bf16.mxu0 0
      %554 = vmatpush1.bf16.xpose.msra.mxu0 0
      %555 = vmatprep.subr.bf16.mxu0 0
      %556 = vmatpush1.bf16.xpose.msra.mxu0 0
      %557 = vmatprep.mubr.bf16.mxu0 0
      %558 = vmatmul.mubr.bf16.gmra.mrb[0].mxu0 %v461
      %v559 = vpop.f32.mrb[0].mxu0
      %v560 = vadd.f32 0.0, %v559
      %v561 = vpop.f32.mrb[0].mxu0
      %v562 = vpop.f32.mrb[0].mxu0
      %v563 = vadd.f32 0.0, %v562
      %v564 = vpop.f32.mrb[0].mxu0
      %565 = vmatprep.mubr.bf16.mxu0 0
      %566 = vmatmul.mubr.bf16.gmra.mrb[0].mxu0 %v462
      %v567 = vpop.f32.mrb[0].mxu0
      %v568 = vadd.f32 0.0, %v567
      %v569 = vpop.f32.mrb[0].mxu0
      %v570 = vpop.f32.mrb[0].mxu0
      %v571 = vadd.f32 0.0, %v570
      %v572 = vpop.f32.mrb[0].mxu0
      %573 = vmatprep.mubr.bf16.mxu0 0
      %574 = vmatmul.mubr.bf16.gmra.mrb[0].mxu0 %v463
      %v575 = vpop.f32.mrb[0].mxu0
      %v576 = vadd.f32 0.0, %v575
      %v577 = vpop.f32.mrb[0].mxu0
      %v578 = vpop.f32.mrb[0].mxu0
      %v579 = vadd.f32 0.0, %v578
      %v580 = vpop.f32.mrb[0].mxu0
      %581 = vmatprep.mubr.bf16.mxu0 0
      %582 = vmatmul.mubr.bf16.gmra.mrb[0].mxu0 %v464
      %v583 = vpop.f32.mrb[0].mxu0
      %v584 = vadd.f32 0.0, %v583
      %v585 = vpop.f32.mrb[0].mxu0
      %v586 = vpop.f32.mrb[0].mxu0
      %v587 = vadd.f32 0.0, %v586
      %v588 = vpop.f32.mrb[0].mxu0
      %589 = vmatprep.mubr.bf16.mxu0 0
      %590 = vmatmul.mubr.bf16.gmra.mrb[0].mxu0 %v465
      %v591 = vpop.f32.mrb[0].mxu0
      %v592 = vadd.f32 0.0, %v591
      %v593 = vpop.f32.mrb[0].mxu0
      %v594 = vpop.f32.mrb[0].mxu0
      %v595 = vadd.f32 0.0, %v594
      %v596 = vpop.f32.mrb[0].mxu0
      %597 = vmatprep.mubr.bf16.mxu0 0
      %598 = vmatmul.mubr.bf16.gmra.mrb[0].mxu0 %v466
      %v599 = vpop.f32.mrb[0].mxu0
      %v600 = vadd.f32 0.0, %v599
      %v601 = vpop.f32.mrb[0].mxu0
      %v602 = vpop.f32.mrb[0].mxu0
      %v603 = vadd.f32 0.0, %v602
      %v604 = vpop.f32.mrb[0].mxu0
      %605 = vmatprep.mubr.bf16.mxu0 0
      %606 = vmatmul.mubr.bf16.gmra.mrb[0].mxu0 %v467
      %v607 = vpop.f32.mrb[0].mxu0
      %v608 = vadd.f32 0.0, %v607
      %v609 = vpop.f32.mrb[0].mxu0
      %v610 = vpop.f32.mrb[0].mxu0
      %v611 = vadd.f32 0.0, %v610
      %v612 = vpop.f32.mrb[0].mxu0
      %613 = vmatprep.mubr.bf16.mxu0 0
      %614 = vmatmul.mubr.bf16.gmra.mrb[0].mxu0 %v468
      %v615 = vpop.f32.mrb[0].mxu0
      %v616 = vadd.f32 0.0, %v615
      %v617 = vpop.f32.mrb[0].mxu0
      %v618 = vpop.f32.mrb[0].mxu0
      %v619 = vadd.f32 0.0, %v618
      %v620 = vpop.f32.mrb[0].mxu0
      %621 = vdwg.mxu0
      %v622 = vld [vmem:[%s4] sm:$0xff]
      %v623 = vld [vmem:[%s4 + $0x8] sm:$0xff]
      %v624 = vld [vmem:[%s4 + $0x10] sm:$0xff]
      %v625 = vld [vmem:[%s4 + $0x18] sm:$0xff]
      %v626 = vld [vmem:[%s4 + $0x20] sm:$0xff]
      %v627 = vld [vmem:[%s4 + $0x28] sm:$0xff]
      %v628 = vld [vmem:[%s4 + $0x30] sm:$0xff]
      %v629 = vld [vmem:[%s4 + $0x38] sm:$0xff]
      %v630 = vld [vmem:[%s4 + $0x40] sm:$0xff]
      %v631 = vld [vmem:[%s4 + $0x48] sm:$0xff]
      %v632 = vld [vmem:[%s4 + $0x50] sm:$0xff]
      %v633 = vld [vmem:[%s4 + $0x58] sm:$0xff]
      %v634 = vld [vmem:[%s4 + $0x60] sm:$0xff]
      %v635 = vld [vmem:[%s4 + $0x68] sm:$0xff]
      %v636 = vld [vmem:[%s4 + $0x70] sm:$0xff]
      %v637 = vld [vmem:[%s4 + $0x78] sm:$0xff]
      %v638 = vld [vmem:[%s5] sm:$0x1]
      %639 = vset.pattern.permute.xlu0 0
      %640 = vperm.xlu0 %639, %v622
      %v641 = vpop.permute.xlu0 %640
      %642 = vset.pattern.permute.xlu0 0
      %643 = vperm.xlu0 %642, %v623
      %v644 = vpop.permute.xlu0 %643
      %645 = vset.pattern.permute.xlu0 0
      %646 = vperm.xlu0 %645, %v624
      %v647 = vpop.permute.xlu0 %646
      %648 = vset.pattern.permute.xlu0 0
      %649 = vperm.xlu0 %648, %v625
      %v650 = vpop.permute.xlu0 %649
      %651 = vset.pattern.permute.xlu0 0
      %652 = vperm.xlu0 %651, %v626
      %v653 = vpop.permute.xlu0 %652
      %654 = vset.pattern.permute.xlu0 0
      %655 = vperm.xlu0 %654, %v627
      %v656 = vpop.permute.xlu0 %655
      %657 = vset.pattern.permute.xlu0 0
      %658 = vperm.xlu0 %657, %v628
      %v659 = vpop.permute.xlu0 %658
      %660 = vset.pattern.permute.xlu0 0
      %661 = vperm.xlu0 %660, %v629
      %v662 = vpop.permute.xlu0 %661
      %663 = vset.pattern.permute.xlu0 0
      %664 = vperm.xlu0 %663, %v630
      %v665 = vpop.permute.xlu0 %664
      %666 = vset.pattern.permute.xlu0 0
      %667 = vperm.xlu0 %666, %v631
      %v668 = vpop.permute.xlu0 %667
      %669 = vset.pattern.permute.xlu0 0
      %670 = vperm.xlu0 %669, %v632
      %v671 = vpop.permute.xlu0 %670
      %672 = vset.pattern.permute.xlu0 0
      %673 = vperm.xlu0 %672, %v633
      %v674 = vpop.permute.xlu0 %673
      %675 = vset.pattern.permute.xlu0 0
      %676 = vperm.xlu0 %675, %v634
      %v677 = vpop.permute.xlu0 %676
      %678 = vset.pattern.permute.xlu0 0
      %679 = vperm.xlu0 %678, %v635
      %v680 = vpop.permute.xlu0 %679
      %681 = vset.pattern.permute.xlu0 0
      %682 = vperm.xlu0 %681, %v636
      %v683 = vpop.permute.xlu0 %682
      %684 = vset.pattern.permute.xlu0 0
      %685 = vperm.xlu0 %684, %v637
      %v686 = vpop.permute.xlu0 %685
      %v687 = vlaneseq
      %v688 = vshrl.u32 %v687, 7
      %v689 = vsub.s32 0, %v688
      %v690 = vrot.slane %v638, %v689
      %vm691 = vcmp.eq.s32.totalorder %v641, %v690
      %vm692 = vcmp.eq.s32.totalorder %v644, %v690
      %vm693 = vcmp.eq.s32.totalorder %v647, %v690
      %vm694 = vcmp.eq.s32.totalorder %v650, %v690
      %vm695 = vcmp.eq.s32.totalorder %v653, %v690
      %vm696 = vcmp.eq.s32.totalorder %v656, %v690
      %vm697 = vcmp.eq.s32.totalorder %v659, %v690
      %vm698 = vcmp.eq.s32.totalorder %v662, %v690
      %vm699 = vcmp.eq.s32.totalorder %v665, %v690
      %vm700 = vcmp.eq.s32.totalorder %v668, %v690
      %vm701 = vcmp.eq.s32.totalorder %v671, %v690
      %vm702 = vcmp.eq.s32.totalorder %v674, %v690
      %vm703 = vcmp.eq.s32.totalorder %v677, %v690
      %vm704 = vcmp.eq.s32.totalorder %v680, %v690
      %vm705 = vcmp.eq.s32.totalorder %v683, %v690
      %vm706 = vcmp.eq.s32.totalorder %v686, %v690
      %v707 = vsel %vm691, %v560, -1e+30
      %v708 = vsel %vm692, %v563, -1e+30
      %v709 = vsel %vm693, %v568, -1e+30
      %v710 = vsel %vm694, %v571, -1e+30
      %v711 = vsel %vm695, %v576, -1e+30
      %v712 = vsel %vm696, %v579, -1e+30
      %v713 = vsel %vm697, %v584, -1e+30
      %v714 = vsel %vm698, %v587, -1e+30
      %v715 = vsel %vm699, %v592, -1e+30
      %v716 = vsel %vm700, %v595, -1e+30
      %v717 = vsel %vm701, %v600, -1e+30
      %v718 = vsel %vm702, %v603, -1e+30
      %v719 = vsel %vm703, %v608, -1e+30
      %v720 = vsel %vm704, %v611, -1e+30
      %v721 = vsel %vm705, %v616, -1e+30
      %v722 = vsel %vm706, %v619, -1e+30
      %v723 = vld [vmem:[#allocation2] sm:$0xff]
      %v724 = vld [vmem:[#allocation2 + $0x8] sm:$0xff]
      %v725 = vld [vmem:[#allocation2 + $0x10] sm:$0xff]
      %v726 = vld [vmem:[#allocation2 + $0x18] sm:$0xff]
      %v727 = vld [vmem:[#allocation2 + $0x20] sm:$0xff]
      %v728 = vld [vmem:[#allocation2 + $0x28] sm:$0xff]
      %v729 = vld [vmem:[#allocation2 + $0x30] sm:$0xff]
      %v730 = vld [vmem:[#allocation2 + $0x38] sm:$0xff]
      %v731 = vld [vmem:[#allocation2 + $0x40] sm:$0xff]
      %v732 = vld [vmem:[#allocation2 + $0x48] sm:$0xff]
      %v733 = vld [vmem:[#allocation2 + $0x50] sm:$0xff]
      %v734 = vld [vmem:[#allocation2 + $0x58] sm:$0xff]
      %v735 = vld [vmem:[#allocation2 + $0x60] sm:$0xff]
      %v736 = vld [vmem:[#allocation2 + $0x68] sm:$0xff]
      %v737 = vld [vmem:[#allocation2 + $0x70] sm:$0xff]
      %v738 = vld [vmem:[#allocation2 + $0x78] sm:$0xff]
      %739 = vmax.xlane.f32.xlu0 %v707
      %v740 = vpop.xlane.xlu0 %739
      %741 = vmax.xlane.f32.xlu0 %v708
      %v742 = vpop.xlane.xlu0 %741
      %743 = vmax.xlane.f32.xlu0 %v709
      %v744 = vpop.xlane.xlu0 %743
      %745 = vmax.xlane.f32.xlu0 %v710
      %v746 = vpop.xlane.xlu0 %745
      %747 = vmax.xlane.f32.xlu0 %v711
      %v748 = vpop.xlane.xlu0 %747
      %749 = vmax.xlane.f32.xlu0 %v712
      %v750 = vpop.xlane.xlu0 %749
      %751 = vmax.xlane.f32.xlu0 %v713
      %v752 = vpop.xlane.xlu0 %751
      %753 = vmax.xlane.f32.xlu0 %v714
      %v754 = vpop.xlane.xlu0 %753
      %755 = vmax.xlane.f32.xlu0 %v715
      %v756 = vpop.xlane.xlu0 %755
      %757 = vmax.xlane.f32.xlu0 %v716
      %v758 = vpop.xlane.xlu0 %757
      %759 = vmax.xlane.f32.xlu0 %v717
      %v760 = vpop.xlane.xlu0 %759
      %761 = vmax.xlane.f32.xlu0 %v718
      %v762 = vpop.xlane.xlu0 %761
      %763 = vmax.xlane.f32.xlu0 %v719
      %v764 = vpop.xlane.xlu0 %763
      %765 = vmax.xlane.f32.xlu0 %v720
      %v766 = vpop.xlane.xlu0 %765
      %767 = vmax.xlane.f32.xlu0 %v721
      %v768 = vpop.xlane.xlu0 %767
      %769 = vmax.xlane.f32.xlu0 %v722
      %v770 = vpop.xlane.xlu0 %769
      %v771 = vmax.f32 %v723, %v740
      %v772 = vmax.f32 %v724, %v742
      %v773 = vmax.f32 %v725, %v744
      %v774 = vmax.f32 %v726, %v746
      %v775 = vmax.f32 %v727, %v748
      %v776 = vmax.f32 %v728, %v750
      %v777 = vmax.f32 %v729, %v752
      %v778 = vmax.f32 %v730, %v754
      %v779 = vmax.f32 %v731, %v756
      %v780 = vmax.f32 %v732, %v758
      %v781 = vmax.f32 %v733, %v760
      %v782 = vmax.f32 %v734, %v762
      %v783 = vmax.f32 %v735, %v764
      %v784 = vmax.f32 %v736, %v766
      %v785 = vmax.f32 %v737, %v768
      %v786 = vmax.f32 %v738, %v770
      %v787 = vsub.f32 %v723, %v771
      %v788 = vsub.f32 %v724, %v772
      %v789 = vsub.f32 %v725, %v773
      %v790 = vsub.f32 %v726, %v774
      %v791 = vsub.f32 %v727, %v775
      %v792 = vsub.f32 %v728, %v776
      %v793 = vsub.f32 %v729, %v777
      %v794 = vsub.f32 %v730, %v778
      %v795 = vsub.f32 %v731, %v779
      %v796 = vsub.f32 %v732, %v780
      %v797 = vsub.f32 %v733, %v781
      %v798 = vsub.f32 %v734, %v782
      %v799 = vsub.f32 %v735, %v783
      %v800 = vsub.f32 %v736, %v784
      %v801 = vsub.f32 %v737, %v785
      %v802 = vsub.f32 %v738, %v786
      %v803 = vmul.f32 %v787, 1.442695
      %v804 = vpow.pop %v803
      %v805 = vmul.f32 %v788, 1.442695
      %v806 = vpow.pop %v805
      %v807 = vmul.f32 %v789, 1.442695
      %v808 = vpow.pop %v807
      %v809 = vmul.f32 %v790, 1.442695
      %v810 = vpow.pop %v809
      %v811 = vmul.f32 %v791, 1.442695
      %v812 = vpow.pop %v811
      %v813 = vmul.f32 %v792, 1.442695
      %v814 = vpow.pop %v813
      %v815 = vmul.f32 %v793, 1.442695
      %v816 = vpow.pop %v815
      %v817 = vmul.f32 %v794, 1.442695
      %v818 = vpow.pop %v817
      %v819 = vmul.f32 %v795, 1.442695
      %v820 = vpow.pop %v819
      %v821 = vmul.f32 %v796, 1.442695
      %v822 = vpow.pop %v821
      %v823 = vmul.f32 %v797, 1.442695
      %v824 = vpow.pop %v823
      %v825 = vmul.f32 %v798, 1.442695
      %v826 = vpow.pop %v825
      %v827 = vmul.f32 %v799, 1.442695
      %v828 = vpow.pop %v827
      %v829 = vmul.f32 %v800, 1.442695
      %v830 = vpow.pop %v829
      %v831 = vmul.f32 %v801, 1.442695
      %v832 = vpow.pop %v831
      %v833 = vmul.f32 %v802, 1.442695
      %v834 = vpow.pop %v833
      %836 = vset.pattern.permute.xlu0 0
      %837 = vperm.xlu0 %836, %v771
      %v838 = vpop.permute.xlu0 %837
      %841 = vset.pattern.permute.xlu0 0
      %842 = vperm.xlu0 %841, %v772
      %v843 = vpop.permute.xlu0 %842
      %846 = vset.pattern.permute.xlu0 0
      %847 = vperm.xlu0 %846, %v773
      %v848 = vpop.permute.xlu0 %847
      %851 = vset.pattern.permute.xlu0 0
      %852 = vperm.xlu0 %851, %v774
      %v853 = vpop.permute.xlu0 %852
      %856 = vset.pattern.permute.xlu0 0
      %857 = vperm.xlu0 %856, %v775
      %v858 = vpop.permute.xlu0 %857
      %861 = vset.pattern.permute.xlu0 0
      %862 = vperm.xlu0 %861, %v776
      %v863 = vpop.permute.xlu0 %862
      %866 = vset.pattern.permute.xlu0 0
      %867 = vperm.xlu0 %866, %v777
      %v868 = vpop.permute.xlu0 %867
      %871 = vset.pattern.permute.xlu0 0
      %872 = vperm.xlu0 %871, %v778
      %v873 = vpop.permute.xlu0 %872
      %876 = vset.pattern.permute.xlu0 0
      %877 = vperm.xlu0 %876, %v779
      %v878 = vpop.permute.xlu0 %877
      %881 = vset.pattern.permute.xlu0 0
      %882 = vperm.xlu0 %881, %v780
      %v883 = vpop.permute.xlu0 %882
      %886 = vset.pattern.permute.xlu0 0
      %887 = vperm.xlu0 %886, %v781
      %v888 = vpop.permute.xlu0 %887
      %891 = vset.pattern.permute.xlu0 0
      %892 = vperm.xlu0 %891, %v782
      %v893 = vpop.permute.xlu0 %892
      %896 = vset.pattern.permute.xlu0 0
      %897 = vperm.xlu0 %896, %v783
      %v898 = vpop.permute.xlu0 %897
      %901 = vset.pattern.permute.xlu0 0
      %902 = vperm.xlu0 %901, %v784
      %v903 = vpop.permute.xlu0 %902
      %906 = vset.pattern.permute.xlu0 0
      %907 = vperm.xlu0 %906, %v785
      %v908 = vpop.permute.xlu0 %907
      %911 = vset.pattern.permute.xlu0 0
      %912 = vperm.xlu0 %911, %v786
      %v913 = vpop.permute.xlu0 %912
      %v915 = vsub.f32 %v707, %v838
      %v916 = vsub.f32 %v708, %v843
      %v917 = vsub.f32 %v709, %v848
      %v918 = vsub.f32 %v710, %v853
      %v919 = vsub.f32 %v711, %v858
      %v920 = vsub.f32 %v712, %v863
      %v921 = vsub.f32 %v713, %v868
      %v922 = vsub.f32 %v714, %v873
      %v923 = vsub.f32 %v715, %v878
      %v924 = vsub.f32 %v716, %v883
      %v925 = vsub.f32 %v717, %v888
      %v926 = vsub.f32 %v718, %v893
      %v927 = vsub.f32 %v719, %v898
      %v928 = vsub.f32 %v720, %v903
      %v929 = vsub.f32 %v721, %v908
      %v930 = vsub.f32 %v722, %v913
      %v931 = vmul.f32 %v915, 1.442695
      %v932 = vpow.pop %v931
      %v933 = vmul.f32 %v916, 1.442695
      %v934 = vpow.pop %v933
      %v935 = vmul.f32 %v917, 1.442695
      %v936 = vpow.pop %v935
      %v937 = vmul.f32 %v918, 1.442695
      %v938 = vpow.pop %v937
      %v939 = vmul.f32 %v919, 1.442695
      %v940 = vpow.pop %v939
      %v941 = vmul.f32 %v920, 1.442695
      %v942 = vpow.pop %v941
      %v943 = vmul.f32 %v921, 1.442695
      %v944 = vpow.pop %v943
      %v945 = vmul.f32 %v922, 1.442695
      %v946 = vpow.pop %v945
      %v947 = vmul.f32 %v923, 1.442695
      %v948 = vpow.pop %v947
      %v949 = vmul.f32 %v924, 1.442695
      %v950 = vpow.pop %v949
      %v951 = vmul.f32 %v925, 1.442695
      %v952 = vpow.pop %v951
      %v953 = vmul.f32 %v926, 1.442695
      %v954 = vpow.pop %v953
      %v955 = vmul.f32 %v927, 1.442695
      %v956 = vpow.pop %v955
      %v957 = vmul.f32 %v928, 1.442695
      %v958 = vpow.pop %v957
      %v959 = vmul.f32 %v929, 1.442695
      %v960 = vpow.pop %v959
      %v961 = vmul.f32 %v930, 1.442695
      %v962 = vpow.pop %v961
      %v963 = vld [vmem:[#allocation3] sm:$0xff]
      %v964 = vld [vmem:[#allocation3 + $0x8] sm:$0xff]
      %v965 = vld [vmem:[#allocation3 + $0x10] sm:$0xff]
      %v966 = vld [vmem:[#allocation3 + $0x18] sm:$0xff]
      %v967 = vld [vmem:[#allocation3 + $0x20] sm:$0xff]
      %v968 = vld [vmem:[#allocation3 + $0x28] sm:$0xff]
      %v969 = vld [vmem:[#allocation3 + $0x30] sm:$0xff]
      %v970 = vld [vmem:[#allocation3 + $0x38] sm:$0xff]
      %v971 = vld [vmem:[#allocation3 + $0x40] sm:$0xff]
      %v972 = vld [vmem:[#allocation3 + $0x48] sm:$0xff]
      %v973 = vld [vmem:[#allocation3 + $0x50] sm:$0xff]
      %v974 = vld [vmem:[#allocation3 + $0x58] sm:$0xff]
      %v975 = vld [vmem:[#allocation3 + $0x60] sm:$0xff]
      %v976 = vld [vmem:[#allocation3 + $0x68] sm:$0xff]
      %v977 = vld [vmem:[#allocation3 + $0x70] sm:$0xff]
      %v978 = vld [vmem:[#allocation3 + $0x78] sm:$0xff]
      %v979 = vmul.f32 %v804, %v963
      %v980 = vmul.f32 %v806, %v964
      %v981 = vmul.f32 %v808, %v965
      %v982 = vmul.f32 %v810, %v966
      %v983 = vmul.f32 %v812, %v967
      %v984 = vmul.f32 %v814, %v968
      %v985 = vmul.f32 %v816, %v969
      %v986 = vmul.f32 %v818, %v970
      %v987 = vmul.f32 %v820, %v971
      %v988 = vmul.f32 %v822, %v972
      %v989 = vmul.f32 %v824, %v973
      %v990 = vmul.f32 %v826, %v974
      %v991 = vmul.f32 %v828, %v975
      %v992 = vmul.f32 %v830, %v976
      %v993 = vmul.f32 %v832, %v977
      %v994 = vmul.f32 %v834, %v978
      %995 = vadd.xlane.f32.xlu0 %v932
      %v996 = vpop.xlane.xlu0 %995
      %997 = vadd.xlane.f32.xlu0 %v934
      %v998 = vpop.xlane.xlu0 %997
      %999 = vadd.xlane.f32.xlu0 %v936
      %v1000 = vpop.xlane.xlu0 %999
      %1001 = vadd.xlane.f32.xlu0 %v938
      %v1002 = vpop.xlane.xlu0 %1001
      %1003 = vadd.xlane.f32.xlu0 %v940
      %v1004 = vpop.xlane.xlu0 %1003
      %1005 = vadd.xlane.f32.xlu0 %v942
      %v1006 = vpop.xlane.xlu0 %1005
      %1007 = vadd.xlane.f32.xlu0 %v944
      %v1008 = vpop.xlane.xlu0 %1007
      %1009 = vadd.xlane.f32.xlu0 %v946
      %v1010 = vpop.xlane.xlu0 %1009
      %1011 = vadd.xlane.f32.xlu0 %v948
      %v1012 = vpop.xlane.xlu0 %1011
      %1013 = vadd.xlane.f32.xlu0 %v950
      %v1014 = vpop.xlane.xlu0 %1013
      %1015 = vadd.xlane.f32.xlu0 %v952
      %v1016 = vpop.xlane.xlu0 %1015
      %1017 = vadd.xlane.f32.xlu0 %v954
      %v1018 = vpop.xlane.xlu0 %1017
      %1019 = vadd.xlane.f32.xlu0 %v956
      %v1020 = vpop.xlane.xlu0 %1019
      %1021 = vadd.xlane.f32.xlu0 %v958
      %v1022 = vpop.xlane.xlu0 %1021
      %1023 = vadd.xlane.f32.xlu0 %v960
      %v1024 = vpop.xlane.xlu0 %1023
      %1025 = vadd.xlane.f32.xlu0 %v962
      %v1026 = vpop.xlane.xlu0 %1025
      %v1027 = vadd.f32 %v979, %v996
      %v1028 = vadd.f32 %v980, %v998
      %v1029 = vadd.f32 %v981, %v1000
      %v1030 = vadd.f32 %v982, %v1002
      %v1031 = vadd.f32 %v983, %v1004
      %v1032 = vadd.f32 %v984, %v1006
      %v1033 = vadd.f32 %v985, %v1008
      %v1034 = vadd.f32 %v986, %v1010
      %v1035 = vadd.f32 %v987, %v1012
      %v1036 = vadd.f32 %v988, %v1014
      %v1037 = vadd.f32 %v989, %v1016
      %v1038 = vadd.f32 %v990, %v1018
      %v1039 = vadd.f32 %v991, %v1020
      %v1040 = vadd.f32 %v992, %v1022
      %v1041 = vadd.f32 %v993, %v1024
      %v1042 = vadd.f32 %v994, %v1026
      %vm1043 = vcmask 7168
      %1044 = vst.msk [vmem:[#allocation3] sm:$0xff] %vm1043, %v1027
      %1045 = vst.msk [vmem:[#allocation3 + $0x8] sm:$0xff] %vm1043, %v1028
      %1046 = vst.msk [vmem:[#allocation3 + $0x10] sm:$0xff] %vm1043, %v1029
      %1047 = vst.msk [vmem:[#allocation3 + $0x18] sm:$0xff] %vm1043, %v1030
      %1048 = vst.msk [vmem:[#allocation3 + $0x20] sm:$0xff] %vm1043, %v1031
      %1049 = vst.msk [vmem:[#allocation3 + $0x28] sm:$0xff] %vm1043, %v1032
      %1050 = vst.msk [vmem:[#allocation3 + $0x30] sm:$0xff] %vm1043, %v1033
      %1051 = vst.msk [vmem:[#allocation3 + $0x38] sm:$0xff] %vm1043, %v1034
      %1052 = vst.msk [vmem:[#allocation3 + $0x40] sm:$0xff] %vm1043, %v1035
      %1053 = vst.msk [vmem:[#allocation3 + $0x48] sm:$0xff] %vm1043, %v1036
      %1054 = vst.msk [vmem:[#allocation3 + $0x50] sm:$0xff] %vm1043, %v1037
      %1055 = vst.msk [vmem:[#allocation3 + $0x58] sm:$0xff] %vm1043, %v1038
      %1056 = vst.msk [vmem:[#allocation3 + $0x60] sm:$0xff] %vm1043, %v1039
      %1057 = vst.msk [vmem:[#allocation3 + $0x68] sm:$0xff] %vm1043, %v1040
      %1058 = vst.msk [vmem:[#allocation3 + $0x70] sm:$0xff] %vm1043, %v1041
      %1059 = vst.msk [vmem:[#allocation3 + $0x78] sm:$0xff] %vm1043, %v1042
      %v1060 = vld [vmem:[#allocation4] sm:$0xff]
      %v1061 = vld [vmem:[#allocation4 + $0x8] sm:$0xff]
      %v1062 = vld [vmem:[#allocation4 + $0x10] sm:$0xff]
      %v1063 = vld [vmem:[#allocation4 + $0x18] sm:$0xff]
      %v1064 = vld [vmem:[#allocation4 + $0x20] sm:$0xff]
      %v1065 = vld [vmem:[#allocation4 + $0x28] sm:$0xff]
      %v1066 = vld [vmem:[#allocation4 + $0x30] sm:$0xff]
      %v1067 = vld [vmem:[#allocation4 + $0x38] sm:$0xff]
      %v1068 = vld [vmem:[#allocation4 + $0x40] sm:$0xff]
      %v1069 = vld [vmem:[#allocation4 + $0x48] sm:$0xff]
      %v1070 = vld [vmem:[#allocation4 + $0x50] sm:$0xff]
      %v1071 = vld [vmem:[#allocation4 + $0x58] sm:$0xff]
      %v1072 = vld [vmem:[#allocation4 + $0x60] sm:$0xff]
      %v1073 = vld [vmem:[#allocation4 + $0x68] sm:$0xff]
      %v1074 = vld [vmem:[#allocation4 + $0x70] sm:$0xff]
      %v1075 = vld [vmem:[#allocation4 + $0x78] sm:$0xff]
      %1077 = vset.pattern.permute.xlu0 0
      %1078 = vperm.xlu0 %1077, %v804
      %v1079 = vpop.permute.xlu0 %1078
      %1082 = vset.pattern.permute.xlu0 0
      %1083 = vperm.xlu0 %1082, %v806
      %v1084 = vpop.permute.xlu0 %1083
      %1087 = vset.pattern.permute.xlu0 0
      %1088 = vperm.xlu0 %1087, %v808
      %v1089 = vpop.permute.xlu0 %1088
      %1092 = vset.pattern.permute.xlu0 0
      %1093 = vperm.xlu0 %1092, %v810
      %v1094 = vpop.permute.xlu0 %1093
      %1097 = vset.pattern.permute.xlu0 0
      %1098 = vperm.xlu0 %1097, %v812
      %v1099 = vpop.permute.xlu0 %1098
      %1102 = vset.pattern.permute.xlu0 0
      %1103 = vperm.xlu0 %1102, %v814
      %v1104 = vpop.permute.xlu0 %1103
      %1107 = vset.pattern.permute.xlu0 0
      %1108 = vperm.xlu0 %1107, %v816
      %v1109 = vpop.permute.xlu0 %1108
      %1112 = vset.pattern.permute.xlu0 0
      %1113 = vperm.xlu0 %1112, %v818
      %v1114 = vpop.permute.xlu0 %1113
      %1117 = vset.pattern.permute.xlu0 0
      %1118 = vperm.xlu0 %1117, %v820
      %v1119 = vpop.permute.xlu0 %1118
      %1122 = vset.pattern.permute.xlu0 0
      %1123 = vperm.xlu0 %1122, %v822
      %v1124 = vpop.permute.xlu0 %1123
      %1127 = vset.pattern.permute.xlu0 0
      %1128 = vperm.xlu0 %1127, %v824
      %v1129 = vpop.permute.xlu0 %1128
      %1132 = vset.pattern.permute.xlu0 0
      %1133 = vperm.xlu0 %1132, %v826
      %v1134 = vpop.permute.xlu0 %1133
      %1137 = vset.pattern.permute.xlu0 0
      %1138 = vperm.xlu0 %1137, %v828
      %v1139 = vpop.permute.xlu0 %1138
      %1142 = vset.pattern.permute.xlu0 0
      %1143 = vperm.xlu0 %1142, %v830
      %v1144 = vpop.permute.xlu0 %1143
      %1147 = vset.pattern.permute.xlu0 0
      %1148 = vperm.xlu0 %1147, %v832
      %v1149 = vpop.permute.xlu0 %1148
      %1152 = vset.pattern.permute.xlu0 0
      %1153 = vperm.xlu0 %1152, %v834
      %v1154 = vpop.permute.xlu0 %1153
      %v1156 = vmul.f32 %v1079, %v1060
      %v1157 = vmul.f32 %v1084, %v1061
      %v1158 = vmul.f32 %v1089, %v1062
      %v1159 = vmul.f32 %v1094, %v1063
      %v1160 = vmul.f32 %v1099, %v1064
      %v1161 = vmul.f32 %v1104, %v1065
      %v1162 = vmul.f32 %v1109, %v1066
      %v1163 = vmul.f32 %v1114, %v1067
      %v1164 = vmul.f32 %v1119, %v1068
      %v1165 = vmul.f32 %v1124, %v1069
      %v1166 = vmul.f32 %v1129, %v1070
      %v1167 = vmul.f32 %v1134, %v1071
      %v1168 = vmul.f32 %v1139, %v1072
      %v1169 = vmul.f32 %v1144, %v1073
      %v1170 = vmul.f32 %v1149, %v1074
      %v1171 = vmul.f32 %v1154, %v1075
      %v1172 = vpack.c.bf16 %v934, %v932
      %v1173 = vpack.c.bf16 %v938, %v936
      %v1174 = vpack.c.bf16 %v942, %v940
      %v1175 = vpack.c.bf16 %v946, %v944
      %v1176 = vpack.c.bf16 %v950, %v948
      %v1177 = vpack.c.bf16 %v954, %v952
      %v1178 = vpack.c.bf16 %v958, %v956
      %v1179 = vpack.c.bf16 %v962, %v960
      %v1180 = vld [vmem:[#allocation12] sm:$0xf]
      %v1181 = vld [vmem:[#allocation12 + $0x4] sm:$0xf]
      %v1182 = vld [vmem:[#allocation12 + $0x8] sm:$0xf]
      %v1183 = vld [vmem:[#allocation12 + $0xc] sm:$0xf]
      %v1184 = vld [vmem:[#allocation12 + $0x10] sm:$0xf]
      %v1185 = vld [vmem:[#allocation12 + $0x14] sm:$0xf]
      %v1186 = vld [vmem:[#allocation12 + $0x18] sm:$0xf]
      %v1187 = vld [vmem:[#allocation12 + $0x1c] sm:$0xf]
      %v1188 = vld [vmem:[#allocation12 + $0x20] sm:$0xf]
      %v1189 = vld [vmem:[#allocation12 + $0x24] sm:$0xf]
      %v1190 = vld [vmem:[#allocation12 + $0x28] sm:$0xf]
      %v1191 = vld [vmem:[#allocation12 + $0x2c] sm:$0xf]
      %v1192 = vld [vmem:[#allocation12 + $0x30] sm:$0xf]
      %v1193 = vld [vmem:[#allocation12 + $0x34] sm:$0xf]
      %v1194 = vld [vmem:[#allocation12 + $0x38] sm:$0xf]
      %v1195 = vld [vmem:[#allocation12 + $0x3c] sm:$0xf]
      %v1212 = vunpack.c.l.b16 %v1180
      %v1213 = vunpack.c.l.b16 %v1181
      %v1214 = vunpack.c.l.b16 %v1182
      %v1215 = vunpack.c.l.b16 %v1183
      %v1216 = vunpack.c.l.b16 %v1184
      %v1217 = vunpack.c.l.b16 %v1185
      %v1218 = vunpack.c.l.b16 %v1186
      %v1219 = vunpack.c.l.b16 %v1187
      %v1220 = vunpack.c.l.b16 %v1188
      %v1221 = vunpack.c.l.b16 %v1189
      %v1222 = vunpack.c.l.b16 %v1190
      %v1223 = vunpack.c.l.b16 %v1191
      %v1224 = vunpack.c.l.b16 %v1192
      %v1225 = vunpack.c.l.b16 %v1193
      %v1226 = vunpack.c.l.b16 %v1194
      %v1227 = vunpack.c.l.b16 %v1195
      %v1228 = vpack.c.b16 %v1213, %v1212
      %v1229 = vpack.c.b16 %v1215, %v1214
      %v1230 = vpack.c.b16 %v1217, %v1216
      %v1231 = vpack.c.b16 %v1219, %v1218
      %v1232 = vpack.c.b16 %v1221, %v1220
      %v1233 = vpack.c.b16 %v1223, %v1222
      %v1234 = vpack.c.b16 %v1225, %v1224
      %v1235 = vpack.c.b16 %v1227, %v1226
      %1244 = vmatprep.subr.bf16.mxu0 0
      %1245 = vmatpush1.bf16.msra.mxu0 %v1228
      %1246 = vmatprep.subr.bf16.mxu0 0
      %1247 = vmatpush1.bf16.msra.mxu0 %v1229
      %1248 = vmatprep.subr.bf16.mxu0 0
      %1249 = vmatpush1.bf16.msra.mxu0 %v1230
      %1250 = vmatprep.subr.bf16.mxu0 0
      %1251 = vmatpush1.bf16.msra.mxu0 %v1231
      %1252 = vmatprep.subr.bf16.mxu0 0
      %1253 = vmatpush1.bf16.msra.mxu0 %v1232
      %1254 = vmatprep.subr.bf16.mxu0 0
      %1255 = vmatpush1.bf16.msra.mxu0 %v1233
      %1256 = vmatprep.subr.bf16.mxu0 0
      %1257 = vmatpush1.bf16.msra.mxu0 %v1234
      %1258 = vmatprep.subr.bf16.mxu0 0
      %1259 = vmatpush1.bf16.msra.mxu0 %v1235
      %1260 = vmatprep.subr.bf16.mxu0 0
      %1261 = vmatpush1.bf16.msra.mxu0 0
      %1262 = vmatprep.subr.bf16.mxu0 0
      %1263 = vmatpush1.bf16.msra.mxu0 0
      %1264 = vmatprep.subr.bf16.mxu0 0
      %1265 = vmatpush1.bf16.msra.mxu0 0
      %1266 = vmatprep.subr.bf16.mxu0 0
      %1267 = vmatpush1.bf16.msra.mxu0 0
      %1268 = vmatprep.subr.bf16.mxu0 0
      %1269 = vmatpush1.bf16.msra.mxu0 0
      %1270 = vmatprep.subr.bf16.mxu0 0
      %1271 = vmatpush1.bf16.msra.mxu0 0
      %1272 = vmatprep.subr.bf16.mxu0 0
      %1273 = vmatpush1.bf16.msra.mxu0 0
      %1274 = vmatprep.subr.bf16.mxu0 0
      %1275 = vmatpush1.bf16.msra.mxu0 0
      %1276 = vmatprep.mubr.bf16.mxu0 0
      %1277 = vmatmul.mubr.bf16.gmra.mrb[0].mxu0 %v1172
      %v1278 = vpop.f32.mrb[0].mxu0
      %v1279 = vadd.f32 0.0, %v1278
      %v1280 = vpop.f32.mrb[0].mxu0
      %v1281 = vpop.f32.mrb[0].mxu0
      %v1282 = vadd.f32 0.0, %v1281
      %v1283 = vpop.f32.mrb[0].mxu0
      %1284 = vmatprep.mubr.bf16.mxu0 0
      %1285 = vmatmul.mubr.bf16.gmra.mrb[0].mxu0 %v1173
      %v1286 = vpop.f32.mrb[0].mxu0
      %v1287 = vadd.f32 0.0, %v1286
      %v1288 = vpop.f32.mrb[0].mxu0
      %v1289 = vpop.f32.mrb[0].mxu0
      %v1290 = vadd.f32 0.0, %v1289
      %v1291 = vpop.f32.mrb[0].mxu0
      %1292 = vmatprep.mubr.bf16.mxu0 0
      %1293 = vmatmul.mubr.bf16.gmra.mrb[0].mxu0 %v1174
      %v1294 = vpop.f32.mrb[0].mxu0
      %v1295 = vadd.f32 0.0, %v1294
      %v1296 = vpop.f32.mrb[0].mxu0
      %v1297 = vpop.f32.mrb[0].mxu0
      %v1298 = vadd.f32 0.0, %v1297
      %v1299 = vpop.f32.mrb[0].mxu0
      %1300 = vmatprep.mubr.bf16.mxu0 0
      %1301 = vmatmul.mubr.bf16.gmra.mrb[0].mxu0 %v1175
      %v1302 = vpop.f32.mrb[0].mxu0
      %v1303 = vadd.f32 0.0, %v1302
      %v1304 = vpop.f32.mrb[0].mxu0
      %v1305 = vpop.f32.mrb[0].mxu0
      %v1306 = vadd.f32 0.0, %v1305
      %v1307 = vpop.f32.mrb[0].mxu0
      %1308 = vmatprep.mubr.bf16.mxu0 0
      %1309 = vmatmul.mubr.bf16.gmra.mrb[0].mxu0 %v1176
      %v1310 = vpop.f32.mrb[0].mxu0
      %v1311 = vadd.f32 0.0, %v1310
      %v1312 = vpop.f32.mrb[0].mxu0
      %v1313 = vpop.f32.mrb[0].mxu0
      %v1314 = vadd.f32 0.0, %v1313
      %v1315 = vpop.f32.mrb[0].mxu0
      %1316 = vmatprep.mubr.bf16.mxu0 0
      %1317 = vmatmul.mubr.bf16.gmra.mrb[0].mxu0 %v1177
      %v1318 = vpop.f32.mrb[0].mxu0
      %v1319 = vadd.f32 0.0, %v1318
      %v1320 = vpop.f32.mrb[0].mxu0
      %v1321 = vpop.f32.mrb[0].mxu0
      %v1322 = vadd.f32 0.0, %v1321
      %v1323 = vpop.f32.mrb[0].mxu0
      %1324 = vmatprep.mubr.bf16.mxu0 0
      %1325 = vmatmul.mubr.bf16.gmra.mrb[0].mxu0 %v1178
      %v1326 = vpop.f32.mrb[0].mxu0
      %v1327 = vadd.f32 0.0, %v1326
      %v1328 = vpop.f32.mrb[0].mxu0
      %v1329 = vpop.f32.mrb[0].mxu0
      %v1330 = vadd.f32 0.0, %v1329
      %v1331 = vpop.f32.mrb[0].mxu0
      %1332 = vmatprep.mubr.bf16.mxu0 0
      %1333 = vmatmul.mubr.bf16.gmra.mrb[0].mxu0 %v1179
      %v1334 = vpop.f32.mrb[0].mxu0
      %v1335 = vadd.f32 0.0, %v1334
      %v1336 = vpop.f32.mrb[0].mxu0
      %v1337 = vpop.f32.mrb[0].mxu0
      %v1338 = vadd.f32 0.0, %v1337
      %v1339 = vpop.f32.mrb[0].mxu0
      %1340 = vdwg.mxu0
      %v1341 = vadd.f32 %v1156, %v1279
      %v1342 = vadd.f32 %v1157, %v1282
      %v1343 = vadd.f32 %v1158, %v1287
      %v1344 = vadd.f32 %v1159, %v1290
      %v1345 = vadd.f32 %v1160, %v1295
      %v1346 = vadd.f32 %v1161, %v1298
      %v1347 = vadd.f32 %v1162, %v1303
      %v1348 = vadd.f32 %v1163, %v1306
      %v1349 = vadd.f32 %v1164, %v1311
      %v1350 = vadd.f32 %v1165, %v1314
      %v1351 = vadd.f32 %v1166, %v1319
      %v1352 = vadd.f32 %v1167, %v1322
      %v1353 = vadd.f32 %v1168, %v1327
      %v1354 = vadd.f32 %v1169, %v1330
      %v1355 = vadd.f32 %v1170, %v1335
      %v1356 = vadd.f32 %v1171, %v1338
      %1357 = vst [vmem:[#allocation4] sm:$0xff] %v1341
      %1358 = vst [vmem:[#allocation4 + $0x8] sm:$0xff] %v1342
      %1359 = vst [vmem:[#allocation4 + $0x10] sm:$0xff] %v1343
      %1360 = vst [vmem:[#allocation4 + $0x18] sm:$0xff] %v1344
      %1361 = vst [vmem:[#allocation4 + $0x20] sm:$0xff] %v1345
      %1362 = vst [vmem:[#allocation4 + $0x28] sm:$0xff] %v1346
      %1363 = vst [vmem:[#allocation4 + $0x30] sm:$0xff] %v1347
      %1364 = vst [vmem:[#allocation4 + $0x38] sm:$0xff] %v1348
      %1365 = vst [vmem:[#allocation4 + $0x40] sm:$0xff] %v1349
      %1366 = vst [vmem:[#allocation4 + $0x48] sm:$0xff] %v1350
      %1367 = vst [vmem:[#allocation4 + $0x50] sm:$0xff] %v1351
      %1368 = vst [vmem:[#allocation4 + $0x58] sm:$0xff] %v1352
      %1369 = vst [vmem:[#allocation4 + $0x60] sm:$0xff] %v1353
      %1370 = vst [vmem:[#allocation4 + $0x68] sm:$0xff] %v1354
      %1371 = vst [vmem:[#allocation4 + $0x70] sm:$0xff] %v1355
      %1372 = vst [vmem:[#allocation4 + $0x78] sm:$0xff] %v1356
      %1373 = vst.msk [vmem:[#allocation2] sm:$0xff] %vm1043, %v771
      %1374 = vst.msk [vmem:[#allocation2 + $0x8] sm:$0xff] %vm1043, %v772
      %1375 = vst.msk [vmem:[#allocation2 + $0x10] sm:$0xff] %vm1043, %v773
      %1376 = vst.msk [vmem:[#allocation2 + $0x18] sm:$0xff] %vm1043, %v774
      %1377 = vst.msk [vmem:[#allocation2 + $0x20] sm:$0xff] %vm1043, %v775
      %1378 = vst.msk [vmem:[#allocation2 + $0x28] sm:$0xff] %vm1043, %v776
      %1379 = vst.msk [vmem:[#allocation2 + $0x30] sm:$0xff] %vm1043, %v777
      %1380 = vst.msk [vmem:[#allocation2 + $0x38] sm:$0xff] %vm1043, %v778
      %1381 = vst.msk [vmem:[#allocation2 + $0x40] sm:$0xff] %vm1043, %v779
      %1382 = vst.msk [vmem:[#allocation2 + $0x48] sm:$0xff] %vm1043, %v780
      %1383 = vst.msk [vmem:[#allocation2 + $0x50] sm:$0xff] %vm1043, %v781
      %1384 = vst.msk [vmem:[#allocation2 + $0x58] sm:$0xff] %vm1043, %v782
      %1385 = vst.msk [vmem:[#allocation2 + $0x60] sm:$0xff] %vm1043, %v783
      %1386 = vst.msk [vmem:[#allocation2 + $0x68] sm:$0xff] %vm1043, %v784
      %1387 = vst.msk [vmem:[#allocation2 + $0x70] sm:$0xff] %vm1043, %v785
      %1388 = vst.msk [vmem:[#allocation2 + $0x78] sm:$0xff] %vm1043, %v786
    $region152: #{lgatr_forward.7} parent=1 // pred_fallthru
      _
    // Predicated region
    $region153: #{lgatr_forward.7} parent=1 // pred_check
      %p1389 = pneg %p334
    $region154: #{lgatr_forward.7} parent=1 // pred_check_branch
      %1391 = sbr.rel (%p1389) target = $region156
    $region155: #{lgatr_forward.7} parent=1 // pred_region
      %v1392 = vld [vmem:[#allocation3] sm:$0xff]
      %v1393 = vld [vmem:[#allocation3 + $0x8] sm:$0xff]
      %v1394 = vld [vmem:[#allocation3 + $0x10] sm:$0xff]
      %v1395 = vld [vmem:[#allocation3 + $0x18] sm:$0xff]
      %v1396 = vld [vmem:[#allocation3 + $0x20] sm:$0xff]
      %v1397 = vld [vmem:[#allocation3 + $0x28] sm:$0xff]
      %v1398 = vld [vmem:[#allocation3 + $0x30] sm:$0xff]
      %v1399 = vld [vmem:[#allocation3 + $0x38] sm:$0xff]
      %v1400 = vld [vmem:[#allocation3 + $0x40] sm:$0xff]
      %v1401 = vld [vmem:[#allocation3 + $0x48] sm:$0xff]
      %v1402 = vld [vmem:[#allocation3 + $0x50] sm:$0xff]
      %v1403 = vld [vmem:[#allocation3 + $0x58] sm:$0xff]
      %v1404 = vld [vmem:[#allocation3 + $0x60] sm:$0xff]
      %v1405 = vld [vmem:[#allocation3 + $0x68] sm:$0xff]
      %v1406 = vld [vmem:[#allocation3 + $0x70] sm:$0xff]
      %v1407 = vld [vmem:[#allocation3 + $0x78] sm:$0xff]
      %v1408 = vmax.f32 %v1392, 1e-30
      %v1409 = vmax.f32 %v1393, 1e-30
      %v1410 = vmax.f32 %v1394, 1e-30
      %v1411 = vmax.f32 %v1395, 1e-30
      %v1412 = vmax.f32 %v1396, 1e-30
      %v1413 = vmax.f32 %v1397, 1e-30
      %v1414 = vmax.f32 %v1398, 1e-30
      %v1415 = vmax.f32 %v1399, 1e-30
      %v1416 = vmax.f32 %v1400, 1e-30
      %v1417 = vmax.f32 %v1401, 1e-30
      %v1418 = vmax.f32 %v1402, 1e-30
      %v1419 = vmax.f32 %v1403, 1e-30
      %v1420 = vmax.f32 %v1404, 1e-30
      %v1421 = vmax.f32 %v1405, 1e-30
      %v1422 = vmax.f32 %v1406, 1e-30
      %v1423 = vmax.f32 %v1407, 1e-30
      %v1424 = vld [vmem:[#allocation4] sm:$0xff]
      %v1425 = vld [vmem:[#allocation4 + $0x8] sm:$0xff]
      %v1426 = vld [vmem:[#allocation4 + $0x10] sm:$0xff]
      %v1427 = vld [vmem:[#allocation4 + $0x18] sm:$0xff]
      %v1428 = vld [vmem:[#allocation4 + $0x20] sm:$0xff]
      %v1429 = vld [vmem:[#allocation4 + $0x28] sm:$0xff]
      %v1430 = vld [vmem:[#allocation4 + $0x30] sm:$0xff]
      %v1431 = vld [vmem:[#allocation4 + $0x38] sm:$0xff]
      %v1432 = vld [vmem:[#allocation4 + $0x40] sm:$0xff]
      %v1433 = vld [vmem:[#allocation4 + $0x48] sm:$0xff]
      %v1434 = vld [vmem:[#allocation4 + $0x50] sm:$0xff]
      %v1435 = vld [vmem:[#allocation4 + $0x58] sm:$0xff]
      %v1436 = vld [vmem:[#allocation4 + $0x60] sm:$0xff]
      %v1437 = vld [vmem:[#allocation4 + $0x68] sm:$0xff]
      %v1438 = vld [vmem:[#allocation4 + $0x70] sm:$0xff]
      %v1439 = vld [vmem:[#allocation4 + $0x78] sm:$0xff]
      %v1440 = vrcp.pop %v1408
      %v1441 = vrcp.pop %v1409
      %v1442 = vrcp.pop %v1410
      %v1443 = vrcp.pop %v1411
      %v1444 = vrcp.pop %v1412
      %v1445 = vrcp.pop %v1413
      %v1446 = vrcp.pop %v1414
      %v1447 = vrcp.pop %v1415
      %v1448 = vrcp.pop %v1416
      %v1449 = vrcp.pop %v1417
      %v1450 = vrcp.pop %v1418
      %v1451 = vrcp.pop %v1419
      %v1452 = vrcp.pop %v1420
      %v1453 = vrcp.pop %v1421
      %v1454 = vrcp.pop %v1422
      %v1455 = vrcp.pop %v1423
      %1457 = vset.pattern.permute.xlu0 0
      %1458 = vperm.xlu0 %1457, %v1440
      %v1459 = vpop.permute.xlu0 %1458
      %1462 = vset.pattern.permute.xlu0 0
      %1463 = vperm.xlu0 %1462, %v1441
      %v1464 = vpop.permute.xlu0 %1463
      %1467 = vset.pattern.permute.xlu0 0
      %1468 = vperm.xlu0 %1467, %v1442
      %v1469 = vpop.permute.xlu0 %1468
      %1472 = vset.pattern.permute.xlu0 0
      %1473 = vperm.xlu0 %1472, %v1443
      %v1474 = vpop.permute.xlu0 %1473
      %1477 = vset.pattern.permute.xlu0 0
      %1478 = vperm.xlu0 %1477, %v1444
      %v1479 = vpop.permute.xlu0 %1478
      %1482 = vset.pattern.permute.xlu0 0
      %1483 = vperm.xlu0 %1482, %v1445
      %v1484 = vpop.permute.xlu0 %1483
      %1487 = vset.pattern.permute.xlu0 0
      %1488 = vperm.xlu0 %1487, %v1446
      %v1489 = vpop.permute.xlu0 %1488
      %1492 = vset.pattern.permute.xlu0 0
      %1493 = vperm.xlu0 %1492, %v1447
      %v1494 = vpop.permute.xlu0 %1493
      %1497 = vset.pattern.permute.xlu0 0
      %1498 = vperm.xlu0 %1497, %v1448
      %v1499 = vpop.permute.xlu0 %1498
      %1502 = vset.pattern.permute.xlu0 0
      %1503 = vperm.xlu0 %1502, %v1449
      %v1504 = vpop.permute.xlu0 %1503
      %1507 = vset.pattern.permute.xlu0 0
      %1508 = vperm.xlu0 %1507, %v1450
      %v1509 = vpop.permute.xlu0 %1508
      %1512 = vset.pattern.permute.xlu0 0
      %1513 = vperm.xlu0 %1512, %v1451
      %v1514 = vpop.permute.xlu0 %1513
      %1517 = vset.pattern.permute.xlu0 0
      %1518 = vperm.xlu0 %1517, %v1452
      %v1519 = vpop.permute.xlu0 %1518
      %1522 = vset.pattern.permute.xlu0 0
      %1523 = vperm.xlu0 %1522, %v1453
      %v1524 = vpop.permute.xlu0 %1523
      %1527 = vset.pattern.permute.xlu0 0
      %1528 = vperm.xlu0 %1527, %v1454
      %v1529 = vpop.permute.xlu0 %1528
      %1532 = vset.pattern.permute.xlu0 0
      %1533 = vperm.xlu0 %1532, %v1455
      %v1534 = vpop.permute.xlu0 %1533
      %v1536 = vmul.f32 %v1424, %v1459
      %v1537 = vmul.f32 %v1425, %v1464
      %v1538 = vmul.f32 %v1426, %v1469
      %v1539 = vmul.f32 %v1427, %v1474
      %v1540 = vmul.f32 %v1428, %v1479
      %v1541 = vmul.f32 %v1429, %v1484
      %v1542 = vmul.f32 %v1430, %v1489
      %v1543 = vmul.f32 %v1431, %v1494
      %v1544 = vmul.f32 %v1432, %v1499
      %v1545 = vmul.f32 %v1433, %v1504
      %v1546 = vmul.f32 %v1434, %v1509
      %v1547 = vmul.f32 %v1435, %v1514
      %v1548 = vmul.f32 %v1436, %v1519
      %v1549 = vmul.f32 %v1437, %v1524
      %v1550 = vmul.f32 %v1438, %v1529
      %v1551 = vmul.f32 %v1439, %v1534
      %v1552 = vpack.c.bf16 %v1537, %v1536
      %v1553 = vpack.c.bf16 %v1539, %v1538
      %v1554 = vpack.c.bf16 %v1541, %v1540
      %v1555 = vpack.c.bf16 %v1543, %v1542
      %v1556 = vpack.c.bf16 %v1545, %v1544
      %v1557 = vpack.c.bf16 %v1547, %v1546
      %v1558 = vpack.c.bf16 %v1549, %v1548
      %v1559 = vpack.c.bf16 %v1551, %v1550
      %v1568 = vunpack.c.l.b16 %v1552
      %v1569 = vunpack.c.h.b16 %v1552
      %v1570 = vunpack.c.l.b16 %v1553
      %v1571 = vunpack.c.h.b16 %v1553
      %v1572 = vunpack.c.l.b16 %v1554
      %v1573 = vunpack.c.h.b16 %v1554
      %v1574 = vunpack.c.l.b16 %v1555
      %v1575 = vunpack.c.h.b16 %v1555
      %v1576 = vunpack.c.l.b16 %v1556
      %v1577 = vunpack.c.h.b16 %v1556
      %v1578 = vunpack.c.l.b16 %v1557
      %v1579 = vunpack.c.h.b16 %v1557
      %v1580 = vunpack.c.l.b16 %v1558
      %v1581 = vunpack.c.h.b16 %v1558
      %v1582 = vunpack.c.l.b16 %v1559
      %v1583 = vunpack.c.h.b16 %v1559
      %v1584 = vpack.c.b16 %v1568, %v1568
      %v1585 = vpack.c.b16 %v1569, %v1569
      %v1586 = vpack.c.b16 %v1570, %v1570
      %v1587 = vpack.c.b16 %v1571, %v1571
      %v1588 = vpack.c.b16 %v1572, %v1572
      %v1589 = vpack.c.b16 %v1573, %v1573
      %v1590 = vpack.c.b16 %v1574, %v1574
      %v1591 = vpack.c.b16 %v1575, %v1575
      %v1592 = vpack.c.b16 %v1576, %v1576
      %v1593 = vpack.c.b16 %v1577, %v1577
      %v1594 = vpack.c.b16 %v1578, %v1578
      %v1595 = vpack.c.b16 %v1579, %v1579
      %v1596 = vpack.c.b16 %v1580, %v1580
      %v1597 = vpack.c.b16 %v1581, %v1581
      %v1598 = vpack.c.b16 %v1582, %v1582
      %v1599 = vpack.c.b16 %v1583, %v1583
      %1616 = vst [vmem:[%s9] sm:$0xf] %v1584
      %1617 = vst [vmem:[%s9 + $0x4] sm:$0xf] %v1585
      %1618 = vst [vmem:[%s9 + $0x8] sm:$0xf] %v1586
      %1619 = vst [vmem:[%s9 + $0xc] sm:$0xf] %v1587
      %1620 = vst [vmem:[%s9 + $0x10] sm:$0xf] %v1588
      %1621 = vst [vmem:[%s9 + $0x14] sm:$0xf] %v1589
      %1622 = vst [vmem:[%s9 + $0x18] sm:$0xf] %v1590
      %1623 = vst [vmem:[%s9 + $0x1c] sm:$0xf] %v1591
      %1624 = vst [vmem:[%s9 + $0x20] sm:$0xf] %v1592
      %1625 = vst [vmem:[%s9 + $0x24] sm:$0xf] %v1593
      %1626 = vst [vmem:[%s9 + $0x28] sm:$0xf] %v1594
      %1627 = vst [vmem:[%s9 + $0x2c] sm:$0xf] %v1595
      %1628 = vst [vmem:[%s9 + $0x30] sm:$0xf] %v1596
      %1629 = vst [vmem:[%s9 + $0x34] sm:$0xf] %v1597
      %1630 = vst [vmem:[%s9 + $0x38] sm:$0xf] %v1598
      %1631 = vst [vmem:[%s9 + $0x3c] sm:$0xf] %v1599
    $region156: #{lgatr_forward.7} parent=1 // pred_fallthru
      _
    // Predicated region
    $region157: #{lgatr_forward.7} parent=1 // pred_check
      _
    $region158: #{lgatr_forward.7} parent=1 // pred_check_branch
      %1633 = sbr.rel (0) target = $region160
    $region159: #{lgatr_forward.7} parent=1 // pred_region
      _
    $region160: #{lgatr_forward.7} parent=1 // pred_fallthru
      _
    // Predicated region
    $region161: #{lgatr_forward.7} parent=1 // pred_check
      _
    $region162: #{lgatr_forward.7} parent=1 // pred_check_branch
      %1635 = sbr.rel (0) target = $region164
    $region163: #{lgatr_forward.7} parent=1 // pred_region
      _
    $region164: #{lgatr_forward.7} parent=1 // pred_fallthru
      _

// kernel: lgatr_forward.11
$region0: #{lgatr_forward.11}
  #allocation0 [shape = 'u32[]', space=smem, size = 0x4, offset = 0x4, fixed_abs, tag = 'smem constant byte address 0x4 - core index']
  #allocation1 [shape = 'u32[144,128]{1,0:T(1,128)}', space=vmem, size = 0x12000, scoped, tag = 'internal scratch']
  %s0 = inlined_call_operand.vmem [shape: bf16[128,128], index: 0, kind: input, shape index: {}]
  %s1 = inlined_call_operand.vmem [shape: bf16[128,128], index: 1, kind: input, shape index: {}]
  %s2 = inlined_call_operand.vmem [shape: f32[1,128], index: 2, kind: input, shape index: {}]
  %s3 = inlined_call_operand.vmem [shape: f32[128,128], index: 3, kind: output, shape index: {}]
  %s4 = sld [smem:[#allocation0]]
  $region22: #{lgatr_forward.11} parent=0
    _
  %s6 = ssub.s32 1, %s4
  %s7 = scalar_select 0, %s6, %s4
  // Predicated region
  $region2: #{lgatr_forward.11} parent=0 // pred_check
    _
  $region3: #{lgatr_forward.11} parent=0 // pred_check_branch
    %9 = sbr.rel (0) target = $region5
  $region4: #{lgatr_forward.11} parent=0 // pred_region
    _
  $region5: #{lgatr_forward.11} parent=0 // pred_fallthru
    _
  // Predicated region
  $region6: #{lgatr_forward.11} parent=0 // pred_check
    _
  $region7: #{lgatr_forward.11} parent=0 // pred_check_branch
    %11 = sbr.rel (0) target = $region9
  $region8: #{lgatr_forward.11} parent=0 // pred_region
    _
  $region9: #{lgatr_forward.11} parent=0 // pred_fallthru
    _
  // Predicated region
  $region10: #{lgatr_forward.11} parent=0 // pred_check
    _
  $region11: #{lgatr_forward.11} parent=0 // pred_check_branch
    %13 = sbr.rel (0) target = $region13
  $region12: #{lgatr_forward.11} parent=0 // pred_region
    _
  $region13: #{lgatr_forward.11} parent=0 // pred_fallthru
    _
  %v15 = vld [vmem:[%s0] sm:$0xf]
  %v16 = vld [vmem:[%s0 + $0x4] sm:$0xf]
  %v17 = vld [vmem:[%s0 + $0x8] sm:$0xf]
  %v18 = vld [vmem:[%s0 + $0xc] sm:$0xf]
  %v19 = vld [vmem:[%s0 + $0x10] sm:$0xf]
  %v20 = vld [vmem:[%s0 + $0x14] sm:$0xf]
  %v21 = vld [vmem:[%s0 + $0x18] sm:$0xf]
  %v22 = vld [vmem:[%s0 + $0x1c] sm:$0xf]
  %v23 = vld [vmem:[%s0 + $0x20] sm:$0xf]
  %v24 = vld [vmem:[%s0 + $0x24] sm:$0xf]
  %v25 = vld [vmem:[%s0 + $0x28] sm:$0xf]
  %v26 = vld [vmem:[%s0 + $0x2c] sm:$0xf]
  %v27 = vld [vmem:[%s0 + $0x30] sm:$0xf]
  %v28 = vld [vmem:[%s0 + $0x34] sm:$0xf]
  %v29 = vld [vmem:[%s0 + $0x38] sm:$0xf]
  %v30 = vld [vmem:[%s0 + $0x3c] sm:$0xf]
  %v31 = vld [vmem:[%s1] sm:$0xf]
  %v32 = vld [vmem:[%s1 + $0x4] sm:$0xf]
  %v33 = vld [vmem:[%s1 + $0x8] sm:$0xf]
  %v34 = vld [vmem:[%s1 + $0xc] sm:$0xf]
  %v35 = vld [vmem:[%s1 + $0x10] sm:$0xf]
  %v36 = vld [vmem:[%s1 + $0x14] sm:$0xf]
  %v37 = vld [vmem:[%s1 + $0x18] sm:$0xf]
  %v38 = vld [vmem:[%s1 + $0x1c] sm:$0xf]
  %v39 = vld [vmem:[%s1 + $0x20] sm:$0xf]
  %v40 = vld [vmem:[%s1 + $0x24] sm:$0xf]
  %v41 = vld [vmem:[%s1 + $0x28] sm:$0xf]
  %v42 = vld [vmem:[%s1 + $0x2c] sm:$0xf]
  %v43 = vld [vmem:[%s1 + $0x30] sm:$0xf]
  %v44 = vld [vmem:[%s1 + $0x34] sm:$0xf]
  %v45 = vld [vmem:[%s1 + $0x38] sm:$0xf]
  %v46 = vld [vmem:[%s1 + $0x3c] sm:$0xf]
  %v47 = vld [vmem:[%s2] sm:$0x1]
  %v49 = vlaneseq
  %v50 = vshrl.u32 %v49, 7
  %v51 = vsub.s32 0, %v50
  %v52 = vrot.slane %v47, %v51
  %v70 = vunpack.c.l.b16 %v15
  %v71 = vunpack.c.l.b16 %v16
  %v72 = vunpack.c.l.b16 %v17
  %v73 = vunpack.c.l.b16 %v18
  %v74 = vunpack.c.l.b16 %v19
  %v75 = vunpack.c.l.b16 %v20
  %v76 = vunpack.c.l.b16 %v21
  %v77 = vunpack.c.l.b16 %v22
  %v78 = vunpack.c.l.b16 %v23
  %v79 = vunpack.c.l.b16 %v24
  %v80 = vunpack.c.l.b16 %v25
  %v81 = vunpack.c.l.b16 %v26
  %v82 = vunpack.c.l.b16 %v27
  %v83 = vunpack.c.l.b16 %v28
  %v84 = vunpack.c.l.b16 %v29
  %v85 = vunpack.c.l.b16 %v30
  %v86 = vpack.c.b16 %v71, %v70
  %v87 = vpack.c.b16 %v73, %v72
  %v88 = vpack.c.b16 %v75, %v74
  %v89 = vpack.c.b16 %v77, %v76
  %v90 = vpack.c.b16 %v79, %v78
  %v91 = vpack.c.b16 %v81, %v80
  %v92 = vpack.c.b16 %v83, %v82
  %v93 = vpack.c.b16 %v85, %v84
  %v118 = vunpack.c.l.b16 %v31
  %v119 = vunpack.c.l.b16 %v32
  %v120 = vunpack.c.l.b16 %v33
  %v121 = vunpack.c.l.b16 %v34
  %v122 = vunpack.c.l.b16 %v35
  %v123 = vunpack.c.l.b16 %v36
  %v124 = vunpack.c.l.b16 %v37
  %v125 = vunpack.c.l.b16 %v38
  %v126 = vunpack.c.l.b16 %v39
  %v127 = vunpack.c.l.b16 %v40
  %v128 = vunpack.c.l.b16 %v41
  %v129 = vunpack.c.l.b16 %v42
  %v130 = vunpack.c.l.b16 %v43
  %v131 = vunpack.c.l.b16 %v44
  %v132 = vunpack.c.l.b16 %v45
  %v133 = vunpack.c.l.b16 %v46
  %v134 = vpack.c.b16 %v119, %v118
  %v135 = vpack.c.b16 %v121, %v120
  %v136 = vpack.c.b16 %v123, %v122
  %v137 = vpack.c.b16 %v125, %v124
  %v138 = vpack.c.b16 %v127, %v126
  %v139 = vpack.c.b16 %v129, %v128
  %v140 = vpack.c.b16 %v131, %v130
  %v141 = vpack.c.b16 %v133, %v132
  %150 = vmatprep.subr.bf16.mxu0 0
  %151 = vmatpush1.bf16.msra.mxu0 %v134
  %152 = vmatprep.subr.bf16.mxu0 0
  %153 = vmatpush1.bf16.msra.mxu0 %v135
  %154 = vmatprep.subr.bf16.mxu0 0
  %155 = vmatpush1.bf16.msra.mxu0 %v136
  %156 = vmatprep.subr.bf16.mxu0 0
  %157 = vmatpush1.bf16.msra.mxu0 %v137
  %158 = vmatprep.subr.bf16.mxu0 0
  %159 = vmatpush1.bf16.msra.mxu0 %v138
  %160 = vmatprep.subr.bf16.mxu0 0
  %161 = vmatpush1.bf16.msra.mxu0 %v139
  %162 = vmatprep.subr.bf16.mxu0 0
  %163 = vmatpush1.bf16.msra.mxu0 %v140
  %164 = vmatprep.subr.bf16.mxu0 0
  %165 = vmatpush1.bf16.msra.mxu0 %v141
  %166 = vmatprep.subr.bf16.mxu0 0
  %167 = vmatpush1.bf16.msra.mxu0 0
  %168 = vmatprep.subr.bf16.mxu0 0
  %169 = vmatpush1.bf16.msra.mxu0 0
  %170 = vmatprep.subr.bf16.mxu0 0
  %171 = vmatpush1.bf16.msra.mxu0 0
  %172 = vmatprep.subr.bf16.mxu0 0
  %173 = vmatpush1.bf16.msra.mxu0 0
  %174 = vmatprep.subr.bf16.mxu0 0
  %175 = vmatpush1.bf16.msra.mxu0 0
  %176 = vmatprep.subr.bf16.mxu0 0
  %177 = vmatpush1.bf16.msra.mxu0 0
  %178 = vmatprep.subr.bf16.mxu0 0
  %179 = vmatpush1.bf16.msra.mxu0 0
  %180 = vmatprep.subr.bf16.mxu0 0
  %181 = vmatpush1.bf16.msra.mxu0 0
  %182 = vmatprep.mubr.bf16.mxu0 0
  %183 = vmatmul.mubr.bf16.gmra.mrb[0].mxu0 %v86
  %v184 = vpop.f32.mrb[0].mxu0
  %v185 = vadd.f32 %v52, %v184
  %v186 = vpop.f32.mrb[0].mxu0
  %v187 = vpop.f32.mrb[0].mxu0
  %v188 = vadd.f32 %v52, %v187
  %v189 = vpop.f32.mrb[0].mxu0
  %190 = vmatprep.mubr.bf16.mxu0 0
  %191 = vmatmul.mubr.bf16.gmra.mrb[0].mxu0 %v87
  %v192 = vpop.f32.mrb[0].mxu0
  %v193 = vadd.f32 %v52, %v192
  %v194 = vpop.f32.mrb[0].mxu0
  %v195 = vpop.f32.mrb[0].mxu0
  %v196 = vadd.f32 %v52, %v195
  %v197 = vpop.f32.mrb[0].mxu0
  %198 = vmatprep.mubr.bf16.mxu0 0
  %199 = vmatmul.mubr.bf16.gmra.mrb[0].mxu0 %v88
  %v200 = vpop.f32.mrb[0].mxu0
  %v201 = vadd.f32 %v52, %v200
  %v202 = vpop.f32.mrb[0].mxu0
  %v203 = vpop.f32.mrb[0].mxu0
  %v204 = vadd.f32 %v52, %v203
  %v205 = vpop.f32.mrb[0].mxu0
  %206 = vmatprep.mubr.bf16.mxu0 0
  %207 = vmatmul.mubr.bf16.gmra.mrb[0].mxu0 %v89
  %v208 = vpop.f32.mrb[0].mxu0
  %v209 = vadd.f32 %v52, %v208
  %v210 = vpop.f32.mrb[0].mxu0
  %v211 = vpop.f32.mrb[0].mxu0
  %v212 = vadd.f32 %v52, %v211
  %v213 = vpop.f32.mrb[0].mxu0
  %214 = vmatprep.mubr.bf16.mxu0 0
  %215 = vmatmul.mubr.bf16.gmra.mrb[0].mxu0 %v90
  %v216 = vpop.f32.mrb[0].mxu0
  %v217 = vadd.f32 %v52, %v216
  %v218 = vpop.f32.mrb[0].mxu0
  %v219 = vpop.f32.mrb[0].mxu0
  %v220 = vadd.f32 %v52, %v219
  %v221 = vpop.f32.mrb[0].mxu0
  %222 = vmatprep.mubr.bf16.mxu0 0
  %223 = vmatmul.mubr.bf16.gmra.mrb[0].mxu0 %v91
  %v224 = vpop.f32.mrb[0].mxu0
  %v225 = vadd.f32 %v52, %v224
  %v226 = vpop.f32.mrb[0].mxu0
  %v227 = vpop.f32.mrb[0].mxu0
  %v228 = vadd.f32 %v52, %v227
  %v229 = vpop.f32.mrb[0].mxu0
  %230 = vmatprep.mubr.bf16.mxu0 0
  %231 = vmatmul.mubr.bf16.gmra.mrb[0].mxu0 %v92
  %v232 = vpop.f32.mrb[0].mxu0
  %v233 = vadd.f32 %v52, %v232
  %v234 = vpop.f32.mrb[0].mxu0
  %v235 = vpop.f32.mrb[0].mxu0
  %v236 = vadd.f32 %v52, %v235
  %v237 = vpop.f32.mrb[0].mxu0
  %238 = vmatprep.mubr.bf16.mxu0 0
  %239 = vmatmul.mubr.bf16.gmra.mrb[0].mxu0 %v93
  %v240 = vpop.f32.mrb[0].mxu0
  %v241 = vadd.f32 %v52, %v240
  %v242 = vpop.f32.mrb[0].mxu0
  %v243 = vpop.f32.mrb[0].mxu0
  %v244 = vadd.f32 %v52, %v243
  %v245 = vpop.f32.mrb[0].mxu0
  %246 = vdwg.mxu0
  %247 = vst [vmem:[%s3] sm:$0xff] %v185
  %248 = vst [vmem:[%s3 + $0x8] sm:$0xff] %v188
  %249 = vst [vmem:[%s3 + $0x10] sm:$0xff] %v193
  %250 = vst [vmem:[%s3 + $0x18] sm:$0xff] %v196
  %251 = vst [vmem:[%s3 + $0x20] sm:$0xff] %v201
  %252 = vst [vmem:[%s3 + $0x28] sm:$0xff] %v204
  %253 = vst [vmem:[%s3 + $0x30] sm:$0xff] %v209
  %254 = vst [vmem:[%s3 + $0x38] sm:$0xff] %v212
  %255 = vst [vmem:[%s3 + $0x40] sm:$0xff] %v217
  %256 = vst [vmem:[%s3 + $0x48] sm:$0xff] %v220
  %257 = vst [vmem:[%s3 + $0x50] sm:$0xff] %v225
  %258 = vst [vmem:[%s3 + $0x58] sm:$0xff] %v228
  %259 = vst [vmem:[%s3 + $0x60] sm:$0xff] %v233
  %260 = vst [vmem:[%s3 + $0x68] sm:$0xff] %v236
  %261 = vst [vmem:[%s3 + $0x70] sm:$0xff] %v241
  %262 = vst [vmem:[%s3 + $0x78] sm:$0xff] %v244
  // Predicated region
  $region14: #{lgatr_forward.11} parent=0 // pred_check
    _
  $region15: #{lgatr_forward.11} parent=0 // pred_check_branch
    %264 = sbr.rel (0) target = $region17
  $region16: #{lgatr_forward.11} parent=0 // pred_region
    _
  $region17: #{lgatr_forward.11} parent=0 // pred_fallthru
    _
  // Predicated region
  $region18: #{lgatr_forward.11} parent=0 // pred_check
    _
  $region19: #{lgatr_forward.11} parent=0 // pred_check_branch
    %266 = sbr.rel (0) target = $region21
  $region20: #{lgatr_forward.11} parent=0 // pred_region
    _
  $region21: #{lgatr_forward.11} parent=0 // pred_fallthru
    _

// kernel: lgatr_forward.10
$region0: #{lgatr_forward.10}
  #allocation0 [shape = 'u32[]', space=smem, size = 0x4, offset = 0x4, fixed_abs, tag = 'smem constant byte address 0x4 - core index']
  #allocation1 [shape = 'u32[144,128]{1,0:T(1,128)}', space=vmem, size = 0x12000, scoped, tag = 'internal scratch']
  %s0 = inlined_call_operand.vmem [shape: bf16[128,128], index: 0, kind: input, shape index: {}]
  %s1 = inlined_call_operand.vmem [shape: bf16[128,128], index: 1, kind: input, shape index: {}]
  %s2 = inlined_call_operand.vmem [shape: f32[1,128], index: 2, kind: input, shape index: {}]
  %s3 = inlined_call_operand.vmem [shape: f32[1,128], index: 3, kind: input, shape index: {}]
  %s4 = inlined_call_operand.vmem [shape: f32[1,256], index: 4, kind: input, shape index: {}]
  %s5 = inlined_call_operand.vmem [shape: bf16[128,128], index: 5, kind: input, shape index: {}]
  %s6 = inlined_call_operand.vmem [shape: f32[1,128], index: 6, kind: input, shape index: {}]
  %s7 = inlined_call_operand.vmem [shape: bf16[128,256], index: 7, kind: input, shape index: {}]
  %s8 = inlined_call_operand.vmem [shape: f32[1,256], index: 8, kind: input, shape index: {}]
  %s9 = inlined_call_operand.vmem [shape: bf16[128,256], index: 9, kind: input, shape index: {}]
  %s10 = inlined_call_operand.vmem [shape: f32[1,256], index: 10, kind: input, shape index: {}]
  %s11 = inlined_call_operand.vmem [shape: bf16[256,128], index: 11, kind: input, shape index: {}]
  %s12 = inlined_call_operand.vmem [shape: f32[1,128], index: 12, kind: input, shape index: {}]
  %s13 = inlined_call_operand.vmem [shape: bf16[128,128], index: 13, kind: output, shape index: {}]
  %s14 = sld [smem:[#allocation0]]
  $region62: #{lgatr_forward.10} parent=0
    _
  %s16 = ssub.s32 1, %s14
  %s17 = scalar_select 0, %s16, %s14
  // Predicated region
  $region2: #{lgatr_forward.10} parent=0 // pred_check
    _
  $region3: #{lgatr_forward.10} parent=0 // pred_check_branch
    %19 = sbr.rel (0) target = $region5
  $region4: #{lgatr_forward.10} parent=0 // pred_region
    _
  $region5: #{lgatr_forward.10} parent=0 // pred_fallthru
    _
  // Predicated region
  $region6: #{lgatr_forward.10} parent=0 // pred_check
    _
  $region7: #{lgatr_forward.10} parent=0 // pred_check_branch
    %21 = sbr.rel (0) target = $region9
  $region8: #{lgatr_forward.10} parent=0 // pred_region
    _
  $region9: #{lgatr_forward.10} parent=0 // pred_fallthru
    _
  // Predicated region
  $region10: #{lgatr_forward.10} parent=0 // pred_check
    _
  $region11: #{lgatr_forward.10} parent=0 // pred_check_branch
    %23 = sbr.rel (0) target = $region13
  $region12: #{lgatr_forward.10} parent=0 // pred_region
    _
  $region13: #{lgatr_forward.10} parent=0 // pred_fallthru
    _
  // Predicated region
  $region14: #{lgatr_forward.10} parent=0 // pred_check
    _
  $region15: #{lgatr_forward.10} parent=0 // pred_check_branch
    %25 = sbr.rel (0) target = $region17
  $region16: #{lgatr_forward.10} parent=0 // pred_region
    _
  $region17: #{lgatr_forward.10} parent=0 // pred_fallthru
    _
  // Predicated region
  $region18: #{lgatr_forward.10} parent=0 // pred_check
    _
  $region19: #{lgatr_forward.10} parent=0 // pred_check_branch
    %27 = sbr.rel (0) target = $region21
  $region20: #{lgatr_forward.10} parent=0 // pred_region
    _
  $region21: #{lgatr_forward.10} parent=0 // pred_fallthru
    _
  // Predicated region
  $region22: #{lgatr_forward.10} parent=0 // pred_check
    _
  $region23: #{lgatr_forward.10} parent=0 // pred_check_branch
    %29 = sbr.rel (0) target = $region25
  $region24: #{lgatr_forward.10} parent=0 // pred_region
    _
  $region25: #{lgatr_forward.10} parent=0 // pred_fallthru
    _
  // Predicated region
  $region26: #{lgatr_forward.10} parent=0 // pred_check
    _
  $region27: #{lgatr_forward.10} parent=0 // pred_check_branch
    %31 = sbr.rel (0) target = $region29
  $region28: #{lgatr_forward.10} parent=0 // pred_region
    _
  $region29: #{lgatr_forward.10} parent=0 // pred_fallthru
    _
  // Predicated region
  $region30: #{lgatr_forward.10} parent=0 // pred_check
    _
  $region31: #{lgatr_forward.10} parent=0 // pred_check_branch
    %33 = sbr.rel (0) target = $region33
  $region32: #{lgatr_forward.10} parent=0 // pred_region
    _
  $region33: #{lgatr_forward.10} parent=0 // pred_fallthru
    _
  // Predicated region
  $region34: #{lgatr_forward.10} parent=0 // pred_check
    _
  $region35: #{lgatr_forward.10} parent=0 // pred_check_branch
    %35 = sbr.rel (0) target = $region37
  $region36: #{lgatr_forward.10} parent=0 // pred_region
    _
  $region37: #{lgatr_forward.10} parent=0 // pred_fallthru
    _
  // Predicated region
  $region38: #{lgatr_forward.10} parent=0 // pred_check
    _
  $region39: #{lgatr_forward.10} parent=0 // pred_check_branch
    %37 = sbr.rel (0) target = $region41
  $region40: #{lgatr_forward.10} parent=0 // pred_region
    _
  $region41: #{lgatr_forward.10} parent=0 // pred_fallthru
    _
  // Predicated region
  $region42: #{lgatr_forward.10} parent=0 // pred_check
    _
  $region43: #{lgatr_forward.10} parent=0 // pred_check_branch
    %39 = sbr.rel (0) target = $region45
  $region44: #{lgatr_forward.10} parent=0 // pred_region
    _
  $region45: #{lgatr_forward.10} parent=0 // pred_fallthru
    _
  // Predicated region
  $region46: #{lgatr_forward.10} parent=0 // pred_check
    _
  $region47: #{lgatr_forward.10} parent=0 // pred_check_branch
    %41 = sbr.rel (0) target = $region49
  $region48: #{lgatr_forward.10} parent=0 // pred_region
    _
  $region49: #{lgatr_forward.10} parent=0 // pred_fallthru
    _
  // Predicated region
  $region50: #{lgatr_forward.10} parent=0 // pred_check
    _
  $region51: #{lgatr_forward.10} parent=0 // pred_check_branch
    %43 = sbr.rel (0) target = $region53
  $region52: #{lgatr_forward.10} parent=0 // pred_region
    _
  $region53: #{lgatr_forward.10} parent=0 // pred_fallthru
    _
  %v45 = vld [vmem:[%s0] sm:$0xf]
  %v46 = vld [vmem:[%s0 + $0x4] sm:$0xf]
  %v47 = vld [vmem:[%s0 + $0x8] sm:$0xf]
  %v48 = vld [vmem:[%s0 + $0xc] sm:$0xf]
  %v49 = vld [vmem:[%s0 + $0x10] sm:$0xf]
  %v50 = vld [vmem:[%s0 + $0x14] sm:$0xf]
  %v51 = vld [vmem:[%s0 + $0x18] sm:$0xf]
  %v52 = vld [vmem:[%s0 + $0x1c] sm:$0xf]
  %v53 = vld [vmem:[%s0 + $0x20] sm:$0xf]
  %v54 = vld [vmem:[%s0 + $0x24] sm:$0xf]
  %v55 = vld [vmem:[%s0 + $0x28] sm:$0xf]
  %v56 = vld [vmem:[%s0 + $0x2c] sm:$0xf]
  %v57 = vld [vmem:[%s0 + $0x30] sm:$0xf]
  %v58 = vld [vmem:[%s0 + $0x34] sm:$0xf]
  %v59 = vld [vmem:[%s0 + $0x38] sm:$0xf]
  %v60 = vld [vmem:[%s0 + $0x3c] sm:$0xf]
  %v61 = vunpack.c.l.bf16 %v45
  %v62 = vunpack.c.l.bf16 %v46
  %v63 = vunpack.c.l.bf16 %v47
  %v64 = vunpack.c.l.bf16 %v48
  %v65 = vunpack.c.l.bf16 %v49
  %v66 = vunpack.c.l.bf16 %v50
  %v67 = vunpack.c.l.bf16 %v51
  %v68 = vunpack.c.l.bf16 %v52
  %v69 = vunpack.c.l.bf16 %v53
  %v70 = vunpack.c.l.bf16 %v54
  %v71 = vunpack.c.l.bf16 %v55
  %v72 = vunpack.c.l.bf16 %v56
  %v73 = vunpack.c.l.bf16 %v57
  %v74 = vunpack.c.l.bf16 %v58
  %v75 = vunpack.c.l.bf16 %v59
  %v76 = vunpack.c.l.bf16 %v60
  %v77 = vld [vmem:[%s1] sm:$0xf]
  %v78 = vld [vmem:[%s1 + $0x4] sm:$0xf]
  %v79 = vld [vmem:[%s1 + $0x8] sm:$0xf]
  %v80 = vld [vmem:[%s1 + $0xc] sm:$0xf]
  %v81 = vld [vmem:[%s1 + $0x10] sm:$0xf]
  %v82 = vld [vmem:[%s1 + $0x14] sm:$0xf]
  %v83 = vld [vmem:[%s1 + $0x18] sm:$0xf]
  %v84 = vld [vmem:[%s1 + $0x1c] sm:$0xf]
  %v85 = vld [vmem:[%s1 + $0x20] sm:$0xf]
  %v86 = vld [vmem:[%s1 + $0x24] sm:$0xf]
  %v87 = vld [vmem:[%s1 + $0x28] sm:$0xf]
  %v88 = vld [vmem:[%s1 + $0x2c] sm:$0xf]
  %v89 = vld [vmem:[%s1 + $0x30] sm:$0xf]
  %v90 = vld [vmem:[%s1 + $0x34] sm:$0xf]
  %v91 = vld [vmem:[%s1 + $0x38] sm:$0xf]
  %v92 = vld [vmem:[%s1 + $0x3c] sm:$0xf]
  %v93 = vld [vmem:[%s5] sm:$0xf]
  %v94 = vld [vmem:[%s5 + $0x4] sm:$0xf]
  %v95 = vld [vmem:[%s5 + $0x8] sm:$0xf]
  %v96 = vld [vmem:[%s5 + $0xc] sm:$0xf]
  %v97 = vld [vmem:[%s5 + $0x10] sm:$0xf]
  %v98 = vld [vmem:[%s5 + $0x14] sm:$0xf]
  %v99 = vld [vmem:[%s5 + $0x18] sm:$0xf]
  %v100 = vld [vmem:[%s5 + $0x1c] sm:$0xf]
  %v101 = vld [vmem:[%s5 + $0x20] sm:$0xf]
  %v102 = vld [vmem:[%s5 + $0x24] sm:$0xf]
  %v103 = vld [vmem:[%s5 + $0x28] sm:$0xf]
  %v104 = vld [vmem:[%s5 + $0x2c] sm:$0xf]
  %v105 = vld [vmem:[%s5 + $0x30] sm:$0xf]
  %v106 = vld [vmem:[%s5 + $0x34] sm:$0xf]
  %v107 = vld [vmem:[%s5 + $0x38] sm:$0xf]
  %v108 = vld [vmem:[%s5 + $0x3c] sm:$0xf]
  %v125 = vunpack.c.l.b16 %v77
  %v126 = vunpack.c.l.b16 %v78
  %v127 = vunpack.c.l.b16 %v79
  %v128 = vunpack.c.l.b16 %v80
  %v129 = vunpack.c.l.b16 %v81
  %v130 = vunpack.c.l.b16 %v82
  %v131 = vunpack.c.l.b16 %v83
  %v132 = vunpack.c.l.b16 %v84
  %v133 = vunpack.c.l.b16 %v85
  %v134 = vunpack.c.l.b16 %v86
  %v135 = vunpack.c.l.b16 %v87
  %v136 = vunpack.c.l.b16 %v88
  %v137 = vunpack.c.l.b16 %v89
  %v138 = vunpack.c.l.b16 %v90
  %v139 = vunpack.c.l.b16 %v91
  %v140 = vunpack.c.l.b16 %v92
  %v141 = vpack.c.b16 %v126, %v125
  %v142 = vpack.c.b16 %v128, %v127
  %v143 = vpack.c.b16 %v130, %v129
  %v144 = vpack.c.b16 %v132, %v131
  %v145 = vpack.c.b16 %v134, %v133
  %v146 = vpack.c.b16 %v136, %v135
  %v147 = vpack.c.b16 %v138, %v137
  %v148 = vpack.c.b16 %v140, %v139
  %v173 = vunpack.c.l.b16 %v93
  %v174 = vunpack.c.l.b16 %v94
  %v175 = vunpack.c.l.b16 %v95
  %v176 = vunpack.c.l.b16 %v96
  %v177 = vunpack.c.l.b16 %v97
  %v178 = vunpack.c.l.b16 %v98
  %v179 = vunpack.c.l.b16 %v99
  %v180 = vunpack.c.l.b16 %v100
  %v181 = vunpack.c.l.b16 %v101
  %v182 = vunpack.c.l.b16 %v102
  %v183 = vunpack.c.l.b16 %v103
  %v184 = vunpack.c.l.b16 %v104
  %v185 = vunpack.c.l.b16 %v105
  %v186 = vunpack.c.l.b16 %v106
  %v187 = vunpack.c.l.b16 %v107
  %v188 = vunpack.c.l.b16 %v108
  %v189 = vpack.c.b16 %v174, %v173
  %v190 = vpack.c.b16 %v176, %v175
  %v191 = vpack.c.b16 %v178, %v177
  %v192 = vpack.c.b16 %v180, %v179
  %v193 = vpack.c.b16 %v182, %v181
  %v194 = vpack.c.b16 %v184, %v183
  %v195 = vpack.c.b16 %v186, %v185
  %v196 = vpack.c.b16 %v188, %v187
  %205 = vmatprep.subr.bf16.mxu0 0
  %206 = vmatpush1.bf16.msra.mxu0 %v189
  %207 = vmatprep.subr.bf16.mxu0 0
  %208 = vmatpush1.bf16.msra.mxu0 %v190
  %209 = vmatprep.subr.bf16.mxu0 0
  %210 = vmatpush1.bf16.msra.mxu0 %v191
  %211 = vmatprep.subr.bf16.mxu0 0
  %212 = vmatpush1.bf16.msra.mxu0 %v192
  %213 = vmatprep.subr.bf16.mxu0 0
  %214 = vmatpush1.bf16.msra.mxu0 %v193
  %215 = vmatprep.subr.bf16.mxu0 0
  %216 = vmatpush1.bf16.msra.mxu0 %v194
  %217 = vmatprep.subr.bf16.mxu0 0
  %218 = vmatpush1.bf16.msra.mxu0 %v195
  %219 = vmatprep.subr.bf16.mxu0 0
  %220 = vmatpush1.bf16.msra.mxu0 %v196
  %221 = vmatprep.subr.bf16.mxu0 0
  %222 = vmatpush1.bf16.msra.mxu0 0
  %223 = vmatprep.subr.bf16.mxu0 0
  %224 = vmatpush1.bf16.msra.mxu0 0
  %225 = vmatprep.subr.bf16.mxu0 0
  %226 = vmatpush1.bf16.msra.mxu0 0
  %227 = vmatprep.subr.bf16.mxu0 0
  %228 = vmatpush1.bf16.msra.mxu0 0
  %229 = vmatprep.subr.bf16.mxu0 0
  %230 = vmatpush1.bf16.msra.mxu0 0
  %231 = vmatprep.subr.bf16.mxu0 0
  %232 = vmatpush1.bf16.msra.mxu0 0
  %233 = vmatprep.subr.bf16.mxu0 0
  %234 = vmatpush1.bf16.msra.mxu0 0
  %235 = vmatprep.subr.bf16.mxu0 0
  %236 = vmatpush1.bf16.msra.mxu0 0
  %237 = vmatprep.mubr.bf16.mxu0 0
  %238 = vmatmul.mubr.bf16.gmra.mrb[0].mxu0 %v141
  %v239 = vpop.f32.mrb[0].mxu0
  %v240 = vadd.f32 0.0, %v239
  %v241 = vpop.f32.mrb[0].mxu0
  %v242 = vpop.f32.mrb[0].mxu0
  %v243 = vadd.f32 0.0, %v242
  %v244 = vpop.f32.mrb[0].mxu0
  %245 = vmatprep.mubr.bf16.mxu0 0
  %246 = vmatmul.mubr.bf16.gmra.mrb[0].mxu0 %v142
  %v247 = vpop.f32.mrb[0].mxu0
  %v248 = vadd.f32 0.0, %v247
  %v249 = vpop.f32.mrb[0].mxu0
  %v250 = vpop.f32.mrb[0].mxu0
  %v251 = vadd.f32 0.0, %v250
  %v252 = vpop.f32.mrb[0].mxu0
  %253 = vmatprep.mubr.bf16.mxu0 0
  %254 = vmatmul.mubr.bf16.gmra.mrb[0].mxu0 %v143
  %v255 = vpop.f32.mrb[0].mxu0
  %v256 = vadd.f32 0.0, %v255
  %v257 = vpop.f32.mrb[0].mxu0
  %v258 = vpop.f32.mrb[0].mxu0
  %v259 = vadd.f32 0.0, %v258
  %v260 = vpop.f32.mrb[0].mxu0
  %261 = vmatprep.mubr.bf16.mxu0 0
  %262 = vmatmul.mubr.bf16.gmra.mrb[0].mxu0 %v144
  %v263 = vpop.f32.mrb[0].mxu0
  %v264 = vadd.f32 0.0, %v263
  %v265 = vpop.f32.mrb[0].mxu0
  %v266 = vpop.f32.mrb[0].mxu0
  %v267 = vadd.f32 0.0, %v266
  %v268 = vpop.f32.mrb[0].mxu0
  %269 = vmatprep.mubr.bf16.mxu0 0
  %270 = vmatmul.mubr.bf16.gmra.mrb[0].mxu0 %v145
  %v271 = vpop.f32.mrb[0].mxu0
  %v272 = vadd.f32 0.0, %v271
  %v273 = vpop.f32.mrb[0].mxu0
  %v274 = vpop.f32.mrb[0].mxu0
  %v275 = vadd.f32 0.0, %v274
  %v276 = vpop.f32.mrb[0].mxu0
  %277 = vmatprep.mubr.bf16.mxu0 0
  %278 = vmatmul.mubr.bf16.gmra.mrb[0].mxu0 %v146
  %v279 = vpop.f32.mrb[0].mxu0
  %v280 = vadd.f32 0.0, %v279
  %v281 = vpop.f32.mrb[0].mxu0
  %v282 = vpop.f32.mrb[0].mxu0
  %v283 = vadd.f32 0.0, %v282
  %v284 = vpop.f32.mrb[0].mxu0
  %285 = vmatprep.mubr.bf16.mxu0 0
  %286 = vmatmul.mubr.bf16.gmra.mrb[0].mxu0 %v147
  %v287 = vpop.f32.mrb[0].mxu0
  %v288 = vadd.f32 0.0, %v287
  %v289 = vpop.f32.mrb[0].mxu0
  %v290 = vpop.f32.mrb[0].mxu0
  %v291 = vadd.f32 0.0, %v290
  %v292 = vpop.f32.mrb[0].mxu0
  %293 = vmatprep.mubr.bf16.mxu0 0
  %294 = vmatmul.mubr.bf16.gmra.mrb[0].mxu0 %v148
  %v295 = vpop.f32.mrb[0].mxu0
  %v296 = vadd.f32 0.0, %v295
  %v297 = vpop.f32.mrb[0].mxu0
  %v298 = vpop.f32.mrb[0].mxu0
  %v299 = vadd.f32 0.0, %v298
  %v300 = vpop.f32.mrb[0].mxu0
  %301 = vdwg.mxu0
  %v302 = vadd.f32 %v61, %v240
  %v303 = vadd.f32 %v62, %v243
  %v304 = vadd.f32 %v63, %v248
  %v305 = vadd.f32 %v64, %v251
  %v306 = vadd.f32 %v65, %v256
  %v307 = vadd.f32 %v66, %v259
  %v308 = vadd.f32 %v67, %v264
  %v309 = vadd.f32 %v68, %v267
  %v310 = vadd.f32 %v69, %v272
  %v311 = vadd.f32 %v70, %v275
  %v312 = vadd.f32 %v71, %v280
  %v313 = vadd.f32 %v72, %v283
  %v314 = vadd.f32 %v73, %v288
  %v315 = vadd.f32 %v74, %v291
  %v316 = vadd.f32 %v75, %v296
  %v317 = vadd.f32 %v76, %v299
  %v318 = vld [vmem:[%s6] sm:$0x1]
  %v320 = vlaneseq
  %v321 = vshrl.u32 %v320, 7
  %v322 = vsub.s32 0, %v321
  %v323 = vrot.slane %v318, %v322
  %v325 = vadd.f32 %v302, %v323
  %v326 = vadd.f32 %v303, %v323
  %v327 = vadd.f32 %v304, %v323
  %v328 = vadd.f32 %v305, %v323
  %v329 = vadd.f32 %v306, %v323
  %v330 = vadd.f32 %v307, %v323
  %v331 = vadd.f32 %v308, %v323
  %v332 = vadd.f32 %v309, %v323
  %v333 = vadd.f32 %v310, %v323
  %v334 = vadd.f32 %v311, %v323
  %v335 = vadd.f32 %v312, %v323
  %v336 = vadd.f32 %v313, %v323
  %v337 = vadd.f32 %v314, %v323
  %v338 = vadd.f32 %v315, %v323
  %v339 = vadd.f32 %v316, %v323
  %v340 = vadd.f32 %v317, %v323
  %v341 = vld [vmem:[%s2] sm:$0x1]
  %v342 = vld [vmem:[%s3] sm:$0x1]
  %v343 = vmul.f32 %v325, %v325
  %v344 = vmul.f32 %v326, %v326
  %v345 = vmul.f32 %v327, %v327
  %v346 = vmul.f32 %v328, %v328
  %v347 = vmul.f32 %v329, %v329
  %v348 = vmul.f32 %v330, %v330
  %v349 = vmul.f32 %v331, %v331
  %v350 = vmul.f32 %v332, %v332
  %v351 = vmul.f32 %v333, %v333
  %v352 = vmul.f32 %v334, %v334
  %v353 = vmul.f32 %v335, %v335
  %v354 = vmul.f32 %v336, %v336
  %v355 = vmul.f32 %v337, %v337
  %v356 = vmul.f32 %v338, %v338
  %v357 = vmul.f32 %v339, %v339
  %v358 = vmul.f32 %v340, %v340
  %v360 = vlaneseq
  %v361 = vshrl.u32 %v360, 7
  %v362 = vsub.s32 0, %v361
  %v363 = vrot.slane %v341, %v362
  %v365 = vmul.f32 %v343, %v363
  %v366 = vmul.f32 %v344, %v363
  %v367 = vmul.f32 %v345, %v363
  %v368 = vmul.f32 %v346, %v363
  %v369 = vmul.f32 %v347, %v363
  %v370 = vmul.f32 %v348, %v363
  %v371 = vmul.f32 %v349, %v363
  %v372 = vmul.f32 %v350, %v363
  %v373 = vmul.f32 %v351, %v363
  %v374 = vmul.f32 %v352, %v363
  %v375 = vmul.f32 %v353, %v363
  %v376 = vmul.f32 %v354, %v363
  %v377 = vmul.f32 %v355, %v363
  %v378 = vmul.f32 %v356, %v363
  %v379 = vmul.f32 %v357, %v363
  %v380 = vmul.f32 %v358, %v363
  %381 = vadd.xlane.f32.xlu0 %v365
  %v382 = vpop.xlane.xlu0 %381
  %383 = vadd.xlane.f32.xlu0 %v366
  %v384 = vpop.xlane.xlu0 %383
  %385 = vadd.xlane.f32.xlu0 %v367
  %v386 = vpop.xlane.xlu0 %385
  %387 = vadd.xlane.f32.xlu0 %v368
  %v388 = vpop.xlane.xlu0 %387
  %389 = vadd.xlane.f32.xlu0 %v369
  %v390 = vpop.xlane.xlu0 %389
  %391 = vadd.xlane.f32.xlu0 %v370
  %v392 = vpop.xlane.xlu0 %391
  %393 = vadd.xlane.f32.xlu0 %v371
  %v394 = vpop.xlane.xlu0 %393
  %395 = vadd.xlane.f32.xlu0 %v372
  %v396 = vpop.xlane.xlu0 %395
  %397 = vadd.xlane.f32.xlu0 %v373
  %v398 = vpop.xlane.xlu0 %397
  %399 = vadd.xlane.f32.xlu0 %v374
  %v400 = vpop.xlane.xlu0 %399
  %401 = vadd.xlane.f32.xlu0 %v375
  %v402 = vpop.xlane.xlu0 %401
  %403 = vadd.xlane.f32.xlu0 %v376
  %v404 = vpop.xlane.xlu0 %403
  %405 = vadd.xlane.f32.xlu0 %v377
  %v406 = vpop.xlane.xlu0 %405
  %407 = vadd.xlane.f32.xlu0 %v378
  %v408 = vpop.xlane.xlu0 %407
  %409 = vadd.xlane.f32.xlu0 %v379
  %v410 = vpop.xlane.xlu0 %409
  %411 = vadd.xlane.f32.xlu0 %v380
  %v412 = vpop.xlane.xlu0 %411
  %v413 = vrcp.pop 4.0
  %v414 = vmul.f32 %v382, %v413
  %v415 = vmul.f32 %v384, %v413
  %v416 = vmul.f32 %v386, %v413
  %v417 = vmul.f32 %v388, %v413
  %v418 = vmul.f32 %v390, %v413
  %v419 = vmul.f32 %v392, %v413
  %v420 = vmul.f32 %v394, %v413
  %v421 = vmul.f32 %v396, %v413
  %v422 = vmul.f32 %v398, %v413
  %v423 = vmul.f32 %v400, %v413
  %v424 = vmul.f32 %v402, %v413
  %v425 = vmul.f32 %v404, %v413
  %v426 = vmul.f32 %v406, %v413
  %v427 = vmul.f32 %v408, %v413
  %v428 = vmul.f32 %v410, %v413
  %v429 = vmul.f32 %v412, %v413
  %v430 = vadd.f32 %v414, 1e-06
  %v431 = vadd.f32 %v415, 1e-06
  %v432 = vadd.f32 %v416, 1e-06
  %v433 = vadd.f32 %v417, 1e-06
  %v434 = vadd.f32 %v418, 1e-06
  %v435 = vadd.f32 %v419, 1e-06
  %v436 = vadd.f32 %v420, 1e-06
  %v437 = vadd.f32 %v421, 1e-06
  %v438 = vadd.f32 %v422, 1e-06
  %v439 = vadd.f32 %v423, 1e-06
  %v440 = vadd.f32 %v424, 1e-06
  %v441 = vadd.f32 %v425, 1e-06
  %v442 = vadd.f32 %v426, 1e-06
  %v443 = vadd.f32 %v427, 1e-06
  %v444 = vadd.f32 %v428, 1e-06
  %v445 = vadd.f32 %v429, 1e-06
  %v446 = vrsqrt.pop %v430
  %v447 = vrsqrt.pop %v431
  %v448 = vrsqrt.pop %v432
  %v449 = vrsqrt.pop %v433
  %v450 = vrsqrt.pop %v434
  %v451 = vrsqrt.pop %v435
  %v452 = vrsqrt.pop %v436
  %v453 = vrsqrt.pop %v437
  %v454 = vrsqrt.pop %v438
  %v455 = vrsqrt.pop %v439
  %v456 = vrsqrt.pop %v440
  %v457 = vrsqrt.pop %v441
  %v458 = vrsqrt.pop %v442
  %v459 = vrsqrt.pop %v443
  %v460 = vrsqrt.pop %v444
  %v461 = vrsqrt.pop %v445
  %v463 = vlaneseq
  %v464 = vshrl.u32 %v463, 7
  %v465 = vsub.s32 0, %v464
  %v466 = vrot.slane %v342, %v465
  %v468 = vmul.f32 %v325, %v466
  %v469 = vmul.f32 %v326, %v466
  %v470 = vmul.f32 %v327, %v466
  %v471 = vmul.f32 %v328, %v466
  %v472 = vmul.f32 %v329, %v466
  %v473 = vmul.f32 %v330, %v466
  %v474 = vmul.f32 %v331, %v466
  %v475 = vmul.f32 %v332, %v466
  %v476 = vmul.f32 %v333, %v466
  %v477 = vmul.f32 %v334, %v466
  %v478 = vmul.f32 %v335, %v466
  %v479 = vmul.f32 %v336, %v466
  %v480 = vmul.f32 %v337, %v466
  %v481 = vmul.f32 %v338, %v466
  %v482 = vmul.f32 %v339, %v466
  %v483 = vmul.f32 %v340, %v466
  %484 = vadd.xlane.f32.xlu0 %v468
  %v485 = vpop.xlane.xlu0 %484
  %486 = vadd.xlane.f32.xlu0 %v469
  %v487 = vpop.xlane.xlu0 %486
  %488 = vadd.xlane.f32.xlu0 %v470
  %v489 = vpop.xlane.xlu0 %488
  %490 = vadd.xlane.f32.xlu0 %v471
  %v491 = vpop.xlane.xlu0 %490
  %492 = vadd.xlane.f32.xlu0 %v472
  %v493 = vpop.xlane.xlu0 %492
  %494 = vadd.xlane.f32.xlu0 %v473
  %v495 = vpop.xlane.xlu0 %494
  %496 = vadd.xlane.f32.xlu0 %v474
  %v497 = vpop.xlane.xlu0 %496
  %498 = vadd.xlane.f32.xlu0 %v475
  %v499 = vpop.xlane.xlu0 %498
  %500 = vadd.xlane.f32.xlu0 %v476
  %v501 = vpop.xlane.xlu0 %500
  %502 = vadd.xlane.f32.xlu0 %v477
  %v503 = vpop.xlane.xlu0 %502
  %504 = vadd.xlane.f32.xlu0 %v478
  %v505 = vpop.xlane.xlu0 %504
  %506 = vadd.xlane.f32.xlu0 %v479
  %v507 = vpop.xlane.xlu0 %506
  %508 = vadd.xlane.f32.xlu0 %v480
  %v509 = vpop.xlane.xlu0 %508
  %510 = vadd.xlane.f32.xlu0 %v481
  %v511 = vpop.xlane.xlu0 %510
  %512 = vadd.xlane.f32.xlu0 %v482
  %v513 = vpop.xlane.xlu0 %512
  %514 = vadd.xlane.f32.xlu0 %v483
  %v515 = vpop.xlane.xlu0 %514
  %v516 = vrcp.pop 8.0
  %v517 = vmul.f32 %v485, %v516
  %v518 = vmul.f32 %v487, %v516
  %v519 = vmul.f32 %v489, %v516
  %v520 = vmul.f32 %v491, %v516
  %v521 = vmul.f32 %v493, %v516
  %v522 = vmul.f32 %v495, %v516
  %v523 = vmul.f32 %v497, %v516
  %v524 = vmul.f32 %v499, %v516
  %v525 = vmul.f32 %v501, %v516
  %v526 = vmul.f32 %v503, %v516
  %v527 = vmul.f32 %v505, %v516
  %v528 = vmul.f32 %v507, %v516
  %v529 = vmul.f32 %v509, %v516
  %v530 = vmul.f32 %v511, %v516
  %v531 = vmul.f32 %v513, %v516
  %v532 = vmul.f32 %v515, %v516
  %v533 = vsub.f32 %v325, %v517
  %v534 = vsub.f32 %v326, %v518
  %v535 = vsub.f32 %v327, %v519
  %v536 = vsub.f32 %v328, %v520
  %v537 = vsub.f32 %v329, %v521
  %v538 = vsub.f32 %v330, %v522
  %v539 = vsub.f32 %v331, %v523
  %v540 = vsub.f32 %v332, %v524
  %v541 = vsub.f32 %v333, %v525
  %v542 = vsub.f32 %v334, %v526
  %v543 = vsub.f32 %v335, %v527
  %v544 = vsub.f32 %v336, %v528
  %v545 = vsub.f32 %v337, %v529
  %v546 = vsub.f32 %v338, %v530
  %v547 = vsub.f32 %v339, %v531
  %v548 = vsub.f32 %v340, %v532
  %v549 = vmul.f32 %v533, %v533
  %v550 = vmul.f32 %v534, %v534
  %v551 = vmul.f32 %v535, %v535
  %v552 = vmul.f32 %v536, %v536
  %v553 = vmul.f32 %v537, %v537
  %v554 = vmul.f32 %v538, %v538
  %v555 = vmul.f32 %v539, %v539
  %v556 = vmul.f32 %v540, %v540
  %v557 = vmul.f32 %v541, %v541
  %v558 = vmul.f32 %v542, %v542
  %v559 = vmul.f32 %v543, %v543
  %v560 = vmul.f32 %v544, %v544
  %v561 = vmul.f32 %v545, %v545
  %v562 = vmul.f32 %v546, %v546
  %v563 = vmul.f32 %v547, %v547
  %v564 = vmul.f32 %v548, %v548
  %v565 = vmul.f32 %v549, %v466
  %v566 = vmul.f32 %v550, %v466
  %v567 = vmul.f32 %v551, %v466
  %v568 = vmul.f32 %v552, %v466
  %v569 = vmul.f32 %v553, %v466
  %v570 = vmul.f32 %v554, %v466
  %v571 = vmul.f32 %v555, %v466
  %v572 = vmul.f32 %v556, %v466
  %v573 = vmul.f32 %v557, %v466
  %v574 = vmul.f32 %v558, %v466
  %v575 = vmul.f32 %v559, %v466
  %v576 = vmul.f32 %v560, %v466
  %v577 = vmul.f32 %v561, %v466
  %v578 = vmul.f32 %v562, %v466
  %v579 = vmul.f32 %v563, %v466
  %v580 = vmul.f32 %v564, %v466
  %581 = vadd.xlane.f32.xlu0 %v565
  %v582 = vpop.xlane.xlu0 %581
  %583 = vadd.xlane.f32.xlu0 %v566
  %v584 = vpop.xlane.xlu0 %583
  %585 = vadd.xlane.f32.xlu0 %v567
  %v586 = vpop.xlane.xlu0 %585
  %587 = vadd.xlane.f32.xlu0 %v568
  %v588 = vpop.xlane.xlu0 %587
  %589 = vadd.xlane.f32.xlu0 %v569
  %v590 = vpop.xlane.xlu0 %589
  %591 = vadd.xlane.f32.xlu0 %v570
  %v592 = vpop.xlane.xlu0 %591
  %593 = vadd.xlane.f32.xlu0 %v571
  %v594 = vpop.xlane.xlu0 %593
  %595 = vadd.xlane.f32.xlu0 %v572
  %v596 = vpop.xlane.xlu0 %595
  %597 = vadd.xlane.f32.xlu0 %v573
  %v598 = vpop.xlane.xlu0 %597
  %599 = vadd.xlane.f32.xlu0 %v574
  %v600 = vpop.xlane.xlu0 %599
  %601 = vadd.xlane.f32.xlu0 %v575
  %v602 = vpop.xlane.xlu0 %601
  %603 = vadd.xlane.f32.xlu0 %v576
  %v604 = vpop.xlane.xlu0 %603
  %605 = vadd.xlane.f32.xlu0 %v577
  %v606 = vpop.xlane.xlu0 %605
  %607 = vadd.xlane.f32.xlu0 %v578
  %v608 = vpop.xlane.xlu0 %607
  %609 = vadd.xlane.f32.xlu0 %v579
  %v610 = vpop.xlane.xlu0 %609
  %611 = vadd.xlane.f32.xlu0 %v580
  %v612 = vpop.xlane.xlu0 %611
  %v613 = vmul.f32 %v582, %v516
  %v614 = vmul.f32 %v584, %v516
  %v615 = vmul.f32 %v586, %v516
  %v616 = vmul.f32 %v588, %v516
  %v617 = vmul.f32 %v590, %v516
  %v618 = vmul.f32 %v592, %v516
  %v619 = vmul.f32 %v594, %v516
  %v620 = vmul.f32 %v596, %v516
  %v621 = vmul.f32 %v598, %v516
  %v622 = vmul.f32 %v600, %v516
  %v623 = vmul.f32 %v602, %v516
  %v624 = vmul.f32 %v604, %v516
  %v625 = vmul.f32 %v606, %v516
  %v626 = vmul.f32 %v608, %v516
  %v627 = vmul.f32 %v610, %v516
  %v628 = vmul.f32 %v612, %v516
  %v629 = vadd.f32 %v613, 1e-06
  %v630 = vadd.f32 %v614, 1e-06
  %v631 = vadd.f32 %v615, 1e-06
  %v632 = vadd.f32 %v616, 1e-06
  %v633 = vadd.f32 %v617, 1e-06
  %v634 = vadd.f32 %v618, 1e-06
  %v635 = vadd.f32 %v619, 1e-06
  %v636 = vadd.f32 %v620, 1e-06
  %v637 = vadd.f32 %v621, 1e-06
  %v638 = vadd.f32 %v622, 1e-06
  %v639 = vadd.f32 %v623, 1e-06
  %v640 = vadd.f32 %v624, 1e-06
  %v641 = vadd.f32 %v625, 1e-06
  %v642 = vadd.f32 %v626, 1e-06
  %v643 = vadd.f32 %v627, 1e-06
  %v644 = vadd.f32 %v628, 1e-06
  %v645 = vrsqrt.pop %v629
  %v646 = vrsqrt.pop %v630
  %v647 = vrsqrt.pop %v631
  %v648 = vrsqrt.pop %v632
  %v649 = vrsqrt.pop %v633
  %v650 = vrsqrt.pop %v634
  %v651 = vrsqrt.pop %v635
  %v652 = vrsqrt.pop %v636
  %v653 = vrsqrt.pop %v637
  %v654 = vrsqrt.pop %v638
  %v655 = vrsqrt.pop %v639
  %v656 = vrsqrt.pop %v640
  %v657 = vrsqrt.pop %v641
  %v658 = vrsqrt.pop %v642
  %v659 = vrsqrt.pop %v643
  %v660 = vrsqrt.pop %v644
  %v661 = vmul.f32 %v363, %v325
  %v662 = vmul.f32 %v363, %v326
  %v663 = vmul.f32 %v363, %v327
  %v664 = vmul.f32 %v363, %v328
  %v665 = vmul.f32 %v363, %v329
  %v666 = vmul.f32 %v363, %v330
  %v667 = vmul.f32 %v363, %v331
  %v668 = vmul.f32 %v363, %v332
  %v669 = vmul.f32 %v363, %v333
  %v670 = vmul.f32 %v363, %v334
  %v671 = vmul.f32 %v363, %v335
  %v672 = vmul.f32 %v363, %v336
  %v673 = vmul.f32 %v363, %v337
  %v674 = vmul.f32 %v363, %v338
  %v675 = vmul.f32 %v363, %v339
  %v676 = vmul.f32 %v363, %v340
  %v677 = vmul.f32 %v661, %v446
  %v678 = vmul.f32 %v662, %v447
  %v679 = vmul.f32 %v663, %v448
  %v680 = vmul.f32 %v664, %v449
  %v681 = vmul.f32 %v665, %v450
  %v682 = vmul.f32 %v666, %v451
  %v683 = vmul.f32 %v667, %v452
  %v684 = vmul.f32 %v668, %v453
  %v685 = vmul.f32 %v669, %v454
  %v686 = vmul.f32 %v670, %v455
  %v687 = vmul.f32 %v671, %v456
  %v688 = vmul.f32 %v672, %v457
  %v689 = vmul.f32 %v673, %v458
  %v690 = vmul.f32 %v674, %v459
  %v691 = vmul.f32 %v675, %v460
  %v692 = vmul.f32 %v676, %v461
  %v693 = vmul.f32 %v466, %v533
  %v694 = vmul.f32 %v466, %v534
  %v695 = vmul.f32 %v466, %v535
  %v696 = vmul.f32 %v466, %v536
  %v697 = vmul.f32 %v466, %v537
  %v698 = vmul.f32 %v466, %v538
  %v699 = vmul.f32 %v466, %v539
  %v700 = vmul.f32 %v466, %v540
  %v701 = vmul.f32 %v466, %v541
  %v702 = vmul.f32 %v466, %v542
  %v703 = vmul.f32 %v466, %v543
  %v704 = vmul.f32 %v466, %v544
  %v705 = vmul.f32 %v466, %v545
  %v706 = vmul.f32 %v466, %v546
  %v707 = vmul.f32 %v466, %v547
  %v708 = vmul.f32 %v466, %v548
  %v709 = vmul.f32 %v693, %v645
  %v710 = vmul.f32 %v694, %v646
  %v711 = vmul.f32 %v695, %v647
  %v712 = vmul.f32 %v696, %v648
  %v713 = vmul.f32 %v697, %v649
  %v714 = vmul.f32 %v698, %v650
  %v715 = vmul.f32 %v699, %v651
  %v716 = vmul.f32 %v700, %v652
  %v717 = vmul.f32 %v701, %v653
  %v718 = vmul.f32 %v702, %v654
  %v719 = vmul.f32 %v703, %v655
  %v720 = vmul.f32 %v704, %v656
  %v721 = vmul.f32 %v705, %v657
  %v722 = vmul.f32 %v706, %v658
  %v723 = vmul.f32 %v707, %v659
  %v724 = vmul.f32 %v708, %v660
  %v725 = vadd.f32 %v677, %v709
  %v726 = vadd.f32 %v678, %v710
  %v727 = vadd.f32 %v679, %v711
  %v728 = vadd.f32 %v680, %v712
  %v729 = vadd.f32 %v681, %v713
  %v730 = vadd.f32 %v682, %v714
  %v731 = vadd.f32 %v683, %v715
  %v732 = vadd.f32 %v684, %v716
  %v733 = vadd.f32 %v685, %v717
  %v734 = vadd.f32 %v686, %v718
  %v735 = vadd.f32 %v687, %v719
  %v736 = vadd.f32 %v688, %v720
  %v737 = vadd.f32 %v689, %v721
  %v738 = vadd.f32 %v690, %v722
  %v739 = vadd.f32 %v691, %v723
  %v740 = vadd.f32 %v692, %v724
  %v741 = vpack.c.bf16 %v726, %v725
  %v742 = vpack.c.bf16 %v728, %v727
  %v743 = vpack.c.bf16 %v730, %v729
  %v744 = vpack.c.bf16 %v732, %v731
  %v745 = vpack.c.bf16 %v734, %v733
  %v746 = vpack.c.bf16 %v736, %v735
  %v747 = vpack.c.bf16 %v738, %v737
  %v748 = vpack.c.bf16 %v740, %v739
  %v749 = vld [vmem:[%s7] sm:$0xff]
  %v750 = vld [vmem:[%s7 + $0x8] sm:$0xff]
  %v751 = vld [vmem:[%s7 + $0x10] sm:$0xff]
  %v752 = vld [vmem:[%s7 + $0x18] sm:$0xff]
  %v753 = vld [vmem:[%s7 + $0x20] sm:$0xff]
  %v754 = vld [vmem:[%s7 + $0x28] sm:$0xff]
  %v755 = vld [vmem:[%s7 + $0x30] sm:$0xff]
  %v756 = vld [vmem:[%s7 + $0x38] sm:$0xff]
  %v757 = vld [vmem:[%s7 + $0x40] sm:$0xff]
  %v758 = vld [vmem:[%s7 + $0x48] sm:$0xff]
  %v759 = vld [vmem:[%s7 + $0x50] sm:$0xff]
  %v760 = vld [vmem:[%s7 + $0x58] sm:$0xff]
  %v761 = vld [vmem:[%s7 + $0x60] sm:$0xff]
  %v762 = vld [vmem:[%s7 + $0x68] sm:$0xff]
  %v763 = vld [vmem:[%s7 + $0x70] sm:$0xff]
  %v764 = vld [vmem:[%s7 + $0x78] sm:$0xff]
  %v765 = vld [vmem:[%s8] sm:$0x3]
  %v767 = vlaneseq
  %v768 = vshrl.u32 %v767, 7
  %v769 = vsub.s32 0, %v768
  %v770 = vrot.slane %v765, %v769
  %v771 = vlaneseq
  %v772 = vshrl.u32 %v771, 7
  %v773 = vsub.s32 1, %v772
  %v774 = vrot.slane %v765, %v773
  %v793 = vunpack.c.l.b16 %v749
  %v794 = vunpack.c.h.b16 %v749
  %v795 = vunpack.c.l.b16 %v750
  %v796 = vunpack.c.h.b16 %v750
  %v797 = vunpack.c.l.b16 %v751
  %v798 = vunpack.c.h.b16 %v751
  %v799 = vunpack.c.l.b16 %v752
  %v800 = vunpack.c.h.b16 %v752
  %v801 = vunpack.c.l.b16 %v753
  %v802 = vunpack.c.h.b16 %v753
  %v803 = vunpack.c.l.b16 %v754
  %v804 = vunpack.c.h.b16 %v754
  %v805 = vunpack.c.l.b16 %v755
  %v806 = vunpack.c.h.b16 %v755
  %v807 = vunpack.c.l.b16 %v756
  %v808 = vunpack.c.h.b16 %v756
  %v809 = vunpack.c.l.b16 %v757
  %v810 = vunpack.c.h.b16 %v757
  %v811 = vunpack.c.l.b16 %v758
  %v812 = vunpack.c.h.b16 %v758
  %v813 = vunpack.c.l.b16 %v759
  %v814 = vunpack.c.h.b16 %v759
  %v815 = vunpack.c.l.b16 %v760
  %v816 = vunpack.c.h.b16 %v760
  %v817 = vunpack.c.l.b16 %v761
  %v818 = vunpack.c.h.b16 %v761
  %v819 = vunpack.c.l.b16 %v762
  %v820 = vunpack.c.h.b16 %v762
  %v821 = vunpack.c.l.b16 %v763
  %v822 = vunpack.c.h.b16 %v763
  %v823 = vunpack.c.l.b16 %v764
  %v824 = vunpack.c.h.b16 %v764
  %v825 = vpack.c.b16 %v795, %v793
  %v826 = vpack.c.b16 %v796, %v794
  %v827 = vpack.c.b16 %v799, %v797
  %v828 = vpack.c.b16 %v800, %v798
  %v829 = vpack.c.b16 %v803, %v801
  %v830 = vpack.c.b16 %v804, %v802
  %v831 = vpack.c.b16 %v807, %v805
  %v832 = vpack.c.b16 %v808, %v806
  %v833 = vpack.c.b16 %v811, %v809
  %v834 = vpack.c.b16 %v812, %v810
  %v835 = vpack.c.b16 %v815, %v813
  %v836 = vpack.c.b16 %v816, %v814
  %v837 = vpack.c.b16 %v819, %v817
  %v838 = vpack.c.b16 %v820, %v818
  %v839 = vpack.c.b16 %v823, %v821
  %v840 = vpack.c.b16 %v824, %v822
  %857 = vmatprep.subr.bf16.mxu0 %v826
  %858 = vmatpush1.bf16.msra.mxu0 %v825
  %859 = vmatprep.subr.bf16.mxu0 %v828
  %860 = vmatpush1.bf16.msra.mxu0 %v827
  %861 = vmatprep.subr.bf16.mxu0 %v830
  %862 = vmatpush1.bf16.msra.mxu0 %v829
  %863 = vmatprep.subr.bf16.mxu0 %v832
  %864 = vmatpush1.bf16.msra.mxu0 %v831
  %865 = vmatprep.subr.bf16.mxu0 %v834
  %866 = vmatpush1.bf16.msra.mxu0 %v833
  %867 = vmatprep.subr.bf16.mxu0 %v836
  %868 = vmatpush1.bf16.msra.mxu0 %v835
  %869 = vmatprep.subr.bf16.mxu0 %v838
  %870 = vmatpush1.bf16.msra.mxu0 %v837
  %871 = vmatprep.subr.bf16.mxu0 %v840
  %872 = vmatpush1.bf16.msra.mxu0 %v839
  %873 = vmatprep.subr.bf16.mxu0 0
  %874 = vmatpush1.bf16.msra.mxu0 0
  %875 = vmatprep.subr.bf16.mxu0 0
  %876 = vmatpush1.bf16.msra.mxu0 0
  %877 = vmatprep.subr.bf16.mxu0 0
  %878 = vmatpush1.bf16.msra.mxu0 0
  %879 = vmatprep.subr.bf16.mxu0 0
  %880 = vmatpush1.bf16.msra.mxu0 0
  %881 = vmatprep.subr.bf16.mxu0 0
  %882 = vmatpush1.bf16.msra.mxu0 0
  %883 = vmatprep.subr.bf16.mxu0 0
  %884 = vmatpush1.bf16.msra.mxu0 0
  %885 = vmatprep.subr.bf16.mxu0 0
  %886 = vmatpush1.bf16.msra.mxu0 0
  %887 = vmatprep.subr.bf16.mxu0 0
  %888 = vmatpush1.bf16.msra.mxu0 0
  %889 = vmatprep.mubr.bf16.mxu0 0
  %890 = vmatmul.mubr.bf16.gmra.mrb[0].mxu0 %v741
  %v891 = vpop.f32.mrb[0].mxu0
  %v892 = vadd.f32 %v770, %v891
  %v893 = vpop.f32.mrb[0].mxu0
  %v894 = vadd.f32 %v774, %v893
  %v895 = vpop.f32.mrb[0].mxu0
  %v896 = vadd.f32 %v770, %v895
  %v897 = vpop.f32.mrb[0].mxu0
  %v898 = vadd.f32 %v774, %v897
  %899 = vmatprep.mubr.bf16.mxu0 0
  %900 = vmatmul.mubr.bf16.gmra.mrb[0].mxu0 %v742
  %v901 = vpop.f32.mrb[0].mxu0
  %v902 = vadd.f32 %v770, %v901
  %v903 = vpop.f32.mrb[0].mxu0
  %v904 = vadd.f32 %v774, %v903
  %v905 = vpop.f32.mrb[0].mxu0
  %v906 = vadd.f32 %v770, %v905
  %v907 = vpop.f32.mrb[0].mxu0
  %v908 = vadd.f32 %v774, %v907
  %909 = vmatprep.mubr.bf16.mxu0 0
  %910 = vmatmul.mubr.bf16.gmra.mrb[0].mxu0 %v743
  %v911 = vpop.f32.mrb[0].mxu0
  %v912 = vadd.f32 %v770, %v911
  %v913 = vpop.f32.mrb[0].mxu0
  %v914 = vadd.f32 %v774, %v913
  %v915 = vpop.f32.mrb[0].mxu0
  %v916 = vadd.f32 %v770, %v915
  %v917 = vpop.f32.mrb[0].mxu0
  %v918 = vadd.f32 %v774, %v917
  %919 = vmatprep.mubr.bf16.mxu0 0
  %920 = vmatmul.mubr.bf16.gmra.mrb[0].mxu0 %v744
  %v921 = vpop.f32.mrb[0].mxu0
  %v922 = vadd.f32 %v770, %v921
  %v923 = vpop.f32.mrb[0].mxu0
  %v924 = vadd.f32 %v774, %v923
  %v925 = vpop.f32.mrb[0].mxu0
  %v926 = vadd.f32 %v770, %v925
  %v927 = vpop.f32.mrb[0].mxu0
  %v928 = vadd.f32 %v774, %v927
  %929 = vmatprep.mubr.bf16.mxu0 0
  %930 = vmatmul.mubr.bf16.gmra.mrb[0].mxu0 %v745
  %v931 = vpop.f32.mrb[0].mxu0
  %v932 = vadd.f32 %v770, %v931
  %v933 = vpop.f32.mrb[0].mxu0
  %v934 = vadd.f32 %v774, %v933
  %v935 = vpop.f32.mrb[0].mxu0
  %v936 = vadd.f32 %v770, %v935
  %v937 = vpop.f32.mrb[0].mxu0
  %v938 = vadd.f32 %v774, %v937
  %939 = vmatprep.mubr.bf16.mxu0 0
  %940 = vmatmul.mubr.bf16.gmra.mrb[0].mxu0 %v746
  %v941 = vpop.f32.mrb[0].mxu0
  %v942 = vadd.f32 %v770, %v941
  %v943 = vpop.f32.mrb[0].mxu0
  %v944 = vadd.f32 %v774, %v943
  %v945 = vpop.f32.mrb[0].mxu0
  %v946 = vadd.f32 %v770, %v945
  %v947 = vpop.f32.mrb[0].mxu0
  %v948 = vadd.f32 %v774, %v947
  %949 = vmatprep.mubr.bf16.mxu0 0
  %950 = vmatmul.mubr.bf16.gmra.mrb[0].mxu0 %v747
  %v951 = vpop.f32.mrb[0].mxu0
  %v952 = vadd.f32 %v770, %v951
  %v953 = vpop.f32.mrb[0].mxu0
  %v954 = vadd.f32 %v774, %v953
  %v955 = vpop.f32.mrb[0].mxu0
  %v956 = vadd.f32 %v770, %v955
  %v957 = vpop.f32.mrb[0].mxu0
  %v958 = vadd.f32 %v774, %v957
  %959 = vmatprep.mubr.bf16.mxu0 0
  %960 = vmatmul.mubr.bf16.gmra.mrb[0].mxu0 %v748
  %v961 = vpop.f32.mrb[0].mxu0
  %v962 = vadd.f32 %v770, %v961
  %v963 = vpop.f32.mrb[0].mxu0
  %v964 = vadd.f32 %v774, %v963
  %v965 = vpop.f32.mrb[0].mxu0
  %v966 = vadd.f32 %v770, %v965
  %v967 = vpop.f32.mrb[0].mxu0
  %v968 = vadd.f32 %v774, %v967
  %969 = vdwg.mxu0
  %v970 = vld [vmem:[%s9] sm:$0xff]
  %v971 = vld [vmem:[%s9 + $0x8] sm:$0xff]
  %v972 = vld [vmem:[%s9 + $0x10] sm:$0xff]
  %v973 = vld [vmem:[%s9 + $0x18] sm:$0xff]
  %v974 = vld [vmem:[%s9 + $0x20] sm:$0xff]
  %v975 = vld [vmem:[%s9 + $0x28] sm:$0xff]
  %v976 = vld [vmem:[%s9 + $0x30] sm:$0xff]
  %v977 = vld [vmem:[%s9 + $0x38] sm:$0xff]
  %v978 = vld [vmem:[%s9 + $0x40] sm:$0xff]
  %v979 = vld [vmem:[%s9 + $0x48] sm:$0xff]
  %v980 = vld [vmem:[%s9 + $0x50] sm:$0xff]
  %v981 = vld [vmem:[%s9 + $0x58] sm:$0xff]
  %v982 = vld [vmem:[%s9 + $0x60] sm:$0xff]
  %v983 = vld [vmem:[%s9 + $0x68] sm:$0xff]
  %v984 = vld [vmem:[%s9 + $0x70] sm:$0xff]
  %v985 = vld [vmem:[%s9 + $0x78] sm:$0xff]
  %v986 = vld [vmem:[%s10] sm:$0x3]
  %v988 = vlaneseq
  %v989 = vshrl.u32 %v988, 7
  %v990 = vsub.s32 0, %v989
  %v991 = vrot.slane %v986, %v990
  %v992 = vlaneseq
  %v993 = vshrl.u32 %v992, 7
  %v994 = vsub.s32 1, %v993
  %v995 = vrot.slane %v986, %v994
  %v1014 = vunpack.c.l.b16 %v970
  %v1015 = vunpack.c.h.b16 %v970
  %v1016 = vunpack.c.l.b16 %v971
  %v1017 = vunpack.c.h.b16 %v971
  %v1018 = vunpack.c.l.b16 %v972
  %v1019 = vunpack.c.h.b16 %v972
  %v1020 = vunpack.c.l.b16 %v973
  %v1021 = vunpack.c.h.b16 %v973
  %v1022 = vunpack.c.l.b16 %v974
  %v1023 = vunpack.c.h.b16 %v974
  %v1024 = vunpack.c.l.b16 %v975
  %v1025 = vunpack.c.h.b16 %v975
  %v1026 = vunpack.c.l.b16 %v976
  %v1027 = vunpack.c.h.b16 %v976
  %v1028 = vunpack.c.l.b16 %v977
  %v1029 = vunpack.c.h.b16 %v977
  %v1030 = vunpack.c.l.b16 %v978
  %v1031 = vunpack.c.h.b16 %v978
  %v1032 = vunpack.c.l.b16 %v979
  %v1033 = vunpack.c.h.b16 %v979
  %v1034 = vunpack.c.l.b16 %v980
  %v1035 = vunpack.c.h.b16 %v980
  %v1036 = vunpack.c.l.b16 %v981
  %v1037 = vunpack.c.h.b16 %v981
  %v1038 = vunpack.c.l.b16 %v982
  %v1039 = vunpack.c.h.b16 %v982
  %v1040 = vunpack.c.l.b16 %v983
  %v1041 = vunpack.c.h.b16 %v983
  %v1042 = vunpack.c.l.b16 %v984
  %v1043 = vunpack.c.h.b16 %v984
  %v1044 = vunpack.c.l.b16 %v985
  %v1045 = vunpack.c.h.b16 %v985
  %v1046 = vpack.c.b16 %v1016, %v1014
  %v1047 = vpack.c.b16 %v1017, %v1015
  %v1048 = vpack.c.b16 %v1020, %v1018
  %v1049 = vpack.c.b16 %v1021, %v1019
  %v1050 = vpack.c.b16 %v1024, %v1022
  %v1051 = vpack.c.b16 %v1025, %v1023
  %v1052 = vpack.c.b16 %v1028, %v1026
  %v1053 = vpack.c.b16 %v1029, %v1027
  %v1054 = vpack.c.b16 %v1032, %v1030
  %v1055 = vpack.c.b16 %v1033, %v1031
  %v1056 = vpack.c.b16 %v1036, %v1034
  %v1057 = vpack.c.b16 %v1037, %v1035
  %v1058 = vpack.c.b16 %v1040, %v1038
  %v1059 = vpack.c.b16 %v1041, %v1039
  %v1060 = vpack.c.b16 %v1044, %v1042
  %v1061 = vpack.c.b16 %v1045, %v1043
  %1078 = vmatprep.subr.bf16.mxu0 %v1047
  %1079 = vmatpush1.bf16.msra.mxu0 %v1046
  %1080 = vmatprep.subr.bf16.mxu0 %v1049
  %1081 = vmatpush1.bf16.msra.mxu0 %v1048
  %1082 = vmatprep.subr.bf16.mxu0 %v1051
  %1083 = vmatpush1.bf16.msra.mxu0 %v1050
  %1084 = vmatprep.subr.bf16.mxu0 %v1053
  %1085 = vmatpush1.bf16.msra.mxu0 %v1052
  %1086 = vmatprep.subr.bf16.mxu0 %v1055
  %1087 = vmatpush1.bf16.msra.mxu0 %v1054
  %1088 = vmatprep.subr.bf16.mxu0 %v1057
  %1089 = vmatpush1.bf16.msra.mxu0 %v1056
  %1090 = vmatprep.subr.bf16.mxu0 %v1059
  %1091 = vmatpush1.bf16.msra.mxu0 %v1058
  %1092 = vmatprep.subr.bf16.mxu0 %v1061
  %1093 = vmatpush1.bf16.msra.mxu0 %v1060
  %1094 = vmatprep.subr.bf16.mxu0 0
  %1095 = vmatpush1.bf16.msra.mxu0 0
  %1096 = vmatprep.subr.bf16.mxu0 0
  %1097 = vmatpush1.bf16.msra.mxu0 0
  %1098 = vmatprep.subr.bf16.mxu0 0
  %1099 = vmatpush1.bf16.msra.mxu0 0
  %1100 = vmatprep.subr.bf16.mxu0 0
  %1101 = vmatpush1.bf16.msra.mxu0 0
  %1102 = vmatprep.subr.bf16.mxu0 0
  %1103 = vmatpush1.bf16.msra.mxu0 0
  %1104 = vmatprep.subr.bf16.mxu0 0
  %1105 = vmatpush1.bf16.msra.mxu0 0
  %1106 = vmatprep.subr.bf16.mxu0 0
  %1107 = vmatpush1.bf16.msra.mxu0 0
  %1108 = vmatprep.subr.bf16.mxu0 0
  %1109 = vmatpush1.bf16.msra.mxu0 0
  %1110 = vmatprep.mubr.bf16.mxu0 0
  %1111 = vmatmul.mubr.bf16.gmra.mrb[0].mxu0 %v741
  %v1112 = vpop.f32.mrb[0].mxu0
  %v1113 = vadd.f32 %v991, %v1112
  %v1114 = vpop.f32.mrb[0].mxu0
  %v1115 = vadd.f32 %v995, %v1114
  %v1116 = vpop.f32.mrb[0].mxu0
  %v1117 = vadd.f32 %v991, %v1116
  %v1118 = vpop.f32.mrb[0].mxu0
  %v1119 = vadd.f32 %v995, %v1118
  %1120 = vmatprep.mubr.bf16.mxu0 0
  %1121 = vmatmul.mubr.bf16.gmra.mrb[0].mxu0 %v742
  %v1122 = vpop.f32.mrb[0].mxu0
  %v1123 = vadd.f32 %v991, %v1122
  %v1124 = vpop.f32.mrb[0].mxu0
  %v1125 = vadd.f32 %v995, %v1124
  %v1126 = vpop.f32.mrb[0].mxu0
  %v1127 = vadd.f32 %v991, %v1126
  %v1128 = vpop.f32.mrb[0].mxu0
  %v1129 = vadd.f32 %v995, %v1128
  %1130 = vmatprep.mubr.bf16.mxu0 0
  %1131 = vmatmul.mubr.bf16.gmra.mrb[0].mxu0 %v743
  %v1132 = vpop.f32.mrb[0].mxu0
  %v1133 = vadd.f32 %v991, %v1132
  %v1134 = vpop.f32.mrb[0].mxu0
  %v1135 = vadd.f32 %v995, %v1134
  %v1136 = vpop.f32.mrb[0].mxu0
  %v1137 = vadd.f32 %v991, %v1136
  %v1138 = vpop.f32.mrb[0].mxu0
  %v1139 = vadd.f32 %v995, %v1138
  %1140 = vmatprep.mubr.bf16.mxu0 0
  %1141 = vmatmul.mubr.bf16.gmra.mrb[0].mxu0 %v744
  %v1142 = vpop.f32.mrb[0].mxu0
  %v1143 = vadd.f32 %v991, %v1142
  %v1144 = vpop.f32.mrb[0].mxu0
  %v1145 = vadd.f32 %v995, %v1144
  %v1146 = vpop.f32.mrb[0].mxu0
  %v1147 = vadd.f32 %v991, %v1146
  %v1148 = vpop.f32.mrb[0].mxu0
  %v1149 = vadd.f32 %v995, %v1148
  %1150 = vmatprep.mubr.bf16.mxu0 0
  %1151 = vmatmul.mubr.bf16.gmra.mrb[0].mxu0 %v745
  %v1152 = vpop.f32.mrb[0].mxu0
  %v1153 = vadd.f32 %v991, %v1152
  %v1154 = vpop.f32.mrb[0].mxu0
  %v1155 = vadd.f32 %v995, %v1154
  %v1156 = vpop.f32.mrb[0].mxu0
  %v1157 = vadd.f32 %v991, %v1156
  %v1158 = vpop.f32.mrb[0].mxu0
  %v1159 = vadd.f32 %v995, %v1158
  %1160 = vmatprep.mubr.bf16.mxu0 0
  %1161 = vmatmul.mubr.bf16.gmra.mrb[0].mxu0 %v746
  %v1162 = vpop.f32.mrb[0].mxu0
  %v1163 = vadd.f32 %v991, %v1162
  %v1164 = vpop.f32.mrb[0].mxu0
  %v1165 = vadd.f32 %v995, %v1164
  %v1166 = vpop.f32.mrb[0].mxu0
  %v1167 = vadd.f32 %v991, %v1166
  %v1168 = vpop.f32.mrb[0].mxu0
  %v1169 = vadd.f32 %v995, %v1168
  %1170 = vmatprep.mubr.bf16.mxu0 0
  %1171 = vmatmul.mubr.bf16.gmra.mrb[0].mxu0 %v747
  %v1172 = vpop.f32.mrb[0].mxu0
  %v1173 = vadd.f32 %v991, %v1172
  %v1174 = vpop.f32.mrb[0].mxu0
  %v1175 = vadd.f32 %v995, %v1174
  %v1176 = vpop.f32.mrb[0].mxu0
  %v1177 = vadd.f32 %v991, %v1176
  %v1178 = vpop.f32.mrb[0].mxu0
  %v1179 = vadd.f32 %v995, %v1178
  %1180 = vmatprep.mubr.bf16.mxu0 0
  %1181 = vmatmul.mubr.bf16.gmra.mrb[0].mxu0 %v748
  %v1182 = vpop.f32.mrb[0].mxu0
  %v1183 = vadd.f32 %v991, %v1182
  %v1184 = vpop.f32.mrb[0].mxu0
  %v1185 = vadd.f32 %v995, %v1184
  %v1186 = vpop.f32.mrb[0].mxu0
  %v1187 = vadd.f32 %v991, %v1186
  %v1188 = vpop.f32.mrb[0].mxu0
  %v1189 = vadd.f32 %v995, %v1188
  %1190 = vdwg.mxu0
  %v1191 = vmul.f32 %v1113, %v1113
  %v1192 = vmul.f32 %v1115, %v1115
  %v1193 = vmul.f32 %v1117, %v1117
  %v1194 = vmul.f32 %v1119, %v1119
  %v1195 = vmul.f32 %v1123, %v1123
  %v1196 = vmul.f32 %v1125, %v1125
  %v1197 = vmul.f32 %v1127, %v1127
  %v1198 = vmul.f32 %v1129, %v1129
  %v1199 = vmul.f32 %v1133, %v1133
  %v1200 = vmul.f32 %v1135, %v1135
  %v1201 = vmul.f32 %v1137, %v1137
  %v1202 = vmul.f32 %v1139, %v1139
  %v1203 = vmul.f32 %v1143, %v1143
  %v1204 = vmul.f32 %v1145, %v1145
  %v1205 = vmul.f32 %v1147, %v1147
  %v1206 = vmul.f32 %v1149, %v1149
  %v1207 = vmul.f32 %v1153, %v1153
  %v1208 = vmul.f32 %v1155, %v1155
  %v1209 = vmul.f32 %v1157, %v1157
  %v1210 = vmul.f32 %v1159, %v1159
  %v1211 = vmul.f32 %v1163, %v1163
  %v1212 = vmul.f32 %v1165, %v1165
  %v1213 = vmul.f32 %v1167, %v1167
  %v1214 = vmul.f32 %v1169, %v1169
  %v1215 = vmul.f32 %v1173, %v1173
  %v1216 = vmul.f32 %v1175, %v1175
  %v1217 = vmul.f32 %v1177, %v1177
  %v1218 = vmul.f32 %v1179, %v1179
  %v1219 = vmul.f32 %v1183, %v1183
  %v1220 = vmul.f32 %v1185, %v1185
  %v1221 = vmul.f32 %v1187, %v1187
  %v1222 = vmul.f32 %v1189, %v1189
  %v1223 = vmul.f32 %v1113, %v1191
  %v1224 = vmul.f32 %v1115, %v1192
  %v1225 = vmul.f32 %v1117, %v1193
  %v1226 = vmul.f32 %v1119, %v1194
  %v1227 = vmul.f32 %v1123, %v1195
  %v1228 = vmul.f32 %v1125, %v1196
  %v1229 = vmul.f32 %v1127, %v1197
  %v1230 = vmul.f32 %v1129, %v1198
  %v1231 = vmul.f32 %v1133, %v1199
  %v1232 = vmul.f32 %v1135, %v1200
  %v1233 = vmul.f32 %v1137, %v1201
  %v1234 = vmul.f32 %v1139, %v1202
  %v1235 = vmul.f32 %v1143, %v1203
  %v1236 = vmul.f32 %v1145, %v1204
  %v1237 = vmul.f32 %v1147, %v1205
  %v1238 = vmul.f32 %v1149, %v1206
  %v1239 = vmul.f32 %v1153, %v1207
  %v1240 = vmul.f32 %v1155, %v1208
  %v1241 = vmul.f32 %v1157, %v1209
  %v1242 = vmul.f32 %v1159, %v1210
  %v1243 = vmul.f32 %v1163, %v1211
  %v1244 = vmul.f32 %v1165, %v1212
  %v1245 = vmul.f32 %v1167, %v1213
  %v1246 = vmul.f32 %v1169, %v1214
  %v1247 = vmul.f32 %v1173, %v1215
  %v1248 = vmul.f32 %v1175, %v1216
  %v1249 = vmul.f32 %v1177, %v1217
  %v1250 = vmul.f32 %v1179, %v1218
  %v1251 = vmul.f32 %v1183, %v1219
  %v1252 = vmul.f32 %v1185, %v1220
  %v1253 = vmul.f32 %v1187, %v1221
  %v1254 = vmul.f32 %v1189, %v1222
  %v1255 = vmul.f32 %v1223, 0.044715
  %v1256 = vmul.f32 %v1224, 0.044715
  %v1257 = vmul.f32 %v1225, 0.044715
  %v1258 = vmul.f32 %v1226, 0.044715
  %v1259 = vmul.f32 %v1227, 0.044715
  %v1260 = vmul.f32 %v1228, 0.044715
  %v1261 = vmul.f32 %v1229, 0.044715
  %v1262 = vmul.f32 %v1230, 0.044715
  %v1263 = vmul.f32 %v1231, 0.044715
  %v1264 = vmul.f32 %v1232, 0.044715
  %v1265 = vmul.f32 %v1233, 0.044715
  %v1266 = vmul.f32 %v1234, 0.044715
  %v1267 = vmul.f32 %v1235, 0.044715
  %v1268 = vmul.f32 %v1236, 0.044715
  %v1269 = vmul.f32 %v1237, 0.044715
  %v1270 = vmul.f32 %v1238, 0.044715
  %v1271 = vmul.f32 %v1239, 0.044715
  %v1272 = vmul.f32 %v1240, 0.044715
  %v1273 = vmul.f32 %v1241, 0.044715
  %v1274 = vmul.f32 %v1242, 0.044715
  %v1275 = vmul.f32 %v1243, 0.044715
  %v1276 = vmul.f32 %v1244, 0.044715
  %v1277 = vmul.f32 %v1245, 0.044715
  %v1278 = vmul.f32 %v1246, 0.044715
  %v1279 = vmul.f32 %v1247, 0.044715
  %v1280 = vmul.f32 %v1248, 0.044715
  %v1281 = vmul.f32 %v1249, 0.044715
  %v1282 = vmul.f32 %v1250, 0.044715
  %v1283 = vmul.f32 %v1251, 0.044715
  %v1284 = vmul.f32 %v1252, 0.044715
  %v1285 = vmul.f32 %v1253, 0.044715
  %v1286 = vmul.f32 %v1254, 0.044715
  %v1287 = vadd.f32 %v1113, %v1255
  %v1288 = vadd.f32 %v1115, %v1256
  %v1289 = vadd.f32 %v1117, %v1257
  %v1290 = vadd.f32 %v1119, %v1258
  %v1291 = vadd.f32 %v1123, %v1259
  %v1292 = vadd.f32 %v1125, %v1260
  %v1293 = vadd.f32 %v1127, %v1261
  %v1294 = vadd.f32 %v1129, %v1262
  %v1295 = vadd.f32 %v1133, %v1263
  %v1296 = vadd.f32 %v1135, %v1264
  %v1297 = vadd.f32 %v1137, %v1265
  %v1298 = vadd.f32 %v1139, %v1266
  %v1299 = vadd.f32 %v1143, %v1267
  %v1300 = vadd.f32 %v1145, %v1268
  %v1301 = vadd.f32 %v1147, %v1269
  %v1302 = vadd.f32 %v1149, %v1270
  %v1303 = vadd.f32 %v1153, %v1271
  %v1304 = vadd.f32 %v1155, %v1272
  %v1305 = vadd.f32 %v1157, %v1273
  %v1306 = vadd.f32 %v1159, %v1274
  %v1307 = vadd.f32 %v1163, %v1275
  %v1308 = vadd.f32 %v1165, %v1276
  %v1309 = vadd.f32 %v1167, %v1277
  %v1310 = vadd.f32 %v1169, %v1278
  %v1311 = vadd.f32 %v1173, %v1279
  %v1312 = vadd.f32 %v1175, %v1280
  %v1313 = vadd.f32 %v1177, %v1281
  %v1314 = vadd.f32 %v1179, %v1282
  %v1315 = vadd.f32 %v1183, %v1283
  %v1316 = vadd.f32 %v1185, %v1284
  %v1317 = vadd.f32 %v1187, %v1285
  %v1318 = vadd.f32 %v1189, %v1286
  %v1319 = vmul.f32 %v1287, 0.7978846
  %v1320 = vmul.f32 %v1288, 0.7978846
  %v1321 = vmul.f32 %v1289, 0.7978846
  %v1322 = vmul.f32 %v1290, 0.7978846
  %v1323 = vmul.f32 %v1291, 0.7978846
  %v1324 = vmul.f32 %v1292, 0.7978846
  %v1325 = vmul.f32 %v1293, 0.7978846
  %v1326 = vmul.f32 %v1294, 0.7978846
  %v1327 = vmul.f32 %v1295, 0.7978846
  %v1328 = vmul.f32 %v1296, 0.7978846
  %v1329 = vmul.f32 %v1297, 0.7978846
  %v1330 = vmul.f32 %v1298, 0.7978846
  %v1331 = vmul.f32 %v1299, 0.7978846
  %v1332 = vmul.f32 %v1300, 0.7978846
  %v1333 = vmul.f32 %v1301, 0.7978846
  %v1334 = vmul.f32 %v1302, 0.7978846
  %v1335 = vmul.f32 %v1303, 0.7978846
  %v1336 = vmul.f32 %v1304, 0.7978846
  %v1337 = vmul.f32 %v1305, 0.7978846
  %v1338 = vmul.f32 %v1306, 0.7978846
  %v1339 = vmul.f32 %v1307, 0.7978846
  %v1340 = vmul.f32 %v1308, 0.7978846
  %v1341 = vmul.f32 %v1309, 0.7978846
  %v1342 = vmul.f32 %v1310, 0.7978846
  %v1343 = vmul.f32 %v1311, 0.7978846
  %v1344 = vmul.f32 %v1312, 0.7978846
  %v1345 = vmul.f32 %v1313, 0.7978846
  %v1346 = vmul.f32 %v1314, 0.7978846
  %v1347 = vmul.f32 %v1315, 0.7978846
  %v1348 = vmul.f32 %v1316, 0.7978846
  %v1349 = vmul.f32 %v1317, 0.7978846
  %v1350 = vmul.f32 %v1318, 0.7978846
  %v1351 = vtanh.pop %v1319
  %v1352 = vtanh.pop %v1320
  %v1353 = vtanh.pop %v1321
  %v1354 = vtanh.pop %v1322
  %v1355 = vtanh.pop %v1323
  %v1356 = vtanh.pop %v1324
  %v1357 = vtanh.pop %v1325
  %v1358 = vtanh.pop %v1326
  %v1359 = vtanh.pop %v1327
  %v1360 = vtanh.pop %v1328
  %v1361 = vtanh.pop %v1329
  %v1362 = vtanh.pop %v1330
  %v1363 = vtanh.pop %v1331
  %v1364 = vtanh.pop %v1332
  %v1365 = vtanh.pop %v1333
  %v1366 = vtanh.pop %v1334
  %v1367 = vtanh.pop %v1335
  %v1368 = vtanh.pop %v1336
  %v1369 = vtanh.pop %v1337
  %v1370 = vtanh.pop %v1338
  %v1371 = vtanh.pop %v1339
  %v1372 = vtanh.pop %v1340
  %v1373 = vtanh.pop %v1341
  %v1374 = vtanh.pop %v1342
  %v1375 = vtanh.pop %v1343
  %v1376 = vtanh.pop %v1344
  %v1377 = vtanh.pop %v1345
  %v1378 = vtanh.pop %v1346
  %v1379 = vtanh.pop %v1347
  %v1380 = vtanh.pop %v1348
  %v1381 = vtanh.pop %v1349
  %v1382 = vtanh.pop %v1350
  %v1383 = vadd.f32 %v1351, 1.0
  %v1384 = vadd.f32 %v1352, 1.0
  %v1385 = vadd.f32 %v1353, 1.0
  %v1386 = vadd.f32 %v1354, 1.0
  %v1387 = vadd.f32 %v1355, 1.0
  %v1388 = vadd.f32 %v1356, 1.0
  %v1389 = vadd.f32 %v1357, 1.0
  %v1390 = vadd.f32 %v1358, 1.0
  %v1391 = vadd.f32 %v1359, 1.0
  %v1392 = vadd.f32 %v1360, 1.0
  %v1393 = vadd.f32 %v1361, 1.0
  %v1394 = vadd.f32 %v1362, 1.0
  %v1395 = vadd.f32 %v1363, 1.0
  %v1396 = vadd.f32 %v1364, 1.0
  %v1397 = vadd.f32 %v1365, 1.0
  %v1398 = vadd.f32 %v1366, 1.0
  %v1399 = vadd.f32 %v1367, 1.0
  %v1400 = vadd.f32 %v1368, 1.0
  %v1401 = vadd.f32 %v1369, 1.0
  %v1402 = vadd.f32 %v1370, 1.0
  %v1403 = vadd.f32 %v1371, 1.0
  %v1404 = vadd.f32 %v1372, 1.0
  %v1405 = vadd.f32 %v1373, 1.0
  %v1406 = vadd.f32 %v1374, 1.0
  %v1407 = vadd.f32 %v1375, 1.0
  %v1408 = vadd.f32 %v1376, 1.0
  %v1409 = vadd.f32 %v1377, 1.0
  %v1410 = vadd.f32 %v1378, 1.0
  %v1411 = vadd.f32 %v1379, 1.0
  %v1412 = vadd.f32 %v1380, 1.0
  %v1413 = vadd.f32 %v1381, 1.0
  %v1414 = vadd.f32 %v1382, 1.0
  %v1415 = vmul.f32 %v1383, 0.5
  %v1416 = vmul.f32 %v1384, 0.5
  %v1417 = vmul.f32 %v1385, 0.5
  %v1418 = vmul.f32 %v1386, 0.5
  %v1419 = vmul.f32 %v1387, 0.5
  %v1420 = vmul.f32 %v1388, 0.5
  %v1421 = vmul.f32 %v1389, 0.5
  %v1422 = vmul.f32 %v1390, 0.5
  %v1423 = vmul.f32 %v1391, 0.5
  %v1424 = vmul.f32 %v1392, 0.5
  %v1425 = vmul.f32 %v1393, 0.5
  %v1426 = vmul.f32 %v1394, 0.5
  %v1427 = vmul.f32 %v1395, 0.5
  %v1428 = vmul.f32 %v1396, 0.5
  %v1429 = vmul.f32 %v1397, 0.5
  %v1430 = vmul.f32 %v1398, 0.5
  %v1431 = vmul.f32 %v1399, 0.5
  %v1432 = vmul.f32 %v1400, 0.5
  %v1433 = vmul.f32 %v1401, 0.5
  %v1434 = vmul.f32 %v1402, 0.5
  %v1435 = vmul.f32 %v1403, 0.5
  %v1436 = vmul.f32 %v1404, 0.5
  %v1437 = vmul.f32 %v1405, 0.5
  %v1438 = vmul.f32 %v1406, 0.5
  %v1439 = vmul.f32 %v1407, 0.5
  %v1440 = vmul.f32 %v1408, 0.5
  %v1441 = vmul.f32 %v1409, 0.5
  %v1442 = vmul.f32 %v1410, 0.5
  %v1443 = vmul.f32 %v1411, 0.5
  %v1444 = vmul.f32 %v1412, 0.5
  %v1445 = vmul.f32 %v1413, 0.5
  %v1446 = vmul.f32 %v1414, 0.5
  %v1447 = vmul.f32 %v1113, %v1415
  %v1448 = vmul.f32 %v1115, %v1416
  %v1449 = vmul.f32 %v1117, %v1417
  %v1450 = vmul.f32 %v1119, %v1418
  %v1451 = vmul.f32 %v1123, %v1419
  %v1452 = vmul.f32 %v1125, %v1420
  %v1453 = vmul.f32 %v1127, %v1421
  %v1454 = vmul.f32 %v1129, %v1422
  %v1455 = vmul.f32 %v1133, %v1423
  %v1456 = vmul.f32 %v1135, %v1424
  %v1457 = vmul.f32 %v1137, %v1425
  %v1458 = vmul.f32 %v1139, %v1426
  %v1459 = vmul.f32 %v1143, %v1427
  %v1460 = vmul.f32 %v1145, %v1428
  %v1461 = vmul.f32 %v1147, %v1429
  %v1462 = vmul.f32 %v1149, %v1430
  %v1463 = vmul.f32 %v1153, %v1431
  %v1464 = vmul.f32 %v1155, %v1432
  %v1465 = vmul.f32 %v1157, %v1433
  %v1466 = vmul.f32 %v1159, %v1434
  %v1467 = vmul.f32 %v1163, %v1435
  %v1468 = vmul.f32 %v1165, %v1436
  %v1469 = vmul.f32 %v1167, %v1437
  %v1470 = vmul.f32 %v1169, %v1438
  %v1471 = vmul.f32 %v1173, %v1439
  %v1472 = vmul.f32 %v1175, %v1440
  %v1473 = vmul.f32 %v1177, %v1441
  %v1474 = vmul.f32 %v1179, %v1442
  %v1475 = vmul.f32 %v1183, %v1443
  %v1476 = vmul.f32 %v1185, %v1444
  %v1477 = vmul.f32 %v1187, %v1445
  %v1478 = vmul.f32 %v1189, %v1446
  %v1479 = vld [vmem:[%s4] sm:$0x3]
  %v1481 = vlaneseq
  %v1482 = vshrl.u32 %v1481, 7
  %v1483 = vsub.s32 0, %v1482
  %v1484 = vrot.slane %v1479, %v1483
  %v1485 = vlaneseq
  %v1486 = vshrl.u32 %v1485, 7
  %v1487 = vsub.s32 1, %v1486
  %v1488 = vrot.slane %v1479, %v1487
  %v1491 = vmul.f32 %v1484, %v892
  %v1492 = vmul.f32 %v1488, %v894
  %v1493 = vmul.f32 %v1484, %v896
  %v1494 = vmul.f32 %v1488, %v898
  %v1495 = vmul.f32 %v1484, %v902
  %v1496 = vmul.f32 %v1488, %v904
  %v1497 = vmul.f32 %v1484, %v906
  %v1498 = vmul.f32 %v1488, %v908
  %v1499 = vmul.f32 %v1484, %v912
  %v1500 = vmul.f32 %v1488, %v914
  %v1501 = vmul.f32 %v1484, %v916
  %v1502 = vmul.f32 %v1488, %v918
  %v1503 = vmul.f32 %v1484, %v922
  %v1504 = vmul.f32 %v1488, %v924
  %v1505 = vmul.f32 %v1484, %v926
  %v1506 = vmul.f32 %v1488, %v928
  %v1507 = vmul.f32 %v1484, %v932
  %v1508 = vmul.f32 %v1488, %v934
  %v1509 = vmul.f32 %v1484, %v936
  %v1510 = vmul.f32 %v1488, %v938
  %v1511 = vmul.f32 %v1484, %v942
  %v1512 = vmul.f32 %v1488, %v944
  %v1513 = vmul.f32 %v1484, %v946
  %v1514 = vmul.f32 %v1488, %v948
  %v1515 = vmul.f32 %v1484, %v952
  %v1516 = vmul.f32 %v1488, %v954
  %v1517 = vmul.f32 %v1484, %v956
  %v1518 = vmul.f32 %v1488, %v958
  %v1519 = vmul.f32 %v1484, %v962
  %v1520 = vmul.f32 %v1488, %v964
  %v1521 = vmul.f32 %v1484, %v966
  %v1522 = vmul.f32 %v1488, %v968
  %v1523 = vsub.f32 1.0, %v1479
  %v1525 = vlaneseq
  %v1526 = vshrl.u32 %v1525, 7
  %v1527 = vsub.s32 0, %v1526
  %v1528 = vrot.slane %v1523, %v1527
  %v1529 = vlaneseq
  %v1530 = vshrl.u32 %v1529, 7
  %v1531 = vsub.s32 1, %v1530
  %v1532 = vrot.slane %v1523, %v1531
  %v1535 = vadd.f32 %v1491, %v1528
  %v1536 = vadd.f32 %v1492, %v1532
  %v1537 = vadd.f32 %v1493, %v1528
  %v1538 = vadd.f32 %v1494, %v1532
  %v1539 = vadd.f32 %v1495, %v1528
  %v1540 = vadd.f32 %v1496, %v1532
  %v1541 = vadd.f32 %v1497, %v1528
  %v1542 = vadd.f32 %v1498, %v1532
  %v1543 = vadd.f32 %v1499, %v1528
  %v1544 = vadd.f32 %v1500, %v1532
  %v1545 = vadd.f32 %v1501, %v1528
  %v1546 = vadd.f32 %v1502, %v1532
  %v1547 = vadd.f32 %v1503, %v1528
  %v1548 = vadd.f32 %v1504, %v1532
  %v1549 = vadd.f32 %v1505, %v1528
  %v1550 = vadd.f32 %v1506, %v1532
  %v1551 = vadd.f32 %v1507, %v1528
  %v1552 = vadd.f32 %v1508, %v1532
  %v1553 = vadd.f32 %v1509, %v1528
  %v1554 = vadd.f32 %v1510, %v1532
  %v1555 = vadd.f32 %v1511, %v1528
  %v1556 = vadd.f32 %v1512, %v1532
  %v1557 = vadd.f32 %v1513, %v1528
  %v1558 = vadd.f32 %v1514, %v1532
  %v1559 = vadd.f32 %v1515, %v1528
  %v1560 = vadd.f32 %v1516, %v1532
  %v1561 = vadd.f32 %v1517, %v1528
  %v1562 = vadd.f32 %v1518, %v1532
  %v1563 = vadd.f32 %v1519, %v1528
  %v1564 = vadd.f32 %v1520, %v1532
  %v1565 = vadd.f32 %v1521, %v1528
  %v1566 = vadd.f32 %v1522, %v1532
  %v1567 = vmul.f32 %v1447, %v1535
  %v1568 = vmul.f32 %v1448, %v1536
  %v1569 = vmul.f32 %v1449, %v1537
  %v1570 = vmul.f32 %v1450, %v1538
  %v1571 = vmul.f32 %v1451, %v1539
  %v1572 = vmul.f32 %v1452, %v1540
  %v1573 = vmul.f32 %v1453, %v1541
  %v1574 = vmul.f32 %v1454, %v1542
  %v1575 = vmul.f32 %v1455, %v1543
  %v1576 = vmul.f32 %v1456, %v1544
  %v1577 = vmul.f32 %v1457, %v1545
  %v1578 = vmul.f32 %v1458, %v1546
  %v1579 = vmul.f32 %v1459, %v1547
  %v1580 = vmul.f32 %v1460, %v1548
  %v1581 = vmul.f32 %v1461, %v1549
  %v1582 = vmul.f32 %v1462, %v1550
  %v1583 = vmul.f32 %v1463, %v1551
  %v1584 = vmul.f32 %v1464, %v1552
  %v1585 = vmul.f32 %v1465, %v1553
  %v1586 = vmul.f32 %v1466, %v1554
  %v1587 = vmul.f32 %v1467, %v1555
  %v1588 = vmul.f32 %v1468, %v1556
  %v1589 = vmul.f32 %v1469, %v1557
  %v1590 = vmul.f32 %v1470, %v1558
  %v1591 = vmul.f32 %v1471, %v1559
  %v1592 = vmul.f32 %v1472, %v1560
  %v1593 = vmul.f32 %v1473, %v1561
  %v1594 = vmul.f32 %v1474, %v1562
  %v1595 = vmul.f32 %v1475, %v1563
  %v1596 = vmul.f32 %v1476, %v1564
  %v1597 = vmul.f32 %v1477, %v1565
  %v1598 = vmul.f32 %v1478, %v1566
  %v1599 = vpack.c.bf16 %v1569, %v1567
  %v1600 = vpack.c.bf16 %v1570, %v1568
  %v1601 = vpack.c.bf16 %v1573, %v1571
  %v1602 = vpack.c.bf16 %v1574, %v1572
  %v1603 = vpack.c.bf16 %v1577, %v1575
  %v1604 = vpack.c.bf16 %v1578, %v1576
  %v1605 = vpack.c.bf16 %v1581, %v1579
  %v1606 = vpack.c.bf16 %v1582, %v1580
  %v1607 = vpack.c.bf16 %v1585, %v1583
  %v1608 = vpack.c.bf16 %v1586, %v1584
  %v1609 = vpack.c.bf16 %v1589, %v1587
  %v1610 = vpack.c.bf16 %v1590, %v1588
  %v1611 = vpack.c.bf16 %v1593, %v1591
  %v1612 = vpack.c.bf16 %v1594, %v1592
  %v1613 = vpack.c.bf16 %v1597, %v1595
  %v1614 = vpack.c.bf16 %v1598, %v1596
  %v1615 = vld [vmem:[%s11] sm:$0xf]
  %v1616 = vld [vmem:[%s11 + $0x4] sm:$0xf]
  %v1617 = vld [vmem:[%s11 + $0x8] sm:$0xf]
  %v1618 = vld [vmem:[%s11 + $0xc] sm:$0xf]
  %v1619 = vld [vmem:[%s11 + $0x10] sm:$0xf]
  %v1620 = vld [vmem:[%s11 + $0x14] sm:$0xf]
  %v1621 = vld [vmem:[%s11 + $0x18] sm:$0xf]
  %v1622 = vld [vmem:[%s11 + $0x1c] sm:$0xf]
  %v1623 = vld [vmem:[%s11 + $0x20] sm:$0xf]
  %v1624 = vld [vmem:[%s11 + $0x24] sm:$0xf]
  %v1625 = vld [vmem:[%s11 + $0x28] sm:$0xf]
  %v1626 = vld [vmem:[%s11 + $0x2c] sm:$0xf]
  %v1627 = vld [vmem:[%s11 + $0x30] sm:$0xf]
  %v1628 = vld [vmem:[%s11 + $0x34] sm:$0xf]
  %v1629 = vld [vmem:[%s11 + $0x38] sm:$0xf]
  %v1630 = vld [vmem:[%s11 + $0x3c] sm:$0xf]
  %v1631 = vld [vmem:[%s11 + $0x40] sm:$0xf]
  %v1632 = vld [vmem:[%s11 + $0x44] sm:$0xf]
  %v1633 = vld [vmem:[%s11 + $0x48] sm:$0xf]
  %v1634 = vld [vmem:[%s11 + $0x4c] sm:$0xf]
  %v1635 = vld [vmem:[%s11 + $0x50] sm:$0xf]
  %v1636 = vld [vmem:[%s11 + $0x54] sm:$0xf]
  %v1637 = vld [vmem:[%s11 + $0x58] sm:$0xf]
  %v1638 = vld [vmem:[%s11 + $0x5c] sm:$0xf]
  %v1639 = vld [vmem:[%s11 + $0x60] sm:$0xf]
  %v1640 = vld [vmem:[%s11 + $0x64] sm:$0xf]
  %v1641 = vld [vmem:[%s11 + $0x68] sm:$0xf]
  %v1642 = vld [vmem:[%s11 + $0x6c] sm:$0xf]
  %v1643 = vld [vmem:[%s11 + $0x70] sm:$0xf]
  %v1644 = vld [vmem:[%s11 + $0x74] sm:$0xf]
  %v1645 = vld [vmem:[%s11 + $0x78] sm:$0xf]
  %v1646 = vld [vmem:[%s11 + $0x7c] sm:$0xf]
  %v1647 = vld [vmem:[%s12] sm:$0x1]
  %v1649 = vlaneseq
  %v1650 = vshrl.u32 %v1649, 7
  %v1651 = vsub.s32 0, %v1650
  %v1652 = vrot.slane %v1647, %v1651
  %v1686 = vunpack.c.l.b16 %v1615
  %v1687 = vunpack.c.l.b16 %v1616
  %v1688 = vunpack.c.l.b16 %v1617
  %v1689 = vunpack.c.l.b16 %v1618
  %v1690 = vunpack.c.l.b16 %v1619
  %v1691 = vunpack.c.l.b16 %v1620
  %v1692 = vunpack.c.l.b16 %v1621
  %v1693 = vunpack.c.l.b16 %v1622
  %v1694 = vunpack.c.l.b16 %v1623
  %v1695 = vunpack.c.l.b16 %v1624
  %v1696 = vunpack.c.l.b16 %v1625
  %v1697 = vunpack.c.l.b16 %v1626
  %v1698 = vunpack.c.l.b16 %v1627
  %v1699 = vunpack.c.l.b16 %v1628
  %v1700 = vunpack.c.l.b16 %v1629
  %v1701 = vunpack.c.l.b16 %v1630
  %v1702 = vunpack.c.l.b16 %v1631
  %v1703 = vunpack.c.l.b16 %v1632
  %v1704 = vunpack.c.l.b16 %v1633
  %v1705 = vunpack.c.l.b16 %v1634
  %v1706 = vunpack.c.l.b16 %v1635
  %v1707 = vunpack.c.l.b16 %v1636
  %v1708 = vunpack.c.l.b16 %v1637
  %v1709 = vunpack.c.l.b16 %v1638
  %v1710 = vunpack.c.l.b16 %v1639
  %v1711 = vunpack.c.l.b16 %v1640
  %v1712 = vunpack.c.l.b16 %v1641
  %v1713 = vunpack.c.l.b16 %v1642
  %v1714 = vunpack.c.l.b16 %v1643
  %v1715 = vunpack.c.l.b16 %v1644
  %v1716 = vunpack.c.l.b16 %v1645
  %v1717 = vunpack.c.l.b16 %v1646
  %v1718 = vpack.c.b16 %v1687, %v1686
  %v1719 = vpack.c.b16 %v1689, %v1688
  %v1720 = vpack.c.b16 %v1691, %v1690
  %v1721 = vpack.c.b16 %v1693, %v1692
  %v1722 = vpack.c.b16 %v1695, %v1694
  %v1723 = vpack.c.b16 %v1697, %v1696
  %v1724 = vpack.c.b16 %v1699, %v1698
  %v1725 = vpack.c.b16 %v1701, %v1700
  %v1726 = vpack.c.b16 %v1703, %v1702
  %v1727 = vpack.c.b16 %v1705, %v1704
  %v1728 = vpack.c.b16 %v1707, %v1706
  %v1729 = vpack.c.b16 %v1709, %v1708
  %v1730 = vpack.c.b16 %v1711, %v1710
  %v1731 = vpack.c.b16 %v1713, %v1712
  %v1732 = vpack.c.b16 %v1715, %v1714
  %v1733 = vpack.c.b16 %v1717, %v1716
  %1750 = vmatprep.subr.bf16.mxu0 0
  %1751 = vmatpush1.bf16.msra.mxu0 %v1718
  %1752 = vmatprep.subr.bf16.mxu0 0
  %1753 = vmatpush1.bf16.msra.mxu0 %v1719
  %1754 = vmatprep.subr.bf16.mxu0 0
  %1755 = vmatpush1.bf16.msra.mxu0 %v1720
  %1756 = vmatprep.subr.bf16.mxu0 0
  %1757 = vmatpush1.bf16.msra.mxu0 %v1721
  %1758 = vmatprep.subr.bf16.mxu0 0
  %1759 = vmatpush1.bf16.msra.mxu0 %v1722
  %1760 = vmatprep.subr.bf16.mxu0 0
  %1761 = vmatpush1.bf16.msra.mxu0 %v1723
  %1762 = vmatprep.subr.bf16.mxu0 0
  %1763 = vmatpush1.bf16.msra.mxu0 %v1724
  %1764 = vmatprep.subr.bf16.mxu0 0
  %1765 = vmatpush1.bf16.msra.mxu0 %v1725
  %1766 = vmatprep.subr.bf16.mxu0 0
  %1767 = vmatpush1.bf16.msra.mxu0 %v1726
  %1768 = vmatprep.subr.bf16.mxu0 0
  %1769 = vmatpush1.bf16.msra.mxu0 %v1727
  %1770 = vmatprep.subr.bf16.mxu0 0
  %1771 = vmatpush1.bf16.msra.mxu0 %v1728
  %1772 = vmatprep.subr.bf16.mxu0 0
  %1773 = vmatpush1.bf16.msra.mxu0 %v1729
  %1774 = vmatprep.subr.bf16.mxu0 0
  %1775 = vmatpush1.bf16.msra.mxu0 %v1730
  %1776 = vmatprep.subr.bf16.mxu0 0
  %1777 = vmatpush1.bf16.msra.mxu0 %v1731
  %1778 = vmatprep.subr.bf16.mxu0 0
  %1779 = vmatpush1.bf16.msra.mxu0 %v1732
  %1780 = vmatprep.subr.bf16.mxu0 0
  %1781 = vmatpush1.bf16.msra.mxu0 %v1733
  %1782 = vmatprep.mubr.bf16.mxu0 %v1600
  %1783 = vmatmul.mubr.bf16.gmra.mrb[0].mxu0 %v1599
  %v1784 = vpop.f32.mrb[0].mxu0
  %v1785 = vadd.f32 %v1652, %v1784
  %v1786 = vpop.f32.mrb[0].mxu0
  %v1787 = vpop.f32.mrb[0].mxu0
  %v1788 = vadd.f32 %v1652, %v1787
  %v1789 = vpop.f32.mrb[0].mxu0
  %1790 = vmatprep.mubr.bf16.mxu0 %v1602
  %1791 = vmatmul.mubr.bf16.gmra.mrb[0].mxu0 %v1601
  %v1792 = vpop.f32.mrb[0].mxu0
  %v1793 = vadd.f32 %v1652, %v1792
  %v1794 = vpop.f32.mrb[0].mxu0
  %v1795 = vpop.f32.mrb[0].mxu0
  %v1796 = vadd.f32 %v1652, %v1795
  %v1797 = vpop.f32.mrb[0].mxu0
  %1798 = vmatprep.mubr.bf16.mxu0 %v1604
  %1799 = vmatmul.mubr.bf16.gmra.mrb[0].mxu0 %v1603
  %v1800 = vpop.f32.mrb[0].mxu0
  %v1801 = vadd.f32 %v1652, %v1800
  %v1802 = vpop.f32.mrb[0].mxu0
  %v1803 = vpop.f32.mrb[0].mxu0
  %v1804 = vadd.f32 %v1652, %v1803
  %v1805 = vpop.f32.mrb[0].mxu0
  %1806 = vmatprep.mubr.bf16.mxu0 %v1606
  %1807 = vmatmul.mubr.bf16.gmra.mrb[0].mxu0 %v1605
  %v1808 = vpop.f32.mrb[0].mxu0
  %v1809 = vadd.f32 %v1652, %v1808
  %v1810 = vpop.f32.mrb[0].mxu0
  %v1811 = vpop.f32.mrb[0].mxu0
  %v1812 = vadd.f32 %v1652, %v1811
  %v1813 = vpop.f32.mrb[0].mxu0
  %1814 = vmatprep.mubr.bf16.mxu0 %v1608
  %1815 = vmatmul.mubr.bf16.gmra.mrb[0].mxu0 %v1607
  %v1816 = vpop.f32.mrb[0].mxu0
  %v1817 = vadd.f32 %v1652, %v1816
  %v1818 = vpop.f32.mrb[0].mxu0
  %v1819 = vpop.f32.mrb[0].mxu0
  %v1820 = vadd.f32 %v1652, %v1819
  %v1821 = vpop.f32.mrb[0].mxu0
  %1822 = vmatprep.mubr.bf16.mxu0 %v1610
  %1823 = vmatmul.mubr.bf16.gmra.mrb[0].mxu0 %v1609
  %v1824 = vpop.f32.mrb[0].mxu0
  %v1825 = vadd.f32 %v1652, %v1824
  %v1826 = vpop.f32.mrb[0].mxu0
  %v1827 = vpop.f32.mrb[0].mxu0
  %v1828 = vadd.f32 %v1652, %v1827
  %v1829 = vpop.f32.mrb[0].mxu0
  %1830 = vmatprep.mubr.bf16.mxu0 %v1612
  %1831 = vmatmul.mubr.bf16.gmra.mrb[0].mxu0 %v1611
  %v1832 = vpop.f32.mrb[0].mxu0
  %v1833 = vadd.f32 %v1652, %v1832
  %v1834 = vpop.f32.mrb[0].mxu0
  %v1835 = vpop.f32.mrb[0].mxu0
  %v1836 = vadd.f32 %v1652, %v1835
  %v1837 = vpop.f32.mrb[0].mxu0
  %1838 = vmatprep.mubr.bf16.mxu0 %v1614
  %1839 = vmatmul.mubr.bf16.gmra.mrb[0].mxu0 %v1613
  %v1840 = vpop.f32.mrb[0].mxu0
  %v1841 = vadd.f32 %v1652, %v1840
  %v1842 = vpop.f32.mrb[0].mxu0
  %v1843 = vpop.f32.mrb[0].mxu0
  %v1844 = vadd.f32 %v1652, %v1843
  %v1845 = vpop.f32.mrb[0].mxu0
  %1846 = vdwg.mxu0
  %v1847 = vadd.f32 %v325, %v1785
  %v1848 = vadd.f32 %v326, %v1788
  %v1849 = vadd.f32 %v327, %v1793
  %v1850 = vadd.f32 %v328, %v1796
  %v1851 = vadd.f32 %v329, %v1801
  %v1852 = vadd.f32 %v330, %v1804
  %v1853 = vadd.f32 %v331, %v1809
  %v1854 = vadd.f32 %v332, %v1812
  %v1855 = vadd.f32 %v333, %v1817
  %v1856 = vadd.f32 %v334, %v1820
  %v1857 = vadd.f32 %v335, %v1825
  %v1858 = vadd.f32 %v336, %v1828
  %v1859 = vadd.f32 %v337, %v1833
  %v1860 = vadd.f32 %v338, %v1836
  %v1861 = vadd.f32 %v339, %v1841
  %v1862 = vadd.f32 %v340, %v1844
  %v1863 = vpack.c.bf16 %v1848, %v1847
  %v1864 = vpack.c.bf16 %v1850, %v1849
  %v1865 = vpack.c.bf16 %v1852, %v1851
  %v1866 = vpack.c.bf16 %v1854, %v1853
  %v1867 = vpack.c.bf16 %v1856, %v1855
  %v1868 = vpack.c.bf16 %v1858, %v1857
  %v1869 = vpack.c.bf16 %v1860, %v1859
  %v1870 = vpack.c.bf16 %v1862, %v1861
  %v1879 = vunpack.c.l.b16 %v1863
  %v1880 = vunpack.c.h.b16 %v1863
  %v1881 = vunpack.c.l.b16 %v1864
  %v1882 = vunpack.c.h.b16 %v1864
  %v1883 = vunpack.c.l.b16 %v1865
  %v1884 = vunpack.c.h.b16 %v1865
  %v1885 = vunpack.c.l.b16 %v1866
  %v1886 = vunpack.c.h.b16 %v1866
  %v1887 = vunpack.c.l.b16 %v1867
  %v1888 = vunpack.c.h.b16 %v1867
  %v1889 = vunpack.c.l.b16 %v1868
  %v1890 = vunpack.c.h.b16 %v1868
  %v1891 = vunpack.c.l.b16 %v1869
  %v1892 = vunpack.c.h.b16 %v1869
  %v1893 = vunpack.c.l.b16 %v1870
  %v1894 = vunpack.c.h.b16 %v1870
  %v1895 = vpack.c.b16 %v1879, %v1879
  %v1896 = vpack.c.b16 %v1880, %v1880
  %v1897 = vpack.c.b16 %v1881, %v1881
  %v1898 = vpack.c.b16 %v1882, %v1882
  %v1899 = vpack.c.b16 %v1883, %v1883
  %v1900 = vpack.c.b16 %v1884, %v1884
  %v1901 = vpack.c.b16 %v1885, %v1885
  %v1902 = vpack.c.b16 %v1886, %v1886
  %v1903 = vpack.c.b16 %v1887, %v1887
  %v1904 = vpack.c.b16 %v1888, %v1888
  %v1905 = vpack.c.b16 %v1889, %v1889
  %v1906 = vpack.c.b16 %v1890, %v1890
  %v1907 = vpack.c.b16 %v1891, %v1891
  %v1908 = vpack.c.b16 %v1892, %v1892
  %v1909 = vpack.c.b16 %v1893, %v1893
  %v1910 = vpack.c.b16 %v1894, %v1894
  %1927 = vst [vmem:[%s13] sm:$0xf] %v1895
  %1928 = vst [vmem:[%s13 + $0x4] sm:$0xf] %v1896
  %1929 = vst [vmem:[%s13 + $0x8] sm:$0xf] %v1897
  %1930 = vst [vmem:[%s13 + $0xc] sm:$0xf] %v1898
  %1931 = vst [vmem:[%s13 + $0x10] sm:$0xf] %v1899
  %1932 = vst [vmem:[%s13 + $0x14] sm:$0xf] %v1900
  %1933 = vst [vmem:[%s13 + $0x18] sm:$0xf] %v1901
  %1934 = vst [vmem:[%s13 + $0x1c] sm:$0xf] %v1902
  %1935 = vst [vmem:[%s13 + $0x20] sm:$0xf] %v1903
  %1936 = vst [vmem:[%s13 + $0x24] sm:$0xf] %v1904
  %1937 = vst [vmem:[%s13 + $0x28] sm:$0xf] %v1905
  %1938 = vst [vmem:[%s13 + $0x2c] sm:$0xf] %v1906
  %1939 = vst [vmem:[%s13 + $0x30] sm:$0xf] %v1907
  %1940 = vst [vmem:[%s13 + $0x34] sm:$0xf] %v1908
  %1941 = vst [vmem:[%s13 + $0x38] sm:$0xf] %v1909
  %1942 = vst [vmem:[%s13 + $0x3c] sm:$0xf] %v1910
  // Predicated region
  $region54: #{lgatr_forward.10} parent=0 // pred_check
    _
  $region55: #{lgatr_forward.10} parent=0 // pred_check_branch
    %1944 = sbr.rel (0) target = $region57
  $region56: #{lgatr_forward.10} parent=0 // pred_region
    _
  $region57: #{lgatr_forward.10} parent=0 // pred_fallthru
    _
  // Predicated region
  $region58: #{lgatr_forward.10} parent=0 // pred_check
    _
  $region59: #{lgatr_forward.10} parent=0 // pred_check_branch
    %1946 = sbr.rel (0) target = $region61
  $region60: #{lgatr_forward.10} parent=0 // pred_region
    _
  $region61: #{lgatr_forward.10} parent=0 // pred_fallthru
    _

// kernel: lgatr_forward.8
$region0: #{lgatr_forward.8}
  #allocation0 [shape = 'u32[]', space=smem, size = 0x4, offset = 0x4, fixed_abs, tag = 'smem constant byte address 0x4 - core index']
  #allocation1 [shape = 'u32[144,128]{1,0:T(1,128)}', space=vmem, size = 0x12000, scoped, tag = 'internal scratch']
  %s0 = inlined_call_operand.vmem [shape: bf16[128,128], index: 0, kind: input, shape index: {}]
  %s1 = inlined_call_operand.vmem [shape: bf16[128,128], index: 1, kind: input, shape index: {}]
  %s2 = inlined_call_operand.vmem [shape: f32[1,128], index: 2, kind: input, shape index: {}]
  %s3 = inlined_call_operand.vmem [shape: f32[1,128], index: 3, kind: input, shape index: {}]
  %s4 = inlined_call_operand.vmem [shape: f32[1,256], index: 4, kind: input, shape index: {}]
  %s5 = inlined_call_operand.vmem [shape: bf16[128,128], index: 5, kind: input, shape index: {}]
  %s6 = inlined_call_operand.vmem [shape: f32[1,128], index: 6, kind: input, shape index: {}]
  %s7 = inlined_call_operand.vmem [shape: bf16[128,256], index: 7, kind: input, shape index: {}]
  %s8 = inlined_call_operand.vmem [shape: f32[1,256], index: 8, kind: input, shape index: {}]
  %s9 = inlined_call_operand.vmem [shape: bf16[128,256], index: 9, kind: input, shape index: {}]
  %s10 = inlined_call_operand.vmem [shape: f32[1,256], index: 10, kind: input, shape index: {}]
  %s11 = inlined_call_operand.vmem [shape: bf16[256,128], index: 11, kind: input, shape index: {}]
  %s12 = inlined_call_operand.vmem [shape: f32[1,128], index: 12, kind: input, shape index: {}]
  %s13 = inlined_call_operand.vmem [shape: bf16[128,384], index: 13, kind: input, shape index: {}]
  %s14 = inlined_call_operand.vmem [shape: f32[1,384], index: 14, kind: input, shape index: {}]
  %s15 = inlined_call_operand.vmem [shape: bf16[128,128], index: 15, kind: output, shape index: {0}]
  %s16 = inlined_call_operand.vmem [shape: bf16[128,384], index: 16, kind: output, shape index: {1}]
  %17 = xla_tuple %s15, %s16
  %s18 = sld [smem:[#allocation0]]
  $region78: #{lgatr_forward.8} parent=0
    _
  %s20 = ssub.s32 1, %s18
  %s21 = scalar_select 0, %s20, %s18
  // Predicated region
  $region2: #{lgatr_forward.8} parent=0 // pred_check
    _
  $region3: #{lgatr_forward.8} parent=0 // pred_check_branch
    %23 = sbr.rel (0) target = $region5
  $region4: #{lgatr_forward.8} parent=0 // pred_region
    _
  $region5: #{lgatr_forward.8} parent=0 // pred_fallthru
    _
  // Predicated region
  $region6: #{lgatr_forward.8} parent=0 // pred_check
    _
  $region7: #{lgatr_forward.8} parent=0 // pred_check_branch
    %25 = sbr.rel (0) target = $region9
  $region8: #{lgatr_forward.8} parent=0 // pred_region
    _
  $region9: #{lgatr_forward.8} parent=0 // pred_fallthru
    _
  // Predicated region
  $region10: #{lgatr_forward.8} parent=0 // pred_check
    _
  $region11: #{lgatr_forward.8} parent=0 // pred_check_branch
    %27 = sbr.rel (0) target = $region13
  $region12: #{lgatr_forward.8} parent=0 // pred_region
    _
  $region13: #{lgatr_forward.8} parent=0 // pred_fallthru
    _
  // Predicated region
  $region14: #{lgatr_forward.8} parent=0 // pred_check
    _
  $region15: #{lgatr_forward.8} parent=0 // pred_check_branch
    %29 = sbr.rel (0) target = $region17
  $region16: #{lgatr_forward.8} parent=0 // pred_region
    _
  $region17: #{lgatr_forward.8} parent=0 // pred_fallthru
    _
  // Predicated region
  $region18: #{lgatr_forward.8} parent=0 // pred_check
    _
  $region19: #{lgatr_forward.8} parent=0 // pred_check_branch
    %31 = sbr.rel (0) target = $region21
  $region20: #{lgatr_forward.8} parent=0 // pred_region
    _
  $region21: #{lgatr_forward.8} parent=0 // pred_fallthru
    _
  // Predicated region
  $region22: #{lgatr_forward.8} parent=0 // pred_check
    _
  $region23: #{lgatr_forward.8} parent=0 // pred_check_branch
    %33 = sbr.rel (0) target = $region25
  $region24: #{lgatr_forward.8} parent=0 // pred_region
    _
  $region25: #{lgatr_forward.8} parent=0 // pred_fallthru
    _
  // Predicated region
  $region26: #{lgatr_forward.8} parent=0 // pred_check
    _
  $region27: #{lgatr_forward.8} parent=0 // pred_check_branch
    %35 = sbr.rel (0) target = $region29
  $region28: #{lgatr_forward.8} parent=0 // pred_region
    _
  $region29: #{lgatr_forward.8} parent=0 // pred_fallthru
    _
  // Predicated region
  $region30: #{lgatr_forward.8} parent=0 // pred_check
    _
  $region31: #{lgatr_forward.8} parent=0 // pred_check_branch
    %37 = sbr.rel (0) target = $region33
  $region32: #{lgatr_forward.8} parent=0 // pred_region
    _
  $region33: #{lgatr_forward.8} parent=0 // pred_fallthru
    _
  // Predicated region
  $region34: #{lgatr_forward.8} parent=0 // pred_check
    _
  $region35: #{lgatr_forward.8} parent=0 // pred_check_branch
    %39 = sbr.rel (0) target = $region37
  $region36: #{lgatr_forward.8} parent=0 // pred_region
    _
  $region37: #{lgatr_forward.8} parent=0 // pred_fallthru
    _
  // Predicated region
  $region38: #{lgatr_forward.8} parent=0 // pred_check
    _
  $region39: #{lgatr_forward.8} parent=0 // pred_check_branch
    %41 = sbr.rel (0) target = $region41
  $region40: #{lgatr_forward.8} parent=0 // pred_region
    _
  $region41: #{lgatr_forward.8} parent=0 // pred_fallthru
    _
  // Predicated region
  $region42: #{lgatr_forward.8} parent=0 // pred_check
    _
  $region43: #{lgatr_forward.8} parent=0 // pred_check_branch
    %43 = sbr.rel (0) target = $region45
  $region44: #{lgatr_forward.8} parent=0 // pred_region
    _
  $region45: #{lgatr_forward.8} parent=0 // pred_fallthru
    _
  // Predicated region
  $region46: #{lgatr_forward.8} parent=0 // pred_check
    _
  $region47: #{lgatr_forward.8} parent=0 // pred_check_branch
    %45 = sbr.rel (0) target = $region49
  $region48: #{lgatr_forward.8} parent=0 // pred_region
    _
  $region49: #{lgatr_forward.8} parent=0 // pred_fallthru
    _
  // Predicated region
  $region50: #{lgatr_forward.8} parent=0 // pred_check
    _
  $region51: #{lgatr_forward.8} parent=0 // pred_check_branch
    %47 = sbr.rel (0) target = $region53
  $region52: #{lgatr_forward.8} parent=0 // pred_region
    _
  $region53: #{lgatr_forward.8} parent=0 // pred_fallthru
    _
  // Predicated region
  $region54: #{lgatr_forward.8} parent=0 // pred_check
    _
  $region55: #{lgatr_forward.8} parent=0 // pred_check_branch
    %49 = sbr.rel (0) target = $region57
  $region56: #{lgatr_forward.8} parent=0 // pred_region
    _
  $region57: #{lgatr_forward.8} parent=0 // pred_fallthru
    _
  // Predicated region
  $region58: #{lgatr_forward.8} parent=0 // pred_check
    _
  $region59: #{lgatr_forward.8} parent=0 // pred_check_branch
    %51 = sbr.rel (0) target = $region61
  $region60: #{lgatr_forward.8} parent=0 // pred_region
    _
  $region61: #{lgatr_forward.8} parent=0 // pred_fallthru
    _
  %v53 = vld [vmem:[%s0] sm:$0xf]
  %v54 = vld [vmem:[%s0 + $0x4] sm:$0xf]
  %v55 = vld [vmem:[%s0 + $0x8] sm:$0xf]
  %v56 = vld [vmem:[%s0 + $0xc] sm:$0xf]
  %v57 = vld [vmem:[%s0 + $0x10] sm:$0xf]
  %v58 = vld [vmem:[%s0 + $0x14] sm:$0xf]
  %v59 = vld [vmem:[%s0 + $0x18] sm:$0xf]
  %v60 = vld [vmem:[%s0 + $0x1c] sm:$0xf]
  %v61 = vld [vmem:[%s0 + $0x20] sm:$0xf]
  %v62 = vld [vmem:[%s0 + $0x24] sm:$0xf]
  %v63 = vld [vmem:[%s0 + $0x28] sm:$0xf]
  %v64 = vld [vmem:[%s0 + $0x2c] sm:$0xf]
  %v65 = vld [vmem:[%s0 + $0x30] sm:$0xf]
  %v66 = vld [vmem:[%s0 + $0x34] sm:$0xf]
  %v67 = vld [vmem:[%s0 + $0x38] sm:$0xf]
  %v68 = vld [vmem:[%s0 + $0x3c] sm:$0xf]
  %v69 = vunpack.c.l.bf16 %v53
  %v70 = vunpack.c.l.bf16 %v54
  %v71 = vunpack.c.l.bf16 %v55
  %v72 = vunpack.c.l.bf16 %v56
  %v73 = vunpack.c.l.bf16 %v57
  %v74 = vunpack.c.l.bf16 %v58
  %v75 = vunpack.c.l.bf16 %v59
  %v76 = vunpack.c.l.bf16 %v60
  %v77 = vunpack.c.l.bf16 %v61
  %v78 = vunpack.c.l.bf16 %v62
  %v79 = vunpack.c.l.bf16 %v63
  %v80 = vunpack.c.l.bf16 %v64
  %v81 = vunpack.c.l.bf16 %v65
  %v82 = vunpack.c.l.bf16 %v66
  %v83 = vunpack.c.l.bf16 %v67
  %v84 = vunpack.c.l.bf16 %v68
  %v85 = vld [vmem:[%s1] sm:$0xf]
  %v86 = vld [vmem:[%s1 + $0x4] sm:$0xf]
  %v87 = vld [vmem:[%s1 + $0x8] sm:$0xf]
  %v88 = vld [vmem:[%s1 + $0xc] sm:$0xf]
  %v89 = vld [vmem:[%s1 + $0x10] sm:$0xf]
  %v90 = vld [vmem:[%s1 + $0x14] sm:$0xf]
  %v91 = vld [vmem:[%s1 + $0x18] sm:$0xf]
  %v92 = vld [vmem:[%s1 + $0x1c] sm:$0xf]
  %v93 = vld [vmem:[%s1 + $0x20] sm:$0xf]
  %v94 = vld [vmem:[%s1 + $0x24] sm:$0xf]
  %v95 = vld [vmem:[%s1 + $0x28] sm:$0xf]
  %v96 = vld [vmem:[%s1 + $0x2c] sm:$0xf]
  %v97 = vld [vmem:[%s1 + $0x30] sm:$0xf]
  %v98 = vld [vmem:[%s1 + $0x34] sm:$0xf]
  %v99 = vld [vmem:[%s1 + $0x38] sm:$0xf]
  %v100 = vld [vmem:[%s1 + $0x3c] sm:$0xf]
  %v101 = vld [vmem:[%s5] sm:$0xf]
  %v102 = vld [vmem:[%s5 + $0x4] sm:$0xf]
  %v103 = vld [vmem:[%s5 + $0x8] sm:$0xf]
  %v104 = vld [vmem:[%s5 + $0xc] sm:$0xf]
  %v105 = vld [vmem:[%s5 + $0x10] sm:$0xf]
  %v106 = vld [vmem:[%s5 + $0x14] sm:$0xf]
  %v107 = vld [vmem:[%s5 + $0x18] sm:$0xf]
  %v108 = vld [vmem:[%s5 + $0x1c] sm:$0xf]
  %v109 = vld [vmem:[%s5 + $0x20] sm:$0xf]
  %v110 = vld [vmem:[%s5 + $0x24] sm:$0xf]
  %v111 = vld [vmem:[%s5 + $0x28] sm:$0xf]
  %v112 = vld [vmem:[%s5 + $0x2c] sm:$0xf]
  %v113 = vld [vmem:[%s5 + $0x30] sm:$0xf]
  %v114 = vld [vmem:[%s5 + $0x34] sm:$0xf]
  %v115 = vld [vmem:[%s5 + $0x38] sm:$0xf]
  %v116 = vld [vmem:[%s5 + $0x3c] sm:$0xf]
  %v133 = vunpack.c.l.b16 %v85
  %v134 = vunpack.c.l.b16 %v86
  %v135 = vunpack.c.l.b16 %v87
  %v136 = vunpack.c.l.b16 %v88
  %v137 = vunpack.c.l.b16 %v89
  %v138 = vunpack.c.l.b16 %v90
  %v139 = vunpack.c.l.b16 %v91
  %v140 = vunpack.c.l.b16 %v92
  %v141 = vunpack.c.l.b16 %v93
  %v142 = vunpack.c.l.b16 %v94
  %v143 = vunpack.c.l.b16 %v95
  %v144 = vunpack.c.l.b16 %v96
  %v145 = vunpack.c.l.b16 %v97
  %v146 = vunpack.c.l.b16 %v98
  %v147 = vunpack.c.l.b16 %v99
  %v148 = vunpack.c.l.b16 %v100
  %v149 = vpack.c.b16 %v134, %v133
  %v150 = vpack.c.b16 %v136, %v135
  %v151 = vpack.c.b16 %v138, %v137
  %v152 = vpack.c.b16 %v140, %v139
  %v153 = vpack.c.b16 %v142, %v141
  %v154 = vpack.c.b16 %v144, %v143
  %v155 = vpack.c.b16 %v146, %v145
  %v156 = vpack.c.b16 %v148, %v147
  %v181 = vunpack.c.l.b16 %v101
  %v182 = vunpack.c.l.b16 %v102
  %v183 = vunpack.c.l.b16 %v103
  %v184 = vunpack.c.l.b16 %v104
  %v185 = vunpack.c.l.b16 %v105
  %v186 = vunpack.c.l.b16 %v106
  %v187 = vunpack.c.l.b16 %v107
  %v188 = vunpack.c.l.b16 %v108
  %v189 = vunpack.c.l.b16 %v109
  %v190 = vunpack.c.l.b16 %v110
  %v191 = vunpack.c.l.b16 %v111
  %v192 = vunpack.c.l.b16 %v112
  %v193 = vunpack.c.l.b16 %v113
  %v194 = vunpack.c.l.b16 %v114
  %v195 = vunpack.c.l.b16 %v115
  %v196 = vunpack.c.l.b16 %v116
  %v197 = vpack.c.b16 %v182, %v181
  %v198 = vpack.c.b16 %v184, %v183
  %v199 = vpack.c.b16 %v186, %v185
  %v200 = vpack.c.b16 %v188, %v187
  %v201 = vpack.c.b16 %v190, %v189
  %v202 = vpack.c.b16 %v192, %v191
  %v203 = vpack.c.b16 %v194, %v193
  %v204 = vpack.c.b16 %v196, %v195
  %213 = vmatprep.subr.bf16.mxu0 0
  %214 = vmatpush1.bf16.msra.mxu0 %v197
  %215 = vmatprep.subr.bf16.mxu0 0
  %216 = vmatpush1.bf16.msra.mxu0 %v198
  %217 = vmatprep.subr.bf16.mxu0 0
  %218 = vmatpush1.bf16.msra.mxu0 %v199
  %219 = vmatprep.subr.bf16.mxu0 0
  %220 = vmatpush1.bf16.msra.mxu0 %v200
  %221 = vmatprep.subr.bf16.mxu0 0
  %222 = vmatpush1.bf16.msra.mxu0 %v201
  %223 = vmatprep.subr.bf16.mxu0 0
  %224 = vmatpush1.bf16.msra.mxu0 %v202
  %225 = vmatprep.subr.bf16.mxu0 0
  %226 = vmatpush1.bf16.msra.mxu0 %v203
  %227 = vmatprep.subr.bf16.mxu0 0
  %228 = vmatpush1.bf16.msra.mxu0 %v204
  %229 = vmatprep.subr.bf16.mxu0 0
  %230 = vmatpush1.bf16.msra.mxu0 0
  %231 = vmatprep.subr.bf16.mxu0 0
  %232 = vmatpush1.bf16.msra.mxu0 0
  %233 = vmatprep.subr.bf16.mxu0 0
  %234 = vmatpush1.bf16.msra.mxu0 0
  %235 = vmatprep.subr.bf16.mxu0 0
  %236 = vmatpush1.bf16.msra.mxu0 0
  %237 = vmatprep.subr.bf16.mxu0 0
  %238 = vmatpush1.bf16.msra.mxu0 0
  %239 = vmatprep.subr.bf16.mxu0 0
  %240 = vmatpush1.bf16.msra.mxu0 0
  %241 = vmatprep.subr.bf16.mxu0 0
  %242 = vmatpush1.bf16.msra.mxu0 0
  %243 = vmatprep.subr.bf16.mxu0 0
  %244 = vmatpush1.bf16.msra.mxu0 0
  %245 = vmatprep.mubr.bf16.mxu0 0
  %246 = vmatmul.mubr.bf16.gmra.mrb[0].mxu0 %v149
  %v247 = vpop.f32.mrb[0].mxu0
  %v248 = vadd.f32 0.0, %v247
  %v249 = vpop.f32.mrb[0].mxu0
  %v250 = vpop.f32.mrb[0].mxu0
  %v251 = vadd.f32 0.0, %v250
  %v252 = vpop.f32.mrb[0].mxu0
  %253 = vmatprep.mubr.bf16.mxu0 0
  %254 = vmatmul.mubr.bf16.gmra.mrb[0].mxu0 %v150
  %v255 = vpop.f32.mrb[0].mxu0
  %v256 = vadd.f32 0.0, %v255
  %v257 = vpop.f32.mrb[0].mxu0
  %v258 = vpop.f32.mrb[0].mxu0
  %v259 = vadd.f32 0.0, %v258
  %v260 = vpop.f32.mrb[0].mxu0
  %261 = vmatprep.mubr.bf16.mxu0 0
  %262 = vmatmul.mubr.bf16.gmra.mrb[0].mxu0 %v151
  %v263 = vpop.f32.mrb[0].mxu0
  %v264 = vadd.f32 0.0, %v263
  %v265 = vpop.f32.mrb[0].mxu0
  %v266 = vpop.f32.mrb[0].mxu0
  %v267 = vadd.f32 0.0, %v266
  %v268 = vpop.f32.mrb[0].mxu0
  %269 = vmatprep.mubr.bf16.mxu0 0
  %270 = vmatmul.mubr.bf16.gmra.mrb[0].mxu0 %v152
  %v271 = vpop.f32.mrb[0].mxu0
  %v272 = vadd.f32 0.0, %v271
  %v273 = vpop.f32.mrb[0].mxu0
  %v274 = vpop.f32.mrb[0].mxu0
  %v275 = vadd.f32 0.0, %v274
  %v276 = vpop.f32.mrb[0].mxu0
  %277 = vmatprep.mubr.bf16.mxu0 0
  %278 = vmatmul.mubr.bf16.gmra.mrb[0].mxu0 %v153
  %v279 = vpop.f32.mrb[0].mxu0
  %v280 = vadd.f32 0.0, %v279
  %v281 = vpop.f32.mrb[0].mxu0
  %v282 = vpop.f32.mrb[0].mxu0
  %v283 = vadd.f32 0.0, %v282
  %v284 = vpop.f32.mrb[0].mxu0
  %285 = vmatprep.mubr.bf16.mxu0 0
  %286 = vmatmul.mubr.bf16.gmra.mrb[0].mxu0 %v154
  %v287 = vpop.f32.mrb[0].mxu0
  %v288 = vadd.f32 0.0, %v287
  %v289 = vpop.f32.mrb[0].mxu0
  %v290 = vpop.f32.mrb[0].mxu0
  %v291 = vadd.f32 0.0, %v290
  %v292 = vpop.f32.mrb[0].mxu0
  %293 = vmatprep.mubr.bf16.mxu0 0
  %294 = vmatmul.mubr.bf16.gmra.mrb[0].mxu0 %v155
  %v295 = vpop.f32.mrb[0].mxu0
  %v296 = vadd.f32 0.0, %v295
  %v297 = vpop.f32.mrb[0].mxu0
  %v298 = vpop.f32.mrb[0].mxu0
  %v299 = vadd.f32 0.0, %v298
  %v300 = vpop.f32.mrb[0].mxu0
  %301 = vmatprep.mubr.bf16.mxu0 0
  %302 = vmatmul.mubr.bf16.gmra.mrb[0].mxu0 %v156
  %v303 = vpop.f32.mrb[0].mxu0
  %v304 = vadd.f32 0.0, %v303
  %v305 = vpop.f32.mrb[0].mxu0
  %v306 = vpop.f32.mrb[0].mxu0
  %v307 = vadd.f32 0.0, %v306
  %v308 = vpop.f32.mrb[0].mxu0
  %309 = vdwg.mxu0
  %v310 = vadd.f32 %v69, %v248
  %v311 = vadd.f32 %v70, %v251
  %v312 = vadd.f32 %v71, %v256
  %v313 = vadd.f32 %v72, %v259
  %v314 = vadd.f32 %v73, %v264
  %v315 = vadd.f32 %v74, %v267
  %v316 = vadd.f32 %v75, %v272
  %v317 = vadd.f32 %v76, %v275
  %v318 = vadd.f32 %v77, %v280
  %v319 = vadd.f32 %v78, %v283
  %v320 = vadd.f32 %v79, %v288
  %v321 = vadd.f32 %v80, %v291
  %v322 = vadd.f32 %v81, %v296
  %v323 = vadd.f32 %v82, %v299
  %v324 = vadd.f32 %v83, %v304
  %v325 = vadd.f32 %v84, %v307
  %v326 = vld [vmem:[%s6] sm:$0x1]
  %v328 = vlaneseq
  %v329 = vshrl.u32 %v328, 7
  %v330 = vsub.s32 0, %v329
  %v331 = vrot.slane %v326, %v330
  %v333 = vadd.f32 %v310, %v331
  %v334 = vadd.f32 %v311, %v331
  %v335 = vadd.f32 %v312, %v331
  %v336 = vadd.f32 %v313, %v331
  %v337 = vadd.f32 %v314, %v331
  %v338 = vadd.f32 %v315, %v331
  %v339 = vadd.f32 %v316, %v331
  %v340 = vadd.f32 %v317, %v331
  %v341 = vadd.f32 %v318, %v331
  %v342 = vadd.f32 %v319, %v331
  %v343 = vadd.f32 %v320, %v331
  %v344 = vadd.f32 %v321, %v331
  %v345 = vadd.f32 %v322, %v331
  %v346 = vadd.f32 %v323, %v331
  %v347 = vadd.f32 %v324, %v331
  %v348 = vadd.f32 %v325, %v331
  %v349 = vld [vmem:[%s2] sm:$0x1]
  %v350 = vld [vmem:[%s3] sm:$0x1]
  %v351 = vmul.f32 %v333, %v333
  %v352 = vmul.f32 %v334, %v334
  %v353 = vmul.f32 %v335, %v335
  %v354 = vmul.f32 %v336, %v336
  %v355 = vmul.f32 %v337, %v337
  %v356 = vmul.f32 %v338, %v338
  %v357 = vmul.f32 %v339, %v339
  %v358 = vmul.f32 %v340, %v340
  %v359 = vmul.f32 %v341, %v341
  %v360 = vmul.f32 %v342, %v342
  %v361 = vmul.f32 %v343, %v343
  %v362 = vmul.f32 %v344, %v344
  %v363 = vmul.f32 %v345, %v345
  %v364 = vmul.f32 %v346, %v346
  %v365 = vmul.f32 %v347, %v347
  %v366 = vmul.f32 %v348, %v348
  %v368 = vlaneseq
  %v369 = vshrl.u32 %v368, 7
  %v370 = vsub.s32 0, %v369
  %v371 = vrot.slane %v349, %v370
  %v373 = vmul.f32 %v351, %v371
  %v374 = vmul.f32 %v352, %v371
  %v375 = vmul.f32 %v353, %v371
  %v376 = vmul.f32 %v354, %v371
  %v377 = vmul.f32 %v355, %v371
  %v378 = vmul.f32 %v356, %v371
  %v379 = vmul.f32 %v357, %v371
  %v380 = vmul.f32 %v358, %v371
  %v381 = vmul.f32 %v359, %v371
  %v382 = vmul.f32 %v360, %v371
  %v383 = vmul.f32 %v361, %v371
  %v384 = vmul.f32 %v362, %v371
  %v385 = vmul.f32 %v363, %v371
  %v386 = vmul.f32 %v364, %v371
  %v387 = vmul.f32 %v365, %v371
  %v388 = vmul.f32 %v366, %v371
  %389 = vadd.xlane.f32.xlu0 %v373
  %v390 = vpop.xlane.xlu0 %389
  %391 = vadd.xlane.f32.xlu0 %v374
  %v392 = vpop.xlane.xlu0 %391
  %393 = vadd.xlane.f32.xlu0 %v375
  %v394 = vpop.xlane.xlu0 %393
  %395 = vadd.xlane.f32.xlu0 %v376
  %v396 = vpop.xlane.xlu0 %395
  %397 = vadd.xlane.f32.xlu0 %v377
  %v398 = vpop.xlane.xlu0 %397
  %399 = vadd.xlane.f32.xlu0 %v378
  %v400 = vpop.xlane.xlu0 %399
  %401 = vadd.xlane.f32.xlu0 %v379
  %v402 = vpop.xlane.xlu0 %401
  %403 = vadd.xlane.f32.xlu0 %v380
  %v404 = vpop.xlane.xlu0 %403
  %405 = vadd.xlane.f32.xlu0 %v381
  %v406 = vpop.xlane.xlu0 %405
  %407 = vadd.xlane.f32.xlu0 %v382
  %v408 = vpop.xlane.xlu0 %407
  %409 = vadd.xlane.f32.xlu0 %v383
  %v410 = vpop.xlane.xlu0 %409
  %411 = vadd.xlane.f32.xlu0 %v384
  %v412 = vpop.xlane.xlu0 %411
  %413 = vadd.xlane.f32.xlu0 %v385
  %v414 = vpop.xlane.xlu0 %413
  %415 = vadd.xlane.f32.xlu0 %v386
  %v416 = vpop.xlane.xlu0 %415
  %417 = vadd.xlane.f32.xlu0 %v387
  %v418 = vpop.xlane.xlu0 %417
  %419 = vadd.xlane.f32.xlu0 %v388
  %v420 = vpop.xlane.xlu0 %419
  %v421 = vrcp.pop 4.0
  %v422 = vmul.f32 %v390, %v421
  %v423 = vmul.f32 %v392, %v421
  %v424 = vmul.f32 %v394, %v421
  %v425 = vmul.f32 %v396, %v421
  %v426 = vmul.f32 %v398, %v421
  %v427 = vmul.f32 %v400, %v421
  %v428 = vmul.f32 %v402, %v421
  %v429 = vmul.f32 %v404, %v421
  %v430 = vmul.f32 %v406, %v421
  %v431 = vmul.f32 %v408, %v421
  %v432 = vmul.f32 %v410, %v421
  %v433 = vmul.f32 %v412, %v421
  %v434 = vmul.f32 %v414, %v421
  %v435 = vmul.f32 %v416, %v421
  %v436 = vmul.f32 %v418, %v421
  %v437 = vmul.f32 %v420, %v421
  %v438 = vadd.f32 %v422, 1e-06
  %v439 = vadd.f32 %v423, 1e-06
  %v440 = vadd.f32 %v424, 1e-06
  %v441 = vadd.f32 %v425, 1e-06
  %v442 = vadd.f32 %v426, 1e-06
  %v443 = vadd.f32 %v427, 1e-06
  %v444 = vadd.f32 %v428, 1e-06
  %v445 = vadd.f32 %v429, 1e-06
  %v446 = vadd.f32 %v430, 1e-06
  %v447 = vadd.f32 %v431, 1e-06
  %v448 = vadd.f32 %v432, 1e-06
  %v449 = vadd.f32 %v433, 1e-06
  %v450 = vadd.f32 %v434, 1e-06
  %v451 = vadd.f32 %v435, 1e-06
  %v452 = vadd.f32 %v436, 1e-06
  %v453 = vadd.f32 %v437, 1e-06
  %v454 = vrsqrt.pop %v438
  %v455 = vrsqrt.pop %v439
  %v456 = vrsqrt.pop %v440
  %v457 = vrsqrt.pop %v441
  %v458 = vrsqrt.pop %v442
  %v459 = vrsqrt.pop %v443
  %v460 = vrsqrt.pop %v444
  %v461 = vrsqrt.pop %v445
  %v462 = vrsqrt.pop %v446
  %v463 = vrsqrt.pop %v447
  %v464 = vrsqrt.pop %v448
  %v465 = vrsqrt.pop %v449
  %v466 = vrsqrt.pop %v450
  %v467 = vrsqrt.pop %v451
  %v468 = vrsqrt.pop %v452
  %v469 = vrsqrt.pop %v453
  %v471 = vlaneseq
  %v472 = vshrl.u32 %v471, 7
  %v473 = vsub.s32 0, %v472
  %v474 = vrot.slane %v350, %v473
  %v476 = vmul.f32 %v333, %v474
  %v477 = vmul.f32 %v334, %v474
  %v478 = vmul.f32 %v335, %v474
  %v479 = vmul.f32 %v336, %v474
  %v480 = vmul.f32 %v337, %v474
  %v481 = vmul.f32 %v338, %v474
  %v482 = vmul.f32 %v339, %v474
  %v483 = vmul.f32 %v340, %v474
  %v484 = vmul.f32 %v341, %v474
  %v485 = vmul.f32 %v342, %v474
  %v486 = vmul.f32 %v343, %v474
  %v487 = vmul.f32 %v344, %v474
  %v488 = vmul.f32 %v345, %v474
  %v489 = vmul.f32 %v346, %v474
  %v490 = vmul.f32 %v347, %v474
  %v491 = vmul.f32 %v348, %v474
  %492 = vadd.xlane.f32.xlu0 %v476
  %v493 = vpop.xlane.xlu0 %492
  %494 = vadd.xlane.f32.xlu0 %v477
  %v495 = vpop.xlane.xlu0 %494
  %496 = vadd.xlane.f32.xlu0 %v478
  %v497 = vpop.xlane.xlu0 %496
  %498 = vadd.xlane.f32.xlu0 %v479
  %v499 = vpop.xlane.xlu0 %498
  %500 = vadd.xlane.f32.xlu0 %v480
  %v501 = vpop.xlane.xlu0 %500
  %502 = vadd.xlane.f32.xlu0 %v481
  %v503 = vpop.xlane.xlu0 %502
  %504 = vadd.xlane.f32.xlu0 %v482
  %v505 = vpop.xlane.xlu0 %504
  %506 = vadd.xlane.f32.xlu0 %v483
  %v507 = vpop.xlane.xlu0 %506
  %508 = vadd.xlane.f32.xlu0 %v484
  %v509 = vpop.xlane.xlu0 %508
  %510 = vadd.xlane.f32.xlu0 %v485
  %v511 = vpop.xlane.xlu0 %510
  %512 = vadd.xlane.f32.xlu0 %v486
  %v513 = vpop.xlane.xlu0 %512
  %514 = vadd.xlane.f32.xlu0 %v487
  %v515 = vpop.xlane.xlu0 %514
  %516 = vadd.xlane.f32.xlu0 %v488
  %v517 = vpop.xlane.xlu0 %516
  %518 = vadd.xlane.f32.xlu0 %v489
  %v519 = vpop.xlane.xlu0 %518
  %520 = vadd.xlane.f32.xlu0 %v490
  %v521 = vpop.xlane.xlu0 %520
  %522 = vadd.xlane.f32.xlu0 %v491
  %v523 = vpop.xlane.xlu0 %522
  %v524 = vrcp.pop 8.0
  %v525 = vmul.f32 %v493, %v524
  %v526 = vmul.f32 %v495, %v524
  %v527 = vmul.f32 %v497, %v524
  %v528 = vmul.f32 %v499, %v524
  %v529 = vmul.f32 %v501, %v524
  %v530 = vmul.f32 %v503, %v524
  %v531 = vmul.f32 %v505, %v524
  %v532 = vmul.f32 %v507, %v524
  %v533 = vmul.f32 %v509, %v524
  %v534 = vmul.f32 %v511, %v524
  %v535 = vmul.f32 %v513, %v524
  %v536 = vmul.f32 %v515, %v524
  %v537 = vmul.f32 %v517, %v524
  %v538 = vmul.f32 %v519, %v524
  %v539 = vmul.f32 %v521, %v524
  %v540 = vmul.f32 %v523, %v524
  %v541 = vsub.f32 %v333, %v525
  %v542 = vsub.f32 %v334, %v526
  %v543 = vsub.f32 %v335, %v527
  %v544 = vsub.f32 %v336, %v528
  %v545 = vsub.f32 %v337, %v529
  %v546 = vsub.f32 %v338, %v530
  %v547 = vsub.f32 %v339, %v531
  %v548 = vsub.f32 %v340, %v532
  %v549 = vsub.f32 %v341, %v533
  %v550 = vsub.f32 %v342, %v534
  %v551 = vsub.f32 %v343, %v535
  %v552 = vsub.f32 %v344, %v536
  %v553 = vsub.f32 %v345, %v537
  %v554 = vsub.f32 %v346, %v538
  %v555 = vsub.f32 %v347, %v539
  %v556 = vsub.f32 %v348, %v540
  %v557 = vmul.f32 %v541, %v541
  %v558 = vmul.f32 %v542, %v542
  %v559 = vmul.f32 %v543, %v543
  %v560 = vmul.f32 %v544, %v544
  %v561 = vmul.f32 %v545, %v545
  %v562 = vmul.f32 %v546, %v546
  %v563 = vmul.f32 %v547, %v547
  %v564 = vmul.f32 %v548, %v548
  %v565 = vmul.f32 %v549, %v549
  %v566 = vmul.f32 %v550, %v550
  %v567 = vmul.f32 %v551, %v551
  %v568 = vmul.f32 %v552, %v552
  %v569 = vmul.f32 %v553, %v553
  %v570 = vmul.f32 %v554, %v554
  %v571 = vmul.f32 %v555, %v555
  %v572 = vmul.f32 %v556, %v556
  %v573 = vmul.f32 %v557, %v474
  %v574 = vmul.f32 %v558, %v474
  %v575 = vmul.f32 %v559, %v474
  %v576 = vmul.f32 %v560, %v474
  %v577 = vmul.f32 %v561, %v474
  %v578 = vmul.f32 %v562, %v474
  %v579 = vmul.f32 %v563, %v474
  %v580 = vmul.f32 %v564, %v474
  %v581 = vmul.f32 %v565, %v474
  %v582 = vmul.f32 %v566, %v474
  %v583 = vmul.f32 %v567, %v474
  %v584 = vmul.f32 %v568, %v474
  %v585 = vmul.f32 %v569, %v474
  %v586 = vmul.f32 %v570, %v474
  %v587 = vmul.f32 %v571, %v474
  %v588 = vmul.f32 %v572, %v474
  %589 = vadd.xlane.f32.xlu0 %v573
  %v590 = vpop.xlane.xlu0 %589
  %591 = vadd.xlane.f32.xlu0 %v574
  %v592 = vpop.xlane.xlu0 %591
  %593 = vadd.xlane.f32.xlu0 %v575
  %v594 = vpop.xlane.xlu0 %593
  %595 = vadd.xlane.f32.xlu0 %v576
  %v596 = vpop.xlane.xlu0 %595
  %597 = vadd.xlane.f32.xlu0 %v577
  %v598 = vpop.xlane.xlu0 %597
  %599 = vadd.xlane.f32.xlu0 %v578
  %v600 = vpop.xlane.xlu0 %599
  %601 = vadd.xlane.f32.xlu0 %v579
  %v602 = vpop.xlane.xlu0 %601
  %603 = vadd.xlane.f32.xlu0 %v580
  %v604 = vpop.xlane.xlu0 %603
  %605 = vadd.xlane.f32.xlu0 %v581
  %v606 = vpop.xlane.xlu0 %605
  %607 = vadd.xlane.f32.xlu0 %v582
  %v608 = vpop.xlane.xlu0 %607
  %609 = vadd.xlane.f32.xlu0 %v583
  %v610 = vpop.xlane.xlu0 %609
  %611 = vadd.xlane.f32.xlu0 %v584
  %v612 = vpop.xlane.xlu0 %611
  %613 = vadd.xlane.f32.xlu0 %v585
  %v614 = vpop.xlane.xlu0 %613
  %615 = vadd.xlane.f32.xlu0 %v586
  %v616 = vpop.xlane.xlu0 %615
  %617 = vadd.xlane.f32.xlu0 %v587
  %v618 = vpop.xlane.xlu0 %617
  %619 = vadd.xlane.f32.xlu0 %v588
  %v620 = vpop.xlane.xlu0 %619
  %v621 = vmul.f32 %v590, %v524
  %v622 = vmul.f32 %v592, %v524
  %v623 = vmul.f32 %v594, %v524
  %v624 = vmul.f32 %v596, %v524
  %v625 = vmul.f32 %v598, %v524
  %v626 = vmul.f32 %v600, %v524
  %v627 = vmul.f32 %v602, %v524
  %v628 = vmul.f32 %v604, %v524
  %v629 = vmul.f32 %v606, %v524
  %v630 = vmul.f32 %v608, %v524
  %v631 = vmul.f32 %v610, %v524
  %v632 = vmul.f32 %v612, %v524
  %v633 = vmul.f32 %v614, %v524
  %v634 = vmul.f32 %v616, %v524
  %v635 = vmul.f32 %v618, %v524
  %v636 = vmul.f32 %v620, %v524
  %v637 = vadd.f32 %v621, 1e-06
  %v638 = vadd.f32 %v622, 1e-06
  %v639 = vadd.f32 %v623, 1e-06
  %v640 = vadd.f32 %v624, 1e-06
  %v641 = vadd.f32 %v625, 1e-06
  %v642 = vadd.f32 %v626, 1e-06
  %v643 = vadd.f32 %v627, 1e-06
  %v644 = vadd.f32 %v628, 1e-06
  %v645 = vadd.f32 %v629, 1e-06
  %v646 = vadd.f32 %v630, 1e-06
  %v647 = vadd.f32 %v631, 1e-06
  %v648 = vadd.f32 %v632, 1e-06
  %v649 = vadd.f32 %v633, 1e-06
  %v650 = vadd.f32 %v634, 1e-06
  %v651 = vadd.f32 %v635, 1e-06
  %v652 = vadd.f32 %v636, 1e-06
  %v653 = vrsqrt.pop %v637
  %v654 = vrsqrt.pop %v638
  %v655 = vrsqrt.pop %v639
  %v656 = vrsqrt.pop %v640
  %v657 = vrsqrt.pop %v641
  %v658 = vrsqrt.pop %v642
  %v659 = vrsqrt.pop %v643
  %v660 = vrsqrt.pop %v644
  %v661 = vrsqrt.pop %v645
  %v662 = vrsqrt.pop %v646
  %v663 = vrsqrt.pop %v647
  %v664 = vrsqrt.pop %v648
  %v665 = vrsqrt.pop %v649
  %v666 = vrsqrt.pop %v650
  %v667 = vrsqrt.pop %v651
  %v668 = vrsqrt.pop %v652
  %v669 = vmul.f32 %v371, %v333
  %v670 = vmul.f32 %v371, %v334
  %v671 = vmul.f32 %v371, %v335
  %v672 = vmul.f32 %v371, %v336
  %v673 = vmul.f32 %v371, %v337
  %v674 = vmul.f32 %v371, %v338
  %v675 = vmul.f32 %v371, %v339
  %v676 = vmul.f32 %v371, %v340
  %v677 = vmul.f32 %v371, %v341
  %v678 = vmul.f32 %v371, %v342
  %v679 = vmul.f32 %v371, %v343
  %v680 = vmul.f32 %v371, %v344
  %v681 = vmul.f32 %v371, %v345
  %v682 = vmul.f32 %v371, %v346
  %v683 = vmul.f32 %v371, %v347
  %v684 = vmul.f32 %v371, %v348
  %v685 = vmul.f32 %v669, %v454
  %v686 = vmul.f32 %v670, %v455
  %v687 = vmul.f32 %v671, %v456
  %v688 = vmul.f32 %v672, %v457
  %v689 = vmul.f32 %v673, %v458
  %v690 = vmul.f32 %v674, %v459
  %v691 = vmul.f32 %v675, %v460
  %v692 = vmul.f32 %v676, %v461
  %v693 = vmul.f32 %v677, %v462
  %v694 = vmul.f32 %v678, %v463
  %v695 = vmul.f32 %v679, %v464
  %v696 = vmul.f32 %v680, %v465
  %v697 = vmul.f32 %v681, %v466
  %v698 = vmul.f32 %v682, %v467
  %v699 = vmul.f32 %v683, %v468
  %v700 = vmul.f32 %v684, %v469
  %v701 = vmul.f32 %v474, %v541
  %v702 = vmul.f32 %v474, %v542
  %v703 = vmul.f32 %v474, %v543
  %v704 = vmul.f32 %v474, %v544
  %v705 = vmul.f32 %v474, %v545
  %v706 = vmul.f32 %v474, %v546
  %v707 = vmul.f32 %v474, %v547
  %v708 = vmul.f32 %v474, %v548
  %v709 = vmul.f32 %v474, %v549
  %v710 = vmul.f32 %v474, %v550
  %v711 = vmul.f32 %v474, %v551
  %v712 = vmul.f32 %v474, %v552
  %v713 = vmul.f32 %v474, %v553
  %v714 = vmul.f32 %v474, %v554
  %v715 = vmul.f32 %v474, %v555
  %v716 = vmul.f32 %v474, %v556
  %v717 = vmul.f32 %v701, %v653
  %v718 = vmul.f32 %v702, %v654
  %v719 = vmul.f32 %v703, %v655
  %v720 = vmul.f32 %v704, %v656
  %v721 = vmul.f32 %v705, %v657
  %v722 = vmul.f32 %v706, %v658
  %v723 = vmul.f32 %v707, %v659
  %v724 = vmul.f32 %v708, %v660
  %v725 = vmul.f32 %v709, %v661
  %v726 = vmul.f32 %v710, %v662
  %v727 = vmul.f32 %v711, %v663
  %v728 = vmul.f32 %v712, %v664
  %v729 = vmul.f32 %v713, %v665
  %v730 = vmul.f32 %v714, %v666
  %v731 = vmul.f32 %v715, %v667
  %v732 = vmul.f32 %v716, %v668
  %v733 = vadd.f32 %v685, %v717
  %v734 = vadd.f32 %v686, %v718
  %v735 = vadd.f32 %v687, %v719
  %v736 = vadd.f32 %v688, %v720
  %v737 = vadd.f32 %v689, %v721
  %v738 = vadd.f32 %v690, %v722
  %v739 = vadd.f32 %v691, %v723
  %v740 = vadd.f32 %v692, %v724
  %v741 = vadd.f32 %v693, %v725
  %v742 = vadd.f32 %v694, %v726
  %v743 = vadd.f32 %v695, %v727
  %v744 = vadd.f32 %v696, %v728
  %v745 = vadd.f32 %v697, %v729
  %v746 = vadd.f32 %v698, %v730
  %v747 = vadd.f32 %v699, %v731
  %v748 = vadd.f32 %v700, %v732
  %v749 = vpack.c.bf16 %v734, %v733
  %v750 = vpack.c.bf16 %v736, %v735
  %v751 = vpack.c.bf16 %v738, %v737
  %v752 = vpack.c.bf16 %v740, %v739
  %v753 = vpack.c.bf16 %v742, %v741
  %v754 = vpack.c.bf16 %v744, %v743
  %v755 = vpack.c.bf16 %v746, %v745
  %v756 = vpack.c.bf16 %v748, %v747
  %v757 = vld [vmem:[%s7] sm:$0xff]
  %v758 = vld [vmem:[%s7 + $0x8] sm:$0xff]
  %v759 = vld [vmem:[%s7 + $0x10] sm:$0xff]
  %v760 = vld [vmem:[%s7 + $0x18] sm:$0xff]
  %v761 = vld [vmem:[%s7 + $0x20] sm:$0xff]
  %v762 = vld [vmem:[%s7 + $0x28] sm:$0xff]
  %v763 = vld [vmem:[%s7 + $0x30] sm:$0xff]
  %v764 = vld [vmem:[%s7 + $0x38] sm:$0xff]
  %v765 = vld [vmem:[%s7 + $0x40] sm:$0xff]
  %v766 = vld [vmem:[%s7 + $0x48] sm:$0xff]
  %v767 = vld [vmem:[%s7 + $0x50] sm:$0xff]
  %v768 = vld [vmem:[%s7 + $0x58] sm:$0xff]
  %v769 = vld [vmem:[%s7 + $0x60] sm:$0xff]
  %v770 = vld [vmem:[%s7 + $0x68] sm:$0xff]
  %v771 = vld [vmem:[%s7 + $0x70] sm:$0xff]
  %v772 = vld [vmem:[%s7 + $0x78] sm:$0xff]
  %v773 = vld [vmem:[%s8] sm:$0x3]
  %v775 = vlaneseq
  %v776 = vshrl.u32 %v775, 7
  %v777 = vsub.s32 0, %v776
  %v778 = vrot.slane %v773, %v777
  %v779 = vlaneseq
  %v780 = vshrl.u32 %v779, 7
  %v781 = vsub.s32 1, %v780
  %v782 = vrot.slane %v773, %v781
  %v801 = vunpack.c.l.b16 %v757
  %v802 = vunpack.c.h.b16 %v757
  %v803 = vunpack.c.l.b16 %v758
  %v804 = vunpack.c.h.b16 %v758
  %v805 = vunpack.c.l.b16 %v759
  %v806 = vunpack.c.h.b16 %v759
  %v807 = vunpack.c.l.b16 %v760
  %v808 = vunpack.c.h.b16 %v760
  %v809 = vunpack.c.l.b16 %v761
  %v810 = vunpack.c.h.b16 %v761
  %v811 = vunpack.c.l.b16 %v762
  %v812 = vunpack.c.h.b16 %v762
  %v813 = vunpack.c.l.b16 %v763
  %v814 = vunpack.c.h.b16 %v763
  %v815 = vunpack.c.l.b16 %v764
  %v816 = vunpack.c.h.b16 %v764
  %v817 = vunpack.c.l.b16 %v765
  %v818 = vunpack.c.h.b16 %v765
  %v819 = vunpack.c.l.b16 %v766
  %v820 = vunpack.c.h.b16 %v766
  %v821 = vunpack.c.l.b16 %v767
  %v822 = vunpack.c.h.b16 %v767
  %v823 = vunpack.c.l.b16 %v768
  %v824 = vunpack.c.h.b16 %v768
  %v825 = vunpack.c.l.b16 %v769
  %v826 = vunpack.c.h.b16 %v769
  %v827 = vunpack.c.l.b16 %v770
  %v828 = vunpack.c.h.b16 %v770
  %v829 = vunpack.c.l.b16 %v771
  %v830 = vunpack.c.h.b16 %v771
  %v831 = vunpack.c.l.b16 %v772
  %v832 = vunpack.c.h.b16 %v772
  %v833 = vpack.c.b16 %v803, %v801
  %v834 = vpack.c.b16 %v804, %v802
  %v835 = vpack.c.b16 %v807, %v805
  %v836 = vpack.c.b16 %v808, %v806
  %v837 = vpack.c.b16 %v811, %v809
  %v838 = vpack.c.b16 %v812, %v810
  %v839 = vpack.c.b16 %v815, %v813
  %v840 = vpack.c.b16 %v816, %v814
  %v841 = vpack.c.b16 %v819, %v817
  %v842 = vpack.c.b16 %v820, %v818
  %v843 = vpack.c.b16 %v823, %v821
  %v844 = vpack.c.b16 %v824, %v822
  %v845 = vpack.c.b16 %v827, %v825
  %v846 = vpack.c.b16 %v828, %v826
  %v847 = vpack.c.b16 %v831, %v829
  %v848 = vpack.c.b16 %v832, %v830
  %865 = vmatprep.subr.bf16.mxu0 %v834
  %866 = vmatpush1.bf16.msra.mxu0 %v833
  %867 = vmatprep.subr.bf16.mxu0 %v836
  %868 = vmatpush1.bf16.msra.mxu0 %v835
  %869 = vmatprep.subr.bf16.mxu0 %v838
  %870 = vmatpush1.bf16.msra.mxu0 %v837
  %871 = vmatprep.subr.bf16.mxu0 %v840
  %872 = vmatpush1.bf16.msra.mxu0 %v839
  %873 = vmatprep.subr.bf16.mxu0 %v842
  %874 = vmatpush1.bf16.msra.mxu0 %v841
  %875 = vmatprep.subr.bf16.mxu0 %v844
  %876 = vmatpush1.bf16.msra.mxu0 %v843
  %877 = vmatprep.subr.bf16.mxu0 %v846
  %878 = vmatpush1.bf16.msra.mxu0 %v845
  %879 = vmatprep.subr.bf16.mxu0 %v848
  %880 = vmatpush1.bf16.msra.mxu0 %v847
  %881 = vmatprep.subr.bf16.mxu0 0
  %882 = vmatpush1.bf16.msra.mxu0 0
  %883 = vmatprep.subr.bf16.mxu0 0
  %884 = vmatpush1.bf16.msra.mxu0 0
  %885 = vmatprep.subr.bf16.mxu0 0
  %886 = vmatpush1.bf16.msra.mxu0 0
  %887 = vmatprep.subr.bf16.mxu0 0
  %888 = vmatpush1.bf16.msra.mxu0 0
  %889 = vmatprep.subr.bf16.mxu0 0
  %890 = vmatpush1.bf16.msra.mxu0 0
  %891 = vmatprep.subr.bf16.mxu0 0
  %892 = vmatpush1.bf16.msra.mxu0 0
  %893 = vmatprep.subr.bf16.mxu0 0
  %894 = vmatpush1.bf16.msra.mxu0 0
  %895 = vmatprep.subr.bf16.mxu0 0
  %896 = vmatpush1.bf16.msra.mxu0 0
  %897 = vmatprep.mubr.bf16.mxu0 0
  %898 = vmatmul.mubr.bf16.gmra.mrb[0].mxu0 %v749
  %v899 = vpop.f32.mrb[0].mxu0
  %v900 = vadd.f32 %v778, %v899
  %v901 = vpop.f32.mrb[0].mxu0
  %v902 = vadd.f32 %v782, %v901
  %v903 = vpop.f32.mrb[0].mxu0
  %v904 = vadd.f32 %v778, %v903
  %v905 = vpop.f32.mrb[0].mxu0
  %v906 = vadd.f32 %v782, %v905
  %907 = vmatprep.mubr.bf16.mxu0 0
  %908 = vmatmul.mubr.bf16.gmra.mrb[0].mxu0 %v750
  %v909 = vpop.f32.mrb[0].mxu0
  %v910 = vadd.f32 %v778, %v909
  %v911 = vpop.f32.mrb[0].mxu0
  %v912 = vadd.f32 %v782, %v911
  %v913 = vpop.f32.mrb[0].mxu0
  %v914 = vadd.f32 %v778, %v913
  %v915 = vpop.f32.mrb[0].mxu0
  %v916 = vadd.f32 %v782, %v915
  %917 = vmatprep.mubr.bf16.mxu0 0
  %918 = vmatmul.mubr.bf16.gmra.mrb[0].mxu0 %v751
  %v919 = vpop.f32.mrb[0].mxu0
  %v920 = vadd.f32 %v778, %v919
  %v921 = vpop.f32.mrb[0].mxu0
  %v922 = vadd.f32 %v782, %v921
  %v923 = vpop.f32.mrb[0].mxu0
  %v924 = vadd.f32 %v778, %v923
  %v925 = vpop.f32.mrb[0].mxu0
  %v926 = vadd.f32 %v782, %v925
  %927 = vmatprep.mubr.bf16.mxu0 0
  %928 = vmatmul.mubr.bf16.gmra.mrb[0].mxu0 %v752
  %v929 = vpop.f32.mrb[0].mxu0
  %v930 = vadd.f32 %v778, %v929
  %v931 = vpop.f32.mrb[0].mxu0
  %v932 = vadd.f32 %v782, %v931
  %v933 = vpop.f32.mrb[0].mxu0
  %v934 = vadd.f32 %v778, %v933
  %v935 = vpop.f32.mrb[0].mxu0
  %v936 = vadd.f32 %v782, %v935
  %937 = vmatprep.mubr.bf16.mxu0 0
  %938 = vmatmul.mubr.bf16.gmra.mrb[0].mxu0 %v753
  %v939 = vpop.f32.mrb[0].mxu0
  %v940 = vadd.f32 %v778, %v939
  %v941 = vpop.f32.mrb[0].mxu0
  %v942 = vadd.f32 %v782, %v941
  %v943 = vpop.f32.mrb[0].mxu0
  %v944 = vadd.f32 %v778, %v943
  %v945 = vpop.f32.mrb[0].mxu0
  %v946 = vadd.f32 %v782, %v945
  %947 = vmatprep.mubr.bf16.mxu0 0
  %948 = vmatmul.mubr.bf16.gmra.mrb[0].mxu0 %v754
  %v949 = vpop.f32.mrb[0].mxu0
  %v950 = vadd.f32 %v778, %v949
  %v951 = vpop.f32.mrb[0].mxu0
  %v952 = vadd.f32 %v782, %v951
  %v953 = vpop.f32.mrb[0].mxu0
  %v954 = vadd.f32 %v778, %v953
  %v955 = vpop.f32.mrb[0].mxu0
  %v956 = vadd.f32 %v782, %v955
  %957 = vmatprep.mubr.bf16.mxu0 0
  %958 = vmatmul.mubr.bf16.gmra.mrb[0].mxu0 %v755
  %v959 = vpop.f32.mrb[0].mxu0
  %v960 = vadd.f32 %v778, %v959
  %v961 = vpop.f32.mrb[0].mxu0
  %v962 = vadd.f32 %v782, %v961
  %v963 = vpop.f32.mrb[0].mxu0
  %v964 = vadd.f32 %v778, %v963
  %v965 = vpop.f32.mrb[0].mxu0
  %v966 = vadd.f32 %v782, %v965
  %967 = vmatprep.mubr.bf16.mxu0 0
  %968 = vmatmul.mubr.bf16.gmra.mrb[0].mxu0 %v756
  %v969 = vpop.f32.mrb[0].mxu0
  %v970 = vadd.f32 %v778, %v969
  %v971 = vpop.f32.mrb[0].mxu0
  %v972 = vadd.f32 %v782, %v971
  %v973 = vpop.f32.mrb[0].mxu0
  %v974 = vadd.f32 %v778, %v973
  %v975 = vpop.f32.mrb[0].mxu0
  %v976 = vadd.f32 %v782, %v975
  %977 = vdwg.mxu0
  %v978 = vld [vmem:[%s9] sm:$0xff]
  %v979 = vld [vmem:[%s9 + $0x8] sm:$0xff]
  %v980 = vld [vmem:[%s9 + $0x10] sm:$0xff]
  %v981 = vld [vmem:[%s9 + $0x18] sm:$0xff]
  %v982 = vld [vmem:[%s9 + $0x20] sm:$0xff]
  %v983 = vld [vmem:[%s9 + $0x28] sm:$0xff]
  %v984 = vld [vmem:[%s9 + $0x30] sm:$0xff]
  %v985 = vld [vmem:[%s9 + $0x38] sm:$0xff]
  %v986 = vld [vmem:[%s9 + $0x40] sm:$0xff]
  %v987 = vld [vmem:[%s9 + $0x48] sm:$0xff]
  %v988 = vld [vmem:[%s9 + $0x50] sm:$0xff]
  %v989 = vld [vmem:[%s9 + $0x58] sm:$0xff]
  %v990 = vld [vmem:[%s9 + $0x60] sm:$0xff]
  %v991 = vld [vmem:[%s9 + $0x68] sm:$0xff]
  %v992 = vld [vmem:[%s9 + $0x70] sm:$0xff]
  %v993 = vld [vmem:[%s9 + $0x78] sm:$0xff]
  %v994 = vld [vmem:[%s10] sm:$0x3]
  %v996 = vlaneseq
  %v997 = vshrl.u32 %v996, 7
  %v998 = vsub.s32 0, %v997
  %v999 = vrot.slane %v994, %v998
  %v1000 = vlaneseq
  %v1001 = vshrl.u32 %v1000, 7
  %v1002 = vsub.s32 1, %v1001
  %v1003 = vrot.slane %v994, %v1002
  %v1022 = vunpack.c.l.b16 %v978
  %v1023 = vunpack.c.h.b16 %v978
  %v1024 = vunpack.c.l.b16 %v979
  %v1025 = vunpack.c.h.b16 %v979
  %v1026 = vunpack.c.l.b16 %v980
  %v1027 = vunpack.c.h.b16 %v980
  %v1028 = vunpack.c.l.b16 %v981
  %v1029 = vunpack.c.h.b16 %v981
  %v1030 = vunpack.c.l.b16 %v982
  %v1031 = vunpack.c.h.b16 %v982
  %v1032 = vunpack.c.l.b16 %v983
  %v1033 = vunpack.c.h.b16 %v983
  %v1034 = vunpack.c.l.b16 %v984
  %v1035 = vunpack.c.h.b16 %v984
  %v1036 = vunpack.c.l.b16 %v985
  %v1037 = vunpack.c.h.b16 %v985
  %v1038 = vunpack.c.l.b16 %v986
  %v1039 = vunpack.c.h.b16 %v986
  %v1040 = vunpack.c.l.b16 %v987
  %v1041 = vunpack.c.h.b16 %v987
  %v1042 = vunpack.c.l.b16 %v988
  %v1043 = vunpack.c.h.b16 %v988
  %v1044 = vunpack.c.l.b16 %v989
  %v1045 = vunpack.c.h.b16 %v989
  %v1046 = vunpack.c.l.b16 %v990
  %v1047 = vunpack.c.h.b16 %v990
  %v1048 = vunpack.c.l.b16 %v991
  %v1049 = vunpack.c.h.b16 %v991
  %v1050 = vunpack.c.l.b16 %v992
  %v1051 = vunpack.c.h.b16 %v992
  %v1052 = vunpack.c.l.b16 %v993
  %v1053 = vunpack.c.h.b16 %v993
  %v1054 = vpack.c.b16 %v1024, %v1022
  %v1055 = vpack.c.b16 %v1025, %v1023
  %v1056 = vpack.c.b16 %v1028, %v1026
  %v1057 = vpack.c.b16 %v1029, %v1027
  %v1058 = vpack.c.b16 %v1032, %v1030
  %v1059 = vpack.c.b16 %v1033, %v1031
  %v1060 = vpack.c.b16 %v1036, %v1034
  %v1061 = vpack.c.b16 %v1037, %v1035
  %v1062 = vpack.c.b16 %v1040, %v1038
  %v1063 = vpack.c.b16 %v1041, %v1039
  %v1064 = vpack.c.b16 %v1044, %v1042
  %v1065 = vpack.c.b16 %v1045, %v1043
  %v1066 = vpack.c.b16 %v1048, %v1046
  %v1067 = vpack.c.b16 %v1049, %v1047
  %v1068 = vpack.c.b16 %v1052, %v1050
  %v1069 = vpack.c.b16 %v1053, %v1051
  %1086 = vmatprep.subr.bf16.mxu0 %v1055
  %1087 = vmatpush1.bf16.msra.mxu0 %v1054
  %1088 = vmatprep.subr.bf16.mxu0 %v1057
  %1089 = vmatpush1.bf16.msra.mxu0 %v1056
  %1090 = vmatprep.subr.bf16.mxu0 %v1059
  %1091 = vmatpush1.bf16.msra.mxu0 %v1058
  %1092 = vmatprep.subr.bf16.mxu0 %v1061
  %1093 = vmatpush1.bf16.msra.mxu0 %v1060
  %1094 = vmatprep.subr.bf16.mxu0 %v1063
  %1095 = vmatpush1.bf16.msra.mxu0 %v1062
  %1096 = vmatprep.subr.bf16.mxu0 %v1065
  %1097 = vmatpush1.bf16.msra.mxu0 %v1064
  %1098 = vmatprep.subr.bf16.mxu0 %v1067
  %1099 = vmatpush1.bf16.msra.mxu0 %v1066
  %1100 = vmatprep.subr.bf16.mxu0 %v1069
  %1101 = vmatpush1.bf16.msra.mxu0 %v1068
  %1102 = vmatprep.subr.bf16.mxu0 0
  %1103 = vmatpush1.bf16.msra.mxu0 0
  %1104 = vmatprep.subr.bf16.mxu0 0
  %1105 = vmatpush1.bf16.msra.mxu0 0
  %1106 = vmatprep.subr.bf16.mxu0 0
  %1107 = vmatpush1.bf16.msra.mxu0 0
  %1108 = vmatprep.subr.bf16.mxu0 0
  %1109 = vmatpush1.bf16.msra.mxu0 0
  %1110 = vmatprep.subr.bf16.mxu0 0
  %1111 = vmatpush1.bf16.msra.mxu0 0
  %1112 = vmatprep.subr.bf16.mxu0 0
  %1113 = vmatpush1.bf16.msra.mxu0 0
  %1114 = vmatprep.subr.bf16.mxu0 0
  %1115 = vmatpush1.bf16.msra.mxu0 0
  %1116 = vmatprep.subr.bf16.mxu0 0
  %1117 = vmatpush1.bf16.msra.mxu0 0
  %1118 = vmatprep.mubr.bf16.mxu0 0
  %1119 = vmatmul.mubr.bf16.gmra.mrb[0].mxu0 %v749
  %v1120 = vpop.f32.mrb[0].mxu0
  %v1121 = vadd.f32 %v999, %v1120
  %v1122 = vpop.f32.mrb[0].mxu0
  %v1123 = vadd.f32 %v1003, %v1122
  %v1124 = vpop.f32.mrb[0].mxu0
  %v1125 = vadd.f32 %v999, %v1124
  %v1126 = vpop.f32.mrb[0].mxu0
  %v1127 = vadd.f32 %v1003, %v1126
  %1128 = vmatprep.mubr.bf16.mxu0 0
  %1129 = vmatmul.mubr.bf16.gmra.mrb[0].mxu0 %v750
  %v1130 = vpop.f32.mrb[0].mxu0
  %v1131 = vadd.f32 %v999, %v1130
  %v1132 = vpop.f32.mrb[0].mxu0
  %v1133 = vadd.f32 %v1003, %v1132
  %v1134 = vpop.f32.mrb[0].mxu0
  %v1135 = vadd.f32 %v999, %v1134
  %v1136 = vpop.f32.mrb[0].mxu0
  %v1137 = vadd.f32 %v1003, %v1136
  %1138 = vmatprep.mubr.bf16.mxu0 0
  %1139 = vmatmul.mubr.bf16.gmra.mrb[0].mxu0 %v751
  %v1140 = vpop.f32.mrb[0].mxu0
  %v1141 = vadd.f32 %v999, %v1140
  %v1142 = vpop.f32.mrb[0].mxu0
  %v1143 = vadd.f32 %v1003, %v1142
  %v1144 = vpop.f32.mrb[0].mxu0
  %v1145 = vadd.f32 %v999, %v1144
  %v1146 = vpop.f32.mrb[0].mxu0
  %v1147 = vadd.f32 %v1003, %v1146
  %1148 = vmatprep.mubr.bf16.mxu0 0
  %1149 = vmatmul.mubr.bf16.gmra.mrb[0].mxu0 %v752
  %v1150 = vpop.f32.mrb[0].mxu0
  %v1151 = vadd.f32 %v999, %v1150
  %v1152 = vpop.f32.mrb[0].mxu0
  %v1153 = vadd.f32 %v1003, %v1152
  %v1154 = vpop.f32.mrb[0].mxu0
  %v1155 = vadd.f32 %v999, %v1154
  %v1156 = vpop.f32.mrb[0].mxu0
  %v1157 = vadd.f32 %v1003, %v1156
  %1158 = vmatprep.mubr.bf16.mxu0 0
  %1159 = vmatmul.mubr.bf16.gmra.mrb[0].mxu0 %v753
  %v1160 = vpop.f32.mrb[0].mxu0
  %v1161 = vadd.f32 %v999, %v1160
  %v1162 = vpop.f32.mrb[0].mxu0
  %v1163 = vadd.f32 %v1003, %v1162
  %v1164 = vpop.f32.mrb[0].mxu0
  %v1165 = vadd.f32 %v999, %v1164
  %v1166 = vpop.f32.mrb[0].mxu0
  %v1167 = vadd.f32 %v1003, %v1166
  %1168 = vmatprep.mubr.bf16.mxu0 0
  %1169 = vmatmul.mubr.bf16.gmra.mrb[0].mxu0 %v754
  %v1170 = vpop.f32.mrb[0].mxu0
  %v1171 = vadd.f32 %v999, %v1170
  %v1172 = vpop.f32.mrb[0].mxu0
  %v1173 = vadd.f32 %v1003, %v1172
  %v1174 = vpop.f32.mrb[0].mxu0
  %v1175 = vadd.f32 %v999, %v1174
  %v1176 = vpop.f32.mrb[0].mxu0
  %v1177 = vadd.f32 %v1003, %v1176
  %1178 = vmatprep.mubr.bf16.mxu0 0
  %1179 = vmatmul.mubr.bf16.gmra.mrb[0].mxu0 %v755
  %v1180 = vpop.f32.mrb[0].mxu0
  %v1181 = vadd.f32 %v999, %v1180
  %v1182 = vpop.f32.mrb[0].mxu0
  %v1183 = vadd.f32 %v1003, %v1182
  %v1184 = vpop.f32.mrb[0].mxu0
  %v1185 = vadd.f32 %v999, %v1184
  %v1186 = vpop.f32.mrb[0].mxu0
  %v1187 = vadd.f32 %v1003, %v1186
  %1188 = vmatprep.mubr.bf16.mxu0 0
  %1189 = vmatmul.mubr.bf16.gmra.mrb[0].mxu0 %v756
  %v1190 = vpop.f32.mrb[0].mxu0
  %v1191 = vadd.f32 %v999, %v1190
  %v1192 = vpop.f32.mrb[0].mxu0
  %v1193 = vadd.f32 %v1003, %v1192
  %v1194 = vpop.f32.mrb[0].mxu0
  %v1195 = vadd.f32 %v999, %v1194
  %v1196 = vpop.f32.mrb[0].mxu0
  %v1197 = vadd.f32 %v1003, %v1196
  %1198 = vdwg.mxu0
  %v1199 = vmul.f32 %v1121, %v1121
  %v1200 = vmul.f32 %v1123, %v1123
  %v1201 = vmul.f32 %v1125, %v1125
  %v1202 = vmul.f32 %v1127, %v1127
  %v1203 = vmul.f32 %v1131, %v1131
  %v1204 = vmul.f32 %v1133, %v1133
  %v1205 = vmul.f32 %v1135, %v1135
  %v1206 = vmul.f32 %v1137, %v1137
  %v1207 = vmul.f32 %v1141, %v1141
  %v1208 = vmul.f32 %v1143, %v1143
  %v1209 = vmul.f32 %v1145, %v1145
  %v1210 = vmul.f32 %v1147, %v1147
  %v1211 = vmul.f32 %v1151, %v1151
  %v1212 = vmul.f32 %v1153, %v1153
  %v1213 = vmul.f32 %v1155, %v1155
  %v1214 = vmul.f32 %v1157, %v1157
  %v1215 = vmul.f32 %v1161, %v1161
  %v1216 = vmul.f32 %v1163, %v1163
  %v1217 = vmul.f32 %v1165, %v1165
  %v1218 = vmul.f32 %v1167, %v1167
  %v1219 = vmul.f32 %v1171, %v1171
  %v1220 = vmul.f32 %v1173, %v1173
  %v1221 = vmul.f32 %v1175, %v1175
  %v1222 = vmul.f32 %v1177, %v1177
  %v1223 = vmul.f32 %v1181, %v1181
  %v1224 = vmul.f32 %v1183, %v1183
  %v1225 = vmul.f32 %v1185, %v1185
  %v1226 = vmul.f32 %v1187, %v1187
  %v1227 = vmul.f32 %v1191, %v1191
  %v1228 = vmul.f32 %v1193, %v1193
  %v1229 = vmul.f32 %v1195, %v1195
  %v1230 = vmul.f32 %v1197, %v1197
  %v1231 = vmul.f32 %v1121, %v1199
  %v1232 = vmul.f32 %v1123, %v1200
  %v1233 = vmul.f32 %v1125, %v1201
  %v1234 = vmul.f32 %v1127, %v1202
  %v1235 = vmul.f32 %v1131, %v1203
  %v1236 = vmul.f32 %v1133, %v1204
  %v1237 = vmul.f32 %v1135, %v1205
  %v1238 = vmul.f32 %v1137, %v1206
  %v1239 = vmul.f32 %v1141, %v1207
  %v1240 = vmul.f32 %v1143, %v1208
  %v1241 = vmul.f32 %v1145, %v1209
  %v1242 = vmul.f32 %v1147, %v1210
  %v1243 = vmul.f32 %v1151, %v1211
  %v1244 = vmul.f32 %v1153, %v1212
  %v1245 = vmul.f32 %v1155, %v1213
  %v1246 = vmul.f32 %v1157, %v1214
  %v1247 = vmul.f32 %v1161, %v1215
  %v1248 = vmul.f32 %v1163, %v1216
  %v1249 = vmul.f32 %v1165, %v1217
  %v1250 = vmul.f32 %v1167, %v1218
  %v1251 = vmul.f32 %v1171, %v1219
  %v1252 = vmul.f32 %v1173, %v1220
  %v1253 = vmul.f32 %v1175, %v1221
  %v1254 = vmul.f32 %v1177, %v1222
  %v1255 = vmul.f32 %v1181, %v1223
  %v1256 = vmul.f32 %v1183, %v1224
  %v1257 = vmul.f32 %v1185, %v1225
  %v1258 = vmul.f32 %v1187, %v1226
  %v1259 = vmul.f32 %v1191, %v1227
  %v1260 = vmul.f32 %v1193, %v1228
  %v1261 = vmul.f32 %v1195, %v1229
  %v1262 = vmul.f32 %v1197, %v1230
  %v1263 = vmul.f32 %v1231, 0.044715
  %v1264 = vmul.f32 %v1232, 0.044715
  %v1265 = vmul.f32 %v1233, 0.044715
  %v1266 = vmul.f32 %v1234, 0.044715
  %v1267 = vmul.f32 %v1235, 0.044715
  %v1268 = vmul.f32 %v1236, 0.044715
  %v1269 = vmul.f32 %v1237, 0.044715
  %v1270 = vmul.f32 %v1238, 0.044715
  %v1271 = vmul.f32 %v1239, 0.044715
  %v1272 = vmul.f32 %v1240, 0.044715
  %v1273 = vmul.f32 %v1241, 0.044715
  %v1274 = vmul.f32 %v1242, 0.044715
  %v1275 = vmul.f32 %v1243, 0.044715
  %v1276 = vmul.f32 %v1244, 0.044715
  %v1277 = vmul.f32 %v1245, 0.044715
  %v1278 = vmul.f32 %v1246, 0.044715
  %v1279 = vmul.f32 %v1247, 0.044715
  %v1280 = vmul.f32 %v1248, 0.044715
  %v1281 = vmul.f32 %v1249, 0.044715
  %v1282 = vmul.f32 %v1250, 0.044715
  %v1283 = vmul.f32 %v1251, 0.044715
  %v1284 = vmul.f32 %v1252, 0.044715
  %v1285 = vmul.f32 %v1253, 0.044715
  %v1286 = vmul.f32 %v1254, 0.044715
  %v1287 = vmul.f32 %v1255, 0.044715
  %v1288 = vmul.f32 %v1256, 0.044715
  %v1289 = vmul.f32 %v1257, 0.044715
  %v1290 = vmul.f32 %v1258, 0.044715
  %v1291 = vmul.f32 %v1259, 0.044715
  %v1292 = vmul.f32 %v1260, 0.044715
  %v1293 = vmul.f32 %v1261, 0.044715
  %v1294 = vmul.f32 %v1262, 0.044715
  %v1295 = vadd.f32 %v1121, %v1263
  %v1296 = vadd.f32 %v1123, %v1264
  %v1297 = vadd.f32 %v1125, %v1265
  %v1298 = vadd.f32 %v1127, %v1266
  %v1299 = vadd.f32 %v1131, %v1267
  %v1300 = vadd.f32 %v1133, %v1268
  %v1301 = vadd.f32 %v1135, %v1269
  %v1302 = vadd.f32 %v1137, %v1270
  %v1303 = vadd.f32 %v1141, %v1271
  %v1304 = vadd.f32 %v1143, %v1272
  %v1305 = vadd.f32 %v1145, %v1273
  %v1306 = vadd.f32 %v1147, %v1274
  %v1307 = vadd.f32 %v1151, %v1275
  %v1308 = vadd.f32 %v1153, %v1276
  %v1309 = vadd.f32 %v1155, %v1277
  %v1310 = vadd.f32 %v1157, %v1278
  %v1311 = vadd.f32 %v1161, %v1279
  %v1312 = vadd.f32 %v1163, %v1280
  %v1313 = vadd.f32 %v1165, %v1281
  %v1314 = vadd.f32 %v1167, %v1282
  %v1315 = vadd.f32 %v1171, %v1283
  %v1316 = vadd.f32 %v1173, %v1284
  %v1317 = vadd.f32 %v1175, %v1285
  %v1318 = vadd.f32 %v1177, %v1286
  %v1319 = vadd.f32 %v1181, %v1287
  %v1320 = vadd.f32 %v1183, %v1288
  %v1321 = vadd.f32 %v1185, %v1289
  %v1322 = vadd.f32 %v1187, %v1290
  %v1323 = vadd.f32 %v1191, %v1291
  %v1324 = vadd.f32 %v1193, %v1292
  %v1325 = vadd.f32 %v1195, %v1293
  %v1326 = vadd.f32 %v1197, %v1294
  %v1327 = vmul.f32 %v1295, 0.7978846
  %v1328 = vmul.f32 %v1296, 0.7978846
  %v1329 = vmul.f32 %v1297, 0.7978846
  %v1330 = vmul.f32 %v1298, 0.7978846
  %v1331 = vmul.f32 %v1299, 0.7978846
  %v1332 = vmul.f32 %v1300, 0.7978846
  %v1333 = vmul.f32 %v1301, 0.7978846
  %v1334 = vmul.f32 %v1302, 0.7978846
  %v1335 = vmul.f32 %v1303, 0.7978846
  %v1336 = vmul.f32 %v1304, 0.7978846
  %v1337 = vmul.f32 %v1305, 0.7978846
  %v1338 = vmul.f32 %v1306, 0.7978846
  %v1339 = vmul.f32 %v1307, 0.7978846
  %v1340 = vmul.f32 %v1308, 0.7978846
  %v1341 = vmul.f32 %v1309, 0.7978846
  %v1342 = vmul.f32 %v1310, 0.7978846
  %v1343 = vmul.f32 %v1311, 0.7978846
  %v1344 = vmul.f32 %v1312, 0.7978846
  %v1345 = vmul.f32 %v1313, 0.7978846
  %v1346 = vmul.f32 %v1314, 0.7978846
  %v1347 = vmul.f32 %v1315, 0.7978846
  %v1348 = vmul.f32 %v1316, 0.7978846
  %v1349 = vmul.f32 %v1317, 0.7978846
  %v1350 = vmul.f32 %v1318, 0.7978846
  %v1351 = vmul.f32 %v1319, 0.7978846
  %v1352 = vmul.f32 %v1320, 0.7978846
  %v1353 = vmul.f32 %v1321, 0.7978846
  %v1354 = vmul.f32 %v1322, 0.7978846
  %v1355 = vmul.f32 %v1323, 0.7978846
  %v1356 = vmul.f32 %v1324, 0.7978846
  %v1357 = vmul.f32 %v1325, 0.7978846
  %v1358 = vmul.f32 %v1326, 0.7978846
  %v1359 = vtanh.pop %v1327
  %v1360 = vtanh.pop %v1328
  %v1361 = vtanh.pop %v1329
  %v1362 = vtanh.pop %v1330
  %v1363 = vtanh.pop %v1331
  %v1364 = vtanh.pop %v1332
  %v1365 = vtanh.pop %v1333
  %v1366 = vtanh.pop %v1334
  %v1367 = vtanh.pop %v1335
  %v1368 = vtanh.pop %v1336
  %v1369 = vtanh.pop %v1337
  %v1370 = vtanh.pop %v1338
  %v1371 = vtanh.pop %v1339
  %v1372 = vtanh.pop %v1340
  %v1373 = vtanh.pop %v1341
  %v1374 = vtanh.pop %v1342
  %v1375 = vtanh.pop %v1343
  %v1376 = vtanh.pop %v1344
  %v1377 = vtanh.pop %v1345
  %v1378 = vtanh.pop %v1346
  %v1379 = vtanh.pop %v1347
  %v1380 = vtanh.pop %v1348
  %v1381 = vtanh.pop %v1349
  %v1382 = vtanh.pop %v1350
  %v1383 = vtanh.pop %v1351
  %v1384 = vtanh.pop %v1352
  %v1385 = vtanh.pop %v1353
  %v1386 = vtanh.pop %v1354
  %v1387 = vtanh.pop %v1355
  %v1388 = vtanh.pop %v1356
  %v1389 = vtanh.pop %v1357
  %v1390 = vtanh.pop %v1358
  %v1391 = vadd.f32 %v1359, 1.0
  %v1392 = vadd.f32 %v1360, 1.0
  %v1393 = vadd.f32 %v1361, 1.0
  %v1394 = vadd.f32 %v1362, 1.0
  %v1395 = vadd.f32 %v1363, 1.0
  %v1396 = vadd.f32 %v1364, 1.0
  %v1397 = vadd.f32 %v1365, 1.0
  %v1398 = vadd.f32 %v1366, 1.0
  %v1399 = vadd.f32 %v1367, 1.0
  %v1400 = vadd.f32 %v1368, 1.0
  %v1401 = vadd.f32 %v1369, 1.0
  %v1402 = vadd.f32 %v1370, 1.0
  %v1403 = vadd.f32 %v1371, 1.0
  %v1404 = vadd.f32 %v1372, 1.0
  %v1405 = vadd.f32 %v1373, 1.0
  %v1406 = vadd.f32 %v1374, 1.0
  %v1407 = vadd.f32 %v1375, 1.0
  %v1408 = vadd.f32 %v1376, 1.0
  %v1409 = vadd.f32 %v1377, 1.0
  %v1410 = vadd.f32 %v1378, 1.0
  %v1411 = vadd.f32 %v1379, 1.0
  %v1412 = vadd.f32 %v1380, 1.0
  %v1413 = vadd.f32 %v1381, 1.0
  %v1414 = vadd.f32 %v1382, 1.0
  %v1415 = vadd.f32 %v1383, 1.0
  %v1416 = vadd.f32 %v1384, 1.0
  %v1417 = vadd.f32 %v1385, 1.0
  %v1418 = vadd.f32 %v1386, 1.0
  %v1419 = vadd.f32 %v1387, 1.0
  %v1420 = vadd.f32 %v1388, 1.0
  %v1421 = vadd.f32 %v1389, 1.0
  %v1422 = vadd.f32 %v1390, 1.0
  %v1423 = vmul.f32 %v1391, 0.5
  %v1424 = vmul.f32 %v1392, 0.5
  %v1425 = vmul.f32 %v1393, 0.5
  %v1426 = vmul.f32 %v1394, 0.5
  %v1427 = vmul.f32 %v1395, 0.5
  %v1428 = vmul.f32 %v1396, 0.5
  %v1429 = vmul.f32 %v1397, 0.5
  %v1430 = vmul.f32 %v1398, 0.5
  %v1431 = vmul.f32 %v1399, 0.5
  %v1432 = vmul.f32 %v1400, 0.5
  %v1433 = vmul.f32 %v1401, 0.5
  %v1434 = vmul.f32 %v1402, 0.5
  %v1435 = vmul.f32 %v1403, 0.5
  %v1436 = vmul.f32 %v1404, 0.5
  %v1437 = vmul.f32 %v1405, 0.5
  %v1438 = vmul.f32 %v1406, 0.5
  %v1439 = vmul.f32 %v1407, 0.5
  %v1440 = vmul.f32 %v1408, 0.5
  %v1441 = vmul.f32 %v1409, 0.5
  %v1442 = vmul.f32 %v1410, 0.5
  %v1443 = vmul.f32 %v1411, 0.5
  %v1444 = vmul.f32 %v1412, 0.5
  %v1445 = vmul.f32 %v1413, 0.5
  %v1446 = vmul.f32 %v1414, 0.5
  %v1447 = vmul.f32 %v1415, 0.5
  %v1448 = vmul.f32 %v1416, 0.5
  %v1449 = vmul.f32 %v1417, 0.5
  %v1450 = vmul.f32 %v1418, 0.5
  %v1451 = vmul.f32 %v1419, 0.5
  %v1452 = vmul.f32 %v1420, 0.5
  %v1453 = vmul.f32 %v1421, 0.5
  %v1454 = vmul.f32 %v1422, 0.5
  %v1455 = vmul.f32 %v1121, %v1423
  %v1456 = vmul.f32 %v1123, %v1424
  %v1457 = vmul.f32 %v1125, %v1425
  %v1458 = vmul.f32 %v1127, %v1426
  %v1459 = vmul.f32 %v1131, %v1427
  %v1460 = vmul.f32 %v1133, %v1428
  %v1461 = vmul.f32 %v1135, %v1429
  %v1462 = vmul.f32 %v1137, %v1430
  %v1463 = vmul.f32 %v1141, %v1431
  %v1464 = vmul.f32 %v1143, %v1432
  %v1465 = vmul.f32 %v1145, %v1433
  %v1466 = vmul.f32 %v1147, %v1434
  %v1467 = vmul.f32 %v1151, %v1435
  %v1468 = vmul.f32 %v1153, %v1436
  %v1469 = vmul.f32 %v1155, %v1437
  %v1470 = vmul.f32 %v1157, %v1438
  %v1471 = vmul.f32 %v1161, %v1439
  %v1472 = vmul.f32 %v1163, %v1440
  %v1473 = vmul.f32 %v1165, %v1441
  %v1474 = vmul.f32 %v1167, %v1442
  %v1475 = vmul.f32 %v1171, %v1443
  %v1476 = vmul.f32 %v1173, %v1444
  %v1477 = vmul.f32 %v1175, %v1445
  %v1478 = vmul.f32 %v1177, %v1446
  %v1479 = vmul.f32 %v1181, %v1447
  %v1480 = vmul.f32 %v1183, %v1448
  %v1481 = vmul.f32 %v1185, %v1449
  %v1482 = vmul.f32 %v1187, %v1450
  %v1483 = vmul.f32 %v1191, %v1451
  %v1484 = vmul.f32 %v1193, %v1452
  %v1485 = vmul.f32 %v1195, %v1453
  %v1486 = vmul.f32 %v1197, %v1454
  %v1487 = vld [vmem:[%s4] sm:$0x3]
  %v1489 = vlaneseq
  %v1490 = vshrl.u32 %v1489, 7
  %v1491 = vsub.s32 0, %v1490
  %v1492 = vrot.slane %v1487, %v1491
  %v1493 = vlaneseq
  %v1494 = vshrl.u32 %v1493, 7
  %v1495 = vsub.s32 1, %v1494
  %v1496 = vrot.slane %v1487, %v1495
  %v1499 = vmul.f32 %v1492, %v900
  %v1500 = vmul.f32 %v1496, %v902
  %v1501 = vmul.f32 %v1492, %v904
  %v1502 = vmul.f32 %v1496, %v906
  %v1503 = vmul.f32 %v1492, %v910
  %v1504 = vmul.f32 %v1496, %v912
  %v1505 = vmul.f32 %v1492, %v914
  %v1506 = vmul.f32 %v1496, %v916
  %v1507 = vmul.f32 %v1492, %v920
  %v1508 = vmul.f32 %v1496, %v922
  %v1509 = vmul.f32 %v1492, %v924
  %v1510 = vmul.f32 %v1496, %v926
  %v1511 = vmul.f32 %v1492, %v930
  %v1512 = vmul.f32 %v1496, %v932
  %v1513 = vmul.f32 %v1492, %v934
  %v1514 = vmul.f32 %v1496, %v936
  %v1515 = vmul.f32 %v1492, %v940
  %v1516 = vmul.f32 %v1496, %v942
  %v1517 = vmul.f32 %v1492, %v944
  %v1518 = vmul.f32 %v1496, %v946
  %v1519 = vmul.f32 %v1492, %v950
  %v1520 = vmul.f32 %v1496, %v952
  %v1521 = vmul.f32 %v1492, %v954
  %v1522 = vmul.f32 %v1496, %v956
  %v1523 = vmul.f32 %v1492, %v960
  %v1524 = vmul.f32 %v1496, %v962
  %v1525 = vmul.f32 %v1492, %v964
  %v1526 = vmul.f32 %v1496, %v966
  %v1527 = vmul.f32 %v1492, %v970
  %v1528 = vmul.f32 %v1496, %v972
  %v1529 = vmul.f32 %v1492, %v974
  %v1530 = vmul.f32 %v1496, %v976
  %v1531 = vsub.f32 1.0, %v1487
  %v1533 = vlaneseq
  %v1534 = vshrl.u32 %v1533, 7
  %v1535 = vsub.s32 0, %v1534
  %v1536 = vrot.slane %v1531, %v1535
  %v1537 = vlaneseq
  %v1538 = vshrl.u32 %v1537, 7
  %v1539 = vsub.s32 1, %v1538
  %v1540 = vrot.slane %v1531, %v1539
  %v1543 = vadd.f32 %v1499, %v1536
  %v1544 = vadd.f32 %v1500, %v1540
  %v1545 = vadd.f32 %v1501, %v1536
  %v1546 = vadd.f32 %v1502, %v1540
  %v1547 = vadd.f32 %v1503, %v1536
  %v1548 = vadd.f32 %v1504, %v1540
  %v1549 = vadd.f32 %v1505, %v1536
  %v1550 = vadd.f32 %v1506, %v1540
  %v1551 = vadd.f32 %v1507, %v1536
  %v1552 = vadd.f32 %v1508, %v1540
  %v1553 = vadd.f32 %v1509, %v1536
  %v1554 = vadd.f32 %v1510, %v1540
  %v1555 = vadd.f32 %v1511, %v1536
  %v1556 = vadd.f32 %v1512, %v1540
  %v1557 = vadd.f32 %v1513, %v1536
  %v1558 = vadd.f32 %v1514, %v1540
  %v1559 = vadd.f32 %v1515, %v1536
  %v1560 = vadd.f32 %v1516, %v1540
  %v1561 = vadd.f32 %v1517, %v1536
  %v1562 = vadd.f32 %v1518, %v1540
  %v1563 = vadd.f32 %v1519, %v1536
  %v1564 = vadd.f32 %v1520, %v1540
  %v1565 = vadd.f32 %v1521, %v1536
  %v1566 = vadd.f32 %v1522, %v1540
  %v1567 = vadd.f32 %v1523, %v1536
  %v1568 = vadd.f32 %v1524, %v1540
  %v1569 = vadd.f32 %v1525, %v1536
  %v1570 = vadd.f32 %v1526, %v1540
  %v1571 = vadd.f32 %v1527, %v1536
  %v1572 = vadd.f32 %v1528, %v1540
  %v1573 = vadd.f32 %v1529, %v1536
  %v1574 = vadd.f32 %v1530, %v1540
  %v1575 = vmul.f32 %v1455, %v1543
  %v1576 = vmul.f32 %v1456, %v1544
  %v1577 = vmul.f32 %v1457, %v1545
  %v1578 = vmul.f32 %v1458, %v1546
  %v1579 = vmul.f32 %v1459, %v1547
  %v1580 = vmul.f32 %v1460, %v1548
  %v1581 = vmul.f32 %v1461, %v1549
  %v1582 = vmul.f32 %v1462, %v1550
  %v1583 = vmul.f32 %v1463, %v1551
  %v1584 = vmul.f32 %v1464, %v1552
  %v1585 = vmul.f32 %v1465, %v1553
  %v1586 = vmul.f32 %v1466, %v1554
  %v1587 = vmul.f32 %v1467, %v1555
  %v1588 = vmul.f32 %v1468, %v1556
  %v1589 = vmul.f32 %v1469, %v1557
  %v1590 = vmul.f32 %v1470, %v1558
  %v1591 = vmul.f32 %v1471, %v1559
  %v1592 = vmul.f32 %v1472, %v1560
  %v1593 = vmul.f32 %v1473, %v1561
  %v1594 = vmul.f32 %v1474, %v1562
  %v1595 = vmul.f32 %v1475, %v1563
  %v1596 = vmul.f32 %v1476, %v1564
  %v1597 = vmul.f32 %v1477, %v1565
  %v1598 = vmul.f32 %v1478, %v1566
  %v1599 = vmul.f32 %v1479, %v1567
  %v1600 = vmul.f32 %v1480, %v1568
  %v1601 = vmul.f32 %v1481, %v1569
  %v1602 = vmul.f32 %v1482, %v1570
  %v1603 = vmul.f32 %v1483, %v1571
  %v1604 = vmul.f32 %v1484, %v1572
  %v1605 = vmul.f32 %v1485, %v1573
  %v1606 = vmul.f32 %v1486, %v1574
  %v1607 = vpack.c.bf16 %v1577, %v1575
  %v1608 = vpack.c.bf16 %v1578, %v1576
  %v1609 = vpack.c.bf16 %v1581, %v1579
  %v1610 = vpack.c.bf16 %v1582, %v1580
  %v1611 = vpack.c.bf16 %v1585, %v1583
  %v1612 = vpack.c.bf16 %v1586, %v1584
  %v1613 = vpack.c.bf16 %v1589, %v1587
  %v1614 = vpack.c.bf16 %v1590, %v1588
  %v1615 = vpack.c.bf16 %v1593, %v1591
  %v1616 = vpack.c.bf16 %v1594, %v1592
  %v1617 = vpack.c.bf16 %v1597, %v1595
  %v1618 = vpack.c.bf16 %v1598, %v1596
  %v1619 = vpack.c.bf16 %v1601, %v1599
  %v1620 = vpack.c.bf16 %v1602, %v1600
  %v1621 = vpack.c.bf16 %v1605, %v1603
  %v1622 = vpack.c.bf16 %v1606, %v1604
  %v1623 = vld [vmem:[%s11] sm:$0xf]
  %v1624 = vld [vmem:[%s11 + $0x4] sm:$0xf]
  %v1625 = vld [vmem:[%s11 + $0x8] sm:$0xf]
  %v1626 = vld [vmem:[%s11 + $0xc] sm:$0xf]
  %v1627 = vld [vmem:[%s11 + $0x10] sm:$0xf]
  %v1628 = vld [vmem:[%s11 + $0x14] sm:$0xf]
  %v1629 = vld [vmem:[%s11 + $0x18] sm:$0xf]
  %v1630 = vld [vmem:[%s11 + $0x1c] sm:$0xf]
  %v1631 = vld [vmem:[%s11 + $0x20] sm:$0xf]
  %v1632 = vld [vmem:[%s11 + $0x24] sm:$0xf]
  %v1633 = vld [vmem:[%s11 + $0x28] sm:$0xf]
  %v1634 = vld [vmem:[%s11 + $0x2c] sm:$0xf]
  %v1635 = vld [vmem:[%s11 + $0x30] sm:$0xf]
  %v1636 = vld [vmem:[%s11 + $0x34] sm:$0xf]
  %v1637 = vld [vmem:[%s11 + $0x38] sm:$0xf]
  %v1638 = vld [vmem:[%s11 + $0x3c] sm:$0xf]
  %v1639 = vld [vmem:[%s11 + $0x40] sm:$0xf]
  %v1640 = vld [vmem:[%s11 + $0x44] sm:$0xf]
  %v1641 = vld [vmem:[%s11 + $0x48] sm:$0xf]
  %v1642 = vld [vmem:[%s11 + $0x4c] sm:$0xf]
  %v1643 = vld [vmem:[%s11 + $0x50] sm:$0xf]
  %v1644 = vld [vmem:[%s11 + $0x54] sm:$0xf]
  %v1645 = vld [vmem:[%s11 + $0x58] sm:$0xf]
  %v1646 = vld [vmem:[%s11 + $0x5c] sm:$0xf]
  %v1647 = vld [vmem:[%s11 + $0x60] sm:$0xf]
  %v1648 = vld [vmem:[%s11 + $0x64] sm:$0xf]
  %v1649 = vld [vmem:[%s11 + $0x68] sm:$0xf]
  %v1650 = vld [vmem:[%s11 + $0x6c] sm:$0xf]
  %v1651 = vld [vmem:[%s11 + $0x70] sm:$0xf]
  %v1652 = vld [vmem:[%s11 + $0x74] sm:$0xf]
  %v1653 = vld [vmem:[%s11 + $0x78] sm:$0xf]
  %v1654 = vld [vmem:[%s11 + $0x7c] sm:$0xf]
  %v1655 = vld [vmem:[%s12] sm:$0x1]
  %v1657 = vlaneseq
  %v1658 = vshrl.u32 %v1657, 7
  %v1659 = vsub.s32 0, %v1658
  %v1660 = vrot.slane %v1655, %v1659
  %v1694 = vunpack.c.l.b16 %v1623
  %v1695 = vunpack.c.l.b16 %v1624
  %v1696 = vunpack.c.l.b16 %v1625
  %v1697 = vunpack.c.l.b16 %v1626
  %v1698 = vunpack.c.l.b16 %v1627
  %v1699 = vunpack.c.l.b16 %v1628
  %v1700 = vunpack.c.l.b16 %v1629
  %v1701 = vunpack.c.l.b16 %v1630
  %v1702 = vunpack.c.l.b16 %v1631
  %v1703 = vunpack.c.l.b16 %v1632
  %v1704 = vunpack.c.l.b16 %v1633
  %v1705 = vunpack.c.l.b16 %v1634
  %v1706 = vunpack.c.l.b16 %v1635
  %v1707 = vunpack.c.l.b16 %v1636
  %v1708 = vunpack.c.l.b16 %v1637
  %v1709 = vunpack.c.l.b16 %v1638
  %v1710 = vunpack.c.l.b16 %v1639
  %v1711 = vunpack.c.l.b16 %v1640
  %v1712 = vunpack.c.l.b16 %v1641
  %v1713 = vunpack.c.l.b16 %v1642
  %v1714 = vunpack.c.l.b16 %v1643
  %v1715 = vunpack.c.l.b16 %v1644
  %v1716 = vunpack.c.l.b16 %v1645
  %v1717 = vunpack.c.l.b16 %v1646
  %v1718 = vunpack.c.l.b16 %v1647
  %v1719 = vunpack.c.l.b16 %v1648
  %v1720 = vunpack.c.l.b16 %v1649
  %v1721 = vunpack.c.l.b16 %v1650
  %v1722 = vunpack.c.l.b16 %v1651
  %v1723 = vunpack.c.l.b16 %v1652
  %v1724 = vunpack.c.l.b16 %v1653
  %v1725 = vunpack.c.l.b16 %v1654
  %v1726 = vpack.c.b16 %v1695, %v1694
  %v1727 = vpack.c.b16 %v1697, %v1696
  %v1728 = vpack.c.b16 %v1699, %v1698
  %v1729 = vpack.c.b16 %v1701, %v1700
  %v1730 = vpack.c.b16 %v1703, %v1702
  %v1731 = vpack.c.b16 %v1705, %v1704
  %v1732 = vpack.c.b16 %v1707, %v1706
  %v1733 = vpack.c.b16 %v1709, %v1708
  %v1734 = vpack.c.b16 %v1711, %v1710
  %v1735 = vpack.c.b16 %v1713, %v1712
  %v1736 = vpack.c.b16 %v1715, %v1714
  %v1737 = vpack.c.b16 %v1717, %v1716
  %v1738 = vpack.c.b16 %v1719, %v1718
  %v1739 = vpack.c.b16 %v1721, %v1720
  %v1740 = vpack.c.b16 %v1723, %v1722
  %v1741 = vpack.c.b16 %v1725, %v1724
  %1758 = vmatprep.subr.bf16.mxu0 0
  %1759 = vmatpush1.bf16.msra.mxu0 %v1726
  %1760 = vmatprep.subr.bf16.mxu0 0
  %1761 = vmatpush1.bf16.msra.mxu0 %v1727
  %1762 = vmatprep.subr.bf16.mxu0 0
  %1763 = vmatpush1.bf16.msra.mxu0 %v1728
  %1764 = vmatprep.subr.bf16.mxu0 0
  %1765 = vmatpush1.bf16.msra.mxu0 %v1729
  %1766 = vmatprep.subr.bf16.mxu0 0
  %1767 = vmatpush1.bf16.msra.mxu0 %v1730
  %1768 = vmatprep.subr.bf16.mxu0 0
  %1769 = vmatpush1.bf16.msra.mxu0 %v1731
  %1770 = vmatprep.subr.bf16.mxu0 0
  %1771 = vmatpush1.bf16.msra.mxu0 %v1732
  %1772 = vmatprep.subr.bf16.mxu0 0
  %1773 = vmatpush1.bf16.msra.mxu0 %v1733
  %1774 = vmatprep.subr.bf16.mxu0 0
  %1775 = vmatpush1.bf16.msra.mxu0 %v1734
  %1776 = vmatprep.subr.bf16.mxu0 0
  %1777 = vmatpush1.bf16.msra.mxu0 %v1735
  %1778 = vmatprep.subr.bf16.mxu0 0
  %1779 = vmatpush1.bf16.msra.mxu0 %v1736
  %1780 = vmatprep.subr.bf16.mxu0 0
  %1781 = vmatpush1.bf16.msra.mxu0 %v1737
  %1782 = vmatprep.subr.bf16.mxu0 0
  %1783 = vmatpush1.bf16.msra.mxu0 %v1738
  %1784 = vmatprep.subr.bf16.mxu0 0
  %1785 = vmatpush1.bf16.msra.mxu0 %v1739
  %1786 = vmatprep.subr.bf16.mxu0 0
  %1787 = vmatpush1.bf16.msra.mxu0 %v1740
  %1788 = vmatprep.subr.bf16.mxu0 0
  %1789 = vmatpush1.bf16.msra.mxu0 %v1741
  %1790 = vmatprep.mubr.bf16.mxu0 %v1608
  %1791 = vmatmul.mubr.bf16.gmra.mrb[0].mxu0 %v1607
  %v1792 = vpop.f32.mrb[0].mxu0
  %v1793 = vadd.f32 %v1660, %v1792
  %v1794 = vpop.f32.mrb[0].mxu0
  %v1795 = vpop.f32.mrb[0].mxu0
  %v1796 = vadd.f32 %v1660, %v1795
  %v1797 = vpop.f32.mrb[0].mxu0
  %1798 = vmatprep.mubr.bf16.mxu0 %v1610
  %1799 = vmatmul.mubr.bf16.gmra.mrb[0].mxu0 %v1609
  %v1800 = vpop.f32.mrb[0].mxu0
  %v1801 = vadd.f32 %v1660, %v1800
  %v1802 = vpop.f32.mrb[0].mxu0
  %v1803 = vpop.f32.mrb[0].mxu0
  %v1804 = vadd.f32 %v1660, %v1803
  %v1805 = vpop.f32.mrb[0].mxu0
  %1806 = vmatprep.mubr.bf16.mxu0 %v1612
  %1807 = vmatmul.mubr.bf16.gmra.mrb[0].mxu0 %v1611
  %v1808 = vpop.f32.mrb[0].mxu0
  %v1809 = vadd.f32 %v1660, %v1808
  %v1810 = vpop.f32.mrb[0].mxu0
  %v1811 = vpop.f32.mrb[0].mxu0
  %v1812 = vadd.f32 %v1660, %v1811
  %v1813 = vpop.f32.mrb[0].mxu0
  %1814 = vmatprep.mubr.bf16.mxu0 %v1614
  %1815 = vmatmul.mubr.bf16.gmra.mrb[0].mxu0 %v1613
  %v1816 = vpop.f32.mrb[0].mxu0
  %v1817 = vadd.f32 %v1660, %v1816
  %v1818 = vpop.f32.mrb[0].mxu0
  %v1819 = vpop.f32.mrb[0].mxu0
  %v1820 = vadd.f32 %v1660, %v1819
  %v1821 = vpop.f32.mrb[0].mxu0
  %1822 = vmatprep.mubr.bf16.mxu0 %v1616
  %1823 = vmatmul.mubr.bf16.gmra.mrb[0].mxu0 %v1615
  %v1824 = vpop.f32.mrb[0].mxu0
  %v1825 = vadd.f32 %v1660, %v1824
  %v1826 = vpop.f32.mrb[0].mxu0
  %v1827 = vpop.f32.mrb[0].mxu0
  %v1828 = vadd.f32 %v1660, %v1827
  %v1829 = vpop.f32.mrb[0].mxu0
  %1830 = vmatprep.mubr.bf16.mxu0 %v1618
  %1831 = vmatmul.mubr.bf16.gmra.mrb[0].mxu0 %v1617
  %v1832 = vpop.f32.mrb[0].mxu0
  %v1833 = vadd.f32 %v1660, %v1832
  %v1834 = vpop.f32.mrb[0].mxu0
  %v1835 = vpop.f32.mrb[0].mxu0
  %v1836 = vadd.f32 %v1660, %v1835
  %v1837 = vpop.f32.mrb[0].mxu0
  %1838 = vmatprep.mubr.bf16.mxu0 %v1620
  %1839 = vmatmul.mubr.bf16.gmra.mrb[0].mxu0 %v1619
  %v1840 = vpop.f32.mrb[0].mxu0
  %v1841 = vadd.f32 %v1660, %v1840
  %v1842 = vpop.f32.mrb[0].mxu0
  %v1843 = vpop.f32.mrb[0].mxu0
  %v1844 = vadd.f32 %v1660, %v1843
  %v1845 = vpop.f32.mrb[0].mxu0
  %1846 = vmatprep.mubr.bf16.mxu0 %v1622
  %1847 = vmatmul.mubr.bf16.gmra.mrb[0].mxu0 %v1621
  %v1848 = vpop.f32.mrb[0].mxu0
  %v1849 = vadd.f32 %v1660, %v1848
  %v1850 = vpop.f32.mrb[0].mxu0
  %v1851 = vpop.f32.mrb[0].mxu0
  %v1852 = vadd.f32 %v1660, %v1851
  %v1853 = vpop.f32.mrb[0].mxu0
  %1854 = vdwg.mxu0
  %v1855 = vadd.f32 %v333, %v1793
  %v1856 = vadd.f32 %v334, %v1796
  %v1857 = vadd.f32 %v335, %v1801
  %v1858 = vadd.f32 %v336, %v1804
  %v1859 = vadd.f32 %v337, %v1809
  %v1860 = vadd.f32 %v338, %v1812
  %v1861 = vadd.f32 %v339, %v1817
  %v1862 = vadd.f32 %v340, %v1820
  %v1863 = vadd.f32 %v341, %v1825
  %v1864 = vadd.f32 %v342, %v1828
  %v1865 = vadd.f32 %v343, %v1833
  %v1866 = vadd.f32 %v344, %v1836
  %v1867 = vadd.f32 %v345, %v1841
  %v1868 = vadd.f32 %v346, %v1844
  %v1869 = vadd.f32 %v347, %v1849
  %v1870 = vadd.f32 %v348, %v1852
  %v1871 = vpack.c.bf16 %v1856, %v1855
  %v1872 = vpack.c.bf16 %v1858, %v1857
  %v1873 = vpack.c.bf16 %v1860, %v1859
  %v1874 = vpack.c.bf16 %v1862, %v1861
  %v1875 = vpack.c.bf16 %v1864, %v1863
  %v1876 = vpack.c.bf16 %v1866, %v1865
  %v1877 = vpack.c.bf16 %v1868, %v1867
  %v1878 = vpack.c.bf16 %v1870, %v1869
  %v1887 = vunpack.c.l.b16 %v1871
  %v1888 = vunpack.c.h.b16 %v1871
  %v1889 = vunpack.c.l.b16 %v1872
  %v1890 = vunpack.c.h.b16 %v1872
  %v1891 = vunpack.c.l.b16 %v1873
  %v1892 = vunpack.c.h.b16 %v1873
  %v1893 = vunpack.c.l.b16 %v1874
  %v1894 = vunpack.c.h.b16 %v1874
  %v1895 = vunpack.c.l.b16 %v1875
  %v1896 = vunpack.c.h.b16 %v1875
  %v1897 = vunpack.c.l.b16 %v1876
  %v1898 = vunpack.c.h.b16 %v1876
  %v1899 = vunpack.c.l.b16 %v1877
  %v1900 = vunpack.c.h.b16 %v1877
  %v1901 = vunpack.c.l.b16 %v1878
  %v1902 = vunpack.c.h.b16 %v1878
  %v1903 = vpack.c.b16 %v1887, %v1887
  %v1904 = vpack.c.b16 %v1888, %v1888
  %v1905 = vpack.c.b16 %v1889, %v1889
  %v1906 = vpack.c.b16 %v1890, %v1890
  %v1907 = vpack.c.b16 %v1891, %v1891
  %v1908 = vpack.c.b16 %v1892, %v1892
  %v1909 = vpack.c.b16 %v1893, %v1893
  %v1910 = vpack.c.b16 %v1894, %v1894
  %v1911 = vpack.c.b16 %v1895, %v1895
  %v1912 = vpack.c.b16 %v1896, %v1896
  %v1913 = vpack.c.b16 %v1897, %v1897
  %v1914 = vpack.c.b16 %v1898, %v1898
  %v1915 = vpack.c.b16 %v1899, %v1899
  %v1916 = vpack.c.b16 %v1900, %v1900
  %v1917 = vpack.c.b16 %v1901, %v1901
  %v1918 = vpack.c.b16 %v1902, %v1902
  %1935 = vst [vmem:[%s15] sm:$0xf] %v1903
  %1936 = vst [vmem:[%s15 + $0x4] sm:$0xf] %v1904
  %1937 = vst [vmem:[%s15 + $0x8] sm:$0xf] %v1905
  %1938 = vst [vmem:[%s15 + $0xc] sm:$0xf] %v1906
  %1939 = vst [vmem:[%s15 + $0x10] sm:$0xf] %v1907
  %1940 = vst [vmem:[%s15 + $0x14] sm:$0xf] %v1908
  %1941 = vst [vmem:[%s15 + $0x18] sm:$0xf] %v1909
  %1942 = vst [vmem:[%s15 + $0x1c] sm:$0xf] %v1910
  %1943 = vst [vmem:[%s15 + $0x20] sm:$0xf] %v1911
  %1944 = vst [vmem:[%s15 + $0x24] sm:$0xf] %v1912
  %1945 = vst [vmem:[%s15 + $0x28] sm:$0xf] %v1913
  %1946 = vst [vmem:[%s15 + $0x2c] sm:$0xf] %v1914
  %1947 = vst [vmem:[%s15 + $0x30] sm:$0xf] %v1915
  %1948 = vst [vmem:[%s15 + $0x34] sm:$0xf] %v1916
  %1949 = vst [vmem:[%s15 + $0x38] sm:$0xf] %v1917
  %1950 = vst [vmem:[%s15 + $0x3c] sm:$0xf] %v1918
  %v1951 = vld [vmem:[%s2] sm:$0x1]
  %v1952 = vld [vmem:[%s3] sm:$0x1]
  %v1953 = vmul.f32 %v1855, %v1855
  %v1954 = vmul.f32 %v1856, %v1856
  %v1955 = vmul.f32 %v1857, %v1857
  %v1956 = vmul.f32 %v1858, %v1858
  %v1957 = vmul.f32 %v1859, %v1859
  %v1958 = vmul.f32 %v1860, %v1860
  %v1959 = vmul.f32 %v1861, %v1861
  %v1960 = vmul.f32 %v1862, %v1862
  %v1961 = vmul.f32 %v1863, %v1863
  %v1962 = vmul.f32 %v1864, %v1864
  %v1963 = vmul.f32 %v1865, %v1865
  %v1964 = vmul.f32 %v1866, %v1866
  %v1965 = vmul.f32 %v1867, %v1867
  %v1966 = vmul.f32 %v1868, %v1868
  %v1967 = vmul.f32 %v1869, %v1869
  %v1968 = vmul.f32 %v1870, %v1870
  %v1970 = vlaneseq
  %v1971 = vshrl.u32 %v1970, 7
  %v1972 = vsub.s32 0, %v1971
  %v1973 = vrot.slane %v1951, %v1972
  %v1975 = vmul.f32 %v1953, %v1973
  %v1976 = vmul.f32 %v1954, %v1973
  %v1977 = vmul.f32 %v1955, %v1973
  %v1978 = vmul.f32 %v1956, %v1973
  %v1979 = vmul.f32 %v1957, %v1973
  %v1980 = vmul.f32 %v1958, %v1973
  %v1981 = vmul.f32 %v1959, %v1973
  %v1982 = vmul.f32 %v1960, %v1973
  %v1983 = vmul.f32 %v1961, %v1973
  %v1984 = vmul.f32 %v1962, %v1973
  %v1985 = vmul.f32 %v1963, %v1973
  %v1986 = vmul.f32 %v1964, %v1973
  %v1987 = vmul.f32 %v1965, %v1973
  %v1988 = vmul.f32 %v1966, %v1973
  %v1989 = vmul.f32 %v1967, %v1973
  %v1990 = vmul.f32 %v1968, %v1973
  %1991 = vadd.xlane.f32.xlu0 %v1975
  %v1992 = vpop.xlane.xlu0 %1991
  %1993 = vadd.xlane.f32.xlu0 %v1976
  %v1994 = vpop.xlane.xlu0 %1993
  %1995 = vadd.xlane.f32.xlu0 %v1977
  %v1996 = vpop.xlane.xlu0 %1995
  %1997 = vadd.xlane.f32.xlu0 %v1978
  %v1998 = vpop.xlane.xlu0 %1997
  %1999 = vadd.xlane.f32.xlu0 %v1979
  %v2000 = vpop.xlane.xlu0 %1999
  %2001 = vadd.xlane.f32.xlu0 %v1980
  %v2002 = vpop.xlane.xlu0 %2001
  %2003 = vadd.xlane.f32.xlu0 %v1981
  %v2004 = vpop.xlane.xlu0 %2003
  %2005 = vadd.xlane.f32.xlu0 %v1982
  %v2006 = vpop.xlane.xlu0 %2005
  %2007 = vadd.xlane.f32.xlu0 %v1983
  %v2008 = vpop.xlane.xlu0 %2007
  %2009 = vadd.xlane.f32.xlu0 %v1984
  %v2010 = vpop.xlane.xlu0 %2009
  %2011 = vadd.xlane.f32.xlu0 %v1985
  %v2012 = vpop.xlane.xlu0 %2011
  %2013 = vadd.xlane.f32.xlu0 %v1986
  %v2014 = vpop.xlane.xlu0 %2013
  %2015 = vadd.xlane.f32.xlu0 %v1987
  %v2016 = vpop.xlane.xlu0 %2015
  %2017 = vadd.xlane.f32.xlu0 %v1988
  %v2018 = vpop.xlane.xlu0 %2017
  %2019 = vadd.xlane.f32.xlu0 %v1989
  %v2020 = vpop.xlane.xlu0 %2019
  %2021 = vadd.xlane.f32.xlu0 %v1990
  %v2022 = vpop.xlane.xlu0 %2021
  %v2023 = vmul.f32 %v1992, %v421
  %v2024 = vmul.f32 %v1994, %v421
  %v2025 = vmul.f32 %v1996, %v421
  %v2026 = vmul.f32 %v1998, %v421
  %v2027 = vmul.f32 %v2000, %v421
  %v2028 = vmul.f32 %v2002, %v421
  %v2029 = vmul.f32 %v2004, %v421
  %v2030 = vmul.f32 %v2006, %v421
  %v2031 = vmul.f32 %v2008, %v421
  %v2032 = vmul.f32 %v2010, %v421
  %v2033 = vmul.f32 %v2012, %v421
  %v2034 = vmul.f32 %v2014, %v421
  %v2035 = vmul.f32 %v2016, %v421
  %v2036 = vmul.f32 %v2018, %v421
  %v2037 = vmul.f32 %v2020, %v421
  %v2038 = vmul.f32 %v2022, %v421
  %v2039 = vadd.f32 %v2023, 1e-06
  %v2040 = vadd.f32 %v2024, 1e-06
  %v2041 = vadd.f32 %v2025, 1e-06
  %v2042 = vadd.f32 %v2026, 1e-06
  %v2043 = vadd.f32 %v2027, 1e-06
  %v2044 = vadd.f32 %v2028, 1e-06
  %v2045 = vadd.f32 %v2029, 1e-06
  %v2046 = vadd.f32 %v2030, 1e-06
  %v2047 = vadd.f32 %v2031, 1e-06
  %v2048 = vadd.f32 %v2032, 1e-06
  %v2049 = vadd.f32 %v2033, 1e-06
  %v2050 = vadd.f32 %v2034, 1e-06
  %v2051 = vadd.f32 %v2035, 1e-06
  %v2052 = vadd.f32 %v2036, 1e-06
  %v2053 = vadd.f32 %v2037, 1e-06
  %v2054 = vadd.f32 %v2038, 1e-06
  %v2055 = vrsqrt.pop %v2039
  %v2056 = vrsqrt.pop %v2040
  %v2057 = vrsqrt.pop %v2041
  %v2058 = vrsqrt.pop %v2042
  %v2059 = vrsqrt.pop %v2043
  %v2060 = vrsqrt.pop %v2044
  %v2061 = vrsqrt.pop %v2045
  %v2062 = vrsqrt.pop %v2046
  %v2063 = vrsqrt.pop %v2047
  %v2064 = vrsqrt.pop %v2048
  %v2065 = vrsqrt.pop %v2049
  %v2066 = vrsqrt.pop %v2050
  %v2067 = vrsqrt.pop %v2051
  %v2068 = vrsqrt.pop %v2052
  %v2069 = vrsqrt.pop %v2053
  %v2070 = vrsqrt.pop %v2054
  %v2072 = vlaneseq
  %v2073 = vshrl.u32 %v2072, 7
  %v2074 = vsub.s32 0, %v2073
  %v2075 = vrot.slane %v1952, %v2074
  %v2077 = vmul.f32 %v1855, %v2075
  %v2078 = vmul.f32 %v1856, %v2075
  %v2079 = vmul.f32 %v1857, %v2075
  %v2080 = vmul.f32 %v1858, %v2075
  %v2081 = vmul.f32 %v1859, %v2075
  %v2082 = vmul.f32 %v1860, %v2075
  %v2083 = vmul.f32 %v1861, %v2075
  %v2084 = vmul.f32 %v1862, %v2075
  %v2085 = vmul.f32 %v1863, %v2075
  %v2086 = vmul.f32 %v1864, %v2075
  %v2087 = vmul.f32 %v1865, %v2075
  %v2088 = vmul.f32 %v1866, %v2075
  %v2089 = vmul.f32 %v1867, %v2075
  %v2090 = vmul.f32 %v1868, %v2075
  %v2091 = vmul.f32 %v1869, %v2075
  %v2092 = vmul.f32 %v1870, %v2075
  %2093 = vadd.xlane.f32.xlu0 %v2077
  %v2094 = vpop.xlane.xlu0 %2093
  %2095 = vadd.xlane.f32.xlu0 %v2078
  %v2096 = vpop.xlane.xlu0 %2095
  %2097 = vadd.xlane.f32.xlu0 %v2079
  %v2098 = vpop.xlane.xlu0 %2097
  %2099 = vadd.xlane.f32.xlu0 %v2080
  %v2100 = vpop.xlane.xlu0 %2099
  %2101 = vadd.xlane.f32.xlu0 %v2081
  %v2102 = vpop.xlane.xlu0 %2101
  %2103 = vadd.xlane.f32.xlu0 %v2082
  %v2104 = vpop.xlane.xlu0 %2103
  %2105 = vadd.xlane.f32.xlu0 %v2083
  %v2106 = vpop.xlane.xlu0 %2105
  %2107 = vadd.xlane.f32.xlu0 %v2084
  %v2108 = vpop.xlane.xlu0 %2107
  %2109 = vadd.xlane.f32.xlu0 %v2085
  %v2110 = vpop.xlane.xlu0 %2109
  %2111 = vadd.xlane.f32.xlu0 %v2086
  %v2112 = vpop.xlane.xlu0 %2111
  %2113 = vadd.xlane.f32.xlu0 %v2087
  %v2114 = vpop.xlane.xlu0 %2113
  %2115 = vadd.xlane.f32.xlu0 %v2088
  %v2116 = vpop.xlane.xlu0 %2115
  %2117 = vadd.xlane.f32.xlu0 %v2089
  %v2118 = vpop.xlane.xlu0 %2117
  %2119 = vadd.xlane.f32.xlu0 %v2090
  %v2120 = vpop.xlane.xlu0 %2119
  %2121 = vadd.xlane.f32.xlu0 %v2091
  %v2122 = vpop.xlane.xlu0 %2121
  %2123 = vadd.xlane.f32.xlu0 %v2092
  %v2124 = vpop.xlane.xlu0 %2123
  %v2125 = vmul.f32 %v2094, %v524
  %v2126 = vmul.f32 %v2096, %v524
  %v2127 = vmul.f32 %v2098, %v524
  %v2128 = vmul.f32 %v2100, %v524
  %v2129 = vmul.f32 %v2102, %v524
  %v2130 = vmul.f32 %v2104, %v524
  %v2131 = vmul.f32 %v2106, %v524
  %v2132 = vmul.f32 %v2108, %v524
  %v2133 = vmul.f32 %v2110, %v524
  %v2134 = vmul.f32 %v2112, %v524
  %v2135 = vmul.f32 %v2114, %v524
  %v2136 = vmul.f32 %v2116, %v524
  %v2137 = vmul.f32 %v2118, %v524
  %v2138 = vmul.f32 %v2120, %v524
  %v2139 = vmul.f32 %v2122, %v524
  %v2140 = vmul.f32 %v2124, %v524
  %v2141 = vsub.f32 %v1855, %v2125
  %v2142 = vsub.f32 %v1856, %v2126
  %v2143 = vsub.f32 %v1857, %v2127
  %v2144 = vsub.f32 %v1858, %v2128
  %v2145 = vsub.f32 %v1859, %v2129
  %v2146 = vsub.f32 %v1860, %v2130
  %v2147 = vsub.f32 %v1861, %v2131
  %v2148 = vsub.f32 %v1862, %v2132
  %v2149 = vsub.f32 %v1863, %v2133
  %v2150 = vsub.f32 %v1864, %v2134
  %v2151 = vsub.f32 %v1865, %v2135
  %v2152 = vsub.f32 %v1866, %v2136
  %v2153 = vsub.f32 %v1867, %v2137
  %v2154 = vsub.f32 %v1868, %v2138
  %v2155 = vsub.f32 %v1869, %v2139
  %v2156 = vsub.f32 %v1870, %v2140
  %v2157 = vmul.f32 %v2141, %v2141
  %v2158 = vmul.f32 %v2142, %v2142
  %v2159 = vmul.f32 %v2143, %v2143
  %v2160 = vmul.f32 %v2144, %v2144
  %v2161 = vmul.f32 %v2145, %v2145
  %v2162 = vmul.f32 %v2146, %v2146
  %v2163 = vmul.f32 %v2147, %v2147
  %v2164 = vmul.f32 %v2148, %v2148
  %v2165 = vmul.f32 %v2149, %v2149
  %v2166 = vmul.f32 %v2150, %v2150
  %v2167 = vmul.f32 %v2151, %v2151
  %v2168 = vmul.f32 %v2152, %v2152
  %v2169 = vmul.f32 %v2153, %v2153
  %v2170 = vmul.f32 %v2154, %v2154
  %v2171 = vmul.f32 %v2155, %v2155
  %v2172 = vmul.f32 %v2156, %v2156
  %v2173 = vmul.f32 %v2157, %v2075
  %v2174 = vmul.f32 %v2158, %v2075
  %v2175 = vmul.f32 %v2159, %v2075
  %v2176 = vmul.f32 %v2160, %v2075
  %v2177 = vmul.f32 %v2161, %v2075
  %v2178 = vmul.f32 %v2162, %v2075
  %v2179 = vmul.f32 %v2163, %v2075
  %v2180 = vmul.f32 %v2164, %v2075
  %v2181 = vmul.f32 %v2165, %v2075
  %v2182 = vmul.f32 %v2166, %v2075
  %v2183 = vmul.f32 %v2167, %v2075
  %v2184 = vmul.f32 %v2168, %v2075
  %v2185 = vmul.f32 %v2169, %v2075
  %v2186 = vmul.f32 %v2170, %v2075
  %v2187 = vmul.f32 %v2171, %v2075
  %v2188 = vmul.f32 %v2172, %v2075
  %2189 = vadd.xlane.f32.xlu0 %v2173
  %v2190 = vpop.xlane.xlu0 %2189
  %2191 = vadd.xlane.f32.xlu0 %v2174
  %v2192 = vpop.xlane.xlu0 %2191
  %2193 = vadd.xlane.f32.xlu0 %v2175
  %v2194 = vpop.xlane.xlu0 %2193
  %2195 = vadd.xlane.f32.xlu0 %v2176
  %v2196 = vpop.xlane.xlu0 %2195
  %2197 = vadd.xlane.f32.xlu0 %v2177
  %v2198 = vpop.xlane.xlu0 %2197
  %2199 = vadd.xlane.f32.xlu0 %v2178
  %v2200 = vpop.xlane.xlu0 %2199
  %2201 = vadd.xlane.f32.xlu0 %v2179
  %v2202 = vpop.xlane.xlu0 %2201
  %2203 = vadd.xlane.f32.xlu0 %v2180
  %v2204 = vpop.xlane.xlu0 %2203
  %2205 = vadd.xlane.f32.xlu0 %v2181
  %v2206 = vpop.xlane.xlu0 %2205
  %2207 = vadd.xlane.f32.xlu0 %v2182
  %v2208 = vpop.xlane.xlu0 %2207
  %2209 = vadd.xlane.f32.xlu0 %v2183
  %v2210 = vpop.xlane.xlu0 %2209
  %2211 = vadd.xlane.f32.xlu0 %v2184
  %v2212 = vpop.xlane.xlu0 %2211
  %2213 = vadd.xlane.f32.xlu0 %v2185
  %v2214 = vpop.xlane.xlu0 %2213
  %2215 = vadd.xlane.f32.xlu0 %v2186
  %v2216 = vpop.xlane.xlu0 %2215
  %2217 = vadd.xlane.f32.xlu0 %v2187
  %v2218 = vpop.xlane.xlu0 %2217
  %2219 = vadd.xlane.f32.xlu0 %v2188
  %v2220 = vpop.xlane.xlu0 %2219
  %v2221 = vmul.f32 %v2190, %v524
  %v2222 = vmul.f32 %v2192, %v524
  %v2223 = vmul.f32 %v2194, %v524
  %v2224 = vmul.f32 %v2196, %v524
  %v2225 = vmul.f32 %v2198, %v524
  %v2226 = vmul.f32 %v2200, %v524
  %v2227 = vmul.f32 %v2202, %v524
  %v2228 = vmul.f32 %v2204, %v524
  %v2229 = vmul.f32 %v2206, %v524
  %v2230 = vmul.f32 %v2208, %v524
  %v2231 = vmul.f32 %v2210, %v524
  %v2232 = vmul.f32 %v2212, %v524
  %v2233 = vmul.f32 %v2214, %v524
  %v2234 = vmul.f32 %v2216, %v524
  %v2235 = vmul.f32 %v2218, %v524
  %v2236 = vmul.f32 %v2220, %v524
  %v2237 = vadd.f32 %v2221, 1e-06
  %v2238 = vadd.f32 %v2222, 1e-06
  %v2239 = vadd.f32 %v2223, 1e-06
  %v2240 = vadd.f32 %v2224, 1e-06
  %v2241 = vadd.f32 %v2225, 1e-06
  %v2242 = vadd.f32 %v2226, 1e-06
  %v2243 = vadd.f32 %v2227, 1e-06
  %v2244 = vadd.f32 %v2228, 1e-06
  %v2245 = vadd.f32 %v2229, 1e-06
  %v2246 = vadd.f32 %v2230, 1e-06
  %v2247 = vadd.f32 %v2231, 1e-06
  %v2248 = vadd.f32 %v2232, 1e-06
  %v2249 = vadd.f32 %v2233, 1e-06
  %v2250 = vadd.f32 %v2234, 1e-06
  %v2251 = vadd.f32 %v2235, 1e-06
  %v2252 = vadd.f32 %v2236, 1e-06
  %v2253 = vrsqrt.pop %v2237
  %v2254 = vrsqrt.pop %v2238
  %v2255 = vrsqrt.pop %v2239
  %v2256 = vrsqrt.pop %v2240
  %v2257 = vrsqrt.pop %v2241
  %v2258 = vrsqrt.pop %v2242
  %v2259 = vrsqrt.pop %v2243
  %v2260 = vrsqrt.pop %v2244
  %v2261 = vrsqrt.pop %v2245
  %v2262 = vrsqrt.pop %v2246
  %v2263 = vrsqrt.pop %v2247
  %v2264 = vrsqrt.pop %v2248
  %v2265 = vrsqrt.pop %v2249
  %v2266 = vrsqrt.pop %v2250
  %v2267 = vrsqrt.pop %v2251
  %v2268 = vrsqrt.pop %v2252
  %v2269 = vmul.f32 %v1973, %v1855
  %v2270 = vmul.f32 %v1973, %v1856
  %v2271 = vmul.f32 %v1973, %v1857
  %v2272 = vmul.f32 %v1973, %v1858
  %v2273 = vmul.f32 %v1973, %v1859
  %v2274 = vmul.f32 %v1973, %v1860
  %v2275 = vmul.f32 %v1973, %v1861
  %v2276 = vmul.f32 %v1973, %v1862
  %v2277 = vmul.f32 %v1973, %v1863
  %v2278 = vmul.f32 %v1973, %v1864
  %v2279 = vmul.f32 %v1973, %v1865
  %v2280 = vmul.f32 %v1973, %v1866
  %v2281 = vmul.f32 %v1973, %v1867
  %v2282 = vmul.f32 %v1973, %v1868
  %v2283 = vmul.f32 %v1973, %v1869
  %v2284 = vmul.f32 %v1973, %v1870
  %v2285 = vmul.f32 %v2269, %v2055
  %v2286 = vmul.f32 %v2270, %v2056
  %v2287 = vmul.f32 %v2271, %v2057
  %v2288 = vmul.f32 %v2272, %v2058
  %v2289 = vmul.f32 %v2273, %v2059
  %v2290 = vmul.f32 %v2274, %v2060
  %v2291 = vmul.f32 %v2275, %v2061
  %v2292 = vmul.f32 %v2276, %v2062
  %v2293 = vmul.f32 %v2277, %v2063
  %v2294 = vmul.f32 %v2278, %v2064
  %v2295 = vmul.f32 %v2279, %v2065
  %v2296 = vmul.f32 %v2280, %v2066
  %v2297 = vmul.f32 %v2281, %v2067
  %v2298 = vmul.f32 %v2282, %v2068
  %v2299 = vmul.f32 %v2283, %v2069
  %v2300 = vmul.f32 %v2284, %v2070
  %v2301 = vmul.f32 %v2075, %v2141
  %v2302 = vmul.f32 %v2075, %v2142
  %v2303 = vmul.f32 %v2075, %v2143
  %v2304 = vmul.f32 %v2075, %v2144
  %v2305 = vmul.f32 %v2075, %v2145
  %v2306 = vmul.f32 %v2075, %v2146
  %v2307 = vmul.f32 %v2075, %v2147
  %v2308 = vmul.f32 %v2075, %v2148
  %v2309 = vmul.f32 %v2075, %v2149
  %v2310 = vmul.f32 %v2075, %v2150
  %v2311 = vmul.f32 %v2075, %v2151
  %v2312 = vmul.f32 %v2075, %v2152
  %v2313 = vmul.f32 %v2075, %v2153
  %v2314 = vmul.f32 %v2075, %v2154
  %v2315 = vmul.f32 %v2075, %v2155
  %v2316 = vmul.f32 %v2075, %v2156
  %v2317 = vmul.f32 %v2301, %v2253
  %v2318 = vmul.f32 %v2302, %v2254
  %v2319 = vmul.f32 %v2303, %v2255
  %v2320 = vmul.f32 %v2304, %v2256
  %v2321 = vmul.f32 %v2305, %v2257
  %v2322 = vmul.f32 %v2306, %v2258
  %v2323 = vmul.f32 %v2307, %v2259
  %v2324 = vmul.f32 %v2308, %v2260
  %v2325 = vmul.f32 %v2309, %v2261
  %v2326 = vmul.f32 %v2310, %v2262
  %v2327 = vmul.f32 %v2311, %v2263
  %v2328 = vmul.f32 %v2312, %v2264
  %v2329 = vmul.f32 %v2313, %v2265
  %v2330 = vmul.f32 %v2314, %v2266
  %v2331 = vmul.f32 %v2315, %v2267
  %v2332 = vmul.f32 %v2316, %v2268
  %v2333 = vadd.f32 %v2285, %v2317
  %v2334 = vadd.f32 %v2286, %v2318
  %v2335 = vadd.f32 %v2287, %v2319
  %v2336 = vadd.f32 %v2288, %v2320
  %v2337 = vadd.f32 %v2289, %v2321
  %v2338 = vadd.f32 %v2290, %v2322
  %v2339 = vadd.f32 %v2291, %v2323
  %v2340 = vadd.f32 %v2292, %v2324
  %v2341 = vadd.f32 %v2293, %v2325
  %v2342 = vadd.f32 %v2294, %v2326
  %v2343 = vadd.f32 %v2295, %v2327
  %v2344 = vadd.f32 %v2296, %v2328
  %v2345 = vadd.f32 %v2297, %v2329
  %v2346 = vadd.f32 %v2298, %v2330
  %v2347 = vadd.f32 %v2299, %v2331
  %v2348 = vadd.f32 %v2300, %v2332
  %v2349 = vpack.c.bf16 %v2334, %v2333
  %v2350 = vpack.c.bf16 %v2336, %v2335
  %v2351 = vpack.c.bf16 %v2338, %v2337
  %v2352 = vpack.c.bf16 %v2340, %v2339
  %v2353 = vpack.c.bf16 %v2342, %v2341
  %v2354 = vpack.c.bf16 %v2344, %v2343
  %v2355 = vpack.c.bf16 %v2346, %v2345
  %v2356 = vpack.c.bf16 %v2348, %v2347
  %v2357 = vld [vmem:[%s13] sm:$0xff]
  %v2358 = vld [vmem:[%s13 + $0x8] sm:$0xf]
  %v2359 = vld [vmem:[%s13 + $0xc] sm:$0xff]
  %v2360 = vld [vmem:[%s13 + $0x14] sm:$0xf]
  %v2361 = vld [vmem:[%s13 + $0x18] sm:$0xff]
  %v2362 = vld [vmem:[%s13 + $0x20] sm:$0xf]
  %v2363 = vld [vmem:[%s13 + $0x24] sm:$0xff]
  %v2364 = vld [vmem:[%s13 + $0x2c] sm:$0xf]
  %v2365 = vld [vmem:[%s13 + $0x30] sm:$0xff]
  %v2366 = vld [vmem:[%s13 + $0x38] sm:$0xf]
  %v2367 = vld [vmem:[%s13 + $0x3c] sm:$0xff]
  %v2368 = vld [vmem:[%s13 + $0x44] sm:$0xf]
  %v2369 = vld [vmem:[%s13 + $0x48] sm:$0xff]
  %v2370 = vld [vmem:[%s13 + $0x50] sm:$0xf]
  %v2371 = vld [vmem:[%s13 + $0x54] sm:$0xff]
  %v2372 = vld [vmem:[%s13 + $0x5c] sm:$0xf]
  %v2373 = vld [vmem:[%s13 + $0x60] sm:$0xff]
  %v2374 = vld [vmem:[%s13 + $0x68] sm:$0xf]
  %v2375 = vld [vmem:[%s13 + $0x6c] sm:$0xff]
  %v2376 = vld [vmem:[%s13 + $0x74] sm:$0xf]
  %v2377 = vld [vmem:[%s13 + $0x78] sm:$0xff]
  %v2378 = vld [vmem:[%s13 + $0x80] sm:$0xf]
  %v2379 = vld [vmem:[%s13 + $0x84] sm:$0xff]
  %v2380 = vld [vmem:[%s13 + $0x8c] sm:$0xf]
  %v2381 = vld [vmem:[%s13 + $0x90] sm:$0xff]
  %v2382 = vld [vmem:[%s13 + $0x98] sm:$0xf]
  %v2383 = vld [vmem:[%s13 + $0x9c] sm:$0xff]
  %v2384 = vld [vmem:[%s13 + $0xa4] sm:$0xf]
  %v2385 = vld [vmem:[%s13 + $0xa8] sm:$0xff]
  %v2386 = vld [vmem:[%s13 + $0xb0] sm:$0xf]
  %v2387 = vld [vmem:[%s13 + $0xb4] sm:$0xff]
  %v2388 = vld [vmem:[%s13 + $0xbc] sm:$0xf]
  %v2389 = vld [vmem:[%s14] sm:$0x7]
  %v2391 = vlaneseq
  %v2392 = vshrl.u32 %v2391, 7
  %v2393 = vsub.s32 0, %v2392
  %v2394 = vrot.slane %v2389, %v2393
  %v2395 = vlaneseq
  %v2396 = vshrl.u32 %v2395, 7
  %v2397 = vsub.s32 1, %v2396
  %v2398 = vrot.slane %v2389, %v2397
  %v2399 = vlaneseq
  %v2400 = vshrl.u32 %v2399, 7
  %v2401 = vsub.s32 2, %v2400
  %v2402 = vrot.slane %v2389, %v2401
  %v2438 = vunpack.c.l.b16 %v2357
  %v2439 = vunpack.c.h.b16 %v2357
  %v2440 = vunpack.c.l.b16 %v2358
  %v2441 = vunpack.c.l.b16 %v2359
  %v2442 = vunpack.c.h.b16 %v2359
  %v2443 = vunpack.c.l.b16 %v2360
  %v2444 = vunpack.c.l.b16 %v2361
  %v2445 = vunpack.c.h.b16 %v2361
  %v2446 = vunpack.c.l.b16 %v2362
  %v2447 = vunpack.c.l.b16 %v2363
  %v2448 = vunpack.c.h.b16 %v2363
  %v2449 = vunpack.c.l.b16 %v2364
  %v2450 = vunpack.c.l.b16 %v2365
  %v2451 = vunpack.c.h.b16 %v2365
  %v2452 = vunpack.c.l.b16 %v2366
  %v2453 = vunpack.c.l.b16 %v2367
  %v2454 = vunpack.c.h.b16 %v2367
  %v2455 = vunpack.c.l.b16 %v2368
  %v2456 = vunpack.c.l.b16 %v2369
  %v2457 = vunpack.c.h.b16 %v2369
  %v2458 = vunpack.c.l.b16 %v2370
  %v2459 = vunpack.c.l.b16 %v2371
  %v2460 = vunpack.c.h.b16 %v2371
  %v2461 = vunpack.c.l.b16 %v2372
  %v2462 = vunpack.c.l.b16 %v2373
  %v2463 = vunpack.c.h.b16 %v2373
  %v2464 = vunpack.c.l.b16 %v2374
  %v2465 = vunpack.c.l.b16 %v2375
  %v2466 = vunpack.c.h.b16 %v2375
  %v2467 = vunpack.c.l.b16 %v2376
  %v2468 = vunpack.c.l.b16 %v2377
  %v2469 = vunpack.c.h.b16 %v2377
  %v2470 = vunpack.c.l.b16 %v2378
  %v2471 = vunpack.c.l.b16 %v2379
  %v2472 = vunpack.c.h.b16 %v2379
  %v2473 = vunpack.c.l.b16 %v2380
  %v2474 = vunpack.c.l.b16 %v2381
  %v2475 = vunpack.c.h.b16 %v2381
  %v2476 = vunpack.c.l.b16 %v2382
  %v2477 = vunpack.c.l.b16 %v2383
  %v2478 = vunpack.c.h.b16 %v2383
  %v2479 = vunpack.c.l.b16 %v2384
  %v2480 = vunpack.c.l.b16 %v2385
  %v2481 = vunpack.c.h.b16 %v2385
  %v2482 = vunpack.c.l.b16 %v2386
  %v2483 = vunpack.c.l.b16 %v2387
  %v2484 = vunpack.c.h.b16 %v2387
  %v2485 = vunpack.c.l.b16 %v2388
  %v2486 = vpack.c.b16 %v2441, %v2438
  %v2487 = vpack.c.b16 %v2442, %v2439
  %v2488 = vpack.c.b16 %v2443, %v2440
  %v2489 = vpack.c.b16 %v2447, %v2444
  %v2490 = vpack.c.b16 %v2448, %v2445
  %v2491 = vpack.c.b16 %v2449, %v2446
  %v2492 = vpack.c.b16 %v2453, %v2450
  %v2493 = vpack.c.b16 %v2454, %v2451
  %v2494 = vpack.c.b16 %v2455, %v2452
  %v2495 = vpack.c.b16 %v2459, %v2456
  %v2496 = vpack.c.b16 %v2460, %v2457
  %v2497 = vpack.c.b16 %v2461, %v2458
  %v2498 = vpack.c.b16 %v2465, %v2462
  %v2499 = vpack.c.b16 %v2466, %v2463
  %v2500 = vpack.c.b16 %v2467, %v2464
  %v2501 = vpack.c.b16 %v2471, %v2468
  %v2502 = vpack.c.b16 %v2472, %v2469
  %v2503 = vpack.c.b16 %v2473, %v2470
  %v2504 = vpack.c.b16 %v2477, %v2474
  %v2505 = vpack.c.b16 %v2478, %v2475
  %v2506 = vpack.c.b16 %v2479, %v2476
  %v2507 = vpack.c.b16 %v2483, %v2480
  %v2508 = vpack.c.b16 %v2484, %v2481
  %v2509 = vpack.c.b16 %v2485, %v2482
  %2534 = vmatprep.subr.bf16.mxu0 %v2487
  %2535 = vmatpush1.bf16.msra.mxu0 %v2486
  %2536 = vmatprep.subr.bf16.mxu0 %v2490
  %2537 = vmatpush1.bf16.msra.mxu0 %v2489
  %2538 = vmatprep.subr.bf16.mxu0 %v2493
  %2539 = vmatpush1.bf16.msra.mxu0 %v2492
  %2540 = vmatprep.subr.bf16.mxu0 %v2496
  %2541 = vmatpush1.bf16.msra.mxu0 %v2495
  %2542 = vmatprep.subr.bf16.mxu0 %v2499
  %2543 = vmatpush1.bf16.msra.mxu0 %v2498
  %2544 = vmatprep.subr.bf16.mxu0 %v2502
  %2545 = vmatpush1.bf16.msra.mxu0 %v2501
  %2546 = vmatprep.subr.bf16.mxu0 %v2505
  %2547 = vmatpush1.bf16.msra.mxu0 %v2504
  %2548 = vmatprep.subr.bf16.mxu0 %v2508
  %2549 = vmatpush1.bf16.msra.mxu0 %v2507
  %2550 = vmatprep.subr.bf16.mxu0 0
  %2551 = vmatpush1.bf16.msra.mxu0 0
  %2552 = vmatprep.subr.bf16.mxu0 0
  %2553 = vmatpush1.bf16.msra.mxu0 0
  %2554 = vmatprep.subr.bf16.mxu0 0
  %2555 = vmatpush1.bf16.msra.mxu0 0
  %2556 = vmatprep.subr.bf16.mxu0 0
  %2557 = vmatpush1.bf16.msra.mxu0 0
  %2558 = vmatprep.subr.bf16.mxu0 0
  %2559 = vmatpush1.bf16.msra.mxu0 0
  %2560 = vmatprep.subr.bf16.mxu0 0
  %2561 = vmatpush1.bf16.msra.mxu0 0
  %2562 = vmatprep.subr.bf16.mxu0 0
  %2563 = vmatpush1.bf16.msra.mxu0 0
  %2564 = vmatprep.subr.bf16.mxu0 0
  %2565 = vmatpush1.bf16.msra.mxu0 0
  %2566 = vmatprep.mubr.bf16.mxu0 0
  %2567 = vmatmul.mubr.bf16.gmra.mrb[0].mxu0 %v2349
  %v2568 = vpop.f32.mrb[0].mxu0
  %v2569 = vadd.f32 %v2394, %v2568
  %v2570 = vpop.f32.mrb[0].mxu0
  %v2571 = vadd.f32 %v2398, %v2570
  %v2572 = vpop.f32.mrb[0].mxu0
  %v2573 = vadd.f32 %v2394, %v2572
  %v2574 = vpop.f32.mrb[0].mxu0
  %v2575 = vadd.f32 %v2398, %v2574
  %2576 = vmatprep.mubr.bf16.mxu0 0
  %2577 = vmatmul.mubr.bf16.gmra.mrb[0].mxu0 %v2350
  %v2578 = vpop.f32.mrb[0].mxu0
  %v2579 = vadd.f32 %v2394, %v2578
  %v2580 = vpop.f32.mrb[0].mxu0
  %v2581 = vadd.f32 %v2398, %v2580
  %v2582 = vpop.f32.mrb[0].mxu0
  %v2583 = vadd.f32 %v2394, %v2582
  %v2584 = vpop.f32.mrb[0].mxu0
  %v2585 = vadd.f32 %v2398, %v2584
  %2586 = vmatprep.mubr.bf16.mxu0 0
  %2587 = vmatmul.mubr.bf16.gmra.mrb[0].mxu0 %v2351
  %v2588 = vpop.f32.mrb[0].mxu0
  %v2589 = vadd.f32 %v2394, %v2588
  %v2590 = vpop.f32.mrb[0].mxu0
  %v2591 = vadd.f32 %v2398, %v2590
  %v2592 = vpop.f32.mrb[0].mxu0
  %v2593 = vadd.f32 %v2394, %v2592
  %v2594 = vpop.f32.mrb[0].mxu0
  %v2595 = vadd.f32 %v2398, %v2594
  %2596 = vmatprep.mubr.bf16.mxu0 0
  %2597 = vmatmul.mubr.bf16.gmra.mrb[0].mxu0 %v2352
  %v2598 = vpop.f32.mrb[0].mxu0
  %v2599 = vadd.f32 %v2394, %v2598
  %v2600 = vpop.f32.mrb[0].mxu0
  %v2601 = vadd.f32 %v2398, %v2600
  %v2602 = vpop.f32.mrb[0].mxu0
  %v2603 = vadd.f32 %v2394, %v2602
  %v2604 = vpop.f32.mrb[0].mxu0
  %v2605 = vadd.f32 %v2398, %v2604
  %2606 = vmatprep.mubr.bf16.mxu0 0
  %2607 = vmatmul.mubr.bf16.gmra.mrb[0].mxu0 %v2353
  %v2608 = vpop.f32.mrb[0].mxu0
  %v2609 = vadd.f32 %v2394, %v2608
  %v2610 = vpop.f32.mrb[0].mxu0
  %v2611 = vadd.f32 %v2398, %v2610
  %v2612 = vpop.f32.mrb[0].mxu0
  %v2613 = vadd.f32 %v2394, %v2612
  %v2614 = vpop.f32.mrb[0].mxu0
  %v2615 = vadd.f32 %v2398, %v2614
  %2616 = vmatprep.mubr.bf16.mxu0 0
  %2617 = vmatmul.mubr.bf16.gmra.mrb[0].mxu0 %v2354
  %v2618 = vpop.f32.mrb[0].mxu0
  %v2619 = vadd.f32 %v2394, %v2618
  %v2620 = vpop.f32.mrb[0].mxu0
  %v2621 = vadd.f32 %v2398, %v2620
  %v2622 = vpop.f32.mrb[0].mxu0
  %v2623 = vadd.f32 %v2394, %v2622
  %v2624 = vpop.f32.mrb[0].mxu0
  %v2625 = vadd.f32 %v2398, %v2624
  %2626 = vmatprep.mubr.bf16.mxu0 0
  %2627 = vmatmul.mubr.bf16.gmra.mrb[0].mxu0 %v2355
  %v2628 = vpop.f32.mrb[0].mxu0
  %v2629 = vadd.f32 %v2394, %v2628
  %v2630 = vpop.f32.mrb[0].mxu0
  %v2631 = vadd.f32 %v2398, %v2630
  %v2632 = vpop.f32.mrb[0].mxu0
  %v2633 = vadd.f32 %v2394, %v2632
  %v2634 = vpop.f32.mrb[0].mxu0
  %v2635 = vadd.f32 %v2398, %v2634
  %2636 = vmatprep.mubr.bf16.mxu0 0
  %2637 = vmatmul.mubr.bf16.gmra.mrb[0].mxu0 %v2356
  %v2638 = vpop.f32.mrb[0].mxu0
  %v2639 = vadd.f32 %v2394, %v2638
  %v2640 = vpop.f32.mrb[0].mxu0
  %v2641 = vadd.f32 %v2398, %v2640
  %v2642 = vpop.f32.mrb[0].mxu0
  %v2643 = vadd.f32 %v2394, %v2642
  %v2644 = vpop.f32.mrb[0].mxu0
  %v2645 = vadd.f32 %v2398, %v2644
  %2646 = vdwg.mxu0
  %2647 = vmatprep.subr.bf16.mxu0 0
  %2648 = vmatpush1.bf16.msra.mxu0 %v2488
  %2649 = vmatprep.subr.bf16.mxu0 0
  %2650 = vmatpush1.bf16.msra.mxu0 %v2491
  %2651 = vmatprep.subr.bf16.mxu0 0
  %2652 = vmatpush1.bf16.msra.mxu0 %v2494
  %2653 = vmatprep.subr.bf16.mxu0 0
  %2654 = vmatpush1.bf16.msra.mxu0 %v2497
  %2655 = vmatprep.subr.bf16.mxu0 0
  %2656 = vmatpush1.bf16.msra.mxu0 %v2500
  %2657 = vmatprep.subr.bf16.mxu0 0
  %2658 = vmatpush1.bf16.msra.mxu0 %v2503
  %2659 = vmatprep.subr.bf16.mxu0 0
  %2660 = vmatpush1.bf16.msra.mxu0 %v2506
  %2661 = vmatprep.subr.bf16.mxu0 0
  %2662 = vmatpush1.bf16.msra.mxu0 %v2509
  %2663 = vmatprep.subr.bf16.mxu0 0
  %2664 = vmatpush1.bf16.msra.mxu0 0
  %2665 = vmatprep.subr.bf16.mxu0 0
  %2666 = vmatpush1.bf16.msra.mxu0 0
  %2667 = vmatprep.subr.bf16.mxu0 0
  %2668 = vmatpush1.bf16.msra.mxu0 0
  %2669 = vmatprep.subr.bf16.mxu0 0
  %2670 = vmatpush1.bf16.msra.mxu0 0
  %2671 = vmatprep.subr.bf16.mxu0 0
  %2672 = vmatpush1.bf16.msra.mxu0 0
  %2673 = vmatprep.subr.bf16.mxu0 0
  %2674 = vmatpush1.bf16.msra.mxu0 0
  %2675 = vmatprep.subr.bf16.mxu0 0
  %2676 = vmatpush1.bf16.msra.mxu0 0
  %2677 = vmatprep.subr.bf16.mxu0 0
  %2678 = vmatpush1.bf16.msra.mxu0 0
  %2679 = vmatprep.mubr.bf16.mxu0 0
  %2680 = vmatmul.mubr.bf16.gmra.mrb[0].mxu0 %v2349
  %v2681 = vpop.f32.mrb[0].mxu0
  %v2682 = vadd.f32 %v2402, %v2681
  %v2683 = vpop.f32.mrb[0].mxu0
  %v2684 = vpop.f32.mrb[0].mxu0
  %v2685 = vadd.f32 %v2402, %v2684
  %v2686 = vpop.f32.mrb[0].mxu0
  %2687 = vmatprep.mubr.bf16.mxu0 0
  %2688 = vmatmul.mubr.bf16.gmra.mrb[0].mxu0 %v2350
  %v2689 = vpop.f32.mrb[0].mxu0
  %v2690 = vadd.f32 %v2402, %v2689
  %v2691 = vpop.f32.mrb[0].mxu0
  %v2692 = vpop.f32.mrb[0].mxu0
  %v2693 = vadd.f32 %v2402, %v2692
  %v2694 = vpop.f32.mrb[0].mxu0
  %2695 = vmatprep.mubr.bf16.mxu0 0
  %2696 = vmatmul.mubr.bf16.gmra.mrb[0].mxu0 %v2351
  %v2697 = vpop.f32.mrb[0].mxu0
  %v2698 = vadd.f32 %v2402, %v2697
  %v2699 = vpop.f32.mrb[0].mxu0
  %v2700 = vpop.f32.mrb[0].mxu0
  %v2701 = vadd.f32 %v2402, %v2700
  %v2702 = vpop.f32.mrb[0].mxu0
  %2703 = vmatprep.mubr.bf16.mxu0 0
  %2704 = vmatmul.mubr.bf16.gmra.mrb[0].mxu0 %v2352
  %v2705 = vpop.f32.mrb[0].mxu0
  %v2706 = vadd.f32 %v2402, %v2705
  %v2707 = vpop.f32.mrb[0].mxu0
  %v2708 = vpop.f32.mrb[0].mxu0
  %v2709 = vadd.f32 %v2402, %v2708
  %v2710 = vpop.f32.mrb[0].mxu0
  %2711 = vmatprep.mubr.bf16.mxu0 0
  %2712 = vmatmul.mubr.bf16.gmra.mrb[0].mxu0 %v2353
  %v2713 = vpop.f32.mrb[0].mxu0
  %v2714 = vadd.f32 %v2402, %v2713
  %v2715 = vpop.f32.mrb[0].mxu0
  %v2716 = vpop.f32.mrb[0].mxu0
  %v2717 = vadd.f32 %v2402, %v2716
  %v2718 = vpop.f32.mrb[0].mxu0
  %2719 = vmatprep.mubr.bf16.mxu0 0
  %2720 = vmatmul.mubr.bf16.gmra.mrb[0].mxu0 %v2354
  %v2721 = vpop.f32.mrb[0].mxu0
  %v2722 = vadd.f32 %v2402, %v2721
  %v2723 = vpop.f32.mrb[0].mxu0
  %v2724 = vpop.f32.mrb[0].mxu0
  %v2725 = vadd.f32 %v2402, %v2724
  %v2726 = vpop.f32.mrb[0].mxu0
  %2727 = vmatprep.mubr.bf16.mxu0 0
  %2728 = vmatmul.mubr.bf16.gmra.mrb[0].mxu0 %v2355
  %v2729 = vpop.f32.mrb[0].mxu0
  %v2730 = vadd.f32 %v2402, %v2729
  %v2731 = vpop.f32.mrb[0].mxu0
  %v2732 = vpop.f32.mrb[0].mxu0
  %v2733 = vadd.f32 %v2402, %v2732
  %v2734 = vpop.f32.mrb[0].mxu0
  %2735 = vmatprep.mubr.bf16.mxu0 0
  %2736 = vmatmul.mubr.bf16.gmra.mrb[0].mxu0 %v2356
  %v2737 = vpop.f32.mrb[0].mxu0
  %v2738 = vadd.f32 %v2402, %v2737
  %v2739 = vpop.f32.mrb[0].mxu0
  %v2740 = vpop.f32.mrb[0].mxu0
  %v2741 = vadd.f32 %v2402, %v2740
  %v2742 = vpop.f32.mrb[0].mxu0
  %2743 = vdwg.mxu0
  %v2744 = vpack.c.bf16 %v2573, %v2569
  %v2745 = vpack.c.bf16 %v2575, %v2571
  %v2746 = vpack.c.bf16 %v2685, %v2682
  %v2747 = vpack.c.bf16 %v2583, %v2579
  %v2748 = vpack.c.bf16 %v2585, %v2581
  %v2749 = vpack.c.bf16 %v2693, %v2690
  %v2750 = vpack.c.bf16 %v2593, %v2589
  %v2751 = vpack.c.bf16 %v2595, %v2591
  %v2752 = vpack.c.bf16 %v2701, %v2698
  %v2753 = vpack.c.bf16 %v2603, %v2599
  %v2754 = vpack.c.bf16 %v2605, %v2601
  %v2755 = vpack.c.bf16 %v2709, %v2706
  %v2756 = vpack.c.bf16 %v2613, %v2609
  %v2757 = vpack.c.bf16 %v2615, %v2611
  %v2758 = vpack.c.bf16 %v2717, %v2714
  %v2759 = vpack.c.bf16 %v2623, %v2619
  %v2760 = vpack.c.bf16 %v2625, %v2621
  %v2761 = vpack.c.bf16 %v2725, %v2722
  %v2762 = vpack.c.bf16 %v2633, %v2629
  %v2763 = vpack.c.bf16 %v2635, %v2631
  %v2764 = vpack.c.bf16 %v2733, %v2730
  %v2765 = vpack.c.bf16 %v2643, %v2639
  %v2766 = vpack.c.bf16 %v2645, %v2641
  %v2767 = vpack.c.bf16 %v2741, %v2738
  %v2792 = vunpack.c.l.b16 %v2744
  %v2793 = vunpack.c.l.b16 %v2745
  %v2794 = vunpack.c.l.b16 %v2746
  %v2795 = vunpack.c.h.b16 %v2744
  %v2796 = vunpack.c.h.b16 %v2745
  %v2797 = vunpack.c.h.b16 %v2746
  %v2798 = vunpack.c.l.b16 %v2747
  %v2799 = vunpack.c.l.b16 %v2748
  %v2800 = vunpack.c.l.b16 %v2749
  %v2801 = vunpack.c.h.b16 %v2747
  %v2802 = vunpack.c.h.b16 %v2748
  %v2803 = vunpack.c.h.b16 %v2749
  %v2804 = vunpack.c.l.b16 %v2750
  %v2805 = vunpack.c.l.b16 %v2751
  %v2806 = vunpack.c.l.b16 %v2752
  %v2807 = vunpack.c.h.b16 %v2750
  %v2808 = vunpack.c.h.b16 %v2751
  %v2809 = vunpack.c.h.b16 %v2752
  %v2810 = vunpack.c.l.b16 %v2753
  %v2811 = vunpack.c.l.b16 %v2754
  %v2812 = vunpack.c.l.b16 %v2755
  %v2813 = vunpack.c.h.b16 %v2753
  %v2814 = vunpack.c.h.b16 %v2754
  %v2815 = vunpack.c.h.b16 %v2755
  %v2816 = vunpack.c.l.b16 %v2756
  %v2817 = vunpack.c.l.b16 %v2757
  %v2818 = vunpack.c.l.b16 %v2758
  %v2819 = vunpack.c.h.b16 %v2756
  %v2820 = vunpack.c.h.b16 %v2757
  %v2821 = vunpack.c.h.b16 %v2758
  %v2822 = vunpack.c.l.b16 %v2759
  %v2823 = vunpack.c.l.b16 %v2760
  %v2824 = vunpack.c.l.b16 %v2761
  %v2825 = vunpack.c.h.b16 %v2759
  %v2826 = vunpack.c.h.b16 %v2760
  %v2827 = vunpack.c.h.b16 %v2761
  %v2828 = vunpack.c.l.b16 %v2762
  %v2829 = vunpack.c.l.b16 %v2763
  %v2830 = vunpack.c.l.b16 %v2764
  %v2831 = vunpack.c.h.b16 %v2762
  %v2832 = vunpack.c.h.b16 %v2763
  %v2833 = vunpack.c.h.b16 %v2764
  %v2834 = vunpack.c.l.b16 %v2765
  %v2835 = vunpack.c.l.b16 %v2766
  %v2836 = vunpack.c.l.b16 %v2767
  %v2837 = vunpack.c.h.b16 %v2765
  %v2838 = vunpack.c.h.b16 %v2766
  %v2839 = vunpack.c.h.b16 %v2767
  %v2840 = vpack.c.b16 %v2793, %v2792
  %v2841 = vpack.c.b16 %v2794, %v2794
  %v2842 = vpack.c.b16 %v2796, %v2795
  %v2843 = vpack.c.b16 %v2797, %v2797
  %v2844 = vpack.c.b16 %v2799, %v2798
  %v2845 = vpack.c.b16 %v2800, %v2800
  %v2846 = vpack.c.b16 %v2802, %v2801
  %v2847 = vpack.c.b16 %v2803, %v2803
  %v2848 = vpack.c.b16 %v2805, %v2804
  %v2849 = vpack.c.b16 %v2806, %v2806
  %v2850 = vpack.c.b16 %v2808, %v2807
  %v2851 = vpack.c.b16 %v2809, %v2809
  %v2852 = vpack.c.b16 %v2811, %v2810
  %v2853 = vpack.c.b16 %v2812, %v2812
  %v2854 = vpack.c.b16 %v2814, %v2813
  %v2855 = vpack.c.b16 %v2815, %v2815
  %v2856 = vpack.c.b16 %v2817, %v2816
  %v2857 = vpack.c.b16 %v2818, %v2818
  %v2858 = vpack.c.b16 %v2820, %v2819
  %v2859 = vpack.c.b16 %v2821, %v2821
  %v2860 = vpack.c.b16 %v2823, %v2822
  %v2861 = vpack.c.b16 %v2824, %v2824
  %v2862 = vpack.c.b16 %v2826, %v2825
  %v2863 = vpack.c.b16 %v2827, %v2827
  %v2864 = vpack.c.b16 %v2829, %v2828
  %v2865 = vpack.c.b16 %v2830, %v2830
  %v2866 = vpack.c.b16 %v2832, %v2831
  %v2867 = vpack.c.b16 %v2833, %v2833
  %v2868 = vpack.c.b16 %v2835, %v2834
  %v2869 = vpack.c.b16 %v2836, %v2836
  %v2870 = vpack.c.b16 %v2838, %v2837
  %v2871 = vpack.c.b16 %v2839, %v2839
  %2904 = vst [vmem:[%s16] sm:$0xff] %v2840
  %2905 = vst [vmem:[%s16 + $0x8] sm:$0xf] %v2841
  %2906 = vst [vmem:[%s16 + $0xc] sm:$0xff] %v2842
  %2907 = vst [vmem:[%s16 + $0x14] sm:$0xf] %v2843
  %2908 = vst [vmem:[%s16 + $0x18] sm:$0xff] %v2844
  %2909 = vst [vmem:[%s16 + $0x20] sm:$0xf] %v2845
  %2910 = vst [vmem:[%s16 + $0x24] sm:$0xff] %v2846
  %2911 = vst [vmem:[%s16 + $0x2c] sm:$0xf] %v2847
  %2912 = vst [vmem:[%s16 + $0x30] sm:$0xff] %v2848
  %2913 = vst [vmem:[%s16 + $0x38] sm:$0xf] %v2849
  %2914 = vst [vmem:[%s16 + $0x3c] sm:$0xff] %v2850
  %2915 = vst [vmem:[%s16 + $0x44] sm:$0xf] %v2851
  %2916 = vst [vmem:[%s16 + $0x48] sm:$0xff] %v2852
  %2917 = vst [vmem:[%s16 + $0x50] sm:$0xf] %v2853
  %2918 = vst [vmem:[%s16 + $0x54] sm:$0xff] %v2854
  %2919 = vst [vmem:[%s16 + $0x5c] sm:$0xf] %v2855
  %2920 = vst [vmem:[%s16 + $0x60] sm:$0xff] %v2856
  %2921 = vst [vmem:[%s16 + $0x68] sm:$0xf] %v2857
  %2922 = vst [vmem:[%s16 + $0x6c] sm:$0xff] %v2858
  %2923 = vst [vmem:[%s16 + $0x74] sm:$0xf] %v2859
  %2924 = vst [vmem:[%s16 + $0x78] sm:$0xff] %v2860
  %2925 = vst [vmem:[%s16 + $0x80] sm:$0xf] %v2861
  %2926 = vst [vmem:[%s16 + $0x84] sm:$0xff] %v2862
  %2927 = vst [vmem:[%s16 + $0x8c] sm:$0xf] %v2863
  %2928 = vst [vmem:[%s16 + $0x90] sm:$0xff] %v2864
  %2929 = vst [vmem:[%s16 + $0x98] sm:$0xf] %v2865
  %2930 = vst [vmem:[%s16 + $0x9c] sm:$0xff] %v2866
  %2931 = vst [vmem:[%s16 + $0xa4] sm:$0xf] %v2867
  %2932 = vst [vmem:[%s16 + $0xa8] sm:$0xff] %v2868
  %2933 = vst [vmem:[%s16 + $0xb0] sm:$0xf] %v2869
  %2934 = vst [vmem:[%s16 + $0xb4] sm:$0xff] %v2870
  %2935 = vst [vmem:[%s16 + $0xbc] sm:$0xf] %v2871
  // Predicated region
  $region62: #{lgatr_forward.8} parent=0 // pred_check
    _
  $region63: #{lgatr_forward.8} parent=0 // pred_check_branch
    %2937 = sbr.rel (0) target = $region65
  $region64: #{lgatr_forward.8} parent=0 // pred_region
    _
  $region65: #{lgatr_forward.8} parent=0 // pred_fallthru
    _
  // Predicated region
  $region66: #{lgatr_forward.8} parent=0 // pred_check
    _
  $region67: #{lgatr_forward.8} parent=0 // pred_check_branch
    %2939 = sbr.rel (0) target = $region69
  $region68: #{lgatr_forward.8} parent=0 // pred_region
    _
  $region69: #{lgatr_forward.8} parent=0 // pred_fallthru
    _
  // Predicated region
  $region70: #{lgatr_forward.8} parent=0 // pred_check
    _
  $region71: #{lgatr_forward.8} parent=0 // pred_check_branch
    %2941 = sbr.rel (0) target = $region73
  $region72: #{lgatr_forward.8} parent=0 // pred_region
    _
  $region73: #{lgatr_forward.8} parent=0 // pred_fallthru
    _
  // Predicated region
  $region74: #{lgatr_forward.8} parent=0 // pred_check
    _
  $region75: #{lgatr_forward.8} parent=0 // pred_check_branch
    %2943 = sbr.rel (0) target = $region77
  $region76: #{lgatr_forward.8} parent=0 // pred_region
    _
  $region77: #{lgatr_forward.8} parent=0 // pred_fallthru
    _

</llo_original>
